<compile_context>
chip_gen: v7x
topology: tpu7x:2x2x1
jax: 0.10.0
libtpu: 0.0.40
codegen_flags: <defaults>
</compile_context>

<pallas_src>
import functools

import jax
import jax.numpy as jnp
from jax.experimental import pallas as pl
from jax.experimental.pallas import tpu as pltpu


# ---------------------------------------------------------------------------
# Pallas kernel: GEMM with fused (folded-BN) bias + ReLU epilogue
# ---------------------------------------------------------------------------

def _matmul_bias_act_kernel(x_ref, w_ref, b_ref, o_ref, *, apply_relu):
    # x_ref: (tm, K) patches tile, w_ref: (K, Cout) resident weights,
    # b_ref: (1, Cout) folded-BN bias row, o_ref: (tm, Cout).
    acc = jnp.dot(x_ref[...], w_ref[...], preferred_element_type=jnp.float32)
    acc = acc + b_ref[...]
    if apply_relu:
        acc = jnp.maximum(acc, 0.0)
    o_ref[...] = acc.astype(o_ref.dtype)


@functools.lru_cache(maxsize=1)
def _default_target_bytes():
    # v6e / v7x: ~4 MiB input tiles keep the ~0.35us/step overhead small while
    # double-buffered in+out stays far below v7x's 64 MiB physical VMEM.
    # v5e (0.82 TB/s HBM): 2 MiB already amortizes the per-step overhead.
    try:
        kind = jax.devices()[0].device_kind.lower()
    except Exception:
        kind = ""
    if "v5" in kind and ("lite" in kind or "e" in kind):
        return 2 * 1024 * 1024
    return 4 * 1024 * 1024


def _pick_m_tile(m, kdim, itemsize, target_bytes=None):
    """Largest divisor of `m` (rows of the patches matrix) such that:
       - the (tile_m, kdim) input block stays near `target_bytes`,
       - tile_m is a multiple of the sublane packing for this dtype (8/16/32),
       - multiples of 128 are preferred (MXU-friendly),
       - the grid keeps >= 2 steps when possible so the 'parallel' axis can be
         sharded across v7x's two TensorCores."""
    if target_bytes is None:
        target_bytes = _default_target_bytes()
    min_rows = {4: 8, 2: 16, 1: 32}.get(itemsize, 8)
    cap = max(min_rows, target_bytes // max(1, kdim * itemsize))
    if m >= 2 * min_rows and (m // 2) % min_rows == 0:
        cap = min(cap, m // 2)          # guarantee >= 2 grid steps (megacore)
    cap = min(cap, m)
    for step in (128, min_rows):
        t = (cap // step) * step
        while t >= step:
            if m % t == 0:
                return t
            t -= step
    return m                             # full-dim block is always legal


def matmul_bias_act(patches, wm, b_row, relu):
    """relu_maybe(patches @ wm + b_row) as one Pallas call (MXU GEMM + epilogue)."""
    m, kdim = patches.shape
    kdim2, cout = wm.shape
    assert kdim == kdim2
    itemsize = patches.dtype.itemsize
    tm = _pick_m_tile(m, kdim, itemsize)
    grid = (m // tm,)

    cost = pl.CostEstimate(
        flops=2 * m * kdim * cout,
        transcendentals=0,
        bytes_accessed=(m * kdim + kdim * cout + cout + m * cout) * itemsize)

    kernel = functools.partial(_matmul_bias_act_kernel, apply_relu=relu)
    return pl.pallas_call(
        kernel,
        out_shape=jax.ShapeDtypeStruct((m, cout), patches.dtype),
        grid=grid,
        in_specs=[
            pl.BlockSpec((tm, kdim), lambda i: (i, 0)),    # patches: tiled over rows
            pl.BlockSpec((kdim, cout), lambda i: (0, 0)),  # weights: resident block
            pl.BlockSpec((1, cout), lambda i: (0, 0)),     # folded-BN bias row
        ],
        out_specs=pl.BlockSpec((tm, cout), lambda i: (i, 0)),
        compiler_params=pltpu.CompilerParams(
            dimension_semantics=("parallel",),
            vmem_limit_bytes=32 * 1024 * 1024,
        ),
        cost_estimate=cost,
    )(patches, wm, b_row)


# ---------------------------------------------------------------------------
# im2col (NHWC) + conv wrapper built on the Pallas GEMM
# ---------------------------------------------------------------------------

def _im2col_nhwc(x, k, stride, pad):
    n, h, w, c = x.shape
    xp = jnp.pad(x, ((0, 0), (pad, pad), (pad, pad), (0, 0))) if pad else x
    ho = (h + 2 * pad - k) // stride + 1
    wo = (w + 2 * pad - k) // stride + 1
    cols = []
    for i in range(k):
        for j in range(k):
            cols.append(xp[:, i:i + stride * ho:stride, j:j + stride * wo:stride, :])
    # (n, ho, wo, c, k*k): patch-feature ordering = (channel major, (i, j) minor),
    # matching the OIHW -> (Cout, Cin*k*k) weight reshape in `_finalize_conv`.
    pat = jnp.stack(cols, axis=-1)
    return pat.reshape(n * ho * wo, c * k * k), ho, wo


def pallas_conv2d_nhwc(x, p):
    """Conv (+ folded-BN bias) (+ ReLU) on NHWC activations via im2col + Pallas GEMM."""
    k, stride, pad = p["k"], p["stride"], p["pad"]
    n, h, w, cin = x.shape
    if k == 1 and stride == 1 and pad == 0:
        ho, wo = h, w
        patches = x.reshape(n * h * w, cin)        # 1x1 conv: im2col is a free reshape
    else:
        patches, ho, wo = _im2col_nhwc(x, k, stride, pad)
    kdim, cout = p["wm"].shape
    if patches.shape[1] != kdim:                   # contraction dim zero-padded to mult of 8
        patches = jnp.pad(patches, ((0, 0), (0, kdim - patches.shape[1])))
    out = matmul_bias_act(patches, p["wm"], p["b_row"], p["relu"])
    return out.reshape(n, ho, wo, cout)


def upsample2x_nearest_nhwc(x):
    n, h, w, c = x.shape
    x = jnp.broadcast_to(x[:, :, None, :, None, :], (n, h, 2, w, 2, c))
    return x.reshape(n, 2 * h, 2 * w, c)


def upsample2x_nearest_nchw(x):
    n, c, h, w = x.shape
    x = jnp.broadcast_to(x[:, :, :, None, :, None], (n, c, h, 2, w, 2))
    return x.reshape(n, c, 2 * h, 2 * w)


# ---------------------------------------------------------------------------
# Parameter construction (BatchNorm folded into the conv at build time)
# ---------------------------------------------------------------------------

def _xavier_uniform(key, cout, cin, k):
    fan_in, fan_out = cin * k * k, cout * k * k
    limit = (6.0 / (fan_in + fan_out)) ** 0.5
    return jax.random.uniform(key, (cout, cin, k, k), jnp.float32, -limit, limit)


def _finalize_conv(w_oihw, b, k, stride, pad, relu):
    cout, cin = w_oihw.shape[0], w_oihw.shape[1]
    kdim = cin * k * k
    kdim_pad = ((kdim + 7) // 8) * 8               # sublane-aligned contraction dim
    wm = w_oihw.reshape(cout, kdim).T              # (K, Cout): channels land on lanes
    if kdim_pad != kdim:
        wm = jnp.pad(wm, ((0, kdim_pad - kdim), (0, 0)))
    return {"k": k, "stride": stride, "pad": pad, "relu": relu,
            "w_oihw": w_oihw, "b": b,
            "wm": wm.astype(jnp.float32),
            "b_row": b.reshape(1, cout).astype(jnp.float32)}


def _conv_bn_relu_params(key, cin, cout, k, stride, pad, eps=1e-5):
    kw, kg, kb, km, kv = jax.random.split(key, 5)
    w = _xavier_uniform(kw, cout, cin, k)
    gamma = jax.random.uniform(kg, (cout,), jnp.float32, 0.5, 1.5)
    beta = 0.1 * jax.random.normal(kb, (cout,), jnp.float32)
    mean = 0.1 * jax.random.normal(km, (cout,), jnp.float32)
    var = jax.random.uniform(kv, (cout,), jnp.float32, 0.5, 1.5)
    # Inference-mode BatchNorm folded straight into the conv weights/bias.
    # TODO(synk): training-mode batch statistics are not modeled.
    scale = gamma / jnp.sqrt(var + eps)
    shift = beta - mean * scale
    return _finalize_conv(w * scale[:, None, None, None], shift, k, stride, pad, relu=True)


def _plain_conv_params(key, cin, cout, k, stride, pad, bias):
    kw, kb = jax.random.split(key)
    w = _xavier_uniform(kw, cout, cin, k)
    b = (jax.random.uniform(kb, (cout,), jnp.float32, -0.1, 0.1) if bias
         else jnp.zeros((cout,), jnp.float32))
    return _finalize_conv(w, b, k, stride, pad, relu=False)


def init_featurenet_params(key, in_channel=(8, 16, 32, 64), out_channel=(32, 16, 8)):
    keys = iter(jax.random.split(key, 32))
    cbr = lambda cin, cout, k, s, p: _conv_bn_relu_params(next(keys), cin, cout, k, s, p)
    return {
        "conv0": [cbr(3, in_channel[0], 3, 1, 1),
                  cbr(in_channel[0], in_channel[0], 3, 1, 1)],
        "conv1": [cbr(in_channel[0], in_channel[1], 5, 2, 2),
                  cbr(in_channel[1], in_channel[1], 3, 1, 1),
                  cbr(in_channel[1], in_channel[1], 3, 1, 1)],
        "conv2": [cbr(in_channel[1], in_channel[2], 5, 2, 2),
                  cbr(in_channel[2], in_channel[2], 3, 1, 1),
                  cbr(in_channel[2], in_channel[2], 3, 1, 1)],
        "conv3": [cbr(in_channel[2], in_channel[3], 5, 2, 2),
                  cbr(in_channel[3], in_channel[3], 3, 1, 1),
                  cbr(in_channel[3], in_channel[3], 3, 1, 1)],
        "out1": _plain_conv_params(next(keys), in_channel[3], out_channel[0], 1, 1, 0, bias=False),
        "inner1": _plain_conv_params(next(keys), in_channel[2], in_channel[3], 1, 1, 0, bias=True),
        "inner2": _plain_conv_params(next(keys), in_channel[1], in_channel[3], 1, 1, 0, bias=True),
        "out2": _plain_conv_params(next(keys), in_channel[3], out_channel[1], 3, 1, 1, bias=False),
        "out3": _plain_conv_params(next(keys), in_channel[3], out_channel[2], 3, 1, 1, bias=False),
    }


# ---------------------------------------------------------------------------
# Forward pass: Pallas (NHWC internal) and a pure-JAX reference (NCHW, lax conv)
# ---------------------------------------------------------------------------

def featurenet_forward(params, x_nchw):
    # NHWC internally so channels sit on lanes; one transpose in, small ones out.
    h = jnp.transpose(x_nchw, (0, 2, 3, 1))
    feats = {}
    for name in ("conv0", "conv1", "conv2", "conv3"):
        for p in params[name]:
            h = pallas_conv2d_nhwc(h, p)
        feats[name] = h

    to_nchw = lambda t: jnp.transpose(t, (0, 3, 1, 2))
    outputs = {}
    intra = feats["conv3"]
    outputs["stage1"] = to_nchw(pallas_conv2d_nhwc(intra, params["out1"]))
    # TODO(synk): nearest-2x upsample + lateral add is pure data movement; left to XLA.
    intra = upsample2x_nearest_nhwc(intra) + pallas_conv2d_nhwc(feats["conv2"], params["inner1"])
    outputs["stage2"] = to_nchw(pallas_conv2d_nhwc(intra, params["out2"]))
    intra = upsample2x_nearest_nhwc(intra) + pallas_conv2d_nhwc(feats["conv1"], params["inner2"])
    outputs["stage3"] = to_nchw(pallas_conv2d_nhwc(intra, params["out3"]))
    return outputs


def _conv_ref_nchw(x, p):
    out = jax.lax.conv_general_dilated(
        x, p["w_oihw"], (p["stride"], p["stride"]),
        [(p["pad"], p["pad"]), (p["pad"], p["pad"])],
        dimension_numbers=("NCHW", "OIHW", "NCHW"),
        precision=jax.lax.Precision.HIGHEST)
    out = out + p["b"].reshape(1, -1, 1, 1)
    if p["relu"]:
        out = jnp.maximum(out, 0.0)
    return out


def featurenet_forward_ref(params, x_nchw):
    h = x_nchw
    feats = {}
    for name in ("conv0", "conv1", "conv2", "conv3"):
        for p in params[name]:
            h = _conv_ref_nchw(h, p)
        feats[name] = h
    outputs = {}
    intra = feats["conv3"]
    outputs["stage1"] = _conv_ref_nchw(intra, params["out1"])
    intra = upsample2x_nearest_nchw(intra) + _conv_ref_nchw(feats["conv2"], params["inner1"])
    outputs["stage2"] = _conv_ref_nchw(intra, params["out2"])
    intra = upsample2x_nearest_nchw(intra) + _conv_ref_nchw(feats["conv1"], params["inner2"])
    outputs["stage3"] = _conv_ref_nchw(intra, params["out3"])
    return outputs


# ---------------------------------------------------------------------------

if __name__ == "__main__":
    key = jax.random.PRNGKey(0)
    kx, kp = jax.random.split(key)

    # Small NCHW input consistent with the module (3 input channels, /8 downsampling).
    x = jax.random.normal(kx, (2, 3, 32, 32), dtype=jnp.float32)
    params = init_featurenet_params(kp)

    fwd = jax.jit(lambda inp: featurenet_forward(params, inp))
    outputs = jax.block_until_ready(fwd(x))

    # Shape checks (match the PyTorch module for a 32x32 input).
    assert outputs["stage1"].shape == (2, 32, 4, 4)
    assert outputs["stage2"].shape == (2, 16, 8, 8)
    assert outputs["stage3"].shape == (2, 8, 16, 16)

    # Numerical check against a pure-JAX reference (lax conv at HIGHEST precision).
    # Tolerance is loose enough to absorb MXU pass-count differences between the
    # Pallas f32 GEMM and XLA's convolution, but tight enough to catch any
    # im2col-ordering / BN-folding / layout bug (those produce O(1) errors).
    ref_fwd = jax.jit(lambda inp: featurenet_forward_ref(params, inp))
    ref = jax.block_until_ready(ref_fwd(x))
    for name in ("stage1", "stage2", "stage3"):
        assert outputs[name].dtype == ref[name].dtype
        assert jnp.allclose(outputs[name], ref[name], atol=2e-2, rtol=2e-2), name

    print("KERNEL_OK")
</pallas_src>

<mosaic_0001>
module attributes {stable_mosaic.version = 11 : i64} {
  func.func @_matmul_bias_act_kernel(%arg0: i32, %arg1: memref<1024x32xf32, #tpu.memory_space<vmem>>, %arg2: memref<32x8xf32, #tpu.memory_space<vmem>>, %arg3: memref<1x8xf32, #tpu.memory_space<vmem>>, %arg4: memref<1024x8xf32, #tpu.memory_space<vmem>>) attributes {dimension_semantics = [#tpu.dimension_semantics<parallel>], iteration_bounds = array<i64: 2>, scalar_prefetch = 0 : i64, scratch_operands = 0 : i64, tpu.core_type = #tpu.core_type<tc>, window_params = [{transform_indices = @transform_0, window_bounds = array<i64: 1024, 32>}, {pipeline_mode = #tpu.pipeline_mode<synchronous>, transform_indices = @transform_1, window_bounds = array<i64: 32, 8>}, {pipeline_mode = #tpu.pipeline_mode<synchronous>, transform_indices = @transform_2, window_bounds = array<i64: 1, 8>}, {transform_indices = @transform_3, window_bounds = array<i64: 1024, 8>}]} {
    %c0 = arith.constant 0 : index
    %c0_0 = arith.constant 0 : index
    %0 = vector.load %arg1[%c0, %c0_0] : memref<1024x32xf32, #tpu.memory_space<vmem>>, vector<1024x32xf32>
    %c0_1 = arith.constant 0 : index
    %c0_2 = arith.constant 0 : index
    %1 = vector.load %arg2[%c0_1, %c0_2] : memref<32x8xf32, #tpu.memory_space<vmem>>, vector<32x8xf32>
    %cst = arith.constant dense<0.000000e+00> : vector<1024x8xf32>
    %2 = tpu.matmul %0, %1, %cst {dimension_numbers = #tpu.dot_dimension_numbers<[1], [0], [0], [1], [0, 0, 1, 1], [], []>} : vector<1024x32xf32>, vector<32x8xf32>, vector<1024x8xf32> -> vector<1024x8xf32>
    %c0_3 = arith.constant 0 : index
    %c0_4 = arith.constant 0 : index
    %3 = vector.load %arg3[%c0_3, %c0_4] : memref<1x8xf32, #tpu.memory_space<vmem>>, vector<1x8xf32>
    %4 = vector.broadcast %3 : vector<1x8xf32> to vector<1024x8xf32>
    %5 = arith.addf %2, %4 : vector<1024x8xf32>
    %cst_5 = arith.constant 0.000000e+00 : f32
    %6 = vector.broadcast %cst_5 : f32 to vector<1024x8xf32>
    %7 = arith.maximumf %5, %6 : vector<1024x8xf32>
    %c0_6 = arith.constant 0 : index
    %c0_7 = arith.constant 0 : index
    %8 = vector.load %arg4[%c0_6, %c0_7] : memref<1024x8xf32, #tpu.memory_space<vmem>>, vector<1024x8xf32>
    tpu.vector_store %arg4[%c0_6, %c0_7], %7 {strides = array<i32>} : memref<1024x8xf32, #tpu.memory_space<vmem>>, vector<1024x8xf32>,
    return
  }
  func.func @transform_0(%arg0: i32) -> (i32, i32) {
    %c0_i32 = arith.constant 0 : i32
    %c0_i32_0 = arith.constant 0 : i32
    return %arg0, %c0_i32 : i32, i32
  }
  func.func @transform_1(%arg0: i32) -> (i32, i32) {
    %c0_i32 = arith.constant 0 : i32
    %c0_i32_0 = arith.constant 0 : i32
    %c0_i32_1 = arith.constant 0 : i32
    return %c0_i32, %c0_i32_0 : i32, i32
  }
  func.func @transform_2(%arg0: i32) -> (i32, i32) {
    %c0_i32 = arith.constant 0 : i32
    %c0_i32_0 = arith.constant 0 : i32
    %c0_i32_1 = arith.constant 0 : i32
    return %c0_i32, %c0_i32_0 : i32, i32
  }
  func.func @transform_3(%arg0: i32) -> (i32, i32) {
    %c0_i32 = arith.constant 0 : i32
    %c0_i32_0 = arith.constant 0 : i32
    return %arg0, %c0_i32 : i32, i32
  }
}

module attributes {stable_mosaic.version = 11 : i64} {
  func.func @_matmul_bias_act_kernel(%arg0: i32, %arg1: memref<1024x72xf32, #tpu.memory_space<vmem>>, %arg2: memref<72x8xf32, #tpu.memory_space<vmem>>, %arg3: memref<1x8xf32, #tpu.memory_space<vmem>>, %arg4: memref<1024x8xf32, #tpu.memory_space<vmem>>) attributes {dimension_semantics = [#tpu.dimension_semantics<parallel>], iteration_bounds = array<i64: 2>, scalar_prefetch = 0 : i64, scratch_operands = 0 : i64, tpu.core_type = #tpu.core_type<tc>, window_params = [{transform_indices = @transform_0, window_bounds = array<i64: 1024, 72>}, {pipeline_mode = #tpu.pipeline_mode<synchronous>, transform_indices = @transform_1, window_bounds = array<i64: 72, 8>}, {pipeline_mode = #tpu.pipeline_mode<synchronous>, transform_indices = @transform_2, window_bounds = array<i64: 1, 8>}, {transform_indices = @transform_3, window_bounds = array<i64: 1024, 8>}]} {
    %c0 = arith.constant 0 : index
    %c0_0 = arith.constant 0 : index
    %0 = vector.load %arg1[%c0, %c0_0] : memref<1024x72xf32, #tpu.memory_space<vmem>>, vector<1024x72xf32>
    %c0_1 = arith.constant 0 : index
    %c0_2 = arith.constant 0 : index
    %1 = vector.load %arg2[%c0_1, %c0_2] : memref<72x8xf32, #tpu.memory_space<vmem>>, vector<72x8xf32>
    %cst = arith.constant dense<0.000000e+00> : vector<1024x8xf32>
    %2 = tpu.matmul %0, %1, %cst {dimension_numbers = #tpu.dot_dimension_numbers<[1], [0], [0], [1], [0, 0, 1, 1], [], []>} : vector<1024x72xf32>, vector<72x8xf32>, vector<1024x8xf32> -> vector<1024x8xf32>
    %c0_3 = arith.constant 0 : index
    %c0_4 = arith.constant 0 : index
    %3 = vector.load %arg3[%c0_3, %c0_4] : memref<1x8xf32, #tpu.memory_space<vmem>>, vector<1x8xf32>
    %4 = vector.broadcast %3 : vector<1x8xf32> to vector<1024x8xf32>
    %5 = arith.addf %2, %4 : vector<1024x8xf32>
    %cst_5 = arith.constant 0.000000e+00 : f32
    %6 = vector.broadcast %cst_5 : f32 to vector<1024x8xf32>
    %7 = arith.maximumf %5, %6 : vector<1024x8xf32>
    %c0_6 = arith.constant 0 : index
    %c0_7 = arith.constant 0 : index
    %8 = vector.load %arg4[%c0_6, %c0_7] : memref<1024x8xf32, #tpu.memory_space<vmem>>, vector<1024x8xf32>
    tpu.vector_store %arg4[%c0_6, %c0_7], %7 {strides = array<i32>} : memref<1024x8xf32, #tpu.memory_space<vmem>>, vector<1024x8xf32>,
    return
  }
  func.func @transform_0(%arg0: i32) -> (i32, i32) {
    %c0_i32 = arith.constant 0 : i32
    %c0_i32_0 = arith.constant 0 : i32
    return %arg0, %c0_i32 : i32, i32
  }
  func.func @transform_1(%arg0: i32) -> (i32, i32) {
    %c0_i32 = arith.constant 0 : i32
    %c0_i32_0 = arith.constant 0 : i32
    %c0_i32_1 = arith.constant 0 : i32
    return %c0_i32, %c0_i32_0 : i32, i32
  }
  func.func @transform_2(%arg0: i32) -> (i32, i32) {
    %c0_i32 = arith.constant 0 : i32
    %c0_i32_0 = arith.constant 0 : i32
    %c0_i32_1 = arith.constant 0 : i32
    return %c0_i32, %c0_i32_0 : i32, i32
  }
  func.func @transform_3(%arg0: i32) -> (i32, i32) {
    %c0_i32 = arith.constant 0 : i32
    %c0_i32_0 = arith.constant 0 : i32
    return %arg0, %c0_i32 : i32, i32
  }
}

module attributes {stable_mosaic.version = 11 : i64} {
  func.func @_matmul_bias_act_kernel(%arg0: i32, %arg1: memref<256x200xf32, #tpu.memory_space<vmem>>, %arg2: memref<200x16xf32, #tpu.memory_space<vmem>>, %arg3: memref<1x16xf32, #tpu.memory_space<vmem>>, %arg4: memref<256x16xf32, #tpu.memory_space<vmem>>) attributes {dimension_semantics = [#tpu.dimension_semantics<parallel>], iteration_bounds = array<i64: 2>, scalar_prefetch = 0 : i64, scratch_operands = 0 : i64, tpu.core_type = #tpu.core_type<tc>, window_params = [{transform_indices = @transform_0, window_bounds = array<i64: 256, 200>}, {pipeline_mode = #tpu.pipeline_mode<synchronous>, transform_indices = @transform_1, window_bounds = array<i64: 200, 16>}, {pipeline_mode = #tpu.pipeline_mode<synchronous>, transform_indices = @transform_2, window_bounds = array<i64: 1, 16>}, {transform_indices = @transform_3, window_bounds = array<i64: 256, 16>}]} {
    %c0 = arith.constant 0 : index
    %c0_0 = arith.constant 0 : index
    %0 = vector.load %arg1[%c0, %c0_0] : memref<256x200xf32, #tpu.memory_space<vmem>>, vector<256x200xf32>
    %c0_1 = arith.constant 0 : index
    %c0_2 = arith.constant 0 : index
    %1 = vector.load %arg2[%c0_1, %c0_2] : memref<200x16xf32, #tpu.memory_space<vmem>>, vector<200x16xf32>
    %cst = arith.constant dense<0.000000e+00> : vector<256x16xf32>
    %2 = tpu.matmul %0, %1, %cst {dimension_numbers = #tpu.dot_dimension_numbers<[1], [0], [0], [1], [0, 0, 1, 1], [], []>} : vector<256x200xf32>, vector<200x16xf32>, vector<256x16xf32> -> vector<256x16xf32>
    %c0_3 = arith.constant 0 : index
    %c0_4 = arith.constant 0 : index
    %3 = vector.load %arg3[%c0_3, %c0_4] : memref<1x16xf32, #tpu.memory_space<vmem>>, vector<1x16xf32>
    %4 = vector.broadcast %3 : vector<1x16xf32> to vector<256x16xf32>
    %5 = arith.addf %2, %4 : vector<256x16xf32>
    %cst_5 = arith.constant 0.000000e+00 : f32
    %6 = vector.broadcast %cst_5 : f32 to vector<256x16xf32>
    %7 = arith.maximumf %5, %6 : vector<256x16xf32>
    %c0_6 = arith.constant 0 : index
    %c0_7 = arith.constant 0 : index
    %8 = vector.load %arg4[%c0_6, %c0_7] : memref<256x16xf32, #tpu.memory_space<vmem>>, vector<256x16xf32>
    tpu.vector_store %arg4[%c0_6, %c0_7], %7 {strides = array<i32>} : memref<256x16xf32, #tpu.memory_space<vmem>>, vector<256x16xf32>,
    return
  }
  func.func @transform_0(%arg0: i32) -> (i32, i32) {
    %c0_i32 = arith.constant 0 : i32
    %c0_i32_0 = arith.constant 0 : i32
    return %arg0, %c0_i32 : i32, i32
  }
  func.func @transform_1(%arg0: i32) -> (i32, i32) {
    %c0_i32 = arith.constant 0 : i32
    %c0_i32_0 = arith.constant 0 : i32
    %c0_i32_1 = arith.constant 0 : i32
    return %c0_i32, %c0_i32_0 : i32, i32
  }
  func.func @transform_2(%arg0: i32) -> (i32, i32) {
    %c0_i32 = arith.constant 0 : i32
    %c0_i32_0 = arith.constant 0 : i32
    %c0_i32_1 = arith.constant 0 : i32
    return %c0_i32, %c0_i32_0 : i32, i32
  }
  func.func @transform_3(%arg0: i32) -> (i32, i32) {
    %c0_i32 = arith.constant 0 : i32
    %c0_i32_0 = arith.constant 0 : i32
    return %arg0, %c0_i32 : i32, i32
  }
}

module attributes {stable_mosaic.version = 11 : i64} {
  func.func @_matmul_bias_act_kernel(%arg0: i32, %arg1: memref<256x144xf32, #tpu.memory_space<vmem>>, %arg2: memref<144x16xf32, #tpu.memory_space<vmem>>, %arg3: memref<1x16xf32, #tpu.memory_space<vmem>>, %arg4: memref<256x16xf32, #tpu.memory_space<vmem>>) attributes {dimension_semantics = [#tpu.dimension_semantics<parallel>], iteration_bounds = array<i64: 2>, scalar_prefetch = 0 : i64, scratch_operands = 0 : i64, tpu.core_type = #tpu.core_type<tc>, window_params = [{transform_indices = @transform_0, window_bounds = array<i64: 256, 144>}, {pipeline_mode = #tpu.pipeline_mode<synchronous>, transform_indices = @transform_1, window_bounds = array<i64: 144, 16>}, {pipeline_mode = #tpu.pipeline_mode<synchronous>, transform_indices = @transform_2, window_bounds = array<i64: 1, 16>}, {transform_indices = @transform_3, window_bounds = array<i64: 256, 16>}]} {
    %c0 = arith.constant 0 : index
    %c0_0 = arith.constant 0 : index
    %0 = vector.load %arg1[%c0, %c0_0] : memref<256x144xf32, #tpu.memory_space<vmem>>, vector<256x144xf32>
    %c0_1 = arith.constant 0 : index
    %c0_2 = arith.constant 0 : index
    %1 = vector.load %arg2[%c0_1, %c0_2] : memref<144x16xf32, #tpu.memory_space<vmem>>, vector<144x16xf32>
    %cst = arith.constant dense<0.000000e+00> : vector<256x16xf32>
    %2 = tpu.matmul %0, %1, %cst {dimension_numbers = #tpu.dot_dimension_numbers<[1], [0], [0], [1], [0, 0, 1, 1], [], []>} : vector<256x144xf32>, vector<144x16xf32>, vector<256x16xf32> -> vector<256x16xf32>
    %c0_3 = arith.constant 0 : index
    %c0_4 = arith.constant 0 : index
    %3 = vector.load %arg3[%c0_3, %c0_4] : memref<1x16xf32, #tpu.memory_space<vmem>>, vector<1x16xf32>
    %4 = vector.broadcast %3 : vector<1x16xf32> to vector<256x16xf32>
    %5 = arith.addf %2, %4 : vector<256x16xf32>
    %cst_5 = arith.constant 0.000000e+00 : f32
    %6 = vector.broadcast %cst_5 : f32 to vector<256x16xf32>
    %7 = arith.maximumf %5, %6 : vector<256x16xf32>
    %c0_6 = arith.constant 0 : index
    %c0_7 = arith.constant 0 : index
    %8 = vector.load %arg4[%c0_6, %c0_7] : memref<256x16xf32, #tpu.memory_space<vmem>>, vector<256x16xf32>
    tpu.vector_store %arg4[%c0_6, %c0_7], %7 {strides = array<i32>} : memref<256x16xf32, #tpu.memory_space<vmem>>, vector<256x16xf32>,
    return
  }
  func.func @transform_0(%arg0: i32) -> (i32, i32) {
    %c0_i32 = arith.constant 0 : i32
    %c0_i32_0 = arith.constant 0 : i32
    return %arg0, %c0_i32 : i32, i32
  }
  func.func @transform_1(%arg0: i32) -> (i32, i32) {
    %c0_i32 = arith.constant 0 : i32
    %c0_i32_0 = arith.constant 0 : i32
    %c0_i32_1 = arith.constant 0 : i32
    return %c0_i32, %c0_i32_0 : i32, i32
  }
  func.func @transform_2(%arg0: i32) -> (i32, i32) {
    %c0_i32 = arith.constant 0 : i32
    %c0_i32_0 = arith.constant 0 : i32
    %c0_i32_1 = arith.constant 0 : i32
    return %c0_i32, %c0_i32_0 : i32, i32
  }
  func.func @transform_3(%arg0: i32) -> (i32, i32) {
    %c0_i32 = arith.constant 0 : i32
    %c0_i32_0 = arith.constant 0 : i32
    return %arg0, %c0_i32 : i32, i32
  }
}

module attributes {stable_mosaic.version = 11 : i64} {
  func.func @_matmul_bias_act_kernel(%arg0: i32, %arg1: memref<64x400xf32, #tpu.memory_space<vmem>>, %arg2: memref<400x32xf32, #tpu.memory_space<vmem>>, %arg3: memref<1x32xf32, #tpu.memory_space<vmem>>, %arg4: memref<64x32xf32, #tpu.memory_space<vmem>>) attributes {dimension_semantics = [#tpu.dimension_semantics<parallel>], iteration_bounds = array<i64: 2>, scalar_prefetch = 0 : i64, scratch_operands = 0 : i64, tpu.core_type = #tpu.core_type<tc>, window_params = [{transform_indices = @transform_0, window_bounds = array<i64: 64, 400>}, {pipeline_mode = #tpu.pipeline_mode<synchronous>, transform_indices = @transform_1, window_bounds = array<i64: 400, 32>}, {pipeline_mode = #tpu.pipeline_mode<synchronous>, transform_indices = @transform_2, window_bounds = array<i64: 1, 32>}, {transform_indices = @transform_3, window_bounds = array<i64: 64, 32>}]} {
    %c0 = arith.constant 0 : index
    %c0_0 = arith.constant 0 : index
    %0 = vector.load %arg1[%c0, %c0_0] : memref<64x400xf32, #tpu.memory_space<vmem>>, vector<64x400xf32>
    %c0_1 = arith.constant 0 : index
    %c0_2 = arith.constant 0 : index
    %1 = vector.load %arg2[%c0_1, %c0_2] : memref<400x32xf32, #tpu.memory_space<vmem>>, vector<400x32xf32>
    %cst = arith.constant dense<0.000000e+00> : vector<64x32xf32>
    %2 = tpu.matmul %0, %1, %cst {dimension_numbers = #tpu.dot_dimension_numbers<[1], [0], [0], [1], [0, 0, 1, 1], [], []>} : vector<64x400xf32>, vector<400x32xf32>, vector<64x32xf32> -> vector<64x32xf32>
    %c0_3 = arith.constant 0 : index
    %c0_4 = arith.constant 0 : index
    %3 = vector.load %arg3[%c0_3, %c0_4] : memref<1x32xf32, #tpu.memory_space<vmem>>, vector<1x32xf32>
    %4 = vector.broadcast %3 : vector<1x32xf32> to vector<64x32xf32>
    %5 = arith.addf %2, %4 : vector<64x32xf32>
    %cst_5 = arith.constant 0.000000e+00 : f32
    %6 = vector.broadcast %cst_5 : f32 to vector<64x32xf32>
    %7 = arith.maximumf %5, %6 : vector<64x32xf32>
    %c0_6 = arith.constant 0 : index
    %c0_7 = arith.constant 0 : index
    %8 = vector.load %arg4[%c0_6, %c0_7] : memref<64x32xf32, #tpu.memory_space<vmem>>, vector<64x32xf32>
    tpu.vector_store %arg4[%c0_6, %c0_7], %7 {strides = array<i32>} : memref<64x32xf32, #tpu.memory_space<vmem>>, vector<64x32xf32>,
    return
  }
  func.func @transform_0(%arg0: i32) -> (i32, i32) {
    %c0_i32 = arith.constant 0 : i32
    %c0_i32_0 = arith.constant 0 : i32
    return %arg0, %c0_i32 : i32, i32
  }
  func.func @transform_1(%arg0: i32) -> (i32, i32) {
    %c0_i32 = arith.constant 0 : i32
    %c0_i32_0 = arith.constant 0 : i32
    %c0_i32_1 = arith.constant 0 : i32
    return %c0_i32, %c0_i32_0 : i32, i32
  }
  func.func @transform_2(%arg0: i32) -> (i32, i32) {
    %c0_i32 = arith.constant 0 : i32
    %c0_i32_0 = arith.constant 0 : i32
    %c0_i32_1 = arith.constant 0 : i32
    return %c0_i32, %c0_i32_0 : i32, i32
  }
  func.func @transform_3(%arg0: i32) -> (i32, i32) {
    %c0_i32 = arith.constant 0 : i32
    %c0_i32_0 = arith.constant 0 : i32
    return %arg0, %c0_i32 : i32, i32
  }
}

module attributes {stable_mosaic.version = 11 : i64} {
  func.func @_matmul_bias_act_kernel(%arg0: i32, %arg1: memref<64x288xf32, #tpu.memory_space<vmem>>, %arg2: memref<288x32xf32, #tpu.memory_space<vmem>>, %arg3: memref<1x32xf32, #tpu.memory_space<vmem>>, %arg4: memref<64x32xf32, #tpu.memory_space<vmem>>) attributes {dimension_semantics = [#tpu.dimension_semantics<parallel>], iteration_bounds = array<i64: 2>, scalar_prefetch = 0 : i64, scratch_operands = 0 : i64, tpu.core_type = #tpu.core_type<tc>, window_params = [{transform_indices = @transform_0, window_bounds = array<i64: 64, 288>}, {pipeline_mode = #tpu.pipeline_mode<synchronous>, transform_indices = @transform_1, window_bounds = array<i64: 288, 32>}, {pipeline_mode = #tpu.pipeline_mode<synchronous>, transform_indices = @transform_2, window_bounds = array<i64: 1, 32>}, {transform_indices = @transform_3, window_bounds = array<i64: 64, 32>}]} {
    %c0 = arith.constant 0 : index
    %c0_0 = arith.constant 0 : index
    %0 = vector.load %arg1[%c0, %c0_0] : memref<64x288xf32, #tpu.memory_space<vmem>>, vector<64x288xf32>
    %c0_1 = arith.constant 0 : index
    %c0_2 = arith.constant 0 : index
    %1 = vector.load %arg2[%c0_1, %c0_2] : memref<288x32xf32, #tpu.memory_space<vmem>>, vector<288x32xf32>
    %cst = arith.constant dense<0.000000e+00> : vector<64x32xf32>
    %2 = tpu.matmul %0, %1, %cst {dimension_numbers = #tpu.dot_dimension_numbers<[1], [0], [0], [1], [0, 0, 1, 1], [], []>} : vector<64x288xf32>, vector<288x32xf32>, vector<64x32xf32> -> vector<64x32xf32>
    %c0_3 = arith.constant 0 : index
    %c0_4 = arith.constant 0 : index
    %3 = vector.load %arg3[%c0_3, %c0_4] : memref<1x32xf32, #tpu.memory_space<vmem>>, vector<1x32xf32>
    %4 = vector.broadcast %3 : vector<1x32xf32> to vector<64x32xf32>
    %5 = arith.addf %2, %4 : vector<64x32xf32>
    %cst_5 = arith.constant 0.000000e+00 : f32
    %6 = vector.broadcast %cst_5 : f32 to vector<64x32xf32>
    %7 = arith.maximumf %5, %6 : vector<64x32xf32>
    %c0_6 = arith.constant 0 : index
    %c0_7 = arith.constant 0 : index
    %8 = vector.load %arg4[%c0_6, %c0_7] : memref<64x32xf32, #tpu.memory_space<vmem>>, vector<64x32xf32>
    tpu.vector_store %arg4[%c0_6, %c0_7], %7 {strides = array<i32>} : memref<64x32xf32, #tpu.memory_space<vmem>>, vector<64x32xf32>,
    return
  }
  func.func @transform_0(%arg0: i32) -> (i32, i32) {
    %c0_i32 = arith.constant 0 : i32
    %c0_i32_0 = arith.constant 0 : i32
    return %arg0, %c0_i32 : i32, i32
  }
  func.func @transform_1(%arg0: i32) -> (i32, i32) {
    %c0_i32 = arith.constant 0 : i32
    %c0_i32_0 = arith.constant 0 : i32
    %c0_i32_1 = arith.constant 0 : i32
    return %c0_i32, %c0_i32_0 : i32, i32
  }
  func.func @transform_2(%arg0: i32) -> (i32, i32) {
    %c0_i32 = arith.constant 0 : i32
    %c0_i32_0 = arith.constant 0 : i32
    %c0_i32_1 = arith.constant 0 : i32
    return %c0_i32, %c0_i32_0 : i32, i32
  }
  func.func @transform_3(%arg0: i32) -> (i32, i32) {
    %c0_i32 = arith.constant 0 : i32
    %c0_i32_0 = arith.constant 0 : i32
    return %arg0, %c0_i32 : i32, i32
  }
}

module attributes {stable_mosaic.version = 11 : i64} {
  func.func @_matmul_bias_act_kernel(%arg0: i32, %arg1: memref<16x800xf32, #tpu.memory_space<vmem>>, %arg2: memref<800x64xf32, #tpu.memory_space<vmem>>, %arg3: memref<1x64xf32, #tpu.memory_space<vmem>>, %arg4: memref<16x64xf32, #tpu.memory_space<vmem>>) attributes {dimension_semantics = [#tpu.dimension_semantics<parallel>], iteration_bounds = array<i64: 2>, scalar_prefetch = 0 : i64, scratch_operands = 0 : i64, tpu.core_type = #tpu.core_type<tc>, window_params = [{transform_indices = @transform_0, window_bounds = array<i64: 16, 800>}, {pipeline_mode = #tpu.pipeline_mode<synchronous>, transform_indices = @transform_1, window_bounds = array<i64: 800, 64>}, {pipeline_mode = #tpu.pipeline_mode<synchronous>, transform_indices = @transform_2, window_bounds = array<i64: 1, 64>}, {transform_indices = @transform_3, window_bounds = array<i64: 16, 64>}]} {
    %c0 = arith.constant 0 : index
    %c0_0 = arith.constant 0 : index
    %0 = vector.load %arg1[%c0, %c0_0] : memref<16x800xf32, #tpu.memory_space<vmem>>, vector<16x800xf32>
    %c0_1 = arith.constant 0 : index
    %c0_2 = arith.constant 0 : index
    %1 = vector.load %arg2[%c0_1, %c0_2] : memref<800x64xf32, #tpu.memory_space<vmem>>, vector<800x64xf32>
    %cst = arith.constant dense<0.000000e+00> : vector<16x64xf32>
    %2 = tpu.matmul %0, %1, %cst {dimension_numbers = #tpu.dot_dimension_numbers<[1], [0], [0], [1], [0, 0, 1, 1], [], []>} : vector<16x800xf32>, vector<800x64xf32>, vector<16x64xf32> -> vector<16x64xf32>
    %c0_3 = arith.constant 0 : index
    %c0_4 = arith.constant 0 : index
    %3 = vector.load %arg3[%c0_3, %c0_4] : memref<1x64xf32, #tpu.memory_space<vmem>>, vector<1x64xf32>
    %4 = vector.broadcast %3 : vector<1x64xf32> to vector<16x64xf32>
    %5 = arith.addf %2, %4 : vector<16x64xf32>
    %cst_5 = arith.constant 0.000000e+00 : f32
    %6 = vector.broadcast %cst_5 : f32 to vector<16x64xf32>
    %7 = arith.maximumf %5, %6 : vector<16x64xf32>
    %c0_6 = arith.constant 0 : index
    %c0_7 = arith.constant 0 : index
    %8 = vector.load %arg4[%c0_6, %c0_7] : memref<16x64xf32, #tpu.memory_space<vmem>>, vector<16x64xf32>
    tpu.vector_store %arg4[%c0_6, %c0_7], %7 {strides = array<i32>} : memref<16x64xf32, #tpu.memory_space<vmem>>, vector<16x64xf32>,
    return
  }
  func.func @transform_0(%arg0: i32) -> (i32, i32) {
    %c0_i32 = arith.constant 0 : i32
    %c0_i32_0 = arith.constant 0 : i32
    return %arg0, %c0_i32 : i32, i32
  }
  func.func @transform_1(%arg0: i32) -> (i32, i32) {
    %c0_i32 = arith.constant 0 : i32
    %c0_i32_0 = arith.constant 0 : i32
    %c0_i32_1 = arith.constant 0 : i32
    return %c0_i32, %c0_i32_0 : i32, i32
  }
  func.func @transform_2(%arg0: i32) -> (i32, i32) {
    %c0_i32 = arith.constant 0 : i32
    %c0_i32_0 = arith.constant 0 : i32
    %c0_i32_1 = arith.constant 0 : i32
    return %c0_i32, %c0_i32_0 : i32, i32
  }
  func.func @transform_3(%arg0: i32) -> (i32, i32) {
    %c0_i32 = arith.constant 0 : i32
    %c0_i32_0 = arith.constant 0 : i32
    return %arg0, %c0_i32 : i32, i32
  }
}

module attributes {stable_mosaic.version = 11 : i64} {
  func.func @_matmul_bias_act_kernel(%arg0: i32, %arg1: memref<16x576xf32, #tpu.memory_space<vmem>>, %arg2: memref<576x64xf32, #tpu.memory_space<vmem>>, %arg3: memref<1x64xf32, #tpu.memory_space<vmem>>, %arg4: memref<16x64xf32, #tpu.memory_space<vmem>>) attributes {dimension_semantics = [#tpu.dimension_semantics<parallel>], iteration_bounds = array<i64: 2>, scalar_prefetch = 0 : i64, scratch_operands = 0 : i64, tpu.core_type = #tpu.core_type<tc>, window_params = [{transform_indices = @transform_0, window_bounds = array<i64: 16, 576>}, {pipeline_mode = #tpu.pipeline_mode<synchronous>, transform_indices = @transform_1, window_bounds = array<i64: 576, 64>}, {pipeline_mode = #tpu.pipeline_mode<synchronous>, transform_indices = @transform_2, window_bounds = array<i64: 1, 64>}, {transform_indices = @transform_3, window_bounds = array<i64: 16, 64>}]} {
    %c0 = arith.constant 0 : index
    %c0_0 = arith.constant 0 : index
    %0 = vector.load %arg1[%c0, %c0_0] : memref<16x576xf32, #tpu.memory_space<vmem>>, vector<16x576xf32>
    %c0_1 = arith.constant 0 : index
    %c0_2 = arith.constant 0 : index
    %1 = vector.load %arg2[%c0_1, %c0_2] : memref<576x64xf32, #tpu.memory_space<vmem>>, vector<576x64xf32>
    %cst = arith.constant dense<0.000000e+00> : vector<16x64xf32>
    %2 = tpu.matmul %0, %1, %cst {dimension_numbers = #tpu.dot_dimension_numbers<[1], [0], [0], [1], [0, 0, 1, 1], [], []>} : vector<16x576xf32>, vector<576x64xf32>, vector<16x64xf32> -> vector<16x64xf32>
    %c0_3 = arith.constant 0 : index
    %c0_4 = arith.constant 0 : index
    %3 = vector.load %arg3[%c0_3, %c0_4] : memref<1x64xf32, #tpu.memory_space<vmem>>, vector<1x64xf32>
    %4 = vector.broadcast %3 : vector<1x64xf32> to vector<16x64xf32>
    %5 = arith.addf %2, %4 : vector<16x64xf32>
    %cst_5 = arith.constant 0.000000e+00 : f32
    %6 = vector.broadcast %cst_5 : f32 to vector<16x64xf32>
    %7 = arith.maximumf %5, %6 : vector<16x64xf32>
    %c0_6 = arith.constant 0 : index
    %c0_7 = arith.constant 0 : index
    %8 = vector.load %arg4[%c0_6, %c0_7] : memref<16x64xf32, #tpu.memory_space<vmem>>, vector<16x64xf32>
    tpu.vector_store %arg4[%c0_6, %c0_7], %7 {strides = array<i32>} : memref<16x64xf32, #tpu.memory_space<vmem>>, vector<16x64xf32>,
    return
  }
  func.func @transform_0(%arg0: i32) -> (i32, i32) {
    %c0_i32 = arith.constant 0 : i32
    %c0_i32_0 = arith.constant 0 : i32
    return %arg0, %c0_i32 : i32, i32
  }
  func.func @transform_1(%arg0: i32) -> (i32, i32) {
    %c0_i32 = arith.constant 0 : i32
    %c0_i32_0 = arith.constant 0 : i32
    %c0_i32_1 = arith.constant 0 : i32
    return %c0_i32, %c0_i32_0 : i32, i32
  }
  func.func @transform_2(%arg0: i32) -> (i32, i32) {
    %c0_i32 = arith.constant 0 : i32
    %c0_i32_0 = arith.constant 0 : i32
    %c0_i32_1 = arith.constant 0 : i32
    return %c0_i32, %c0_i32_0 : i32, i32
  }
  func.func @transform_3(%arg0: i32) -> (i32, i32) {
    %c0_i32 = arith.constant 0 : i32
    %c0_i32_0 = arith.constant 0 : i32
    return %arg0, %c0_i32 : i32, i32
  }
}

module attributes {stable_mosaic.version = 11 : i64} {
  func.func @_matmul_bias_act_kernel(%arg0: i32, %arg1: memref<16x64xf32, #tpu.memory_space<vmem>>, %arg2: memref<64x32xf32, #tpu.memory_space<vmem>>, %arg3: memref<1x32xf32, #tpu.memory_space<vmem>>, %arg4: memref<16x32xf32, #tpu.memory_space<vmem>>) attributes {dimension_semantics = [#tpu.dimension_semantics<parallel>], iteration_bounds = array<i64: 2>, scalar_prefetch = 0 : i64, scratch_operands = 0 : i64, tpu.core_type = #tpu.core_type<tc>, window_params = [{transform_indices = @transform_0, window_bounds = array<i64: 16, 64>}, {pipeline_mode = #tpu.pipeline_mode<synchronous>, transform_indices = @transform_1, window_bounds = array<i64: 64, 32>}, {pipeline_mode = #tpu.pipeline_mode<synchronous>, transform_indices = @transform_2, window_bounds = array<i64: 1, 32>}, {transform_indices = @transform_3, window_bounds = array<i64: 16, 32>}]} {
    %c0 = arith.constant 0 : index
    %c0_0 = arith.constant 0 : index
    %0 = vector.load %arg1[%c0, %c0_0] : memref<16x64xf32, #tpu.memory_space<vmem>>, vector<16x64xf32>
    %c0_1 = arith.constant 0 : index
    %c0_2 = arith.constant 0 : index
    %1 = vector.load %arg2[%c0_1, %c0_2] : memref<64x32xf32, #tpu.memory_space<vmem>>, vector<64x32xf32>
    %cst = arith.constant dense<0.000000e+00> : vector<16x32xf32>
    %2 = tpu.matmul %0, %1, %cst {dimension_numbers = #tpu.dot_dimension_numbers<[1], [0], [0], [1], [0, 0, 1, 1], [], []>} : vector<16x64xf32>, vector<64x32xf32>, vector<16x32xf32> -> vector<16x32xf32>
    %c0_3 = arith.constant 0 : index
    %c0_4 = arith.constant 0 : index
    %3 = vector.load %arg3[%c0_3, %c0_4] : memref<1x32xf32, #tpu.memory_space<vmem>>, vector<1x32xf32>
    %4 = vector.broadcast %3 : vector<1x32xf32> to vector<16x32xf32>
    %5 = arith.addf %2, %4 : vector<16x32xf32>
    %c0_5 = arith.constant 0 : index
    %c0_6 = arith.constant 0 : index
    %6 = vector.load %arg4[%c0_5, %c0_6] : memref<16x32xf32, #tpu.memory_space<vmem>>, vector<16x32xf32>
    tpu.vector_store %arg4[%c0_5, %c0_6], %5 {strides = array<i32>} : memref<16x32xf32, #tpu.memory_space<vmem>>, vector<16x32xf32>,
    return
  }
  func.func @transform_0(%arg0: i32) -> (i32, i32) {
    %c0_i32 = arith.constant 0 : i32
    %c0_i32_0 = arith.constant 0 : i32
    return %arg0, %c0_i32 : i32, i32
  }
  func.func @transform_1(%arg0: i32) -> (i32, i32) {
    %c0_i32 = arith.constant 0 : i32
    %c0_i32_0 = arith.constant 0 : i32
    %c0_i32_1 = arith.constant 0 : i32
    return %c0_i32, %c0_i32_0 : i32, i32
  }
  func.func @transform_2(%arg0: i32) -> (i32, i32) {
    %c0_i32 = arith.constant 0 : i32
    %c0_i32_0 = arith.constant 0 : i32
    %c0_i32_1 = arith.constant 0 : i32
    return %c0_i32, %c0_i32_0 : i32, i32
  }
  func.func @transform_3(%arg0: i32) -> (i32, i32) {
    %c0_i32 = arith.constant 0 : i32
    %c0_i32_0 = arith.constant 0 : i32
    return %arg0, %c0_i32 : i32, i32
  }
}

module attributes {stable_mosaic.version = 11 : i64} {
  func.func @_matmul_bias_act_kernel(%arg0: i32, %arg1: memref<64x32xf32, #tpu.memory_space<vmem>>, %arg2: memref<32x64xf32, #tpu.memory_space<vmem>>, %arg3: memref<1x64xf32, #tpu.memory_space<vmem>>, %arg4: memref<64x64xf32, #tpu.memory_space<vmem>>) attributes {dimension_semantics = [#tpu.dimension_semantics<parallel>], iteration_bounds = array<i64: 2>, scalar_prefetch = 0 : i64, scratch_operands = 0 : i64, tpu.core_type = #tpu.core_type<tc>, window_params = [{transform_indices = @transform_0, window_bounds = array<i64: 64, 32>}, {pipeline_mode = #tpu.pipeline_mode<synchronous>, transform_indices = @transform_1, window_bounds = array<i64: 32, 64>}, {pipeline_mode = #tpu.pipeline_mode<synchronous>, transform_indices = @transform_2, window_bounds = array<i64: 1, 64>}, {transform_indices = @transform_3, window_bounds = array<i64: 64, 64>}]} {
    %c0 = arith.constant 0 : index
    %c0_0 = arith.constant 0 : index
    %0 = vector.load %arg1[%c0, %c0_0] : memref<64x32xf32, #tpu.memory_space<vmem>>, vector<64x32xf32>
    %c0_1 = arith.constant 0 : index
    %c0_2 = arith.constant 0 : index
    %1 = vector.load %arg2[%c0_1, %c0_2] : memref<32x64xf32, #tpu.memory_space<vmem>>, vector<32x64xf32>
    %cst = arith.constant dense<0.000000e+00> : vector<64x64xf32>
    %2 = tpu.matmul %0, %1, %cst {dimension_numbers = #tpu.dot_dimension_numbers<[1], [0], [0], [1], [0, 0, 1, 1], [], []>} : vector<64x32xf32>, vector<32x64xf32>, vector<64x64xf32> -> vector<64x64xf32>
    %c0_3 = arith.constant 0 : index
    %c0_4 = arith.constant 0 : index
    %3 = vector.load %arg3[%c0_3, %c0_4] : memref<1x64xf32, #tpu.memory_space<vmem>>, vector<1x64xf32>
    %4 = vector.broadcast %3 : vector<1x64xf32> to vector<64x64xf32>
    %5 = arith.addf %2, %4 : vector<64x64xf32>
    %c0_5 = arith.constant 0 : index
    %c0_6 = arith.constant 0 : index
    %6 = vector.load %arg4[%c0_5, %c0_6] : memref<64x64xf32, #tpu.memory_space<vmem>>, vector<64x64xf32>
    tpu.vector_store %arg4[%c0_5, %c0_6], %5 {strides = array<i32>} : memref<64x64xf32, #tpu.memory_space<vmem>>, vector<64x64xf32>,
    return
  }
  func.func @transform_0(%arg0: i32) -> (i32, i32) {
    %c0_i32 = arith.constant 0 : i32
    %c0_i32_0 = arith.constant 0 : i32
    return %arg0, %c0_i32 : i32, i32
  }
  func.func @transform_1(%arg0: i32) -> (i32, i32) {
    %c0_i32 = arith.constant 0 : i32
    %c0_i32_0 = arith.constant 0 : i32
    %c0_i32_1 = arith.constant 0 : i32
    return %c0_i32, %c0_i32_0 : i32, i32
  }
  func.func @transform_2(%arg0: i32) -> (i32, i32) {
    %c0_i32 = arith.constant 0 : i32
    %c0_i32_0 = arith.constant 0 : i32
    %c0_i32_1 = arith.constant 0 : i32
    return %c0_i32, %c0_i32_0 : i32, i32
  }
  func.func @transform_3(%arg0: i32) -> (i32, i32) {
    %c0_i32 = arith.constant 0 : i32
    %c0_i32_0 = arith.constant 0 : i32
    return %arg0, %c0_i32 : i32, i32
  }
}

module attributes {stable_mosaic.version = 11 : i64} {
  func.func @_matmul_bias_act_kernel(%arg0: i32, %arg1: memref<64x576xf32, #tpu.memory_space<vmem>>, %arg2: memref<576x16xf32, #tpu.memory_space<vmem>>, %arg3: memref<1x16xf32, #tpu.memory_space<vmem>>, %arg4: memref<64x16xf32, #tpu.memory_space<vmem>>) attributes {dimension_semantics = [#tpu.dimension_semantics<parallel>], iteration_bounds = array<i64: 2>, scalar_prefetch = 0 : i64, scratch_operands = 0 : i64, tpu.core_type = #tpu.core_type<tc>, window_params = [{transform_indices = @transform_0, window_bounds = array<i64: 64, 576>}, {pipeline_mode = #tpu.pipeline_mode<synchronous>, transform_indices = @transform_1, window_bounds = array<i64: 576, 16>}, {pipeline_mode = #tpu.pipeline_mode<synchronous>, transform_indices = @transform_2, window_bounds = array<i64: 1, 16>}, {transform_indices = @transform_3, window_bounds = array<i64: 64, 16>}]} {
    %c0 = arith.constant 0 : index
    %c0_0 = arith.constant 0 : index
    %0 = vector.load %arg1[%c0, %c0_0] : memref<64x576xf32, #tpu.memory_space<vmem>>, vector<64x576xf32>
    %c0_1 = arith.constant 0 : index
    %c0_2 = arith.constant 0 : index
    %1 = vector.load %arg2[%c0_1, %c0_2] : memref<576x16xf32, #tpu.memory_space<vmem>>, vector<576x16xf32>
    %cst = arith.constant dense<0.000000e+00> : vector<64x16xf32>
    %2 = tpu.matmul %0, %1, %cst {dimension_numbers = #tpu.dot_dimension_numbers<[1], [0], [0], [1], [0, 0, 1, 1], [], []>} : vector<64x576xf32>, vector<576x16xf32>, vector<64x16xf32> -> vector<64x16xf32>
    %c0_3 = arith.constant 0 : index
    %c0_4 = arith.constant 0 : index
    %3 = vector.load %arg3[%c0_3, %c0_4] : memref<1x16xf32, #tpu.memory_space<vmem>>, vector<1x16xf32>
    %4 = vector.broadcast %3 : vector<1x16xf32> to vector<64x16xf32>
    %5 = arith.addf %2, %4 : vector<64x16xf32>
    %c0_5 = arith.constant 0 : index
    %c0_6 = arith.constant 0 : index
    %6 = vector.load %arg4[%c0_5, %c0_6] : memref<64x16xf32, #tpu.memory_space<vmem>>, vector<64x16xf32>
    tpu.vector_store %arg4[%c0_5, %c0_6], %5 {strides = array<i32>} : memref<64x16xf32, #tpu.memory_space<vmem>>, vector<64x16xf32>,
    return
  }
  func.func @transform_0(%arg0: i32) -> (i32, i32) {
    %c0_i32 = arith.constant 0 : i32
    %c0_i32_0 = arith.constant 0 : i32
    return %arg0, %c0_i32 : i32, i32
  }
  func.func @transform_1(%arg0: i32) -> (i32, i32) {
    %c0_i32 = arith.constant 0 : i32
    %c0_i32_0 = arith.constant 0 : i32
    %c0_i32_1 = arith.constant 0 : i32
    return %c0_i32, %c0_i32_0 : i32, i32
  }
  func.func @transform_2(%arg0: i32) -> (i32, i32) {
    %c0_i32 = arith.constant 0 : i32
    %c0_i32_0 = arith.constant 0 : i32
    %c0_i32_1 = arith.constant 0 : i32
    return %c0_i32, %c0_i32_0 : i32, i32
  }
  func.func @transform_3(%arg0: i32) -> (i32, i32) {
    %c0_i32 = arith.constant 0 : i32
    %c0_i32_0 = arith.constant 0 : i32
    return %arg0, %c0_i32 : i32, i32
  }
}

module attributes {stable_mosaic.version = 11 : i64} {
  func.func @_matmul_bias_act_kernel(%arg0: i32, %arg1: memref<256x16xf32, #tpu.memory_space<vmem>>, %arg2: memref<16x64xf32, #tpu.memory_space<vmem>>, %arg3: memref<1x64xf32, #tpu.memory_space<vmem>>, %arg4: memref<256x64xf32, #tpu.memory_space<vmem>>) attributes {dimension_semantics = [#tpu.dimension_semantics<parallel>], iteration_bounds = array<i64: 2>, scalar_prefetch = 0 : i64, scratch_operands = 0 : i64, tpu.core_type = #tpu.core_type<tc>, window_params = [{transform_indices = @transform_0, window_bounds = array<i64: 256, 16>}, {pipeline_mode = #tpu.pipeline_mode<synchronous>, transform_indices = @transform_1, window_bounds = array<i64: 16, 64>}, {pipeline_mode = #tpu.pipeline_mode<synchronous>, transform_indices = @transform_2, window_bounds = array<i64: 1, 64>}, {transform_indices = @transform_3, window_bounds = array<i64: 256, 64>}]} {
    %c0 = arith.constant 0 : index
    %c0_0 = arith.constant 0 : index
    %0 = vector.load %arg1[%c0, %c0_0] : memref<256x16xf32, #tpu.memory_space<vmem>>, vector<256x16xf32>
    %c0_1 = arith.constant 0 : index
    %c0_2 = arith.constant 0 : index
    %1 = vector.load %arg2[%c0_1, %c0_2] : memref<16x64xf32, #tpu.memory_space<vmem>>, vector<16x64xf32>
    %cst = arith.constant dense<0.000000e+00> : vector<256x64xf32>
    %2 = tpu.matmul %0, %1, %cst {dimension_numbers = #tpu.dot_dimension_numbers<[1], [0], [0], [1], [0, 0, 1, 1], [], []>} : vector<256x16xf32>, vector<16x64xf32>, vector<256x64xf32> -> vector<256x64xf32>
    %c0_3 = arith.constant 0 : index
    %c0_4 = arith.constant 0 : index
    %3 = vector.load %arg3[%c0_3, %c0_4] : memref<1x64xf32, #tpu.memory_space<vmem>>, vector<1x64xf32>
    %4 = vector.broadcast %3 : vector<1x64xf32> to vector<256x64xf32>
    %5 = arith.addf %2, %4 : vector<256x64xf32>
    %c0_5 = arith.constant 0 : index
    %c0_6 = arith.constant 0 : index
    %6 = vector.load %arg4[%c0_5, %c0_6] : memref<256x64xf32, #tpu.memory_space<vmem>>, vector<256x64xf32>
    tpu.vector_store %arg4[%c0_5, %c0_6], %5 {strides = array<i32>} : memref<256x64xf32, #tpu.memory_space<vmem>>, vector<256x64xf32>,
    return
  }
  func.func @transform_0(%arg0: i32) -> (i32, i32) {
    %c0_i32 = arith.constant 0 : i32
    %c0_i32_0 = arith.constant 0 : i32
    return %arg0, %c0_i32 : i32, i32
  }
  func.func @transform_1(%arg0: i32) -> (i32, i32) {
    %c0_i32 = arith.constant 0 : i32
    %c0_i32_0 = arith.constant 0 : i32
    %c0_i32_1 = arith.constant 0 : i32
    return %c0_i32, %c0_i32_0 : i32, i32
  }
  func.func @transform_2(%arg0: i32) -> (i32, i32) {
    %c0_i32 = arith.constant 0 : i32
    %c0_i32_0 = arith.constant 0 : i32
    %c0_i32_1 = arith.constant 0 : i32
    return %c0_i32, %c0_i32_0 : i32, i32
  }
  func.func @transform_3(%arg0: i32) -> (i32, i32) {
    %c0_i32 = arith.constant 0 : i32
    %c0_i32_0 = arith.constant 0 : i32
    return %arg0, %c0_i32 : i32, i32
  }
}

module attributes {stable_mosaic.version = 11 : i64} {
  func.func @_matmul_bias_act_kernel(%arg0: i32, %arg1: memref<256x576xf32, #tpu.memory_space<vmem>>, %arg2: memref<576x8xf32, #tpu.memory_space<vmem>>, %arg3: memref<1x8xf32, #tpu.memory_space<vmem>>, %arg4: memref<256x8xf32, #tpu.memory_space<vmem>>) attributes {dimension_semantics = [#tpu.dimension_semantics<parallel>], iteration_bounds = array<i64: 2>, scalar_prefetch = 0 : i64, scratch_operands = 0 : i64, tpu.core_type = #tpu.core_type<tc>, window_params = [{transform_indices = @transform_0, window_bounds = array<i64: 256, 576>}, {pipeline_mode = #tpu.pipeline_mode<synchronous>, transform_indices = @transform_1, window_bounds = array<i64: 576, 8>}, {pipeline_mode = #tpu.pipeline_mode<synchronous>, transform_indices = @transform_2, window_bounds = array<i64: 1, 8>}, {transform_indices = @transform_3, window_bounds = array<i64: 256, 8>}]} {
    %c0 = arith.constant 0 : index
    %c0_0 = arith.constant 0 : index
    %0 = vector.load %arg1[%c0, %c0_0] : memref<256x576xf32, #tpu.memory_space<vmem>>, vector<256x576xf32>
    %c0_1 = arith.constant 0 : index
    %c0_2 = arith.constant 0 : index
    %1 = vector.load %arg2[%c0_1, %c0_2] : memref<576x8xf32, #tpu.memory_space<vmem>>, vector<576x8xf32>
    %cst = arith.constant dense<0.000000e+00> : vector<256x8xf32>
    %2 = tpu.matmul %0, %1, %cst {dimension_numbers = #tpu.dot_dimension_numbers<[1], [0], [0], [1], [0, 0, 1, 1], [], []>} : vector<256x576xf32>, vector<576x8xf32>, vector<256x8xf32> -> vector<256x8xf32>
    %c0_3 = arith.constant 0 : index
    %c0_4 = arith.constant 0 : index
    %3 = vector.load %arg3[%c0_3, %c0_4] : memref<1x8xf32, #tpu.memory_space<vmem>>, vector<1x8xf32>
    %4 = vector.broadcast %3 : vector<1x8xf32> to vector<256x8xf32>
    %5 = arith.addf %2, %4 : vector<256x8xf32>
    %c0_5 = arith.constant 0 : index
    %c0_6 = arith.constant 0 : index
    %6 = vector.load %arg4[%c0_5, %c0_6] : memref<256x8xf32, #tpu.memory_space<vmem>>, vector<256x8xf32>
    tpu.vector_store %arg4[%c0_5, %c0_6], %5 {strides = array<i32>} : memref<256x8xf32, #tpu.memory_space<vmem>>, vector<256x8xf32>,
    return
  }
  func.func @transform_0(%arg0: i32) -> (i32, i32) {
    %c0_i32 = arith.constant 0 : i32
    %c0_i32_0 = arith.constant 0 : i32
    return %arg0, %c0_i32 : i32, i32
  }
  func.func @transform_1(%arg0: i32) -> (i32, i32) {
    %c0_i32 = arith.constant 0 : i32
    %c0_i32_0 = arith.constant 0 : i32
    %c0_i32_1 = arith.constant 0 : i32
    return %c0_i32, %c0_i32_0 : i32, i32
  }
  func.func @transform_2(%arg0: i32) -> (i32, i32) {
    %c0_i32 = arith.constant 0 : i32
    %c0_i32_0 = arith.constant 0 : i32
    %c0_i32_1 = arith.constant 0 : i32
    return %c0_i32, %c0_i32_0 : i32, i32
  }
  func.func @transform_3(%arg0: i32) -> (i32, i32) {
    %c0_i32 = arith.constant 0 : i32
    %c0_i32_0 = arith.constant 0 : i32
    return %arg0, %c0_i32 : i32, i32
  }
}

</mosaic_0001>

<llo_original>
// kernel: _lambda_.16
$region0: #{_lambda_.16}
  #allocation0 [shape = 'u32[]', space=smem, size = 0x4, offset = 0x4, fixed_abs, tag = 'smem constant byte address 0x4 - core index']
  #allocation1 [shape = 'u32[144,128]{1,0:T(1,128)}', space=vmem, size = 0x12000, scoped, tag = 'internal scratch']
  %s0 = inlined_call_operand.vmem [shape: f32[2048,32], index: 0, kind: input, shape index: {}]
  %s1 = inlined_call_operand.vmem [shape: f32[32,8], index: 1, kind: input, shape index: {}]
  %s2 = inlined_call_operand.vmem [shape: f32[1,8], index: 2, kind: input, shape index: {}]
  %s3 = inlined_call_operand.vmem [shape: f32[2048,8], index: 3, kind: output, shape index: {}]
  %s4 = sld [smem:[#allocation0]]
  $region45: #{_lambda_.16} parent=0
    _
  %s6 = ssub.s32 1, %s4
  %s7 = scalar_select 0, %s6, %s4
  loop: start=0, step=1, limit=4
  $region2: #{_lambda_.16} parent=0 // loop_pre_header
    _
  $region3: #{_lambda_.16} parent=0 // loop_header
    %s9 = sphi 0, %s13
    %p10 = scmp.ge.s32.totalorder %s9, 4
    %s19 = sphi 0, %s21
    %s22 = sphi 0, %s19
    %s23 = sphi 0, %s22
    %s39 = sphi 0, %s23
    %s43 = sphi 0, %s43
    %s45 = sphi 0, %s43
    %s46 = sphi 0, %s45
    %s60 = sphi 0, %s46
    %s64 = sphi 0, %s64
    %s66 = sphi 0, %s64
    %s67 = sphi 0, %s66
    %s81 = sphi 0, %s67
    %s87 = sphi 0, %s89
    %s90 = sphi 0, %s87
    %s91 = sphi 0, %s90
    %s107 = sphi 0, %s91
  $region4: #{_lambda_.16} parent=0 // loop_header_branch
    %12 = sbr.rel (%p10) target = $region8
  $region5: #{_lambda_.16} parent=0 // loop_body
    %s14 = ssub.s32 %s9, 1
    %s15 = ssub.s32 %s9, 2
    %s16 = sadd.s32 %s9, 1
    %s17 = ssub.s32 %s9, %s16
    %p18 = scmp.eq.s32.totalorder %s17, 0
    %s20 = sadd.s32 %s19, 1
    %s21 = scalar_select %p18, %s19, %s20
    %p24 = pneg %p18
    %p25 = scmp.eq.s32.totalorder %s9, 1
    %p26 = por %p24, %p25
    %p27 = scmp.ne.s32.totalorder %s19, %s22
    %p28 = scmp.eq.s32.totalorder %s9, 0
    %p29 = por %p27, %p28
    %p30 = scmp.ne.s32.totalorder %s19, %s22
    %p31 = scmp.eq.s32.totalorder %s14, 1
    %p32 = por %p30, %p31
    %p33 = scmp.ne.s32.totalorder %s22, %s23
    %p34 = scmp.eq.s32.totalorder %s14, 0
    %p35 = por %p33, %p34
    %p36 = scmp.ne.s32.totalorder %s22, %s23
    %p37 = scmp.eq.s32.totalorder %s15, 1
    %p38 = por %p36, %p37
    %p40 = scmp.ne.s32.totalorder %s23, %s39
    %p41 = scmp.eq.s32.totalorder %s15, 0
    %p42 = por %p40, %p41
    %s44 = sadd.s32 %s43, 1
    %p47 = scmp.eq.s32.totalorder %s9, 1
    %p48 = scmp.ne.s32.totalorder %s43, %s45
    %p49 = scmp.eq.s32.totalorder %s9, 0
    %p50 = por %p48, %p49
    %p51 = scmp.ne.s32.totalorder %s43, %s45
    %p52 = scmp.eq.s32.totalorder %s14, 1
    %p53 = por %p51, %p52
    %p54 = scmp.ne.s32.totalorder %s45, %s46
    %p55 = scmp.eq.s32.totalorder %s14, 0
    %p56 = por %p54, %p55
    %p57 = scmp.ne.s32.totalorder %s45, %s46
    %p58 = scmp.eq.s32.totalorder %s15, 1
    %p59 = por %p57, %p58
    %p61 = scmp.ne.s32.totalorder %s46, %s60
    %p62 = scmp.eq.s32.totalorder %s15, 0
    %p63 = por %p61, %p62
    %s65 = sadd.s32 %s64, 1
    %p68 = scmp.eq.s32.totalorder %s9, 1
    %p69 = scmp.ne.s32.totalorder %s64, %s66
    %p70 = scmp.eq.s32.totalorder %s9, 0
    %p71 = por %p69, %p70
    %p72 = scmp.ne.s32.totalorder %s64, %s66
    %p73 = scmp.eq.s32.totalorder %s14, 1
    %p74 = por %p72, %p73
    %p75 = scmp.ne.s32.totalorder %s66, %s67
    %p76 = scmp.eq.s32.totalorder %s14, 0
    %p77 = por %p75, %p76
    %p78 = scmp.ne.s32.totalorder %s66, %s67
    %p79 = scmp.eq.s32.totalorder %s15, 1
    %p80 = por %p78, %p79
    %p82 = scmp.ne.s32.totalorder %s67, %s81
    %p83 = scmp.eq.s32.totalorder %s15, 0
    %p84 = por %p82, %p83
    %s85 = ssub.s32 %s9, %s16
    %p86 = scmp.eq.s32.totalorder %s85, 0
    %s88 = sadd.s32 %s87, 1
    %s89 = scalar_select %p86, %s87, %s88
    %p92 = pneg %p86
    %p93 = scmp.eq.s32.totalorder %s9, 1
    %p94 = por %p92, %p93
    %p95 = scmp.ne.s32.totalorder %s87, %s90
    %p96 = scmp.eq.s32.totalorder %s9, 0
    %p97 = por %p95, %p96
    %p98 = scmp.ne.s32.totalorder %s87, %s90
    %p99 = scmp.eq.s32.totalorder %s14, 1
    %p100 = por %p98, %p99
    %p101 = scmp.ne.s32.totalorder %s90, %s91
    %p102 = scmp.eq.s32.totalorder %s14, 0
    %p103 = por %p101, %p102
    %p104 = scmp.ne.s32.totalorder %s90, %s91
    %p105 = scmp.eq.s32.totalorder %s15, 1
    %p106 = por %p104, %p105
    %p108 = scmp.ne.s32.totalorder %s91, %s107
    %p109 = scmp.eq.s32.totalorder %s15, 0
    %p110 = por %p108, %p109
    %p111 = scmp.le.s32.totalorder 1, %s9
    %p112 = scmp.lt.s32.totalorder %s9, 3
    %p113 = pnand %p111, %p112
    %p114 = pneg %p113
    // Predicated region
    $region9: #{_lambda_.16} parent=5 // pred_check
      _
    $region10: #{_lambda_.16} parent=5 // pred_check_branch
      %116 = sbr.rel (%p113) target = $region12
    $region11: #{_lambda_.16} parent=5 // pred_region
      %s117 = ssub.s32 %s9, 1
      // Predicated region
      $region13: #{_lambda_.16} parent=11 // pred_check
        %p118 = pneg %p56
      $region14: #{_lambda_.16} parent=11 // pred_check_branch
        %120 = sbr.rel (%p118) target = $region16
      $region15: #{_lambda_.16} parent=11 // pred_region
        _
      $region16: #{_lambda_.16} parent=11 // pred_fallthru
        _
      // Predicated region
      $region17: #{_lambda_.16} parent=11 // pred_check
        %p121 = pneg %p77
      $region18: #{_lambda_.16} parent=11 // pred_check_branch
        %123 = sbr.rel (%p121) target = $region20
      $region19: #{_lambda_.16} parent=11 // pred_region
        _
      $region20: #{_lambda_.16} parent=11 // pred_fallthru
        _
    $region12: #{_lambda_.16} parent=5 // pred_fallthru
      _
    %p124 = scmp.lt.s32.totalorder %s9, 2
    // Predicated region
    $region21: #{_lambda_.16} parent=5 // pred_check
      %p125 = pneg %p124
    $region22: #{_lambda_.16} parent=5 // pred_check_branch
      %127 = sbr.rel (%p125) target = $region24
    $region23: #{_lambda_.16} parent=5 // pred_region
      // Predicated region
      $region25: #{_lambda_.16} parent=23 // pred_check
        %p128 = pneg %p29
      $region26: #{_lambda_.16} parent=23 // pred_check_branch
        %130 = sbr.rel (%p128) target = $region28
      $region27: #{_lambda_.16} parent=23 // pred_region
        %s131 = smul.u32 128, %s9
        %p132 = scmp.lt.s32.totalorder %s131, 255
        %s133 = scalar_select %p132, %s131, 255
        %s134 = smul.addr %s133, 8
        %s135 = scalar_lea.vmem %s0, %s134
        %s136 = smul.u32 128, %s9
      $region28: #{_lambda_.16} parent=23 // pred_fallthru
        _
    $region24: #{_lambda_.16} parent=5 // pred_fallthru
      _
    %p137 = scmp.le.s32.totalorder 1, %s9
    %p138 = scmp.lt.s32.totalorder %s9, 3
    %p139 = pnand %p137, %p138
    %p140 = pneg %p139
    // Predicated region
    $region29: #{_lambda_.16} parent=5 // pred_check
      _
    $region30: #{_lambda_.16} parent=5 // pred_check_branch
      %142 = sbr.rel (%p139) target = $region32
    $region31: #{_lambda_.16} parent=5 // pred_region
      %s143 = ssub.s32 %s9, 1
      %s144 = smul.u32 128, %s14
      %p145 = scmp.lt.s32.totalorder %s144, 255
      %s146 = scalar_select %p145, %s144, 255
      %s147 = smul.addr %s146, 8
      %s148 = scalar_lea.vmem %s0, %s147
      %p149 = pneg %p35
      %p150 = pneg %p32
      %p151 = pneg %p56
      %p152 = pneg %p53
      %p153 = pneg %p77
      %p154 = pneg %p74
      %p155 = pneg %p103
      %p156 = pneg %p100
      %s157 = smul.u32 128, %s14
      %p158 = scmp.lt.s32.totalorder %s157, 255
      %s159 = scalar_select %p158, %s157, 255
      %s160 = smul.addr %s159, 8
      %s161 = scalar_lea.vmem %s3, %s160
      %s162 = smul.u32 128, %s14
      %p163 = scmp.lt.s32.totalorder %s162, 255
      %s164 = scalar_select %p163, %s162, 255
      %s165 = smul.addr %s164, 8
      %s166 = scalar_lea.vmem %s0, %s165
      %s167 = smul.u32 128, %s14
      %s168 = smul.u32 128, %s14
      %p169 = scmp.lt.s32.totalorder %s168, 255
      %s170 = scalar_select %p169, %s168, 255
      %s171 = smul.addr %s170, 8
      %s172 = scalar_lea.vmem %s3, %s171
      %s173 = smul.u32 128, %s14
      %v174 = vld [vmem:[%s166] sm:$0xff]
      %v175 = vld [vmem:[%s166 + $0x8] sm:$0xff]
      %v176 = vld [vmem:[%s166 + $0x10] sm:$0xff]
      %v177 = vld [vmem:[%s166 + $0x18] sm:$0xff]
      %v178 = vld [vmem:[%s166 + $0x20] sm:$0xff]
      %v179 = vld [vmem:[%s166 + $0x28] sm:$0xff]
      %v180 = vld [vmem:[%s166 + $0x30] sm:$0xff]
      %v181 = vld [vmem:[%s166 + $0x38] sm:$0xff]
      %v182 = vld [vmem:[%s166 + $0x40] sm:$0xff]
      %v183 = vld [vmem:[%s166 + $0x48] sm:$0xff]
      %v184 = vld [vmem:[%s166 + $0x50] sm:$0xff]
      %v185 = vld [vmem:[%s166 + $0x58] sm:$0xff]
      %v186 = vld [vmem:[%s166 + $0x60] sm:$0xff]
      %v187 = vld [vmem:[%s166 + $0x68] sm:$0xff]
      %v188 = vld [vmem:[%s166 + $0x70] sm:$0xff]
      %v189 = vld [vmem:[%s166 + $0x78] sm:$0xff]
      %v190 = vld [vmem:[%s166 + $0x80] sm:$0xff]
      %v191 = vld [vmem:[%s166 + $0x88] sm:$0xff]
      %v192 = vld [vmem:[%s166 + $0x90] sm:$0xff]
      %v193 = vld [vmem:[%s166 + $0x98] sm:$0xff]
      %v194 = vld [vmem:[%s166 + $0xa0] sm:$0xff]
      %v195 = vld [vmem:[%s166 + $0xa8] sm:$0xff]
      %v196 = vld [vmem:[%s166 + $0xb0] sm:$0xff]
      %v197 = vld [vmem:[%s166 + $0xb8] sm:$0xff]
      %v198 = vld [vmem:[%s166 + $0xc0] sm:$0xff]
      %v199 = vld [vmem:[%s166 + $0xc8] sm:$0xff]
      %v200 = vld [vmem:[%s166 + $0xd0] sm:$0xff]
      %v201 = vld [vmem:[%s166 + $0xd8] sm:$0xff]
      %v202 = vld [vmem:[%s166 + $0xe0] sm:$0xff]
      %v203 = vld [vmem:[%s166 + $0xe8] sm:$0xff]
      %v204 = vld [vmem:[%s166 + $0xf0] sm:$0xff]
      %v205 = vld [vmem:[%s166 + $0xf8] sm:$0xff]
      %v206 = vld [vmem:[%s166 + $0x100] sm:$0xff]
      %v207 = vld [vmem:[%s166 + $0x108] sm:$0xff]
      %v208 = vld [vmem:[%s166 + $0x110] sm:$0xff]
      %v209 = vld [vmem:[%s166 + $0x118] sm:$0xff]
      %v210 = vld [vmem:[%s166 + $0x120] sm:$0xff]
      %v211 = vld [vmem:[%s166 + $0x128] sm:$0xff]
      %v212 = vld [vmem:[%s166 + $0x130] sm:$0xff]
      %v213 = vld [vmem:[%s166 + $0x138] sm:$0xff]
      %v214 = vld [vmem:[%s166 + $0x140] sm:$0xff]
      %v215 = vld [vmem:[%s166 + $0x148] sm:$0xff]
      %v216 = vld [vmem:[%s166 + $0x150] sm:$0xff]
      %v217 = vld [vmem:[%s166 + $0x158] sm:$0xff]
      %v218 = vld [vmem:[%s166 + $0x160] sm:$0xff]
      %v219 = vld [vmem:[%s166 + $0x168] sm:$0xff]
      %v220 = vld [vmem:[%s166 + $0x170] sm:$0xff]
      %v221 = vld [vmem:[%s166 + $0x178] sm:$0xff]
      %v222 = vld [vmem:[%s166 + $0x180] sm:$0xff]
      %v223 = vld [vmem:[%s166 + $0x188] sm:$0xff]
      %v224 = vld [vmem:[%s166 + $0x190] sm:$0xff]
      %v225 = vld [vmem:[%s166 + $0x198] sm:$0xff]
      %v226 = vld [vmem:[%s166 + $0x1a0] sm:$0xff]
      %v227 = vld [vmem:[%s166 + $0x1a8] sm:$0xff]
      %v228 = vld [vmem:[%s166 + $0x1b0] sm:$0xff]
      %v229 = vld [vmem:[%s166 + $0x1b8] sm:$0xff]
      %v230 = vld [vmem:[%s166 + $0x1c0] sm:$0xff]
      %v231 = vld [vmem:[%s166 + $0x1c8] sm:$0xff]
      %v232 = vld [vmem:[%s166 + $0x1d0] sm:$0xff]
      %v233 = vld [vmem:[%s166 + $0x1d8] sm:$0xff]
      %v234 = vld [vmem:[%s166 + $0x1e0] sm:$0xff]
      %v235 = vld [vmem:[%s166 + $0x1e8] sm:$0xff]
      %v236 = vld [vmem:[%s166 + $0x1f0] sm:$0xff]
      %v237 = vld [vmem:[%s166 + $0x1f8] sm:$0xff]
      %v238 = vld [vmem:[%s166 + $0x200] sm:$0xff]
      %v239 = vld [vmem:[%s166 + $0x208] sm:$0xff]
      %v240 = vld [vmem:[%s166 + $0x210] sm:$0xff]
      %v241 = vld [vmem:[%s166 + $0x218] sm:$0xff]
      %v242 = vld [vmem:[%s166 + $0x220] sm:$0xff]
      %v243 = vld [vmem:[%s166 + $0x228] sm:$0xff]
      %v244 = vld [vmem:[%s166 + $0x230] sm:$0xff]
      %v245 = vld [vmem:[%s166 + $0x238] sm:$0xff]
      %v246 = vld [vmem:[%s166 + $0x240] sm:$0xff]
      %v247 = vld [vmem:[%s166 + $0x248] sm:$0xff]
      %v248 = vld [vmem:[%s166 + $0x250] sm:$0xff]
      %v249 = vld [vmem:[%s166 + $0x258] sm:$0xff]
      %v250 = vld [vmem:[%s166 + $0x260] sm:$0xff]
      %v251 = vld [vmem:[%s166 + $0x268] sm:$0xff]
      %v252 = vld [vmem:[%s166 + $0x270] sm:$0xff]
      %v253 = vld [vmem:[%s166 + $0x278] sm:$0xff]
      %v254 = vld [vmem:[%s166 + $0x280] sm:$0xff]
      %v255 = vld [vmem:[%s166 + $0x288] sm:$0xff]
      %v256 = vld [vmem:[%s166 + $0x290] sm:$0xff]
      %v257 = vld [vmem:[%s166 + $0x298] sm:$0xff]
      %v258 = vld [vmem:[%s166 + $0x2a0] sm:$0xff]
      %v259 = vld [vmem:[%s166 + $0x2a8] sm:$0xff]
      %v260 = vld [vmem:[%s166 + $0x2b0] sm:$0xff]
      %v261 = vld [vmem:[%s166 + $0x2b8] sm:$0xff]
      %v262 = vld [vmem:[%s166 + $0x2c0] sm:$0xff]
      %v263 = vld [vmem:[%s166 + $0x2c8] sm:$0xff]
      %v264 = vld [vmem:[%s166 + $0x2d0] sm:$0xff]
      %v265 = vld [vmem:[%s166 + $0x2d8] sm:$0xff]
      %v266 = vld [vmem:[%s166 + $0x2e0] sm:$0xff]
      %v267 = vld [vmem:[%s166 + $0x2e8] sm:$0xff]
      %v268 = vld [vmem:[%s166 + $0x2f0] sm:$0xff]
      %v269 = vld [vmem:[%s166 + $0x2f8] sm:$0xff]
      %v270 = vld [vmem:[%s166 + $0x300] sm:$0xff]
      %v271 = vld [vmem:[%s166 + $0x308] sm:$0xff]
      %v272 = vld [vmem:[%s166 + $0x310] sm:$0xff]
      %v273 = vld [vmem:[%s166 + $0x318] sm:$0xff]
      %v274 = vld [vmem:[%s166 + $0x320] sm:$0xff]
      %v275 = vld [vmem:[%s166 + $0x328] sm:$0xff]
      %v276 = vld [vmem:[%s166 + $0x330] sm:$0xff]
      %v277 = vld [vmem:[%s166 + $0x338] sm:$0xff]
      %v278 = vld [vmem:[%s166 + $0x340] sm:$0xff]
      %v279 = vld [vmem:[%s166 + $0x348] sm:$0xff]
      %v280 = vld [vmem:[%s166 + $0x350] sm:$0xff]
      %v281 = vld [vmem:[%s166 + $0x358] sm:$0xff]
      %v282 = vld [vmem:[%s166 + $0x360] sm:$0xff]
      %v283 = vld [vmem:[%s166 + $0x368] sm:$0xff]
      %v284 = vld [vmem:[%s166 + $0x370] sm:$0xff]
      %v285 = vld [vmem:[%s166 + $0x378] sm:$0xff]
      %v286 = vld [vmem:[%s166 + $0x380] sm:$0xff]
      %v287 = vld [vmem:[%s166 + $0x388] sm:$0xff]
      %v288 = vld [vmem:[%s166 + $0x390] sm:$0xff]
      %v289 = vld [vmem:[%s166 + $0x398] sm:$0xff]
      %v290 = vld [vmem:[%s166 + $0x3a0] sm:$0xff]
      %v291 = vld [vmem:[%s166 + $0x3a8] sm:$0xff]
      %v292 = vld [vmem:[%s166 + $0x3b0] sm:$0xff]
      %v293 = vld [vmem:[%s166 + $0x3b8] sm:$0xff]
      %v294 = vld [vmem:[%s166 + $0x3c0] sm:$0xff]
      %v295 = vld [vmem:[%s166 + $0x3c8] sm:$0xff]
      %v296 = vld [vmem:[%s166 + $0x3d0] sm:$0xff]
      %v297 = vld [vmem:[%s166 + $0x3d8] sm:$0xff]
      %v298 = vld [vmem:[%s166 + $0x3e0] sm:$0xff]
      %v299 = vld [vmem:[%s166 + $0x3e8] sm:$0xff]
      %v300 = vld [vmem:[%s166 + $0x3f0] sm:$0xff]
      %v301 = vld [vmem:[%s166 + $0x3f8] sm:$0xff]
      %v302 = vld [vmem:[%s1] sm:$0xff]
      %v303 = vld [vmem:[%s1 + $0x8] sm:$0xff]
      %v304 = vld [vmem:[%s1 + $0x10] sm:$0xff]
      %v305 = vld [vmem:[%s1 + $0x18] sm:$0xff]
      %v306 = vld [vmem:[%s2] sm:$0x1]
      %v308 = vlaneseq
      %v309 = vshrl.u32 %v308, 7
      %v310 = vsub.s32 0, %v309
      %v311 = vrot.slane %v306, %v310
      %vm313 = vcmask 261120
      %v315 = vsel %vm313, %v174, 0
      %v318 = vsel %vm313, %v175, 0
      %v321 = vsel %vm313, %v176, 0
      %v324 = vsel %vm313, %v177, 0
      %v327 = vsel %vm313, %v178, 0
      %v330 = vsel %vm313, %v179, 0
      %v333 = vsel %vm313, %v180, 0
      %v336 = vsel %vm313, %v181, 0
      %v339 = vsel %vm313, %v182, 0
      %v342 = vsel %vm313, %v183, 0
      %v345 = vsel %vm313, %v184, 0
      %v348 = vsel %vm313, %v185, 0
      %v351 = vsel %vm313, %v186, 0
      %v354 = vsel %vm313, %v187, 0
      %v357 = vsel %vm313, %v188, 0
      %v360 = vsel %vm313, %v189, 0
      %v363 = vsel %vm313, %v190, 0
      %v366 = vsel %vm313, %v191, 0
      %v369 = vsel %vm313, %v192, 0
      %v372 = vsel %vm313, %v193, 0
      %v375 = vsel %vm313, %v194, 0
      %v378 = vsel %vm313, %v195, 0
      %v381 = vsel %vm313, %v196, 0
      %v384 = vsel %vm313, %v197, 0
      %v387 = vsel %vm313, %v198, 0
      %v390 = vsel %vm313, %v199, 0
      %v393 = vsel %vm313, %v200, 0
      %v396 = vsel %vm313, %v201, 0
      %v399 = vsel %vm313, %v202, 0
      %v402 = vsel %vm313, %v203, 0
      %v405 = vsel %vm313, %v204, 0
      %v408 = vsel %vm313, %v205, 0
      %v411 = vsel %vm313, %v206, 0
      %v414 = vsel %vm313, %v207, 0
      %v417 = vsel %vm313, %v208, 0
      %v420 = vsel %vm313, %v209, 0
      %v423 = vsel %vm313, %v210, 0
      %v426 = vsel %vm313, %v211, 0
      %v429 = vsel %vm313, %v212, 0
      %v432 = vsel %vm313, %v213, 0
      %v435 = vsel %vm313, %v214, 0
      %v438 = vsel %vm313, %v215, 0
      %v441 = vsel %vm313, %v216, 0
      %v444 = vsel %vm313, %v217, 0
      %v447 = vsel %vm313, %v218, 0
      %v450 = vsel %vm313, %v219, 0
      %v453 = vsel %vm313, %v220, 0
      %v456 = vsel %vm313, %v221, 0
      %v459 = vsel %vm313, %v222, 0
      %v462 = vsel %vm313, %v223, 0
      %v465 = vsel %vm313, %v224, 0
      %v468 = vsel %vm313, %v225, 0
      %v471 = vsel %vm313, %v226, 0
      %v474 = vsel %vm313, %v227, 0
      %v477 = vsel %vm313, %v228, 0
      %v480 = vsel %vm313, %v229, 0
      %v483 = vsel %vm313, %v230, 0
      %v486 = vsel %vm313, %v231, 0
      %v489 = vsel %vm313, %v232, 0
      %v492 = vsel %vm313, %v233, 0
      %v495 = vsel %vm313, %v234, 0
      %v498 = vsel %vm313, %v235, 0
      %v501 = vsel %vm313, %v236, 0
      %v504 = vsel %vm313, %v237, 0
      %v507 = vsel %vm313, %v238, 0
      %v510 = vsel %vm313, %v239, 0
      %v513 = vsel %vm313, %v240, 0
      %v516 = vsel %vm313, %v241, 0
      %v519 = vsel %vm313, %v242, 0
      %v522 = vsel %vm313, %v243, 0
      %v525 = vsel %vm313, %v244, 0
      %v528 = vsel %vm313, %v245, 0
      %v531 = vsel %vm313, %v246, 0
      %v534 = vsel %vm313, %v247, 0
      %v537 = vsel %vm313, %v248, 0
      %v540 = vsel %vm313, %v249, 0
      %v543 = vsel %vm313, %v250, 0
      %v546 = vsel %vm313, %v251, 0
      %v549 = vsel %vm313, %v252, 0
      %v552 = vsel %vm313, %v253, 0
      %v555 = vsel %vm313, %v254, 0
      %v558 = vsel %vm313, %v255, 0
      %v561 = vsel %vm313, %v256, 0
      %v564 = vsel %vm313, %v257, 0
      %v567 = vsel %vm313, %v258, 0
      %v570 = vsel %vm313, %v259, 0
      %v573 = vsel %vm313, %v260, 0
      %v576 = vsel %vm313, %v261, 0
      %v579 = vsel %vm313, %v262, 0
      %v582 = vsel %vm313, %v263, 0
      %v585 = vsel %vm313, %v264, 0
      %v588 = vsel %vm313, %v265, 0
      %v591 = vsel %vm313, %v266, 0
      %v594 = vsel %vm313, %v267, 0
      %v597 = vsel %vm313, %v268, 0
      %v600 = vsel %vm313, %v269, 0
      %v603 = vsel %vm313, %v270, 0
      %v606 = vsel %vm313, %v271, 0
      %v609 = vsel %vm313, %v272, 0
      %v612 = vsel %vm313, %v273, 0
      %v615 = vsel %vm313, %v274, 0
      %v618 = vsel %vm313, %v275, 0
      %v621 = vsel %vm313, %v276, 0
      %v624 = vsel %vm313, %v277, 0
      %v627 = vsel %vm313, %v278, 0
      %v630 = vsel %vm313, %v279, 0
      %v633 = vsel %vm313, %v280, 0
      %v636 = vsel %vm313, %v281, 0
      %v639 = vsel %vm313, %v282, 0
      %v642 = vsel %vm313, %v283, 0
      %v645 = vsel %vm313, %v284, 0
      %v648 = vsel %vm313, %v285, 0
      %v651 = vsel %vm313, %v286, 0
      %v654 = vsel %vm313, %v287, 0
      %v657 = vsel %vm313, %v288, 0
      %v660 = vsel %vm313, %v289, 0
      %v663 = vsel %vm313, %v290, 0
      %v666 = vsel %vm313, %v291, 0
      %v669 = vsel %vm313, %v292, 0
      %v672 = vsel %vm313, %v293, 0
      %v675 = vsel %vm313, %v294, 0
      %v678 = vsel %vm313, %v295, 0
      %v681 = vsel %vm313, %v296, 0
      %v684 = vsel %vm313, %v297, 0
      %v687 = vsel %vm313, %v298, 0
      %v690 = vsel %vm313, %v299, 0
      %v693 = vsel %vm313, %v300, 0
      %v696 = vsel %vm313, %v301, 0
      %698 = vmatprep.subr.mxu0 0.0
      %699 = vmatpush1.msra.mxu0 %v302
      %700 = vmatprep.subr.mxu0 0.0
      %701 = vmatpush1.msra.mxu0 %v303
      %702 = vmatprep.subr.mxu0 0.0
      %703 = vmatpush1.msra.mxu0 %v304
      %704 = vmatprep.subr.mxu0 0.0
      %705 = vmatpush1.msra.mxu0 %v305
      %706 = vmatprep.subr.mxu0 0.0
      %707 = vmatpush1.msra.mxu0 0.0
      %708 = vmatprep.subr.mxu0 0.0
      %709 = vmatpush1.msra.mxu0 0.0
      %710 = vmatprep.subr.mxu0 0.0
      %711 = vmatpush1.msra.mxu0 0.0
      %712 = vmatprep.subr.mxu0 0.0
      %713 = vmatpush1.msra.mxu0 0.0
      %714 = vmatprep.subr.mxu0 0.0
      %715 = vmatpush1.msra.mxu0 0.0
      %716 = vmatprep.subr.mxu0 0.0
      %717 = vmatpush1.msra.mxu0 0.0
      %718 = vmatprep.subr.mxu0 0.0
      %719 = vmatpush1.msra.mxu0 0.0
      %720 = vmatprep.subr.mxu0 0.0
      %721 = vmatpush1.msra.mxu0 0.0
      %722 = vmatprep.subr.mxu0 0.0
      %723 = vmatpush1.msra.mxu0 0.0
      %724 = vmatprep.subr.mxu0 0.0
      %725 = vmatpush1.msra.mxu0 0.0
      %726 = vmatprep.subr.mxu0 0.0
      %727 = vmatpush1.msra.mxu0 0.0
      %728 = vmatprep.subr.mxu0 0.0
      %729 = vmatpush1.msra.mxu0 0.0
      %730 = vmatprep.subr.mxu0 0.0
      %731 = vmatpush1.msra.mxu0 0.0
      %732 = vmatprep.subr.mxu0 0.0
      %733 = vmatpush1.msra.mxu0 0.0
      %734 = vmatprep.subr.mxu0 0.0
      %735 = vmatpush1.msra.mxu0 0.0
      %736 = vmatprep.subr.mxu0 0.0
      %737 = vmatpush1.msra.mxu0 0.0
      %738 = vmatprep.subr.mxu0 0.0
      %739 = vmatpush1.msra.mxu0 0.0
      %740 = vmatprep.subr.mxu0 0.0
      %741 = vmatpush1.msra.mxu0 0.0
      %742 = vmatprep.subr.mxu0 0.0
      %743 = vmatpush1.msra.mxu0 0.0
      %744 = vmatprep.subr.mxu0 0.0
      %745 = vmatpush1.msra.mxu0 0.0
      %746 = vmatprep.subr.mxu0 0.0
      %747 = vmatpush1.msra.mxu0 0.0
      %748 = vmatprep.subr.mxu0 0.0
      %749 = vmatpush1.msra.mxu0 0.0
      %750 = vmatprep.subr.mxu0 0.0
      %751 = vmatpush1.msra.mxu0 0.0
      %752 = vmatprep.subr.mxu0 0.0
      %753 = vmatpush1.msra.mxu0 0.0
      %754 = vmatprep.subr.mxu0 0.0
      %755 = vmatpush1.msra.mxu0 0.0
      %756 = vmatprep.subr.mxu0 0.0
      %757 = vmatpush1.msra.mxu0 0.0
      %758 = vmatprep.subr.mxu0 0.0
      %759 = vmatpush1.msra.mxu0 0.0
      %760 = vmatprep.subr.mxu0 0.0
      %761 = vmatpush1.msra.mxu0 0.0
      %762 = vmatprep.mubr.f32.mxu0 0.0
      %763 = vmatmul.mubr.f32.gmra.mrb[0].mxu0 %v315
      %v764 = vpop.f32.mrb[0].mxu0
      %v765 = vadd.f32 %v311, %v764
      %v766 = vpop.f32.mrb[0].mxu0
      %767 = vmatprep.mubr.f32.mxu0 0.0
      %768 = vmatmul.mubr.f32.gmra.mrb[0].mxu0 %v318
      %v769 = vpop.f32.mrb[0].mxu0
      %v770 = vadd.f32 %v311, %v769
      %v771 = vpop.f32.mrb[0].mxu0
      %772 = vmatprep.mubr.f32.mxu0 0.0
      %773 = vmatmul.mubr.f32.gmra.mrb[0].mxu0 %v321
      %v774 = vpop.f32.mrb[0].mxu0
      %v775 = vadd.f32 %v311, %v774
      %v776 = vpop.f32.mrb[0].mxu0
      %777 = vmatprep.mubr.f32.mxu0 0.0
      %778 = vmatmul.mubr.f32.gmra.mrb[0].mxu0 %v324
      %v779 = vpop.f32.mrb[0].mxu0
      %v780 = vadd.f32 %v311, %v779
      %v781 = vpop.f32.mrb[0].mxu0
      %782 = vmatprep.mubr.f32.mxu0 0.0
      %783 = vmatmul.mubr.f32.gmra.mrb[0].mxu0 %v327
      %v784 = vpop.f32.mrb[0].mxu0
      %v785 = vadd.f32 %v311, %v784
      %v786 = vpop.f32.mrb[0].mxu0
      %787 = vmatprep.mubr.f32.mxu0 0.0
      %788 = vmatmul.mubr.f32.gmra.mrb[0].mxu0 %v330
      %v789 = vpop.f32.mrb[0].mxu0
      %v790 = vadd.f32 %v311, %v789
      %v791 = vpop.f32.mrb[0].mxu0
      %792 = vmatprep.mubr.f32.mxu0 0.0
      %793 = vmatmul.mubr.f32.gmra.mrb[0].mxu0 %v333
      %v794 = vpop.f32.mrb[0].mxu0
      %v795 = vadd.f32 %v311, %v794
      %v796 = vpop.f32.mrb[0].mxu0
      %797 = vmatprep.mubr.f32.mxu0 0.0
      %798 = vmatmul.mubr.f32.gmra.mrb[0].mxu0 %v336
      %v799 = vpop.f32.mrb[0].mxu0
      %v800 = vadd.f32 %v311, %v799
      %v801 = vpop.f32.mrb[0].mxu0
      %802 = vmatprep.mubr.f32.mxu0 0.0
      %803 = vmatmul.mubr.f32.gmra.mrb[0].mxu0 %v339
      %v804 = vpop.f32.mrb[0].mxu0
      %v805 = vadd.f32 %v311, %v804
      %v806 = vpop.f32.mrb[0].mxu0
      %807 = vmatprep.mubr.f32.mxu0 0.0
      %808 = vmatmul.mubr.f32.gmra.mrb[0].mxu0 %v342
      %v809 = vpop.f32.mrb[0].mxu0
      %v810 = vadd.f32 %v311, %v809
      %v811 = vpop.f32.mrb[0].mxu0
      %812 = vmatprep.mubr.f32.mxu0 0.0
      %813 = vmatmul.mubr.f32.gmra.mrb[0].mxu0 %v345
      %v814 = vpop.f32.mrb[0].mxu0
      %v815 = vadd.f32 %v311, %v814
      %v816 = vpop.f32.mrb[0].mxu0
      %817 = vmatprep.mubr.f32.mxu0 0.0
      %818 = vmatmul.mubr.f32.gmra.mrb[0].mxu0 %v348
      %v819 = vpop.f32.mrb[0].mxu0
      %v820 = vadd.f32 %v311, %v819
      %v821 = vpop.f32.mrb[0].mxu0
      %822 = vmatprep.mubr.f32.mxu0 0.0
      %823 = vmatmul.mubr.f32.gmra.mrb[0].mxu0 %v351
      %v824 = vpop.f32.mrb[0].mxu0
      %v825 = vadd.f32 %v311, %v824
      %v826 = vpop.f32.mrb[0].mxu0
      %827 = vmatprep.mubr.f32.mxu0 0.0
      %828 = vmatmul.mubr.f32.gmra.mrb[0].mxu0 %v354
      %v829 = vpop.f32.mrb[0].mxu0
      %v830 = vadd.f32 %v311, %v829
      %v831 = vpop.f32.mrb[0].mxu0
      %832 = vmatprep.mubr.f32.mxu0 0.0
      %833 = vmatmul.mubr.f32.gmra.mrb[0].mxu0 %v357
      %v834 = vpop.f32.mrb[0].mxu0
      %v835 = vadd.f32 %v311, %v834
      %v836 = vpop.f32.mrb[0].mxu0
      %837 = vmatprep.mubr.f32.mxu0 0.0
      %838 = vmatmul.mubr.f32.gmra.mrb[0].mxu0 %v360
      %v839 = vpop.f32.mrb[0].mxu0
      %v840 = vadd.f32 %v311, %v839
      %v841 = vpop.f32.mrb[0].mxu0
      %842 = vmatprep.mubr.f32.mxu0 0.0
      %843 = vmatmul.mubr.f32.gmra.mrb[0].mxu0 %v363
      %v844 = vpop.f32.mrb[0].mxu0
      %v845 = vadd.f32 %v311, %v844
      %v846 = vpop.f32.mrb[0].mxu0
      %847 = vmatprep.mubr.f32.mxu0 0.0
      %848 = vmatmul.mubr.f32.gmra.mrb[0].mxu0 %v366
      %v849 = vpop.f32.mrb[0].mxu0
      %v850 = vadd.f32 %v311, %v849
      %v851 = vpop.f32.mrb[0].mxu0
      %852 = vmatprep.mubr.f32.mxu0 0.0
      %853 = vmatmul.mubr.f32.gmra.mrb[0].mxu0 %v369
      %v854 = vpop.f32.mrb[0].mxu0
      %v855 = vadd.f32 %v311, %v854
      %v856 = vpop.f32.mrb[0].mxu0
      %857 = vmatprep.mubr.f32.mxu0 0.0
      %858 = vmatmul.mubr.f32.gmra.mrb[0].mxu0 %v372
      %v859 = vpop.f32.mrb[0].mxu0
      %v860 = vadd.f32 %v311, %v859
      %v861 = vpop.f32.mrb[0].mxu0
      %862 = vmatprep.mubr.f32.mxu0 0.0
      %863 = vmatmul.mubr.f32.gmra.mrb[0].mxu0 %v375
      %v864 = vpop.f32.mrb[0].mxu0
      %v865 = vadd.f32 %v311, %v864
      %v866 = vpop.f32.mrb[0].mxu0
      %867 = vmatprep.mubr.f32.mxu0 0.0
      %868 = vmatmul.mubr.f32.gmra.mrb[0].mxu0 %v378
      %v869 = vpop.f32.mrb[0].mxu0
      %v870 = vadd.f32 %v311, %v869
      %v871 = vpop.f32.mrb[0].mxu0
      %872 = vmatprep.mubr.f32.mxu0 0.0
      %873 = vmatmul.mubr.f32.gmra.mrb[0].mxu0 %v381
      %v874 = vpop.f32.mrb[0].mxu0
      %v875 = vadd.f32 %v311, %v874
      %v876 = vpop.f32.mrb[0].mxu0
      %877 = vmatprep.mubr.f32.mxu0 0.0
      %878 = vmatmul.mubr.f32.gmra.mrb[0].mxu0 %v384
      %v879 = vpop.f32.mrb[0].mxu0
      %v880 = vadd.f32 %v311, %v879
      %v881 = vpop.f32.mrb[0].mxu0
      %882 = vmatprep.mubr.f32.mxu0 0.0
      %883 = vmatmul.mubr.f32.gmra.mrb[0].mxu0 %v387
      %v884 = vpop.f32.mrb[0].mxu0
      %v885 = vadd.f32 %v311, %v884
      %v886 = vpop.f32.mrb[0].mxu0
      %887 = vmatprep.mubr.f32.mxu0 0.0
      %888 = vmatmul.mubr.f32.gmra.mrb[0].mxu0 %v390
      %v889 = vpop.f32.mrb[0].mxu0
      %v890 = vadd.f32 %v311, %v889
      %v891 = vpop.f32.mrb[0].mxu0
      %892 = vmatprep.mubr.f32.mxu0 0.0
      %893 = vmatmul.mubr.f32.gmra.mrb[0].mxu0 %v393
      %v894 = vpop.f32.mrb[0].mxu0
      %v895 = vadd.f32 %v311, %v894
      %v896 = vpop.f32.mrb[0].mxu0
      %897 = vmatprep.mubr.f32.mxu0 0.0
      %898 = vmatmul.mubr.f32.gmra.mrb[0].mxu0 %v396
      %v899 = vpop.f32.mrb[0].mxu0
      %v900 = vadd.f32 %v311, %v899
      %v901 = vpop.f32.mrb[0].mxu0
      %902 = vmatprep.mubr.f32.mxu0 0.0
      %903 = vmatmul.mubr.f32.gmra.mrb[0].mxu0 %v399
      %v904 = vpop.f32.mrb[0].mxu0
      %v905 = vadd.f32 %v311, %v904
      %v906 = vpop.f32.mrb[0].mxu0
      %907 = vmatprep.mubr.f32.mxu0 0.0
      %908 = vmatmul.mubr.f32.gmra.mrb[0].mxu0 %v402
      %v909 = vpop.f32.mrb[0].mxu0
      %v910 = vadd.f32 %v311, %v909
      %v911 = vpop.f32.mrb[0].mxu0
      %912 = vmatprep.mubr.f32.mxu0 0.0
      %913 = vmatmul.mubr.f32.gmra.mrb[0].mxu0 %v405
      %v914 = vpop.f32.mrb[0].mxu0
      %v915 = vadd.f32 %v311, %v914
      %v916 = vpop.f32.mrb[0].mxu0
      %917 = vmatprep.mubr.f32.mxu0 0.0
      %918 = vmatmul.mubr.f32.gmra.mrb[0].mxu0 %v408
      %v919 = vpop.f32.mrb[0].mxu0
      %v920 = vadd.f32 %v311, %v919
      %v921 = vpop.f32.mrb[0].mxu0
      %922 = vmatprep.mubr.f32.mxu0 0.0
      %923 = vmatmul.mubr.f32.gmra.mrb[0].mxu0 %v411
      %v924 = vpop.f32.mrb[0].mxu0
      %v925 = vadd.f32 %v311, %v924
      %v926 = vpop.f32.mrb[0].mxu0
      %927 = vmatprep.mubr.f32.mxu0 0.0
      %928 = vmatmul.mubr.f32.gmra.mrb[0].mxu0 %v414
      %v929 = vpop.f32.mrb[0].mxu0
      %v930 = vadd.f32 %v311, %v929
      %v931 = vpop.f32.mrb[0].mxu0
      %932 = vmatprep.mubr.f32.mxu0 0.0
      %933 = vmatmul.mubr.f32.gmra.mrb[0].mxu0 %v417
      %v934 = vpop.f32.mrb[0].mxu0
      %v935 = vadd.f32 %v311, %v934
      %v936 = vpop.f32.mrb[0].mxu0
      %937 = vmatprep.mubr.f32.mxu0 0.0
      %938 = vmatmul.mubr.f32.gmra.mrb[0].mxu0 %v420
      %v939 = vpop.f32.mrb[0].mxu0
      %v940 = vadd.f32 %v311, %v939
      %v941 = vpop.f32.mrb[0].mxu0
      %942 = vmatprep.mubr.f32.mxu0 0.0
      %943 = vmatmul.mubr.f32.gmra.mrb[0].mxu0 %v423
      %v944 = vpop.f32.mrb[0].mxu0
      %v945 = vadd.f32 %v311, %v944
      %v946 = vpop.f32.mrb[0].mxu0
      %947 = vmatprep.mubr.f32.mxu0 0.0
      %948 = vmatmul.mubr.f32.gmra.mrb[0].mxu0 %v426
      %v949 = vpop.f32.mrb[0].mxu0
      %v950 = vadd.f32 %v311, %v949
      %v951 = vpop.f32.mrb[0].mxu0
      %952 = vmatprep.mubr.f32.mxu0 0.0
      %953 = vmatmul.mubr.f32.gmra.mrb[0].mxu0 %v429
      %v954 = vpop.f32.mrb[0].mxu0
      %v955 = vadd.f32 %v311, %v954
      %v956 = vpop.f32.mrb[0].mxu0
      %957 = vmatprep.mubr.f32.mxu0 0.0
      %958 = vmatmul.mubr.f32.gmra.mrb[0].mxu0 %v432
      %v959 = vpop.f32.mrb[0].mxu0
      %v960 = vadd.f32 %v311, %v959
      %v961 = vpop.f32.mrb[0].mxu0
      %962 = vmatprep.mubr.f32.mxu0 0.0
      %963 = vmatmul.mubr.f32.gmra.mrb[0].mxu0 %v435
      %v964 = vpop.f32.mrb[0].mxu0
      %v965 = vadd.f32 %v311, %v964
      %v966 = vpop.f32.mrb[0].mxu0
      %967 = vmatprep.mubr.f32.mxu0 0.0
      %968 = vmatmul.mubr.f32.gmra.mrb[0].mxu0 %v438
      %v969 = vpop.f32.mrb[0].mxu0
      %v970 = vadd.f32 %v311, %v969
      %v971 = vpop.f32.mrb[0].mxu0
      %972 = vmatprep.mubr.f32.mxu0 0.0
      %973 = vmatmul.mubr.f32.gmra.mrb[0].mxu0 %v441
      %v974 = vpop.f32.mrb[0].mxu0
      %v975 = vadd.f32 %v311, %v974
      %v976 = vpop.f32.mrb[0].mxu0
      %977 = vmatprep.mubr.f32.mxu0 0.0
      %978 = vmatmul.mubr.f32.gmra.mrb[0].mxu0 %v444
      %v979 = vpop.f32.mrb[0].mxu0
      %v980 = vadd.f32 %v311, %v979
      %v981 = vpop.f32.mrb[0].mxu0
      %982 = vmatprep.mubr.f32.mxu0 0.0
      %983 = vmatmul.mubr.f32.gmra.mrb[0].mxu0 %v447
      %v984 = vpop.f32.mrb[0].mxu0
      %v985 = vadd.f32 %v311, %v984
      %v986 = vpop.f32.mrb[0].mxu0
      %987 = vmatprep.mubr.f32.mxu0 0.0
      %988 = vmatmul.mubr.f32.gmra.mrb[0].mxu0 %v450
      %v989 = vpop.f32.mrb[0].mxu0
      %v990 = vadd.f32 %v311, %v989
      %v991 = vpop.f32.mrb[0].mxu0
      %992 = vmatprep.mubr.f32.mxu0 0.0
      %993 = vmatmul.mubr.f32.gmra.mrb[0].mxu0 %v453
      %v994 = vpop.f32.mrb[0].mxu0
      %v995 = vadd.f32 %v311, %v994
      %v996 = vpop.f32.mrb[0].mxu0
      %997 = vmatprep.mubr.f32.mxu0 0.0
      %998 = vmatmul.mubr.f32.gmra.mrb[0].mxu0 %v456
      %v999 = vpop.f32.mrb[0].mxu0
      %v1000 = vadd.f32 %v311, %v999
      %v1001 = vpop.f32.mrb[0].mxu0
      %1002 = vmatprep.mubr.f32.mxu0 0.0
      %1003 = vmatmul.mubr.f32.gmra.mrb[0].mxu0 %v459
      %v1004 = vpop.f32.mrb[0].mxu0
      %v1005 = vadd.f32 %v311, %v1004
      %v1006 = vpop.f32.mrb[0].mxu0
      %1007 = vmatprep.mubr.f32.mxu0 0.0
      %1008 = vmatmul.mubr.f32.gmra.mrb[0].mxu0 %v462
      %v1009 = vpop.f32.mrb[0].mxu0
      %v1010 = vadd.f32 %v311, %v1009
      %v1011 = vpop.f32.mrb[0].mxu0
      %1012 = vmatprep.mubr.f32.mxu0 0.0
      %1013 = vmatmul.mubr.f32.gmra.mrb[0].mxu0 %v465
      %v1014 = vpop.f32.mrb[0].mxu0
      %v1015 = vadd.f32 %v311, %v1014
      %v1016 = vpop.f32.mrb[0].mxu0
      %1017 = vmatprep.mubr.f32.mxu0 0.0
      %1018 = vmatmul.mubr.f32.gmra.mrb[0].mxu0 %v468
      %v1019 = vpop.f32.mrb[0].mxu0
      %v1020 = vadd.f32 %v311, %v1019
      %v1021 = vpop.f32.mrb[0].mxu0
      %1022 = vmatprep.mubr.f32.mxu0 0.0
      %1023 = vmatmul.mubr.f32.gmra.mrb[0].mxu0 %v471
      %v1024 = vpop.f32.mrb[0].mxu0
      %v1025 = vadd.f32 %v311, %v1024
      %v1026 = vpop.f32.mrb[0].mxu0
      %1027 = vmatprep.mubr.f32.mxu0 0.0
      %1028 = vmatmul.mubr.f32.gmra.mrb[0].mxu0 %v474
      %v1029 = vpop.f32.mrb[0].mxu0
      %v1030 = vadd.f32 %v311, %v1029
      %v1031 = vpop.f32.mrb[0].mxu0
      %1032 = vmatprep.mubr.f32.mxu0 0.0
      %1033 = vmatmul.mubr.f32.gmra.mrb[0].mxu0 %v477
      %v1034 = vpop.f32.mrb[0].mxu0
      %v1035 = vadd.f32 %v311, %v1034
      %v1036 = vpop.f32.mrb[0].mxu0
      %1037 = vmatprep.mubr.f32.mxu0 0.0
      %1038 = vmatmul.mubr.f32.gmra.mrb[0].mxu0 %v480
      %v1039 = vpop.f32.mrb[0].mxu0
      %v1040 = vadd.f32 %v311, %v1039
      %v1041 = vpop.f32.mrb[0].mxu0
      %1042 = vmatprep.mubr.f32.mxu0 0.0
      %1043 = vmatmul.mubr.f32.gmra.mrb[0].mxu0 %v483
      %v1044 = vpop.f32.mrb[0].mxu0
      %v1045 = vadd.f32 %v311, %v1044
      %v1046 = vpop.f32.mrb[0].mxu0
      %1047 = vmatprep.mubr.f32.mxu0 0.0
      %1048 = vmatmul.mubr.f32.gmra.mrb[0].mxu0 %v486
      %v1049 = vpop.f32.mrb[0].mxu0
      %v1050 = vadd.f32 %v311, %v1049
      %v1051 = vpop.f32.mrb[0].mxu0
      %1052 = vmatprep.mubr.f32.mxu0 0.0
      %1053 = vmatmul.mubr.f32.gmra.mrb[0].mxu0 %v489
      %v1054 = vpop.f32.mrb[0].mxu0
      %v1055 = vadd.f32 %v311, %v1054
      %v1056 = vpop.f32.mrb[0].mxu0
      %1057 = vmatprep.mubr.f32.mxu0 0.0
      %1058 = vmatmul.mubr.f32.gmra.mrb[0].mxu0 %v492
      %v1059 = vpop.f32.mrb[0].mxu0
      %v1060 = vadd.f32 %v311, %v1059
      %v1061 = vpop.f32.mrb[0].mxu0
      %1062 = vmatprep.mubr.f32.mxu0 0.0
      %1063 = vmatmul.mubr.f32.gmra.mrb[0].mxu0 %v495
      %v1064 = vpop.f32.mrb[0].mxu0
      %v1065 = vadd.f32 %v311, %v1064
      %v1066 = vpop.f32.mrb[0].mxu0
      %1067 = vmatprep.mubr.f32.mxu0 0.0
      %1068 = vmatmul.mubr.f32.gmra.mrb[0].mxu0 %v498
      %v1069 = vpop.f32.mrb[0].mxu0
      %v1070 = vadd.f32 %v311, %v1069
      %v1071 = vpop.f32.mrb[0].mxu0
      %1072 = vmatprep.mubr.f32.mxu0 0.0
      %1073 = vmatmul.mubr.f32.gmra.mrb[0].mxu0 %v501
      %v1074 = vpop.f32.mrb[0].mxu0
      %v1075 = vadd.f32 %v311, %v1074
      %v1076 = vpop.f32.mrb[0].mxu0
      %1077 = vmatprep.mubr.f32.mxu0 0.0
      %1078 = vmatmul.mubr.f32.gmra.mrb[0].mxu0 %v504
      %v1079 = vpop.f32.mrb[0].mxu0
      %v1080 = vadd.f32 %v311, %v1079
      %v1081 = vpop.f32.mrb[0].mxu0
      %1082 = vmatprep.mubr.f32.mxu0 0.0
      %1083 = vmatmul.mubr.f32.gmra.mrb[0].mxu0 %v507
      %v1084 = vpop.f32.mrb[0].mxu0
      %v1085 = vadd.f32 %v311, %v1084
      %v1086 = vpop.f32.mrb[0].mxu0
      %1087 = vmatprep.mubr.f32.mxu0 0.0
      %1088 = vmatmul.mubr.f32.gmra.mrb[0].mxu0 %v510
      %v1089 = vpop.f32.mrb[0].mxu0
      %v1090 = vadd.f32 %v311, %v1089
      %v1091 = vpop.f32.mrb[0].mxu0
      %1092 = vmatprep.mubr.f32.mxu0 0.0
      %1093 = vmatmul.mubr.f32.gmra.mrb[0].mxu0 %v513
      %v1094 = vpop.f32.mrb[0].mxu0
      %v1095 = vadd.f32 %v311, %v1094
      %v1096 = vpop.f32.mrb[0].mxu0
      %1097 = vmatprep.mubr.f32.mxu0 0.0
      %1098 = vmatmul.mubr.f32.gmra.mrb[0].mxu0 %v516
      %v1099 = vpop.f32.mrb[0].mxu0
      %v1100 = vadd.f32 %v311, %v1099
      %v1101 = vpop.f32.mrb[0].mxu0
      %1102 = vmatprep.mubr.f32.mxu0 0.0
      %1103 = vmatmul.mubr.f32.gmra.mrb[0].mxu0 %v519
      %v1104 = vpop.f32.mrb[0].mxu0
      %v1105 = vadd.f32 %v311, %v1104
      %v1106 = vpop.f32.mrb[0].mxu0
      %1107 = vmatprep.mubr.f32.mxu0 0.0
      %1108 = vmatmul.mubr.f32.gmra.mrb[0].mxu0 %v522
      %v1109 = vpop.f32.mrb[0].mxu0
      %v1110 = vadd.f32 %v311, %v1109
      %v1111 = vpop.f32.mrb[0].mxu0
      %1112 = vmatprep.mubr.f32.mxu0 0.0
      %1113 = vmatmul.mubr.f32.gmra.mrb[0].mxu0 %v525
      %v1114 = vpop.f32.mrb[0].mxu0
      %v1115 = vadd.f32 %v311, %v1114
      %v1116 = vpop.f32.mrb[0].mxu0
      %1117 = vmatprep.mubr.f32.mxu0 0.0
      %1118 = vmatmul.mubr.f32.gmra.mrb[0].mxu0 %v528
      %v1119 = vpop.f32.mrb[0].mxu0
      %v1120 = vadd.f32 %v311, %v1119
      %v1121 = vpop.f32.mrb[0].mxu0
      %1122 = vmatprep.mubr.f32.mxu0 0.0
      %1123 = vmatmul.mubr.f32.gmra.mrb[0].mxu0 %v531
      %v1124 = vpop.f32.mrb[0].mxu0
      %v1125 = vadd.f32 %v311, %v1124
      %v1126 = vpop.f32.mrb[0].mxu0
      %1127 = vmatprep.mubr.f32.mxu0 0.0
      %1128 = vmatmul.mubr.f32.gmra.mrb[0].mxu0 %v534
      %v1129 = vpop.f32.mrb[0].mxu0
      %v1130 = vadd.f32 %v311, %v1129
      %v1131 = vpop.f32.mrb[0].mxu0
      %1132 = vmatprep.mubr.f32.mxu0 0.0
      %1133 = vmatmul.mubr.f32.gmra.mrb[0].mxu0 %v537
      %v1134 = vpop.f32.mrb[0].mxu0
      %v1135 = vadd.f32 %v311, %v1134
      %v1136 = vpop.f32.mrb[0].mxu0
      %1137 = vmatprep.mubr.f32.mxu0 0.0
      %1138 = vmatmul.mubr.f32.gmra.mrb[0].mxu0 %v540
      %v1139 = vpop.f32.mrb[0].mxu0
      %v1140 = vadd.f32 %v311, %v1139
      %v1141 = vpop.f32.mrb[0].mxu0
      %1142 = vmatprep.mubr.f32.mxu0 0.0
      %1143 = vmatmul.mubr.f32.gmra.mrb[0].mxu0 %v543
      %v1144 = vpop.f32.mrb[0].mxu0
      %v1145 = vadd.f32 %v311, %v1144
      %v1146 = vpop.f32.mrb[0].mxu0
      %1147 = vmatprep.mubr.f32.mxu0 0.0
      %1148 = vmatmul.mubr.f32.gmra.mrb[0].mxu0 %v546
      %v1149 = vpop.f32.mrb[0].mxu0
      %v1150 = vadd.f32 %v311, %v1149
      %v1151 = vpop.f32.mrb[0].mxu0
      %1152 = vmatprep.mubr.f32.mxu0 0.0
      %1153 = vmatmul.mubr.f32.gmra.mrb[0].mxu0 %v549
      %v1154 = vpop.f32.mrb[0].mxu0
      %v1155 = vadd.f32 %v311, %v1154
      %v1156 = vpop.f32.mrb[0].mxu0
      %1157 = vmatprep.mubr.f32.mxu0 0.0
      %1158 = vmatmul.mubr.f32.gmra.mrb[0].mxu0 %v552
      %v1159 = vpop.f32.mrb[0].mxu0
      %v1160 = vadd.f32 %v311, %v1159
      %v1161 = vpop.f32.mrb[0].mxu0
      %1162 = vmatprep.mubr.f32.mxu0 0.0
      %1163 = vmatmul.mubr.f32.gmra.mrb[0].mxu0 %v555
      %v1164 = vpop.f32.mrb[0].mxu0
      %v1165 = vadd.f32 %v311, %v1164
      %v1166 = vpop.f32.mrb[0].mxu0
      %1167 = vmatprep.mubr.f32.mxu0 0.0
      %1168 = vmatmul.mubr.f32.gmra.mrb[0].mxu0 %v558
      %v1169 = vpop.f32.mrb[0].mxu0
      %v1170 = vadd.f32 %v311, %v1169
      %v1171 = vpop.f32.mrb[0].mxu0
      %1172 = vmatprep.mubr.f32.mxu0 0.0
      %1173 = vmatmul.mubr.f32.gmra.mrb[0].mxu0 %v561
      %v1174 = vpop.f32.mrb[0].mxu0
      %v1175 = vadd.f32 %v311, %v1174
      %v1176 = vpop.f32.mrb[0].mxu0
      %1177 = vmatprep.mubr.f32.mxu0 0.0
      %1178 = vmatmul.mubr.f32.gmra.mrb[0].mxu0 %v564
      %v1179 = vpop.f32.mrb[0].mxu0
      %v1180 = vadd.f32 %v311, %v1179
      %v1181 = vpop.f32.mrb[0].mxu0
      %1182 = vmatprep.mubr.f32.mxu0 0.0
      %1183 = vmatmul.mubr.f32.gmra.mrb[0].mxu0 %v567
      %v1184 = vpop.f32.mrb[0].mxu0
      %v1185 = vadd.f32 %v311, %v1184
      %v1186 = vpop.f32.mrb[0].mxu0
      %1187 = vmatprep.mubr.f32.mxu0 0.0
      %1188 = vmatmul.mubr.f32.gmra.mrb[0].mxu0 %v570
      %v1189 = vpop.f32.mrb[0].mxu0
      %v1190 = vadd.f32 %v311, %v1189
      %v1191 = vpop.f32.mrb[0].mxu0
      %1192 = vmatprep.mubr.f32.mxu0 0.0
      %1193 = vmatmul.mubr.f32.gmra.mrb[0].mxu0 %v573
      %v1194 = vpop.f32.mrb[0].mxu0
      %v1195 = vadd.f32 %v311, %v1194
      %v1196 = vpop.f32.mrb[0].mxu0
      %1197 = vmatprep.mubr.f32.mxu0 0.0
      %1198 = vmatmul.mubr.f32.gmra.mrb[0].mxu0 %v576
      %v1199 = vpop.f32.mrb[0].mxu0
      %v1200 = vadd.f32 %v311, %v1199
      %v1201 = vpop.f32.mrb[0].mxu0
      %1202 = vmatprep.mubr.f32.mxu0 0.0
      %1203 = vmatmul.mubr.f32.gmra.mrb[0].mxu0 %v579
      %v1204 = vpop.f32.mrb[0].mxu0
      %v1205 = vadd.f32 %v311, %v1204
      %v1206 = vpop.f32.mrb[0].mxu0
      %1207 = vmatprep.mubr.f32.mxu0 0.0
      %1208 = vmatmul.mubr.f32.gmra.mrb[0].mxu0 %v582
      %v1209 = vpop.f32.mrb[0].mxu0
      %v1210 = vadd.f32 %v311, %v1209
      %v1211 = vpop.f32.mrb[0].mxu0
      %1212 = vmatprep.mubr.f32.mxu0 0.0
      %1213 = vmatmul.mubr.f32.gmra.mrb[0].mxu0 %v585
      %v1214 = vpop.f32.mrb[0].mxu0
      %v1215 = vadd.f32 %v311, %v1214
      %v1216 = vpop.f32.mrb[0].mxu0
      %1217 = vmatprep.mubr.f32.mxu0 0.0
      %1218 = vmatmul.mubr.f32.gmra.mrb[0].mxu0 %v588
      %v1219 = vpop.f32.mrb[0].mxu0
      %v1220 = vadd.f32 %v311, %v1219
      %v1221 = vpop.f32.mrb[0].mxu0
      %1222 = vmatprep.mubr.f32.mxu0 0.0
      %1223 = vmatmul.mubr.f32.gmra.mrb[0].mxu0 %v591
      %v1224 = vpop.f32.mrb[0].mxu0
      %v1225 = vadd.f32 %v311, %v1224
      %v1226 = vpop.f32.mrb[0].mxu0
      %1227 = vmatprep.mubr.f32.mxu0 0.0
      %1228 = vmatmul.mubr.f32.gmra.mrb[0].mxu0 %v594
      %v1229 = vpop.f32.mrb[0].mxu0
      %v1230 = vadd.f32 %v311, %v1229
      %v1231 = vpop.f32.mrb[0].mxu0
      %1232 = vmatprep.mubr.f32.mxu0 0.0
      %1233 = vmatmul.mubr.f32.gmra.mrb[0].mxu0 %v597
      %v1234 = vpop.f32.mrb[0].mxu0
      %v1235 = vadd.f32 %v311, %v1234
      %v1236 = vpop.f32.mrb[0].mxu0
      %1237 = vmatprep.mubr.f32.mxu0 0.0
      %1238 = vmatmul.mubr.f32.gmra.mrb[0].mxu0 %v600
      %v1239 = vpop.f32.mrb[0].mxu0
      %v1240 = vadd.f32 %v311, %v1239
      %v1241 = vpop.f32.mrb[0].mxu0
      %1242 = vmatprep.mubr.f32.mxu0 0.0
      %1243 = vmatmul.mubr.f32.gmra.mrb[0].mxu0 %v603
      %v1244 = vpop.f32.mrb[0].mxu0
      %v1245 = vadd.f32 %v311, %v1244
      %v1246 = vpop.f32.mrb[0].mxu0
      %1247 = vmatprep.mubr.f32.mxu0 0.0
      %1248 = vmatmul.mubr.f32.gmra.mrb[0].mxu0 %v606
      %v1249 = vpop.f32.mrb[0].mxu0
      %v1250 = vadd.f32 %v311, %v1249
      %v1251 = vpop.f32.mrb[0].mxu0
      %1252 = vmatprep.mubr.f32.mxu0 0.0
      %1253 = vmatmul.mubr.f32.gmra.mrb[0].mxu0 %v609
      %v1254 = vpop.f32.mrb[0].mxu0
      %v1255 = vadd.f32 %v311, %v1254
      %v1256 = vpop.f32.mrb[0].mxu0
      %1257 = vmatprep.mubr.f32.mxu0 0.0
      %1258 = vmatmul.mubr.f32.gmra.mrb[0].mxu0 %v612
      %v1259 = vpop.f32.mrb[0].mxu0
      %v1260 = vadd.f32 %v311, %v1259
      %v1261 = vpop.f32.mrb[0].mxu0
      %1262 = vmatprep.mubr.f32.mxu0 0.0
      %1263 = vmatmul.mubr.f32.gmra.mrb[0].mxu0 %v615
      %v1264 = vpop.f32.mrb[0].mxu0
      %v1265 = vadd.f32 %v311, %v1264
      %v1266 = vpop.f32.mrb[0].mxu0
      %1267 = vmatprep.mubr.f32.mxu0 0.0
      %1268 = vmatmul.mubr.f32.gmra.mrb[0].mxu0 %v618
      %v1269 = vpop.f32.mrb[0].mxu0
      %v1270 = vadd.f32 %v311, %v1269
      %v1271 = vpop.f32.mrb[0].mxu0
      %1272 = vmatprep.mubr.f32.mxu0 0.0
      %1273 = vmatmul.mubr.f32.gmra.mrb[0].mxu0 %v621
      %v1274 = vpop.f32.mrb[0].mxu0
      %v1275 = vadd.f32 %v311, %v1274
      %v1276 = vpop.f32.mrb[0].mxu0
      %1277 = vmatprep.mubr.f32.mxu0 0.0
      %1278 = vmatmul.mubr.f32.gmra.mrb[0].mxu0 %v624
      %v1279 = vpop.f32.mrb[0].mxu0
      %v1280 = vadd.f32 %v311, %v1279
      %v1281 = vpop.f32.mrb[0].mxu0
      %1282 = vmatprep.mubr.f32.mxu0 0.0
      %1283 = vmatmul.mubr.f32.gmra.mrb[0].mxu0 %v627
      %v1284 = vpop.f32.mrb[0].mxu0
      %v1285 = vadd.f32 %v311, %v1284
      %v1286 = vpop.f32.mrb[0].mxu0
      %1287 = vmatprep.mubr.f32.mxu0 0.0
      %1288 = vmatmul.mubr.f32.gmra.mrb[0].mxu0 %v630
      %v1289 = vpop.f32.mrb[0].mxu0
      %v1290 = vadd.f32 %v311, %v1289
      %v1291 = vpop.f32.mrb[0].mxu0
      %1292 = vmatprep.mubr.f32.mxu0 0.0
      %1293 = vmatmul.mubr.f32.gmra.mrb[0].mxu0 %v633
      %v1294 = vpop.f32.mrb[0].mxu0
      %v1295 = vadd.f32 %v311, %v1294
      %v1296 = vpop.f32.mrb[0].mxu0
      %1297 = vmatprep.mubr.f32.mxu0 0.0
      %1298 = vmatmul.mubr.f32.gmra.mrb[0].mxu0 %v636
      %v1299 = vpop.f32.mrb[0].mxu0
      %v1300 = vadd.f32 %v311, %v1299
      %v1301 = vpop.f32.mrb[0].mxu0
      %1302 = vmatprep.mubr.f32.mxu0 0.0
      %1303 = vmatmul.mubr.f32.gmra.mrb[0].mxu0 %v639
      %v1304 = vpop.f32.mrb[0].mxu0
      %v1305 = vadd.f32 %v311, %v1304
      %v1306 = vpop.f32.mrb[0].mxu0
      %1307 = vmatprep.mubr.f32.mxu0 0.0
      %1308 = vmatmul.mubr.f32.gmra.mrb[0].mxu0 %v642
      %v1309 = vpop.f32.mrb[0].mxu0
      %v1310 = vadd.f32 %v311, %v1309
      %v1311 = vpop.f32.mrb[0].mxu0
      %1312 = vmatprep.mubr.f32.mxu0 0.0
      %1313 = vmatmul.mubr.f32.gmra.mrb[0].mxu0 %v645
      %v1314 = vpop.f32.mrb[0].mxu0
      %v1315 = vadd.f32 %v311, %v1314
      %v1316 = vpop.f32.mrb[0].mxu0
      %1317 = vmatprep.mubr.f32.mxu0 0.0
      %1318 = vmatmul.mubr.f32.gmra.mrb[0].mxu0 %v648
      %v1319 = vpop.f32.mrb[0].mxu0
      %v1320 = vadd.f32 %v311, %v1319
      %v1321 = vpop.f32.mrb[0].mxu0
      %1322 = vmatprep.mubr.f32.mxu0 0.0
      %1323 = vmatmul.mubr.f32.gmra.mrb[0].mxu0 %v651
      %v1324 = vpop.f32.mrb[0].mxu0
      %v1325 = vadd.f32 %v311, %v1324
      %v1326 = vpop.f32.mrb[0].mxu0
      %1327 = vmatprep.mubr.f32.mxu0 0.0
      %1328 = vmatmul.mubr.f32.gmra.mrb[0].mxu0 %v654
      %v1329 = vpop.f32.mrb[0].mxu0
      %v1330 = vadd.f32 %v311, %v1329
      %v1331 = vpop.f32.mrb[0].mxu0
      %1332 = vmatprep.mubr.f32.mxu0 0.0
      %1333 = vmatmul.mubr.f32.gmra.mrb[0].mxu0 %v657
      %v1334 = vpop.f32.mrb[0].mxu0
      %v1335 = vadd.f32 %v311, %v1334
      %v1336 = vpop.f32.mrb[0].mxu0
      %1337 = vmatprep.mubr.f32.mxu0 0.0
      %1338 = vmatmul.mubr.f32.gmra.mrb[0].mxu0 %v660
      %v1339 = vpop.f32.mrb[0].mxu0
      %v1340 = vadd.f32 %v311, %v1339
      %v1341 = vpop.f32.mrb[0].mxu0
      %1342 = vmatprep.mubr.f32.mxu0 0.0
      %1343 = vmatmul.mubr.f32.gmra.mrb[0].mxu0 %v663
      %v1344 = vpop.f32.mrb[0].mxu0
      %v1345 = vadd.f32 %v311, %v1344
      %v1346 = vpop.f32.mrb[0].mxu0
      %1347 = vmatprep.mubr.f32.mxu0 0.0
      %1348 = vmatmul.mubr.f32.gmra.mrb[0].mxu0 %v666
      %v1349 = vpop.f32.mrb[0].mxu0
      %v1350 = vadd.f32 %v311, %v1349
      %v1351 = vpop.f32.mrb[0].mxu0
      %1352 = vmatprep.mubr.f32.mxu0 0.0
      %1353 = vmatmul.mubr.f32.gmra.mrb[0].mxu0 %v669
      %v1354 = vpop.f32.mrb[0].mxu0
      %v1355 = vadd.f32 %v311, %v1354
      %v1356 = vpop.f32.mrb[0].mxu0
      %1357 = vmatprep.mubr.f32.mxu0 0.0
      %1358 = vmatmul.mubr.f32.gmra.mrb[0].mxu0 %v672
      %v1359 = vpop.f32.mrb[0].mxu0
      %v1360 = vadd.f32 %v311, %v1359
      %v1361 = vpop.f32.mrb[0].mxu0
      %1362 = vmatprep.mubr.f32.mxu0 0.0
      %1363 = vmatmul.mubr.f32.gmra.mrb[0].mxu0 %v675
      %v1364 = vpop.f32.mrb[0].mxu0
      %v1365 = vadd.f32 %v311, %v1364
      %v1366 = vpop.f32.mrb[0].mxu0
      %1367 = vmatprep.mubr.f32.mxu0 0.0
      %1368 = vmatmul.mubr.f32.gmra.mrb[0].mxu0 %v678
      %v1369 = vpop.f32.mrb[0].mxu0
      %v1370 = vadd.f32 %v311, %v1369
      %v1371 = vpop.f32.mrb[0].mxu0
      %1372 = vmatprep.mubr.f32.mxu0 0.0
      %1373 = vmatmul.mubr.f32.gmra.mrb[0].mxu0 %v681
      %v1374 = vpop.f32.mrb[0].mxu0
      %v1375 = vadd.f32 %v311, %v1374
      %v1376 = vpop.f32.mrb[0].mxu0
      %1377 = vmatprep.mubr.f32.mxu0 0.0
      %1378 = vmatmul.mubr.f32.gmra.mrb[0].mxu0 %v684
      %v1379 = vpop.f32.mrb[0].mxu0
      %v1380 = vadd.f32 %v311, %v1379
      %v1381 = vpop.f32.mrb[0].mxu0
      %1382 = vmatprep.mubr.f32.mxu0 0.0
      %1383 = vmatmul.mubr.f32.gmra.mrb[0].mxu0 %v687
      %v1384 = vpop.f32.mrb[0].mxu0
      %v1385 = vadd.f32 %v311, %v1384
      %v1386 = vpop.f32.mrb[0].mxu0
      %1387 = vmatprep.mubr.f32.mxu0 0.0
      %1388 = vmatmul.mubr.f32.gmra.mrb[0].mxu0 %v690
      %v1389 = vpop.f32.mrb[0].mxu0
      %v1390 = vadd.f32 %v311, %v1389
      %v1391 = vpop.f32.mrb[0].mxu0
      %1392 = vmatprep.mubr.f32.mxu0 0.0
      %1393 = vmatmul.mubr.f32.gmra.mrb[0].mxu0 %v693
      %v1394 = vpop.f32.mrb[0].mxu0
      %v1395 = vadd.f32 %v311, %v1394
      %v1396 = vpop.f32.mrb[0].mxu0
      %1397 = vmatprep.mubr.f32.mxu0 0.0
      %1398 = vmatmul.mubr.f32.gmra.mrb[0].mxu0 %v696
      %v1399 = vpop.f32.mrb[0].mxu0
      %v1400 = vadd.f32 %v311, %v1399
      %v1401 = vpop.f32.mrb[0].mxu0
      %1402 = vdwg.mxu0
      %v1403 = vmax.f32 %v765, 0.0
      %v1404 = vmax.f32 %v770, 0.0
      %v1405 = vmax.f32 %v775, 0.0
      %v1406 = vmax.f32 %v780, 0.0
      %v1407 = vmax.f32 %v785, 0.0
      %v1408 = vmax.f32 %v790, 0.0
      %v1409 = vmax.f32 %v795, 0.0
      %v1410 = vmax.f32 %v800, 0.0
      %v1411 = vmax.f32 %v805, 0.0
      %v1412 = vmax.f32 %v810, 0.0
      %v1413 = vmax.f32 %v815, 0.0
      %v1414 = vmax.f32 %v820, 0.0
      %v1415 = vmax.f32 %v825, 0.0
      %v1416 = vmax.f32 %v830, 0.0
      %v1417 = vmax.f32 %v835, 0.0
      %v1418 = vmax.f32 %v840, 0.0
      %v1419 = vmax.f32 %v845, 0.0
      %v1420 = vmax.f32 %v850, 0.0
      %v1421 = vmax.f32 %v855, 0.0
      %v1422 = vmax.f32 %v860, 0.0
      %v1423 = vmax.f32 %v865, 0.0
      %v1424 = vmax.f32 %v870, 0.0
      %v1425 = vmax.f32 %v875, 0.0
      %v1426 = vmax.f32 %v880, 0.0
      %v1427 = vmax.f32 %v885, 0.0
      %v1428 = vmax.f32 %v890, 0.0
      %v1429 = vmax.f32 %v895, 0.0
      %v1430 = vmax.f32 %v900, 0.0
      %v1431 = vmax.f32 %v905, 0.0
      %v1432 = vmax.f32 %v910, 0.0
      %v1433 = vmax.f32 %v915, 0.0
      %v1434 = vmax.f32 %v920, 0.0
      %v1435 = vmax.f32 %v925, 0.0
      %v1436 = vmax.f32 %v930, 0.0
      %v1437 = vmax.f32 %v935, 0.0
      %v1438 = vmax.f32 %v940, 0.0
      %v1439 = vmax.f32 %v945, 0.0
      %v1440 = vmax.f32 %v950, 0.0
      %v1441 = vmax.f32 %v955, 0.0
      %v1442 = vmax.f32 %v960, 0.0
      %v1443 = vmax.f32 %v965, 0.0
      %v1444 = vmax.f32 %v970, 0.0
      %v1445 = vmax.f32 %v975, 0.0
      %v1446 = vmax.f32 %v980, 0.0
      %v1447 = vmax.f32 %v985, 0.0
      %v1448 = vmax.f32 %v990, 0.0
      %v1449 = vmax.f32 %v995, 0.0
      %v1450 = vmax.f32 %v1000, 0.0
      %v1451 = vmax.f32 %v1005, 0.0
      %v1452 = vmax.f32 %v1010, 0.0
      %v1453 = vmax.f32 %v1015, 0.0
      %v1454 = vmax.f32 %v1020, 0.0
      %v1455 = vmax.f32 %v1025, 0.0
      %v1456 = vmax.f32 %v1030, 0.0
      %v1457 = vmax.f32 %v1035, 0.0
      %v1458 = vmax.f32 %v1040, 0.0
      %v1459 = vmax.f32 %v1045, 0.0
      %v1460 = vmax.f32 %v1050, 0.0
      %v1461 = vmax.f32 %v1055, 0.0
      %v1462 = vmax.f32 %v1060, 0.0
      %v1463 = vmax.f32 %v1065, 0.0
      %v1464 = vmax.f32 %v1070, 0.0
      %v1465 = vmax.f32 %v1075, 0.0
      %v1466 = vmax.f32 %v1080, 0.0
      %v1467 = vmax.f32 %v1085, 0.0
      %v1468 = vmax.f32 %v1090, 0.0
      %v1469 = vmax.f32 %v1095, 0.0
      %v1470 = vmax.f32 %v1100, 0.0
      %v1471 = vmax.f32 %v1105, 0.0
      %v1472 = vmax.f32 %v1110, 0.0
      %v1473 = vmax.f32 %v1115, 0.0
      %v1474 = vmax.f32 %v1120, 0.0
      %v1475 = vmax.f32 %v1125, 0.0
      %v1476 = vmax.f32 %v1130, 0.0
      %v1477 = vmax.f32 %v1135, 0.0
      %v1478 = vmax.f32 %v1140, 0.0
      %v1479 = vmax.f32 %v1145, 0.0
      %v1480 = vmax.f32 %v1150, 0.0
      %v1481 = vmax.f32 %v1155, 0.0
      %v1482 = vmax.f32 %v1160, 0.0
      %v1483 = vmax.f32 %v1165, 0.0
      %v1484 = vmax.f32 %v1170, 0.0
      %v1485 = vmax.f32 %v1175, 0.0
      %v1486 = vmax.f32 %v1180, 0.0
      %v1487 = vmax.f32 %v1185, 0.0
      %v1488 = vmax.f32 %v1190, 0.0
      %v1489 = vmax.f32 %v1195, 0.0
      %v1490 = vmax.f32 %v1200, 0.0
      %v1491 = vmax.f32 %v1205, 0.0
      %v1492 = vmax.f32 %v1210, 0.0
      %v1493 = vmax.f32 %v1215, 0.0
      %v1494 = vmax.f32 %v1220, 0.0
      %v1495 = vmax.f32 %v1225, 0.0
      %v1496 = vmax.f32 %v1230, 0.0
      %v1497 = vmax.f32 %v1235, 0.0
      %v1498 = vmax.f32 %v1240, 0.0
      %v1499 = vmax.f32 %v1245, 0.0
      %v1500 = vmax.f32 %v1250, 0.0
      %v1501 = vmax.f32 %v1255, 0.0
      %v1502 = vmax.f32 %v1260, 0.0
      %v1503 = vmax.f32 %v1265, 0.0
      %v1504 = vmax.f32 %v1270, 0.0
      %v1505 = vmax.f32 %v1275, 0.0
      %v1506 = vmax.f32 %v1280, 0.0
      %v1507 = vmax.f32 %v1285, 0.0
      %v1508 = vmax.f32 %v1290, 0.0
      %v1509 = vmax.f32 %v1295, 0.0
      %v1510 = vmax.f32 %v1300, 0.0
      %v1511 = vmax.f32 %v1305, 0.0
      %v1512 = vmax.f32 %v1310, 0.0
      %v1513 = vmax.f32 %v1315, 0.0
      %v1514 = vmax.f32 %v1320, 0.0
      %v1515 = vmax.f32 %v1325, 0.0
      %v1516 = vmax.f32 %v1330, 0.0
      %v1517 = vmax.f32 %v1335, 0.0
      %v1518 = vmax.f32 %v1340, 0.0
      %v1519 = vmax.f32 %v1345, 0.0
      %v1520 = vmax.f32 %v1350, 0.0
      %v1521 = vmax.f32 %v1355, 0.0
      %v1522 = vmax.f32 %v1360, 0.0
      %v1523 = vmax.f32 %v1365, 0.0
      %v1524 = vmax.f32 %v1370, 0.0
      %v1525 = vmax.f32 %v1375, 0.0
      %v1526 = vmax.f32 %v1380, 0.0
      %v1527 = vmax.f32 %v1385, 0.0
      %v1528 = vmax.f32 %v1390, 0.0
      %v1529 = vmax.f32 %v1395, 0.0
      %v1530 = vmax.f32 %v1400, 0.0
      %vm1531 = vcmask 64512
      %1532 = vst.msk [vmem:[%s172] sm:$0xff] %vm1531, %v1403
      %1533 = vst.msk [vmem:[%s172 + $0x8] sm:$0xff] %vm1531, %v1404
      %1534 = vst.msk [vmem:[%s172 + $0x10] sm:$0xff] %vm1531, %v1405
      %1535 = vst.msk [vmem:[%s172 + $0x18] sm:$0xff] %vm1531, %v1406
      %1536 = vst.msk [vmem:[%s172 + $0x20] sm:$0xff] %vm1531, %v1407
      %1537 = vst.msk [vmem:[%s172 + $0x28] sm:$0xff] %vm1531, %v1408
      %1538 = vst.msk [vmem:[%s172 + $0x30] sm:$0xff] %vm1531, %v1409
      %1539 = vst.msk [vmem:[%s172 + $0x38] sm:$0xff] %vm1531, %v1410
      %1540 = vst.msk [vmem:[%s172 + $0x40] sm:$0xff] %vm1531, %v1411
      %1541 = vst.msk [vmem:[%s172 + $0x48] sm:$0xff] %vm1531, %v1412
      %1542 = vst.msk [vmem:[%s172 + $0x50] sm:$0xff] %vm1531, %v1413
      %1543 = vst.msk [vmem:[%s172 + $0x58] sm:$0xff] %vm1531, %v1414
      %1544 = vst.msk [vmem:[%s172 + $0x60] sm:$0xff] %vm1531, %v1415
      %1545 = vst.msk [vmem:[%s172 + $0x68] sm:$0xff] %vm1531, %v1416
      %1546 = vst.msk [vmem:[%s172 + $0x70] sm:$0xff] %vm1531, %v1417
      %1547 = vst.msk [vmem:[%s172 + $0x78] sm:$0xff] %vm1531, %v1418
      %1548 = vst.msk [vmem:[%s172 + $0x80] sm:$0xff] %vm1531, %v1419
      %1549 = vst.msk [vmem:[%s172 + $0x88] sm:$0xff] %vm1531, %v1420
      %1550 = vst.msk [vmem:[%s172 + $0x90] sm:$0xff] %vm1531, %v1421
      %1551 = vst.msk [vmem:[%s172 + $0x98] sm:$0xff] %vm1531, %v1422
      %1552 = vst.msk [vmem:[%s172 + $0xa0] sm:$0xff] %vm1531, %v1423
      %1553 = vst.msk [vmem:[%s172 + $0xa8] sm:$0xff] %vm1531, %v1424
      %1554 = vst.msk [vmem:[%s172 + $0xb0] sm:$0xff] %vm1531, %v1425
      %1555 = vst.msk [vmem:[%s172 + $0xb8] sm:$0xff] %vm1531, %v1426
      %1556 = vst.msk [vmem:[%s172 + $0xc0] sm:$0xff] %vm1531, %v1427
      %1557 = vst.msk [vmem:[%s172 + $0xc8] sm:$0xff] %vm1531, %v1428
      %1558 = vst.msk [vmem:[%s172 + $0xd0] sm:$0xff] %vm1531, %v1429
      %1559 = vst.msk [vmem:[%s172 + $0xd8] sm:$0xff] %vm1531, %v1430
      %1560 = vst.msk [vmem:[%s172 + $0xe0] sm:$0xff] %vm1531, %v1431
      %1561 = vst.msk [vmem:[%s172 + $0xe8] sm:$0xff] %vm1531, %v1432
      %1562 = vst.msk [vmem:[%s172 + $0xf0] sm:$0xff] %vm1531, %v1433
      %1563 = vst.msk [vmem:[%s172 + $0xf8] sm:$0xff] %vm1531, %v1434
      %1564 = vst.msk [vmem:[%s172 + $0x100] sm:$0xff] %vm1531, %v1435
      %1565 = vst.msk [vmem:[%s172 + $0x108] sm:$0xff] %vm1531, %v1436
      %1566 = vst.msk [vmem:[%s172 + $0x110] sm:$0xff] %vm1531, %v1437
      %1567 = vst.msk [vmem:[%s172 + $0x118] sm:$0xff] %vm1531, %v1438
      %1568 = vst.msk [vmem:[%s172 + $0x120] sm:$0xff] %vm1531, %v1439
      %1569 = vst.msk [vmem:[%s172 + $0x128] sm:$0xff] %vm1531, %v1440
      %1570 = vst.msk [vmem:[%s172 + $0x130] sm:$0xff] %vm1531, %v1441
      %1571 = vst.msk [vmem:[%s172 + $0x138] sm:$0xff] %vm1531, %v1442
      %1572 = vst.msk [vmem:[%s172 + $0x140] sm:$0xff] %vm1531, %v1443
      %1573 = vst.msk [vmem:[%s172 + $0x148] sm:$0xff] %vm1531, %v1444
      %1574 = vst.msk [vmem:[%s172 + $0x150] sm:$0xff] %vm1531, %v1445
      %1575 = vst.msk [vmem:[%s172 + $0x158] sm:$0xff] %vm1531, %v1446
      %1576 = vst.msk [vmem:[%s172 + $0x160] sm:$0xff] %vm1531, %v1447
      %1577 = vst.msk [vmem:[%s172 + $0x168] sm:$0xff] %vm1531, %v1448
      %1578 = vst.msk [vmem:[%s172 + $0x170] sm:$0xff] %vm1531, %v1449
      %1579 = vst.msk [vmem:[%s172 + $0x178] sm:$0xff] %vm1531, %v1450
      %1580 = vst.msk [vmem:[%s172 + $0x180] sm:$0xff] %vm1531, %v1451
      %1581 = vst.msk [vmem:[%s172 + $0x188] sm:$0xff] %vm1531, %v1452
      %1582 = vst.msk [vmem:[%s172 + $0x190] sm:$0xff] %vm1531, %v1453
      %1583 = vst.msk [vmem:[%s172 + $0x198] sm:$0xff] %vm1531, %v1454
      %1584 = vst.msk [vmem:[%s172 + $0x1a0] sm:$0xff] %vm1531, %v1455
      %1585 = vst.msk [vmem:[%s172 + $0x1a8] sm:$0xff] %vm1531, %v1456
      %1586 = vst.msk [vmem:[%s172 + $0x1b0] sm:$0xff] %vm1531, %v1457
      %1587 = vst.msk [vmem:[%s172 + $0x1b8] sm:$0xff] %vm1531, %v1458
      %1588 = vst.msk [vmem:[%s172 + $0x1c0] sm:$0xff] %vm1531, %v1459
      %1589 = vst.msk [vmem:[%s172 + $0x1c8] sm:$0xff] %vm1531, %v1460
      %1590 = vst.msk [vmem:[%s172 + $0x1d0] sm:$0xff] %vm1531, %v1461
      %1591 = vst.msk [vmem:[%s172 + $0x1d8] sm:$0xff] %vm1531, %v1462
      %1592 = vst.msk [vmem:[%s172 + $0x1e0] sm:$0xff] %vm1531, %v1463
      %1593 = vst.msk [vmem:[%s172 + $0x1e8] sm:$0xff] %vm1531, %v1464
      %1594 = vst.msk [vmem:[%s172 + $0x1f0] sm:$0xff] %vm1531, %v1465
      %1595 = vst.msk [vmem:[%s172 + $0x1f8] sm:$0xff] %vm1531, %v1466
      %1596 = vst.msk [vmem:[%s172 + $0x200] sm:$0xff] %vm1531, %v1467
      %1597 = vst.msk [vmem:[%s172 + $0x208] sm:$0xff] %vm1531, %v1468
      %1598 = vst.msk [vmem:[%s172 + $0x210] sm:$0xff] %vm1531, %v1469
      %1599 = vst.msk [vmem:[%s172 + $0x218] sm:$0xff] %vm1531, %v1470
      %1600 = vst.msk [vmem:[%s172 + $0x220] sm:$0xff] %vm1531, %v1471
      %1601 = vst.msk [vmem:[%s172 + $0x228] sm:$0xff] %vm1531, %v1472
      %1602 = vst.msk [vmem:[%s172 + $0x230] sm:$0xff] %vm1531, %v1473
      %1603 = vst.msk [vmem:[%s172 + $0x238] sm:$0xff] %vm1531, %v1474
      %1604 = vst.msk [vmem:[%s172 + $0x240] sm:$0xff] %vm1531, %v1475
      %1605 = vst.msk [vmem:[%s172 + $0x248] sm:$0xff] %vm1531, %v1476
      %1606 = vst.msk [vmem:[%s172 + $0x250] sm:$0xff] %vm1531, %v1477
      %1607 = vst.msk [vmem:[%s172 + $0x258] sm:$0xff] %vm1531, %v1478
      %1608 = vst.msk [vmem:[%s172 + $0x260] sm:$0xff] %vm1531, %v1479
      %1609 = vst.msk [vmem:[%s172 + $0x268] sm:$0xff] %vm1531, %v1480
      %1610 = vst.msk [vmem:[%s172 + $0x270] sm:$0xff] %vm1531, %v1481
      %1611 = vst.msk [vmem:[%s172 + $0x278] sm:$0xff] %vm1531, %v1482
      %1612 = vst.msk [vmem:[%s172 + $0x280] sm:$0xff] %vm1531, %v1483
      %1613 = vst.msk [vmem:[%s172 + $0x288] sm:$0xff] %vm1531, %v1484
      %1614 = vst.msk [vmem:[%s172 + $0x290] sm:$0xff] %vm1531, %v1485
      %1615 = vst.msk [vmem:[%s172 + $0x298] sm:$0xff] %vm1531, %v1486
      %1616 = vst.msk [vmem:[%s172 + $0x2a0] sm:$0xff] %vm1531, %v1487
      %1617 = vst.msk [vmem:[%s172 + $0x2a8] sm:$0xff] %vm1531, %v1488
      %1618 = vst.msk [vmem:[%s172 + $0x2b0] sm:$0xff] %vm1531, %v1489
      %1619 = vst.msk [vmem:[%s172 + $0x2b8] sm:$0xff] %vm1531, %v1490
      %1620 = vst.msk [vmem:[%s172 + $0x2c0] sm:$0xff] %vm1531, %v1491
      %1621 = vst.msk [vmem:[%s172 + $0x2c8] sm:$0xff] %vm1531, %v1492
      %1622 = vst.msk [vmem:[%s172 + $0x2d0] sm:$0xff] %vm1531, %v1493
      %1623 = vst.msk [vmem:[%s172 + $0x2d8] sm:$0xff] %vm1531, %v1494
      %1624 = vst.msk [vmem:[%s172 + $0x2e0] sm:$0xff] %vm1531, %v1495
      %1625 = vst.msk [vmem:[%s172 + $0x2e8] sm:$0xff] %vm1531, %v1496
      %1626 = vst.msk [vmem:[%s172 + $0x2f0] sm:$0xff] %vm1531, %v1497
      %1627 = vst.msk [vmem:[%s172 + $0x2f8] sm:$0xff] %vm1531, %v1498
      %1628 = vst.msk [vmem:[%s172 + $0x300] sm:$0xff] %vm1531, %v1499
      %1629 = vst.msk [vmem:[%s172 + $0x308] sm:$0xff] %vm1531, %v1500
      %1630 = vst.msk [vmem:[%s172 + $0x310] sm:$0xff] %vm1531, %v1501
      %1631 = vst.msk [vmem:[%s172 + $0x318] sm:$0xff] %vm1531, %v1502
      %1632 = vst.msk [vmem:[%s172 + $0x320] sm:$0xff] %vm1531, %v1503
      %1633 = vst.msk [vmem:[%s172 + $0x328] sm:$0xff] %vm1531, %v1504
      %1634 = vst.msk [vmem:[%s172 + $0x330] sm:$0xff] %vm1531, %v1505
      %1635 = vst.msk [vmem:[%s172 + $0x338] sm:$0xff] %vm1531, %v1506
      %1636 = vst.msk [vmem:[%s172 + $0x340] sm:$0xff] %vm1531, %v1507
      %1637 = vst.msk [vmem:[%s172 + $0x348] sm:$0xff] %vm1531, %v1508
      %1638 = vst.msk [vmem:[%s172 + $0x350] sm:$0xff] %vm1531, %v1509
      %1639 = vst.msk [vmem:[%s172 + $0x358] sm:$0xff] %vm1531, %v1510
      %1640 = vst.msk [vmem:[%s172 + $0x360] sm:$0xff] %vm1531, %v1511
      %1641 = vst.msk [vmem:[%s172 + $0x368] sm:$0xff] %vm1531, %v1512
      %1642 = vst.msk [vmem:[%s172 + $0x370] sm:$0xff] %vm1531, %v1513
      %1643 = vst.msk [vmem:[%s172 + $0x378] sm:$0xff] %vm1531, %v1514
      %1644 = vst.msk [vmem:[%s172 + $0x380] sm:$0xff] %vm1531, %v1515
      %1645 = vst.msk [vmem:[%s172 + $0x388] sm:$0xff] %vm1531, %v1516
      %1646 = vst.msk [vmem:[%s172 + $0x390] sm:$0xff] %vm1531, %v1517
      %1647 = vst.msk [vmem:[%s172 + $0x398] sm:$0xff] %vm1531, %v1518
      %1648 = vst.msk [vmem:[%s172 + $0x3a0] sm:$0xff] %vm1531, %v1519
      %1649 = vst.msk [vmem:[%s172 + $0x3a8] sm:$0xff] %vm1531, %v1520
      %1650 = vst.msk [vmem:[%s172 + $0x3b0] sm:$0xff] %vm1531, %v1521
      %1651 = vst.msk [vmem:[%s172 + $0x3b8] sm:$0xff] %vm1531, %v1522
      %1652 = vst.msk [vmem:[%s172 + $0x3c0] sm:$0xff] %vm1531, %v1523
      %1653 = vst.msk [vmem:[%s172 + $0x3c8] sm:$0xff] %vm1531, %v1524
      %1654 = vst.msk [vmem:[%s172 + $0x3d0] sm:$0xff] %vm1531, %v1525
      %1655 = vst.msk [vmem:[%s172 + $0x3d8] sm:$0xff] %vm1531, %v1526
      %1656 = vst.msk [vmem:[%s172 + $0x3e0] sm:$0xff] %vm1531, %v1527
      %1657 = vst.msk [vmem:[%s172 + $0x3e8] sm:$0xff] %vm1531, %v1528
      %1658 = vst.msk [vmem:[%s172 + $0x3f0] sm:$0xff] %vm1531, %v1529
      %1659 = vst.msk [vmem:[%s172 + $0x3f8] sm:$0xff] %vm1531, %v1530
      %s1660 = smul.u32 128, %s14
      %p1661 = scmp.lt.s32.totalorder %s1660, 255
      %s1662 = scalar_select %p1661, %s1660, 255
      %s1663 = smul.addr %s1662, 8
      %s1664 = scalar_lea.vmem %s3, %s1663
      // Predicated region
      $region33: #{_lambda_.16} parent=31 // pred_check
        %p1665 = pneg %p100
      $region34: #{_lambda_.16} parent=31 // pred_check_branch
        %1667 = sbr.rel (%p1665) target = $region36
      $region35: #{_lambda_.16} parent=31 // pred_region
        %s1668 = smul.u32 128, %s14
      $region36: #{_lambda_.16} parent=31 // pred_fallthru
        _
    $region32: #{_lambda_.16} parent=5 // pred_fallthru
      _
    %p1669 = scmp.le.s32.totalorder 2, %s9
    // Predicated region
    $region37: #{_lambda_.16} parent=5 // pred_check
      %p1670 = pneg %p1669
    $region38: #{_lambda_.16} parent=5 // pred_check_branch
      %1672 = sbr.rel (%p1670) target = $region40
    $region39: #{_lambda_.16} parent=5 // pred_region
      %s1673 = ssub.s32 %s9, 2
      // Predicated region
      $region41: #{_lambda_.16} parent=39 // pred_check
        %p1674 = pneg %p106
      $region42: #{_lambda_.16} parent=39 // pred_check_branch
        %1676 = sbr.rel (%p1674) target = $region44
      $region43: #{_lambda_.16} parent=39 // pred_region
        %s1677 = smul.u32 128, %s15
        %p1678 = scmp.lt.s32.totalorder %s1677, 255
        %s1679 = scalar_select %p1678, %s1677, 255
        %s1680 = smul.addr %s1679, 8
        %s1681 = scalar_lea.vmem %s3, %s1680
      $region44: #{_lambda_.16} parent=39 // pred_fallthru
        _
    $region40: #{_lambda_.16} parent=5 // pred_fallthru
      _
  $region6: #{_lambda_.16} parent=0 // loop_footer
    %s13 = sadd.s32 1, %s9
  $region7: #{_lambda_.16} parent=0 // loop_footer_branch
    %8 = sbr.rel target = $region3
  $region8: #{_lambda_.16} parent=0 // loop_exit
    _

// kernel: _lambda_.17
$region0: #{_lambda_.17}
  #allocation0 [shape = 'u32[]', space=smem, size = 0x4, offset = 0x4, fixed_abs, tag = 'smem constant byte address 0x4 - core index']
  #allocation1 [shape = 'u32[144,128]{1,0:T(1,128)}', space=vmem, size = 0x12000, scoped, tag = 'internal scratch']
  %s0 = inlined_call_operand.vmem [shape: f32[2048,72], index: 0, kind: input, shape index: {}]
  %s1 = inlined_call_operand.vmem [shape: f32[72,8], index: 1, kind: input, shape index: {}]
  %s2 = inlined_call_operand.vmem [shape: f32[1,8], index: 2, kind: input, shape index: {}]
  %s3 = inlined_call_operand.vmem [shape: f32[2048,8], index: 3, kind: output, shape index: {}]
  %s4 = sld [smem:[#allocation0]]
  $region45: #{_lambda_.17} parent=0
    _
  %s6 = ssub.s32 1, %s4
  %s7 = scalar_select 0, %s6, %s4
  loop: start=0, step=1, limit=4
  $region2: #{_lambda_.17} parent=0 // loop_pre_header
    _
  $region3: #{_lambda_.17} parent=0 // loop_header
    %s9 = sphi 0, %s13
    %p10 = scmp.ge.s32.totalorder %s9, 4
    %s19 = sphi 0, %s21
    %s22 = sphi 0, %s19
    %s23 = sphi 0, %s22
    %s39 = sphi 0, %s23
    %s43 = sphi 0, %s43
    %s45 = sphi 0, %s43
    %s46 = sphi 0, %s45
    %s60 = sphi 0, %s46
    %s64 = sphi 0, %s64
    %s66 = sphi 0, %s64
    %s67 = sphi 0, %s66
    %s81 = sphi 0, %s67
    %s87 = sphi 0, %s89
    %s90 = sphi 0, %s87
    %s91 = sphi 0, %s90
    %s107 = sphi 0, %s91
  $region4: #{_lambda_.17} parent=0 // loop_header_branch
    %12 = sbr.rel (%p10) target = $region8
  $region5: #{_lambda_.17} parent=0 // loop_body
    %s14 = ssub.s32 %s9, 1
    %s15 = ssub.s32 %s9, 2
    %s16 = sadd.s32 %s9, 1
    %s17 = ssub.s32 %s9, %s16
    %p18 = scmp.eq.s32.totalorder %s17, 0
    %s20 = sadd.s32 %s19, 1
    %s21 = scalar_select %p18, %s19, %s20
    %p24 = pneg %p18
    %p25 = scmp.eq.s32.totalorder %s9, 1
    %p26 = por %p24, %p25
    %p27 = scmp.ne.s32.totalorder %s19, %s22
    %p28 = scmp.eq.s32.totalorder %s9, 0
    %p29 = por %p27, %p28
    %p30 = scmp.ne.s32.totalorder %s19, %s22
    %p31 = scmp.eq.s32.totalorder %s14, 1
    %p32 = por %p30, %p31
    %p33 = scmp.ne.s32.totalorder %s22, %s23
    %p34 = scmp.eq.s32.totalorder %s14, 0
    %p35 = por %p33, %p34
    %p36 = scmp.ne.s32.totalorder %s22, %s23
    %p37 = scmp.eq.s32.totalorder %s15, 1
    %p38 = por %p36, %p37
    %p40 = scmp.ne.s32.totalorder %s23, %s39
    %p41 = scmp.eq.s32.totalorder %s15, 0
    %p42 = por %p40, %p41
    %s44 = sadd.s32 %s43, 1
    %p47 = scmp.eq.s32.totalorder %s9, 1
    %p48 = scmp.ne.s32.totalorder %s43, %s45
    %p49 = scmp.eq.s32.totalorder %s9, 0
    %p50 = por %p48, %p49
    %p51 = scmp.ne.s32.totalorder %s43, %s45
    %p52 = scmp.eq.s32.totalorder %s14, 1
    %p53 = por %p51, %p52
    %p54 = scmp.ne.s32.totalorder %s45, %s46
    %p55 = scmp.eq.s32.totalorder %s14, 0
    %p56 = por %p54, %p55
    %p57 = scmp.ne.s32.totalorder %s45, %s46
    %p58 = scmp.eq.s32.totalorder %s15, 1
    %p59 = por %p57, %p58
    %p61 = scmp.ne.s32.totalorder %s46, %s60
    %p62 = scmp.eq.s32.totalorder %s15, 0
    %p63 = por %p61, %p62
    %s65 = sadd.s32 %s64, 1
    %p68 = scmp.eq.s32.totalorder %s9, 1
    %p69 = scmp.ne.s32.totalorder %s64, %s66
    %p70 = scmp.eq.s32.totalorder %s9, 0
    %p71 = por %p69, %p70
    %p72 = scmp.ne.s32.totalorder %s64, %s66
    %p73 = scmp.eq.s32.totalorder %s14, 1
    %p74 = por %p72, %p73
    %p75 = scmp.ne.s32.totalorder %s66, %s67
    %p76 = scmp.eq.s32.totalorder %s14, 0
    %p77 = por %p75, %p76
    %p78 = scmp.ne.s32.totalorder %s66, %s67
    %p79 = scmp.eq.s32.totalorder %s15, 1
    %p80 = por %p78, %p79
    %p82 = scmp.ne.s32.totalorder %s67, %s81
    %p83 = scmp.eq.s32.totalorder %s15, 0
    %p84 = por %p82, %p83
    %s85 = ssub.s32 %s9, %s16
    %p86 = scmp.eq.s32.totalorder %s85, 0
    %s88 = sadd.s32 %s87, 1
    %s89 = scalar_select %p86, %s87, %s88
    %p92 = pneg %p86
    %p93 = scmp.eq.s32.totalorder %s9, 1
    %p94 = por %p92, %p93
    %p95 = scmp.ne.s32.totalorder %s87, %s90
    %p96 = scmp.eq.s32.totalorder %s9, 0
    %p97 = por %p95, %p96
    %p98 = scmp.ne.s32.totalorder %s87, %s90
    %p99 = scmp.eq.s32.totalorder %s14, 1
    %p100 = por %p98, %p99
    %p101 = scmp.ne.s32.totalorder %s90, %s91
    %p102 = scmp.eq.s32.totalorder %s14, 0
    %p103 = por %p101, %p102
    %p104 = scmp.ne.s32.totalorder %s90, %s91
    %p105 = scmp.eq.s32.totalorder %s15, 1
    %p106 = por %p104, %p105
    %p108 = scmp.ne.s32.totalorder %s91, %s107
    %p109 = scmp.eq.s32.totalorder %s15, 0
    %p110 = por %p108, %p109
    %p111 = scmp.le.s32.totalorder 1, %s9
    %p112 = scmp.lt.s32.totalorder %s9, 3
    %p113 = pnand %p111, %p112
    %p114 = pneg %p113
    // Predicated region
    $region9: #{_lambda_.17} parent=5 // pred_check
      _
    $region10: #{_lambda_.17} parent=5 // pred_check_branch
      %116 = sbr.rel (%p113) target = $region12
    $region11: #{_lambda_.17} parent=5 // pred_region
      %s117 = ssub.s32 %s9, 1
      // Predicated region
      $region13: #{_lambda_.17} parent=11 // pred_check
        %p118 = pneg %p56
      $region14: #{_lambda_.17} parent=11 // pred_check_branch
        %120 = sbr.rel (%p118) target = $region16
      $region15: #{_lambda_.17} parent=11 // pred_region
        _
      $region16: #{_lambda_.17} parent=11 // pred_fallthru
        _
      // Predicated region
      $region17: #{_lambda_.17} parent=11 // pred_check
        %p121 = pneg %p77
      $region18: #{_lambda_.17} parent=11 // pred_check_branch
        %123 = sbr.rel (%p121) target = $region20
      $region19: #{_lambda_.17} parent=11 // pred_region
        _
      $region20: #{_lambda_.17} parent=11 // pred_fallthru
        _
    $region12: #{_lambda_.17} parent=5 // pred_fallthru
      _
    %p124 = scmp.lt.s32.totalorder %s9, 2
    // Predicated region
    $region21: #{_lambda_.17} parent=5 // pred_check
      %p125 = pneg %p124
    $region22: #{_lambda_.17} parent=5 // pred_check_branch
      %127 = sbr.rel (%p125) target = $region24
    $region23: #{_lambda_.17} parent=5 // pred_region
      // Predicated region
      $region25: #{_lambda_.17} parent=23 // pred_check
        %p128 = pneg %p29
      $region26: #{_lambda_.17} parent=23 // pred_check_branch
        %130 = sbr.rel (%p128) target = $region28
      $region27: #{_lambda_.17} parent=23 // pred_region
        %s131 = smul.u32 128, %s9
        %p132 = scmp.lt.s32.totalorder %s131, 255
        %s133 = scalar_select %p132, %s131, 255
        %s134 = smul.addr %s133, 8
        %s135 = scalar_lea.vmem %s0, %s134
        %s136 = smul.u32 128, %s9
      $region28: #{_lambda_.17} parent=23 // pred_fallthru
        _
    $region24: #{_lambda_.17} parent=5 // pred_fallthru
      _
    %p137 = scmp.le.s32.totalorder 1, %s9
    %p138 = scmp.lt.s32.totalorder %s9, 3
    %p139 = pnand %p137, %p138
    %p140 = pneg %p139
    // Predicated region
    $region29: #{_lambda_.17} parent=5 // pred_check
      _
    $region30: #{_lambda_.17} parent=5 // pred_check_branch
      %142 = sbr.rel (%p139) target = $region32
    $region31: #{_lambda_.17} parent=5 // pred_region
      %s143 = ssub.s32 %s9, 1
      %s144 = smul.u32 128, %s14
      %p145 = scmp.lt.s32.totalorder %s144, 255
      %s146 = scalar_select %p145, %s144, 255
      %s147 = smul.addr %s146, 8
      %s148 = scalar_lea.vmem %s0, %s147
      %p149 = pneg %p35
      %p150 = pneg %p32
      %p151 = pneg %p56
      %p152 = pneg %p53
      %p153 = pneg %p77
      %p154 = pneg %p74
      %p155 = pneg %p103
      %p156 = pneg %p100
      %s157 = smul.u32 128, %s14
      %p158 = scmp.lt.s32.totalorder %s157, 255
      %s159 = scalar_select %p158, %s157, 255
      %s160 = smul.addr %s159, 8
      %s161 = scalar_lea.vmem %s3, %s160
      %s162 = smul.u32 128, %s14
      %p163 = scmp.lt.s32.totalorder %s162, 255
      %s164 = scalar_select %p163, %s162, 255
      %s165 = smul.addr %s164, 8
      %s166 = scalar_lea.vmem %s0, %s165
      %s167 = smul.u32 128, %s14
      %s168 = smul.u32 128, %s14
      %p169 = scmp.lt.s32.totalorder %s168, 255
      %s170 = scalar_select %p169, %s168, 255
      %s171 = smul.addr %s170, 8
      %s172 = scalar_lea.vmem %s3, %s171
      %s173 = smul.u32 128, %s14
      %v174 = vld [vmem:[%s166] sm:$0xff]
      %v175 = vld [vmem:[%s166 + $0x8] sm:$0xff]
      %v176 = vld [vmem:[%s166 + $0x10] sm:$0xff]
      %v177 = vld [vmem:[%s166 + $0x18] sm:$0xff]
      %v178 = vld [vmem:[%s166 + $0x20] sm:$0xff]
      %v179 = vld [vmem:[%s166 + $0x28] sm:$0xff]
      %v180 = vld [vmem:[%s166 + $0x30] sm:$0xff]
      %v181 = vld [vmem:[%s166 + $0x38] sm:$0xff]
      %v182 = vld [vmem:[%s166 + $0x40] sm:$0xff]
      %v183 = vld [vmem:[%s166 + $0x48] sm:$0xff]
      %v184 = vld [vmem:[%s166 + $0x50] sm:$0xff]
      %v185 = vld [vmem:[%s166 + $0x58] sm:$0xff]
      %v186 = vld [vmem:[%s166 + $0x60] sm:$0xff]
      %v187 = vld [vmem:[%s166 + $0x68] sm:$0xff]
      %v188 = vld [vmem:[%s166 + $0x70] sm:$0xff]
      %v189 = vld [vmem:[%s166 + $0x78] sm:$0xff]
      %v190 = vld [vmem:[%s166 + $0x80] sm:$0xff]
      %v191 = vld [vmem:[%s166 + $0x88] sm:$0xff]
      %v192 = vld [vmem:[%s166 + $0x90] sm:$0xff]
      %v193 = vld [vmem:[%s166 + $0x98] sm:$0xff]
      %v194 = vld [vmem:[%s166 + $0xa0] sm:$0xff]
      %v195 = vld [vmem:[%s166 + $0xa8] sm:$0xff]
      %v196 = vld [vmem:[%s166 + $0xb0] sm:$0xff]
      %v197 = vld [vmem:[%s166 + $0xb8] sm:$0xff]
      %v198 = vld [vmem:[%s166 + $0xc0] sm:$0xff]
      %v199 = vld [vmem:[%s166 + $0xc8] sm:$0xff]
      %v200 = vld [vmem:[%s166 + $0xd0] sm:$0xff]
      %v201 = vld [vmem:[%s166 + $0xd8] sm:$0xff]
      %v202 = vld [vmem:[%s166 + $0xe0] sm:$0xff]
      %v203 = vld [vmem:[%s166 + $0xe8] sm:$0xff]
      %v204 = vld [vmem:[%s166 + $0xf0] sm:$0xff]
      %v205 = vld [vmem:[%s166 + $0xf8] sm:$0xff]
      %v206 = vld [vmem:[%s166 + $0x100] sm:$0xff]
      %v207 = vld [vmem:[%s166 + $0x108] sm:$0xff]
      %v208 = vld [vmem:[%s166 + $0x110] sm:$0xff]
      %v209 = vld [vmem:[%s166 + $0x118] sm:$0xff]
      %v210 = vld [vmem:[%s166 + $0x120] sm:$0xff]
      %v211 = vld [vmem:[%s166 + $0x128] sm:$0xff]
      %v212 = vld [vmem:[%s166 + $0x130] sm:$0xff]
      %v213 = vld [vmem:[%s166 + $0x138] sm:$0xff]
      %v214 = vld [vmem:[%s166 + $0x140] sm:$0xff]
      %v215 = vld [vmem:[%s166 + $0x148] sm:$0xff]
      %v216 = vld [vmem:[%s166 + $0x150] sm:$0xff]
      %v217 = vld [vmem:[%s166 + $0x158] sm:$0xff]
      %v218 = vld [vmem:[%s166 + $0x160] sm:$0xff]
      %v219 = vld [vmem:[%s166 + $0x168] sm:$0xff]
      %v220 = vld [vmem:[%s166 + $0x170] sm:$0xff]
      %v221 = vld [vmem:[%s166 + $0x178] sm:$0xff]
      %v222 = vld [vmem:[%s166 + $0x180] sm:$0xff]
      %v223 = vld [vmem:[%s166 + $0x188] sm:$0xff]
      %v224 = vld [vmem:[%s166 + $0x190] sm:$0xff]
      %v225 = vld [vmem:[%s166 + $0x198] sm:$0xff]
      %v226 = vld [vmem:[%s166 + $0x1a0] sm:$0xff]
      %v227 = vld [vmem:[%s166 + $0x1a8] sm:$0xff]
      %v228 = vld [vmem:[%s166 + $0x1b0] sm:$0xff]
      %v229 = vld [vmem:[%s166 + $0x1b8] sm:$0xff]
      %v230 = vld [vmem:[%s166 + $0x1c0] sm:$0xff]
      %v231 = vld [vmem:[%s166 + $0x1c8] sm:$0xff]
      %v232 = vld [vmem:[%s166 + $0x1d0] sm:$0xff]
      %v233 = vld [vmem:[%s166 + $0x1d8] sm:$0xff]
      %v234 = vld [vmem:[%s166 + $0x1e0] sm:$0xff]
      %v235 = vld [vmem:[%s166 + $0x1e8] sm:$0xff]
      %v236 = vld [vmem:[%s166 + $0x1f0] sm:$0xff]
      %v237 = vld [vmem:[%s166 + $0x1f8] sm:$0xff]
      %v238 = vld [vmem:[%s166 + $0x200] sm:$0xff]
      %v239 = vld [vmem:[%s166 + $0x208] sm:$0xff]
      %v240 = vld [vmem:[%s166 + $0x210] sm:$0xff]
      %v241 = vld [vmem:[%s166 + $0x218] sm:$0xff]
      %v242 = vld [vmem:[%s166 + $0x220] sm:$0xff]
      %v243 = vld [vmem:[%s166 + $0x228] sm:$0xff]
      %v244 = vld [vmem:[%s166 + $0x230] sm:$0xff]
      %v245 = vld [vmem:[%s166 + $0x238] sm:$0xff]
      %v246 = vld [vmem:[%s166 + $0x240] sm:$0xff]
      %v247 = vld [vmem:[%s166 + $0x248] sm:$0xff]
      %v248 = vld [vmem:[%s166 + $0x250] sm:$0xff]
      %v249 = vld [vmem:[%s166 + $0x258] sm:$0xff]
      %v250 = vld [vmem:[%s166 + $0x260] sm:$0xff]
      %v251 = vld [vmem:[%s166 + $0x268] sm:$0xff]
      %v252 = vld [vmem:[%s166 + $0x270] sm:$0xff]
      %v253 = vld [vmem:[%s166 + $0x278] sm:$0xff]
      %v254 = vld [vmem:[%s166 + $0x280] sm:$0xff]
      %v255 = vld [vmem:[%s166 + $0x288] sm:$0xff]
      %v256 = vld [vmem:[%s166 + $0x290] sm:$0xff]
      %v257 = vld [vmem:[%s166 + $0x298] sm:$0xff]
      %v258 = vld [vmem:[%s166 + $0x2a0] sm:$0xff]
      %v259 = vld [vmem:[%s166 + $0x2a8] sm:$0xff]
      %v260 = vld [vmem:[%s166 + $0x2b0] sm:$0xff]
      %v261 = vld [vmem:[%s166 + $0x2b8] sm:$0xff]
      %v262 = vld [vmem:[%s166 + $0x2c0] sm:$0xff]
      %v263 = vld [vmem:[%s166 + $0x2c8] sm:$0xff]
      %v264 = vld [vmem:[%s166 + $0x2d0] sm:$0xff]
      %v265 = vld [vmem:[%s166 + $0x2d8] sm:$0xff]
      %v266 = vld [vmem:[%s166 + $0x2e0] sm:$0xff]
      %v267 = vld [vmem:[%s166 + $0x2e8] sm:$0xff]
      %v268 = vld [vmem:[%s166 + $0x2f0] sm:$0xff]
      %v269 = vld [vmem:[%s166 + $0x2f8] sm:$0xff]
      %v270 = vld [vmem:[%s166 + $0x300] sm:$0xff]
      %v271 = vld [vmem:[%s166 + $0x308] sm:$0xff]
      %v272 = vld [vmem:[%s166 + $0x310] sm:$0xff]
      %v273 = vld [vmem:[%s166 + $0x318] sm:$0xff]
      %v274 = vld [vmem:[%s166 + $0x320] sm:$0xff]
      %v275 = vld [vmem:[%s166 + $0x328] sm:$0xff]
      %v276 = vld [vmem:[%s166 + $0x330] sm:$0xff]
      %v277 = vld [vmem:[%s166 + $0x338] sm:$0xff]
      %v278 = vld [vmem:[%s166 + $0x340] sm:$0xff]
      %v279 = vld [vmem:[%s166 + $0x348] sm:$0xff]
      %v280 = vld [vmem:[%s166 + $0x350] sm:$0xff]
      %v281 = vld [vmem:[%s166 + $0x358] sm:$0xff]
      %v282 = vld [vmem:[%s166 + $0x360] sm:$0xff]
      %v283 = vld [vmem:[%s166 + $0x368] sm:$0xff]
      %v284 = vld [vmem:[%s166 + $0x370] sm:$0xff]
      %v285 = vld [vmem:[%s166 + $0x378] sm:$0xff]
      %v286 = vld [vmem:[%s166 + $0x380] sm:$0xff]
      %v287 = vld [vmem:[%s166 + $0x388] sm:$0xff]
      %v288 = vld [vmem:[%s166 + $0x390] sm:$0xff]
      %v289 = vld [vmem:[%s166 + $0x398] sm:$0xff]
      %v290 = vld [vmem:[%s166 + $0x3a0] sm:$0xff]
      %v291 = vld [vmem:[%s166 + $0x3a8] sm:$0xff]
      %v292 = vld [vmem:[%s166 + $0x3b0] sm:$0xff]
      %v293 = vld [vmem:[%s166 + $0x3b8] sm:$0xff]
      %v294 = vld [vmem:[%s166 + $0x3c0] sm:$0xff]
      %v295 = vld [vmem:[%s166 + $0x3c8] sm:$0xff]
      %v296 = vld [vmem:[%s166 + $0x3d0] sm:$0xff]
      %v297 = vld [vmem:[%s166 + $0x3d8] sm:$0xff]
      %v298 = vld [vmem:[%s166 + $0x3e0] sm:$0xff]
      %v299 = vld [vmem:[%s166 + $0x3e8] sm:$0xff]
      %v300 = vld [vmem:[%s166 + $0x3f0] sm:$0xff]
      %v301 = vld [vmem:[%s166 + $0x3f8] sm:$0xff]
      %v302 = vld [vmem:[%s1] sm:$0xff]
      %v303 = vld [vmem:[%s1 + $0x8] sm:$0xff]
      %v304 = vld [vmem:[%s1 + $0x10] sm:$0xff]
      %v305 = vld [vmem:[%s1 + $0x18] sm:$0xff]
      %v306 = vld [vmem:[%s1 + $0x20] sm:$0xff]
      %v307 = vld [vmem:[%s1 + $0x28] sm:$0xff]
      %v308 = vld [vmem:[%s1 + $0x30] sm:$0xff]
      %v309 = vld [vmem:[%s1 + $0x38] sm:$0xff]
      %v310 = vld [vmem:[%s1 + $0x40] sm:$0xff]
      %v311 = vld [vmem:[%s2] sm:$0x1]
      %v313 = vlaneseq
      %v314 = vshrl.u32 %v313, 7
      %v315 = vsub.s32 0, %v314
      %v316 = vrot.slane %v311, %v315
      %vm318 = vcmask 588800
      %v320 = vsel %vm318, %v174, 0
      %v323 = vsel %vm318, %v175, 0
      %v326 = vsel %vm318, %v176, 0
      %v329 = vsel %vm318, %v177, 0
      %v332 = vsel %vm318, %v178, 0
      %v335 = vsel %vm318, %v179, 0
      %v338 = vsel %vm318, %v180, 0
      %v341 = vsel %vm318, %v181, 0
      %v344 = vsel %vm318, %v182, 0
      %v347 = vsel %vm318, %v183, 0
      %v350 = vsel %vm318, %v184, 0
      %v353 = vsel %vm318, %v185, 0
      %v356 = vsel %vm318, %v186, 0
      %v359 = vsel %vm318, %v187, 0
      %v362 = vsel %vm318, %v188, 0
      %v365 = vsel %vm318, %v189, 0
      %v368 = vsel %vm318, %v190, 0
      %v371 = vsel %vm318, %v191, 0
      %v374 = vsel %vm318, %v192, 0
      %v377 = vsel %vm318, %v193, 0
      %v380 = vsel %vm318, %v194, 0
      %v383 = vsel %vm318, %v195, 0
      %v386 = vsel %vm318, %v196, 0
      %v389 = vsel %vm318, %v197, 0
      %v392 = vsel %vm318, %v198, 0
      %v395 = vsel %vm318, %v199, 0
      %v398 = vsel %vm318, %v200, 0
      %v401 = vsel %vm318, %v201, 0
      %v404 = vsel %vm318, %v202, 0
      %v407 = vsel %vm318, %v203, 0
      %v410 = vsel %vm318, %v204, 0
      %v413 = vsel %vm318, %v205, 0
      %v416 = vsel %vm318, %v206, 0
      %v419 = vsel %vm318, %v207, 0
      %v422 = vsel %vm318, %v208, 0
      %v425 = vsel %vm318, %v209, 0
      %v428 = vsel %vm318, %v210, 0
      %v431 = vsel %vm318, %v211, 0
      %v434 = vsel %vm318, %v212, 0
      %v437 = vsel %vm318, %v213, 0
      %v440 = vsel %vm318, %v214, 0
      %v443 = vsel %vm318, %v215, 0
      %v446 = vsel %vm318, %v216, 0
      %v449 = vsel %vm318, %v217, 0
      %v452 = vsel %vm318, %v218, 0
      %v455 = vsel %vm318, %v219, 0
      %v458 = vsel %vm318, %v220, 0
      %v461 = vsel %vm318, %v221, 0
      %v464 = vsel %vm318, %v222, 0
      %v467 = vsel %vm318, %v223, 0
      %v470 = vsel %vm318, %v224, 0
      %v473 = vsel %vm318, %v225, 0
      %v476 = vsel %vm318, %v226, 0
      %v479 = vsel %vm318, %v227, 0
      %v482 = vsel %vm318, %v228, 0
      %v485 = vsel %vm318, %v229, 0
      %v488 = vsel %vm318, %v230, 0
      %v491 = vsel %vm318, %v231, 0
      %v494 = vsel %vm318, %v232, 0
      %v497 = vsel %vm318, %v233, 0
      %v500 = vsel %vm318, %v234, 0
      %v503 = vsel %vm318, %v235, 0
      %v506 = vsel %vm318, %v236, 0
      %v509 = vsel %vm318, %v237, 0
      %v512 = vsel %vm318, %v238, 0
      %v515 = vsel %vm318, %v239, 0
      %v518 = vsel %vm318, %v240, 0
      %v521 = vsel %vm318, %v241, 0
      %v524 = vsel %vm318, %v242, 0
      %v527 = vsel %vm318, %v243, 0
      %v530 = vsel %vm318, %v244, 0
      %v533 = vsel %vm318, %v245, 0
      %v536 = vsel %vm318, %v246, 0
      %v539 = vsel %vm318, %v247, 0
      %v542 = vsel %vm318, %v248, 0
      %v545 = vsel %vm318, %v249, 0
      %v548 = vsel %vm318, %v250, 0
      %v551 = vsel %vm318, %v251, 0
      %v554 = vsel %vm318, %v252, 0
      %v557 = vsel %vm318, %v253, 0
      %v560 = vsel %vm318, %v254, 0
      %v563 = vsel %vm318, %v255, 0
      %v566 = vsel %vm318, %v256, 0
      %v569 = vsel %vm318, %v257, 0
      %v572 = vsel %vm318, %v258, 0
      %v575 = vsel %vm318, %v259, 0
      %v578 = vsel %vm318, %v260, 0
      %v581 = vsel %vm318, %v261, 0
      %v584 = vsel %vm318, %v262, 0
      %v587 = vsel %vm318, %v263, 0
      %v590 = vsel %vm318, %v264, 0
      %v593 = vsel %vm318, %v265, 0
      %v596 = vsel %vm318, %v266, 0
      %v599 = vsel %vm318, %v267, 0
      %v602 = vsel %vm318, %v268, 0
      %v605 = vsel %vm318, %v269, 0
      %v608 = vsel %vm318, %v270, 0
      %v611 = vsel %vm318, %v271, 0
      %v614 = vsel %vm318, %v272, 0
      %v617 = vsel %vm318, %v273, 0
      %v620 = vsel %vm318, %v274, 0
      %v623 = vsel %vm318, %v275, 0
      %v626 = vsel %vm318, %v276, 0
      %v629 = vsel %vm318, %v277, 0
      %v632 = vsel %vm318, %v278, 0
      %v635 = vsel %vm318, %v279, 0
      %v638 = vsel %vm318, %v280, 0
      %v641 = vsel %vm318, %v281, 0
      %v644 = vsel %vm318, %v282, 0
      %v647 = vsel %vm318, %v283, 0
      %v650 = vsel %vm318, %v284, 0
      %v653 = vsel %vm318, %v285, 0
      %v656 = vsel %vm318, %v286, 0
      %v659 = vsel %vm318, %v287, 0
      %v662 = vsel %vm318, %v288, 0
      %v665 = vsel %vm318, %v289, 0
      %v668 = vsel %vm318, %v290, 0
      %v671 = vsel %vm318, %v291, 0
      %v674 = vsel %vm318, %v292, 0
      %v677 = vsel %vm318, %v293, 0
      %v680 = vsel %vm318, %v294, 0
      %v683 = vsel %vm318, %v295, 0
      %v686 = vsel %vm318, %v296, 0
      %v689 = vsel %vm318, %v297, 0
      %v692 = vsel %vm318, %v298, 0
      %v695 = vsel %vm318, %v299, 0
      %v698 = vsel %vm318, %v300, 0
      %v701 = vsel %vm318, %v301, 0
      %703 = vmatprep.subr.mxu0 0.0
      %704 = vmatpush1.msra.mxu0 %v302
      %705 = vmatprep.subr.mxu0 0.0
      %706 = vmatpush1.msra.mxu0 %v303
      %707 = vmatprep.subr.mxu0 0.0
      %708 = vmatpush1.msra.mxu0 %v304
      %709 = vmatprep.subr.mxu0 0.0
      %710 = vmatpush1.msra.mxu0 %v305
      %711 = vmatprep.subr.mxu0 0.0
      %712 = vmatpush1.msra.mxu0 %v306
      %713 = vmatprep.subr.mxu0 0.0
      %714 = vmatpush1.msra.mxu0 %v307
      %715 = vmatprep.subr.mxu0 0.0
      %716 = vmatpush1.msra.mxu0 %v308
      %717 = vmatprep.subr.mxu0 0.0
      %718 = vmatpush1.msra.mxu0 %v309
      %719 = vmatprep.subr.mxu0 0.0
      %720 = vmatpush1.msra.mxu0 %v310
      %721 = vmatprep.subr.mxu0 0.0
      %722 = vmatpush1.msra.mxu0 0.0
      %723 = vmatprep.subr.mxu0 0.0
      %724 = vmatpush1.msra.mxu0 0.0
      %725 = vmatprep.subr.mxu0 0.0
      %726 = vmatpush1.msra.mxu0 0.0
      %727 = vmatprep.subr.mxu0 0.0
      %728 = vmatpush1.msra.mxu0 0.0
      %729 = vmatprep.subr.mxu0 0.0
      %730 = vmatpush1.msra.mxu0 0.0
      %731 = vmatprep.subr.mxu0 0.0
      %732 = vmatpush1.msra.mxu0 0.0
      %733 = vmatprep.subr.mxu0 0.0
      %734 = vmatpush1.msra.mxu0 0.0
      %735 = vmatprep.subr.mxu0 0.0
      %736 = vmatpush1.msra.mxu0 0.0
      %737 = vmatprep.subr.mxu0 0.0
      %738 = vmatpush1.msra.mxu0 0.0
      %739 = vmatprep.subr.mxu0 0.0
      %740 = vmatpush1.msra.mxu0 0.0
      %741 = vmatprep.subr.mxu0 0.0
      %742 = vmatpush1.msra.mxu0 0.0
      %743 = vmatprep.subr.mxu0 0.0
      %744 = vmatpush1.msra.mxu0 0.0
      %745 = vmatprep.subr.mxu0 0.0
      %746 = vmatpush1.msra.mxu0 0.0
      %747 = vmatprep.subr.mxu0 0.0
      %748 = vmatpush1.msra.mxu0 0.0
      %749 = vmatprep.subr.mxu0 0.0
      %750 = vmatpush1.msra.mxu0 0.0
      %751 = vmatprep.subr.mxu0 0.0
      %752 = vmatpush1.msra.mxu0 0.0
      %753 = vmatprep.subr.mxu0 0.0
      %754 = vmatpush1.msra.mxu0 0.0
      %755 = vmatprep.subr.mxu0 0.0
      %756 = vmatpush1.msra.mxu0 0.0
      %757 = vmatprep.subr.mxu0 0.0
      %758 = vmatpush1.msra.mxu0 0.0
      %759 = vmatprep.subr.mxu0 0.0
      %760 = vmatpush1.msra.mxu0 0.0
      %761 = vmatprep.subr.mxu0 0.0
      %762 = vmatpush1.msra.mxu0 0.0
      %763 = vmatprep.subr.mxu0 0.0
      %764 = vmatpush1.msra.mxu0 0.0
      %765 = vmatprep.subr.mxu0 0.0
      %766 = vmatpush1.msra.mxu0 0.0
      %767 = vmatprep.mubr.f32.mxu0 0.0
      %768 = vmatmul.mubr.f32.gmra.mrb[0].mxu0 %v320
      %v769 = vpop.f32.mrb[0].mxu0
      %v770 = vadd.f32 %v316, %v769
      %v771 = vpop.f32.mrb[0].mxu0
      %772 = vmatprep.mubr.f32.mxu0 0.0
      %773 = vmatmul.mubr.f32.gmra.mrb[0].mxu0 %v323
      %v774 = vpop.f32.mrb[0].mxu0
      %v775 = vadd.f32 %v316, %v774
      %v776 = vpop.f32.mrb[0].mxu0
      %777 = vmatprep.mubr.f32.mxu0 0.0
      %778 = vmatmul.mubr.f32.gmra.mrb[0].mxu0 %v326
      %v779 = vpop.f32.mrb[0].mxu0
      %v780 = vadd.f32 %v316, %v779
      %v781 = vpop.f32.mrb[0].mxu0
      %782 = vmatprep.mubr.f32.mxu0 0.0
      %783 = vmatmul.mubr.f32.gmra.mrb[0].mxu0 %v329
      %v784 = vpop.f32.mrb[0].mxu0
      %v785 = vadd.f32 %v316, %v784
      %v786 = vpop.f32.mrb[0].mxu0
      %787 = vmatprep.mubr.f32.mxu0 0.0
      %788 = vmatmul.mubr.f32.gmra.mrb[0].mxu0 %v332
      %v789 = vpop.f32.mrb[0].mxu0
      %v790 = vadd.f32 %v316, %v789
      %v791 = vpop.f32.mrb[0].mxu0
      %792 = vmatprep.mubr.f32.mxu0 0.0
      %793 = vmatmul.mubr.f32.gmra.mrb[0].mxu0 %v335
      %v794 = vpop.f32.mrb[0].mxu0
      %v795 = vadd.f32 %v316, %v794
      %v796 = vpop.f32.mrb[0].mxu0
      %797 = vmatprep.mubr.f32.mxu0 0.0
      %798 = vmatmul.mubr.f32.gmra.mrb[0].mxu0 %v338
      %v799 = vpop.f32.mrb[0].mxu0
      %v800 = vadd.f32 %v316, %v799
      %v801 = vpop.f32.mrb[0].mxu0
      %802 = vmatprep.mubr.f32.mxu0 0.0
      %803 = vmatmul.mubr.f32.gmra.mrb[0].mxu0 %v341
      %v804 = vpop.f32.mrb[0].mxu0
      %v805 = vadd.f32 %v316, %v804
      %v806 = vpop.f32.mrb[0].mxu0
      %807 = vmatprep.mubr.f32.mxu0 0.0
      %808 = vmatmul.mubr.f32.gmra.mrb[0].mxu0 %v344
      %v809 = vpop.f32.mrb[0].mxu0
      %v810 = vadd.f32 %v316, %v809
      %v811 = vpop.f32.mrb[0].mxu0
      %812 = vmatprep.mubr.f32.mxu0 0.0
      %813 = vmatmul.mubr.f32.gmra.mrb[0].mxu0 %v347
      %v814 = vpop.f32.mrb[0].mxu0
      %v815 = vadd.f32 %v316, %v814
      %v816 = vpop.f32.mrb[0].mxu0
      %817 = vmatprep.mubr.f32.mxu0 0.0
      %818 = vmatmul.mubr.f32.gmra.mrb[0].mxu0 %v350
      %v819 = vpop.f32.mrb[0].mxu0
      %v820 = vadd.f32 %v316, %v819
      %v821 = vpop.f32.mrb[0].mxu0
      %822 = vmatprep.mubr.f32.mxu0 0.0
      %823 = vmatmul.mubr.f32.gmra.mrb[0].mxu0 %v353
      %v824 = vpop.f32.mrb[0].mxu0
      %v825 = vadd.f32 %v316, %v824
      %v826 = vpop.f32.mrb[0].mxu0
      %827 = vmatprep.mubr.f32.mxu0 0.0
      %828 = vmatmul.mubr.f32.gmra.mrb[0].mxu0 %v356
      %v829 = vpop.f32.mrb[0].mxu0
      %v830 = vadd.f32 %v316, %v829
      %v831 = vpop.f32.mrb[0].mxu0
      %832 = vmatprep.mubr.f32.mxu0 0.0
      %833 = vmatmul.mubr.f32.gmra.mrb[0].mxu0 %v359
      %v834 = vpop.f32.mrb[0].mxu0
      %v835 = vadd.f32 %v316, %v834
      %v836 = vpop.f32.mrb[0].mxu0
      %837 = vmatprep.mubr.f32.mxu0 0.0
      %838 = vmatmul.mubr.f32.gmra.mrb[0].mxu0 %v362
      %v839 = vpop.f32.mrb[0].mxu0
      %v840 = vadd.f32 %v316, %v839
      %v841 = vpop.f32.mrb[0].mxu0
      %842 = vmatprep.mubr.f32.mxu0 0.0
      %843 = vmatmul.mubr.f32.gmra.mrb[0].mxu0 %v365
      %v844 = vpop.f32.mrb[0].mxu0
      %v845 = vadd.f32 %v316, %v844
      %v846 = vpop.f32.mrb[0].mxu0
      %847 = vmatprep.mubr.f32.mxu0 0.0
      %848 = vmatmul.mubr.f32.gmra.mrb[0].mxu0 %v368
      %v849 = vpop.f32.mrb[0].mxu0
      %v850 = vadd.f32 %v316, %v849
      %v851 = vpop.f32.mrb[0].mxu0
      %852 = vmatprep.mubr.f32.mxu0 0.0
      %853 = vmatmul.mubr.f32.gmra.mrb[0].mxu0 %v371
      %v854 = vpop.f32.mrb[0].mxu0
      %v855 = vadd.f32 %v316, %v854
      %v856 = vpop.f32.mrb[0].mxu0
      %857 = vmatprep.mubr.f32.mxu0 0.0
      %858 = vmatmul.mubr.f32.gmra.mrb[0].mxu0 %v374
      %v859 = vpop.f32.mrb[0].mxu0
      %v860 = vadd.f32 %v316, %v859
      %v861 = vpop.f32.mrb[0].mxu0
      %862 = vmatprep.mubr.f32.mxu0 0.0
      %863 = vmatmul.mubr.f32.gmra.mrb[0].mxu0 %v377
      %v864 = vpop.f32.mrb[0].mxu0
      %v865 = vadd.f32 %v316, %v864
      %v866 = vpop.f32.mrb[0].mxu0
      %867 = vmatprep.mubr.f32.mxu0 0.0
      %868 = vmatmul.mubr.f32.gmra.mrb[0].mxu0 %v380
      %v869 = vpop.f32.mrb[0].mxu0
      %v870 = vadd.f32 %v316, %v869
      %v871 = vpop.f32.mrb[0].mxu0
      %872 = vmatprep.mubr.f32.mxu0 0.0
      %873 = vmatmul.mubr.f32.gmra.mrb[0].mxu0 %v383
      %v874 = vpop.f32.mrb[0].mxu0
      %v875 = vadd.f32 %v316, %v874
      %v876 = vpop.f32.mrb[0].mxu0
      %877 = vmatprep.mubr.f32.mxu0 0.0
      %878 = vmatmul.mubr.f32.gmra.mrb[0].mxu0 %v386
      %v879 = vpop.f32.mrb[0].mxu0
      %v880 = vadd.f32 %v316, %v879
      %v881 = vpop.f32.mrb[0].mxu0
      %882 = vmatprep.mubr.f32.mxu0 0.0
      %883 = vmatmul.mubr.f32.gmra.mrb[0].mxu0 %v389
      %v884 = vpop.f32.mrb[0].mxu0
      %v885 = vadd.f32 %v316, %v884
      %v886 = vpop.f32.mrb[0].mxu0
      %887 = vmatprep.mubr.f32.mxu0 0.0
      %888 = vmatmul.mubr.f32.gmra.mrb[0].mxu0 %v392
      %v889 = vpop.f32.mrb[0].mxu0
      %v890 = vadd.f32 %v316, %v889
      %v891 = vpop.f32.mrb[0].mxu0
      %892 = vmatprep.mubr.f32.mxu0 0.0
      %893 = vmatmul.mubr.f32.gmra.mrb[0].mxu0 %v395
      %v894 = vpop.f32.mrb[0].mxu0
      %v895 = vadd.f32 %v316, %v894
      %v896 = vpop.f32.mrb[0].mxu0
      %897 = vmatprep.mubr.f32.mxu0 0.0
      %898 = vmatmul.mubr.f32.gmra.mrb[0].mxu0 %v398
      %v899 = vpop.f32.mrb[0].mxu0
      %v900 = vadd.f32 %v316, %v899
      %v901 = vpop.f32.mrb[0].mxu0
      %902 = vmatprep.mubr.f32.mxu0 0.0
      %903 = vmatmul.mubr.f32.gmra.mrb[0].mxu0 %v401
      %v904 = vpop.f32.mrb[0].mxu0
      %v905 = vadd.f32 %v316, %v904
      %v906 = vpop.f32.mrb[0].mxu0
      %907 = vmatprep.mubr.f32.mxu0 0.0
      %908 = vmatmul.mubr.f32.gmra.mrb[0].mxu0 %v404
      %v909 = vpop.f32.mrb[0].mxu0
      %v910 = vadd.f32 %v316, %v909
      %v911 = vpop.f32.mrb[0].mxu0
      %912 = vmatprep.mubr.f32.mxu0 0.0
      %913 = vmatmul.mubr.f32.gmra.mrb[0].mxu0 %v407
      %v914 = vpop.f32.mrb[0].mxu0
      %v915 = vadd.f32 %v316, %v914
      %v916 = vpop.f32.mrb[0].mxu0
      %917 = vmatprep.mubr.f32.mxu0 0.0
      %918 = vmatmul.mubr.f32.gmra.mrb[0].mxu0 %v410
      %v919 = vpop.f32.mrb[0].mxu0
      %v920 = vadd.f32 %v316, %v919
      %v921 = vpop.f32.mrb[0].mxu0
      %922 = vmatprep.mubr.f32.mxu0 0.0
      %923 = vmatmul.mubr.f32.gmra.mrb[0].mxu0 %v413
      %v924 = vpop.f32.mrb[0].mxu0
      %v925 = vadd.f32 %v316, %v924
      %v926 = vpop.f32.mrb[0].mxu0
      %927 = vmatprep.mubr.f32.mxu0 0.0
      %928 = vmatmul.mubr.f32.gmra.mrb[0].mxu0 %v416
      %v929 = vpop.f32.mrb[0].mxu0
      %v930 = vadd.f32 %v316, %v929
      %v931 = vpop.f32.mrb[0].mxu0
      %932 = vmatprep.mubr.f32.mxu0 0.0
      %933 = vmatmul.mubr.f32.gmra.mrb[0].mxu0 %v419
      %v934 = vpop.f32.mrb[0].mxu0
      %v935 = vadd.f32 %v316, %v934
      %v936 = vpop.f32.mrb[0].mxu0
      %937 = vmatprep.mubr.f32.mxu0 0.0
      %938 = vmatmul.mubr.f32.gmra.mrb[0].mxu0 %v422
      %v939 = vpop.f32.mrb[0].mxu0
      %v940 = vadd.f32 %v316, %v939
      %v941 = vpop.f32.mrb[0].mxu0
      %942 = vmatprep.mubr.f32.mxu0 0.0
      %943 = vmatmul.mubr.f32.gmra.mrb[0].mxu0 %v425
      %v944 = vpop.f32.mrb[0].mxu0
      %v945 = vadd.f32 %v316, %v944
      %v946 = vpop.f32.mrb[0].mxu0
      %947 = vmatprep.mubr.f32.mxu0 0.0
      %948 = vmatmul.mubr.f32.gmra.mrb[0].mxu0 %v428
      %v949 = vpop.f32.mrb[0].mxu0
      %v950 = vadd.f32 %v316, %v949
      %v951 = vpop.f32.mrb[0].mxu0
      %952 = vmatprep.mubr.f32.mxu0 0.0
      %953 = vmatmul.mubr.f32.gmra.mrb[0].mxu0 %v431
      %v954 = vpop.f32.mrb[0].mxu0
      %v955 = vadd.f32 %v316, %v954
      %v956 = vpop.f32.mrb[0].mxu0
      %957 = vmatprep.mubr.f32.mxu0 0.0
      %958 = vmatmul.mubr.f32.gmra.mrb[0].mxu0 %v434
      %v959 = vpop.f32.mrb[0].mxu0
      %v960 = vadd.f32 %v316, %v959
      %v961 = vpop.f32.mrb[0].mxu0
      %962 = vmatprep.mubr.f32.mxu0 0.0
      %963 = vmatmul.mubr.f32.gmra.mrb[0].mxu0 %v437
      %v964 = vpop.f32.mrb[0].mxu0
      %v965 = vadd.f32 %v316, %v964
      %v966 = vpop.f32.mrb[0].mxu0
      %967 = vmatprep.mubr.f32.mxu0 0.0
      %968 = vmatmul.mubr.f32.gmra.mrb[0].mxu0 %v440
      %v969 = vpop.f32.mrb[0].mxu0
      %v970 = vadd.f32 %v316, %v969
      %v971 = vpop.f32.mrb[0].mxu0
      %972 = vmatprep.mubr.f32.mxu0 0.0
      %973 = vmatmul.mubr.f32.gmra.mrb[0].mxu0 %v443
      %v974 = vpop.f32.mrb[0].mxu0
      %v975 = vadd.f32 %v316, %v974
      %v976 = vpop.f32.mrb[0].mxu0
      %977 = vmatprep.mubr.f32.mxu0 0.0
      %978 = vmatmul.mubr.f32.gmra.mrb[0].mxu0 %v446
      %v979 = vpop.f32.mrb[0].mxu0
      %v980 = vadd.f32 %v316, %v979
      %v981 = vpop.f32.mrb[0].mxu0
      %982 = vmatprep.mubr.f32.mxu0 0.0
      %983 = vmatmul.mubr.f32.gmra.mrb[0].mxu0 %v449
      %v984 = vpop.f32.mrb[0].mxu0
      %v985 = vadd.f32 %v316, %v984
      %v986 = vpop.f32.mrb[0].mxu0
      %987 = vmatprep.mubr.f32.mxu0 0.0
      %988 = vmatmul.mubr.f32.gmra.mrb[0].mxu0 %v452
      %v989 = vpop.f32.mrb[0].mxu0
      %v990 = vadd.f32 %v316, %v989
      %v991 = vpop.f32.mrb[0].mxu0
      %992 = vmatprep.mubr.f32.mxu0 0.0
      %993 = vmatmul.mubr.f32.gmra.mrb[0].mxu0 %v455
      %v994 = vpop.f32.mrb[0].mxu0
      %v995 = vadd.f32 %v316, %v994
      %v996 = vpop.f32.mrb[0].mxu0
      %997 = vmatprep.mubr.f32.mxu0 0.0
      %998 = vmatmul.mubr.f32.gmra.mrb[0].mxu0 %v458
      %v999 = vpop.f32.mrb[0].mxu0
      %v1000 = vadd.f32 %v316, %v999
      %v1001 = vpop.f32.mrb[0].mxu0
      %1002 = vmatprep.mubr.f32.mxu0 0.0
      %1003 = vmatmul.mubr.f32.gmra.mrb[0].mxu0 %v461
      %v1004 = vpop.f32.mrb[0].mxu0
      %v1005 = vadd.f32 %v316, %v1004
      %v1006 = vpop.f32.mrb[0].mxu0
      %1007 = vmatprep.mubr.f32.mxu0 0.0
      %1008 = vmatmul.mubr.f32.gmra.mrb[0].mxu0 %v464
      %v1009 = vpop.f32.mrb[0].mxu0
      %v1010 = vadd.f32 %v316, %v1009
      %v1011 = vpop.f32.mrb[0].mxu0
      %1012 = vmatprep.mubr.f32.mxu0 0.0
      %1013 = vmatmul.mubr.f32.gmra.mrb[0].mxu0 %v467
      %v1014 = vpop.f32.mrb[0].mxu0
      %v1015 = vadd.f32 %v316, %v1014
      %v1016 = vpop.f32.mrb[0].mxu0
      %1017 = vmatprep.mubr.f32.mxu0 0.0
      %1018 = vmatmul.mubr.f32.gmra.mrb[0].mxu0 %v470
      %v1019 = vpop.f32.mrb[0].mxu0
      %v1020 = vadd.f32 %v316, %v1019
      %v1021 = vpop.f32.mrb[0].mxu0
      %1022 = vmatprep.mubr.f32.mxu0 0.0
      %1023 = vmatmul.mubr.f32.gmra.mrb[0].mxu0 %v473
      %v1024 = vpop.f32.mrb[0].mxu0
      %v1025 = vadd.f32 %v316, %v1024
      %v1026 = vpop.f32.mrb[0].mxu0
      %1027 = vmatprep.mubr.f32.mxu0 0.0
      %1028 = vmatmul.mubr.f32.gmra.mrb[0].mxu0 %v476
      %v1029 = vpop.f32.mrb[0].mxu0
      %v1030 = vadd.f32 %v316, %v1029
      %v1031 = vpop.f32.mrb[0].mxu0
      %1032 = vmatprep.mubr.f32.mxu0 0.0
      %1033 = vmatmul.mubr.f32.gmra.mrb[0].mxu0 %v479
      %v1034 = vpop.f32.mrb[0].mxu0
      %v1035 = vadd.f32 %v316, %v1034
      %v1036 = vpop.f32.mrb[0].mxu0
      %1037 = vmatprep.mubr.f32.mxu0 0.0
      %1038 = vmatmul.mubr.f32.gmra.mrb[0].mxu0 %v482
      %v1039 = vpop.f32.mrb[0].mxu0
      %v1040 = vadd.f32 %v316, %v1039
      %v1041 = vpop.f32.mrb[0].mxu0
      %1042 = vmatprep.mubr.f32.mxu0 0.0
      %1043 = vmatmul.mubr.f32.gmra.mrb[0].mxu0 %v485
      %v1044 = vpop.f32.mrb[0].mxu0
      %v1045 = vadd.f32 %v316, %v1044
      %v1046 = vpop.f32.mrb[0].mxu0
      %1047 = vmatprep.mubr.f32.mxu0 0.0
      %1048 = vmatmul.mubr.f32.gmra.mrb[0].mxu0 %v488
      %v1049 = vpop.f32.mrb[0].mxu0
      %v1050 = vadd.f32 %v316, %v1049
      %v1051 = vpop.f32.mrb[0].mxu0
      %1052 = vmatprep.mubr.f32.mxu0 0.0
      %1053 = vmatmul.mubr.f32.gmra.mrb[0].mxu0 %v491
      %v1054 = vpop.f32.mrb[0].mxu0
      %v1055 = vadd.f32 %v316, %v1054
      %v1056 = vpop.f32.mrb[0].mxu0
      %1057 = vmatprep.mubr.f32.mxu0 0.0
      %1058 = vmatmul.mubr.f32.gmra.mrb[0].mxu0 %v494
      %v1059 = vpop.f32.mrb[0].mxu0
      %v1060 = vadd.f32 %v316, %v1059
      %v1061 = vpop.f32.mrb[0].mxu0
      %1062 = vmatprep.mubr.f32.mxu0 0.0
      %1063 = vmatmul.mubr.f32.gmra.mrb[0].mxu0 %v497
      %v1064 = vpop.f32.mrb[0].mxu0
      %v1065 = vadd.f32 %v316, %v1064
      %v1066 = vpop.f32.mrb[0].mxu0
      %1067 = vmatprep.mubr.f32.mxu0 0.0
      %1068 = vmatmul.mubr.f32.gmra.mrb[0].mxu0 %v500
      %v1069 = vpop.f32.mrb[0].mxu0
      %v1070 = vadd.f32 %v316, %v1069
      %v1071 = vpop.f32.mrb[0].mxu0
      %1072 = vmatprep.mubr.f32.mxu0 0.0
      %1073 = vmatmul.mubr.f32.gmra.mrb[0].mxu0 %v503
      %v1074 = vpop.f32.mrb[0].mxu0
      %v1075 = vadd.f32 %v316, %v1074
      %v1076 = vpop.f32.mrb[0].mxu0
      %1077 = vmatprep.mubr.f32.mxu0 0.0
      %1078 = vmatmul.mubr.f32.gmra.mrb[0].mxu0 %v506
      %v1079 = vpop.f32.mrb[0].mxu0
      %v1080 = vadd.f32 %v316, %v1079
      %v1081 = vpop.f32.mrb[0].mxu0
      %1082 = vmatprep.mubr.f32.mxu0 0.0
      %1083 = vmatmul.mubr.f32.gmra.mrb[0].mxu0 %v509
      %v1084 = vpop.f32.mrb[0].mxu0
      %v1085 = vadd.f32 %v316, %v1084
      %v1086 = vpop.f32.mrb[0].mxu0
      %1087 = vmatprep.mubr.f32.mxu0 0.0
      %1088 = vmatmul.mubr.f32.gmra.mrb[0].mxu0 %v512
      %v1089 = vpop.f32.mrb[0].mxu0
      %v1090 = vadd.f32 %v316, %v1089
      %v1091 = vpop.f32.mrb[0].mxu0
      %1092 = vmatprep.mubr.f32.mxu0 0.0
      %1093 = vmatmul.mubr.f32.gmra.mrb[0].mxu0 %v515
      %v1094 = vpop.f32.mrb[0].mxu0
      %v1095 = vadd.f32 %v316, %v1094
      %v1096 = vpop.f32.mrb[0].mxu0
      %1097 = vmatprep.mubr.f32.mxu0 0.0
      %1098 = vmatmul.mubr.f32.gmra.mrb[0].mxu0 %v518
      %v1099 = vpop.f32.mrb[0].mxu0
      %v1100 = vadd.f32 %v316, %v1099
      %v1101 = vpop.f32.mrb[0].mxu0
      %1102 = vmatprep.mubr.f32.mxu0 0.0
      %1103 = vmatmul.mubr.f32.gmra.mrb[0].mxu0 %v521
      %v1104 = vpop.f32.mrb[0].mxu0
      %v1105 = vadd.f32 %v316, %v1104
      %v1106 = vpop.f32.mrb[0].mxu0
      %1107 = vmatprep.mubr.f32.mxu0 0.0
      %1108 = vmatmul.mubr.f32.gmra.mrb[0].mxu0 %v524
      %v1109 = vpop.f32.mrb[0].mxu0
      %v1110 = vadd.f32 %v316, %v1109
      %v1111 = vpop.f32.mrb[0].mxu0
      %1112 = vmatprep.mubr.f32.mxu0 0.0
      %1113 = vmatmul.mubr.f32.gmra.mrb[0].mxu0 %v527
      %v1114 = vpop.f32.mrb[0].mxu0
      %v1115 = vadd.f32 %v316, %v1114
      %v1116 = vpop.f32.mrb[0].mxu0
      %1117 = vmatprep.mubr.f32.mxu0 0.0
      %1118 = vmatmul.mubr.f32.gmra.mrb[0].mxu0 %v530
      %v1119 = vpop.f32.mrb[0].mxu0
      %v1120 = vadd.f32 %v316, %v1119
      %v1121 = vpop.f32.mrb[0].mxu0
      %1122 = vmatprep.mubr.f32.mxu0 0.0
      %1123 = vmatmul.mubr.f32.gmra.mrb[0].mxu0 %v533
      %v1124 = vpop.f32.mrb[0].mxu0
      %v1125 = vadd.f32 %v316, %v1124
      %v1126 = vpop.f32.mrb[0].mxu0
      %1127 = vmatprep.mubr.f32.mxu0 0.0
      %1128 = vmatmul.mubr.f32.gmra.mrb[0].mxu0 %v536
      %v1129 = vpop.f32.mrb[0].mxu0
      %v1130 = vadd.f32 %v316, %v1129
      %v1131 = vpop.f32.mrb[0].mxu0
      %1132 = vmatprep.mubr.f32.mxu0 0.0
      %1133 = vmatmul.mubr.f32.gmra.mrb[0].mxu0 %v539
      %v1134 = vpop.f32.mrb[0].mxu0
      %v1135 = vadd.f32 %v316, %v1134
      %v1136 = vpop.f32.mrb[0].mxu0
      %1137 = vmatprep.mubr.f32.mxu0 0.0
      %1138 = vmatmul.mubr.f32.gmra.mrb[0].mxu0 %v542
      %v1139 = vpop.f32.mrb[0].mxu0
      %v1140 = vadd.f32 %v316, %v1139
      %v1141 = vpop.f32.mrb[0].mxu0
      %1142 = vmatprep.mubr.f32.mxu0 0.0
      %1143 = vmatmul.mubr.f32.gmra.mrb[0].mxu0 %v545
      %v1144 = vpop.f32.mrb[0].mxu0
      %v1145 = vadd.f32 %v316, %v1144
      %v1146 = vpop.f32.mrb[0].mxu0
      %1147 = vmatprep.mubr.f32.mxu0 0.0
      %1148 = vmatmul.mubr.f32.gmra.mrb[0].mxu0 %v548
      %v1149 = vpop.f32.mrb[0].mxu0
      %v1150 = vadd.f32 %v316, %v1149
      %v1151 = vpop.f32.mrb[0].mxu0
      %1152 = vmatprep.mubr.f32.mxu0 0.0
      %1153 = vmatmul.mubr.f32.gmra.mrb[0].mxu0 %v551
      %v1154 = vpop.f32.mrb[0].mxu0
      %v1155 = vadd.f32 %v316, %v1154
      %v1156 = vpop.f32.mrb[0].mxu0
      %1157 = vmatprep.mubr.f32.mxu0 0.0
      %1158 = vmatmul.mubr.f32.gmra.mrb[0].mxu0 %v554
      %v1159 = vpop.f32.mrb[0].mxu0
      %v1160 = vadd.f32 %v316, %v1159
      %v1161 = vpop.f32.mrb[0].mxu0
      %1162 = vmatprep.mubr.f32.mxu0 0.0
      %1163 = vmatmul.mubr.f32.gmra.mrb[0].mxu0 %v557
      %v1164 = vpop.f32.mrb[0].mxu0
      %v1165 = vadd.f32 %v316, %v1164
      %v1166 = vpop.f32.mrb[0].mxu0
      %1167 = vmatprep.mubr.f32.mxu0 0.0
      %1168 = vmatmul.mubr.f32.gmra.mrb[0].mxu0 %v560
      %v1169 = vpop.f32.mrb[0].mxu0
      %v1170 = vadd.f32 %v316, %v1169
      %v1171 = vpop.f32.mrb[0].mxu0
      %1172 = vmatprep.mubr.f32.mxu0 0.0
      %1173 = vmatmul.mubr.f32.gmra.mrb[0].mxu0 %v563
      %v1174 = vpop.f32.mrb[0].mxu0
      %v1175 = vadd.f32 %v316, %v1174
      %v1176 = vpop.f32.mrb[0].mxu0
      %1177 = vmatprep.mubr.f32.mxu0 0.0
      %1178 = vmatmul.mubr.f32.gmra.mrb[0].mxu0 %v566
      %v1179 = vpop.f32.mrb[0].mxu0
      %v1180 = vadd.f32 %v316, %v1179
      %v1181 = vpop.f32.mrb[0].mxu0
      %1182 = vmatprep.mubr.f32.mxu0 0.0
      %1183 = vmatmul.mubr.f32.gmra.mrb[0].mxu0 %v569
      %v1184 = vpop.f32.mrb[0].mxu0
      %v1185 = vadd.f32 %v316, %v1184
      %v1186 = vpop.f32.mrb[0].mxu0
      %1187 = vmatprep.mubr.f32.mxu0 0.0
      %1188 = vmatmul.mubr.f32.gmra.mrb[0].mxu0 %v572
      %v1189 = vpop.f32.mrb[0].mxu0
      %v1190 = vadd.f32 %v316, %v1189
      %v1191 = vpop.f32.mrb[0].mxu0
      %1192 = vmatprep.mubr.f32.mxu0 0.0
      %1193 = vmatmul.mubr.f32.gmra.mrb[0].mxu0 %v575
      %v1194 = vpop.f32.mrb[0].mxu0
      %v1195 = vadd.f32 %v316, %v1194
      %v1196 = vpop.f32.mrb[0].mxu0
      %1197 = vmatprep.mubr.f32.mxu0 0.0
      %1198 = vmatmul.mubr.f32.gmra.mrb[0].mxu0 %v578
      %v1199 = vpop.f32.mrb[0].mxu0
      %v1200 = vadd.f32 %v316, %v1199
      %v1201 = vpop.f32.mrb[0].mxu0
      %1202 = vmatprep.mubr.f32.mxu0 0.0
      %1203 = vmatmul.mubr.f32.gmra.mrb[0].mxu0 %v581
      %v1204 = vpop.f32.mrb[0].mxu0
      %v1205 = vadd.f32 %v316, %v1204
      %v1206 = vpop.f32.mrb[0].mxu0
      %1207 = vmatprep.mubr.f32.mxu0 0.0
      %1208 = vmatmul.mubr.f32.gmra.mrb[0].mxu0 %v584
      %v1209 = vpop.f32.mrb[0].mxu0
      %v1210 = vadd.f32 %v316, %v1209
      %v1211 = vpop.f32.mrb[0].mxu0
      %1212 = vmatprep.mubr.f32.mxu0 0.0
      %1213 = vmatmul.mubr.f32.gmra.mrb[0].mxu0 %v587
      %v1214 = vpop.f32.mrb[0].mxu0
      %v1215 = vadd.f32 %v316, %v1214
      %v1216 = vpop.f32.mrb[0].mxu0
      %1217 = vmatprep.mubr.f32.mxu0 0.0
      %1218 = vmatmul.mubr.f32.gmra.mrb[0].mxu0 %v590
      %v1219 = vpop.f32.mrb[0].mxu0
      %v1220 = vadd.f32 %v316, %v1219
      %v1221 = vpop.f32.mrb[0].mxu0
      %1222 = vmatprep.mubr.f32.mxu0 0.0
      %1223 = vmatmul.mubr.f32.gmra.mrb[0].mxu0 %v593
      %v1224 = vpop.f32.mrb[0].mxu0
      %v1225 = vadd.f32 %v316, %v1224
      %v1226 = vpop.f32.mrb[0].mxu0
      %1227 = vmatprep.mubr.f32.mxu0 0.0
      %1228 = vmatmul.mubr.f32.gmra.mrb[0].mxu0 %v596
      %v1229 = vpop.f32.mrb[0].mxu0
      %v1230 = vadd.f32 %v316, %v1229
      %v1231 = vpop.f32.mrb[0].mxu0
      %1232 = vmatprep.mubr.f32.mxu0 0.0
      %1233 = vmatmul.mubr.f32.gmra.mrb[0].mxu0 %v599
      %v1234 = vpop.f32.mrb[0].mxu0
      %v1235 = vadd.f32 %v316, %v1234
      %v1236 = vpop.f32.mrb[0].mxu0
      %1237 = vmatprep.mubr.f32.mxu0 0.0
      %1238 = vmatmul.mubr.f32.gmra.mrb[0].mxu0 %v602
      %v1239 = vpop.f32.mrb[0].mxu0
      %v1240 = vadd.f32 %v316, %v1239
      %v1241 = vpop.f32.mrb[0].mxu0
      %1242 = vmatprep.mubr.f32.mxu0 0.0
      %1243 = vmatmul.mubr.f32.gmra.mrb[0].mxu0 %v605
      %v1244 = vpop.f32.mrb[0].mxu0
      %v1245 = vadd.f32 %v316, %v1244
      %v1246 = vpop.f32.mrb[0].mxu0
      %1247 = vmatprep.mubr.f32.mxu0 0.0
      %1248 = vmatmul.mubr.f32.gmra.mrb[0].mxu0 %v608
      %v1249 = vpop.f32.mrb[0].mxu0
      %v1250 = vadd.f32 %v316, %v1249
      %v1251 = vpop.f32.mrb[0].mxu0
      %1252 = vmatprep.mubr.f32.mxu0 0.0
      %1253 = vmatmul.mubr.f32.gmra.mrb[0].mxu0 %v611
      %v1254 = vpop.f32.mrb[0].mxu0
      %v1255 = vadd.f32 %v316, %v1254
      %v1256 = vpop.f32.mrb[0].mxu0
      %1257 = vmatprep.mubr.f32.mxu0 0.0
      %1258 = vmatmul.mubr.f32.gmra.mrb[0].mxu0 %v614
      %v1259 = vpop.f32.mrb[0].mxu0
      %v1260 = vadd.f32 %v316, %v1259
      %v1261 = vpop.f32.mrb[0].mxu0
      %1262 = vmatprep.mubr.f32.mxu0 0.0
      %1263 = vmatmul.mubr.f32.gmra.mrb[0].mxu0 %v617
      %v1264 = vpop.f32.mrb[0].mxu0
      %v1265 = vadd.f32 %v316, %v1264
      %v1266 = vpop.f32.mrb[0].mxu0
      %1267 = vmatprep.mubr.f32.mxu0 0.0
      %1268 = vmatmul.mubr.f32.gmra.mrb[0].mxu0 %v620
      %v1269 = vpop.f32.mrb[0].mxu0
      %v1270 = vadd.f32 %v316, %v1269
      %v1271 = vpop.f32.mrb[0].mxu0
      %1272 = vmatprep.mubr.f32.mxu0 0.0
      %1273 = vmatmul.mubr.f32.gmra.mrb[0].mxu0 %v623
      %v1274 = vpop.f32.mrb[0].mxu0
      %v1275 = vadd.f32 %v316, %v1274
      %v1276 = vpop.f32.mrb[0].mxu0
      %1277 = vmatprep.mubr.f32.mxu0 0.0
      %1278 = vmatmul.mubr.f32.gmra.mrb[0].mxu0 %v626
      %v1279 = vpop.f32.mrb[0].mxu0
      %v1280 = vadd.f32 %v316, %v1279
      %v1281 = vpop.f32.mrb[0].mxu0
      %1282 = vmatprep.mubr.f32.mxu0 0.0
      %1283 = vmatmul.mubr.f32.gmra.mrb[0].mxu0 %v629
      %v1284 = vpop.f32.mrb[0].mxu0
      %v1285 = vadd.f32 %v316, %v1284
      %v1286 = vpop.f32.mrb[0].mxu0
      %1287 = vmatprep.mubr.f32.mxu0 0.0
      %1288 = vmatmul.mubr.f32.gmra.mrb[0].mxu0 %v632
      %v1289 = vpop.f32.mrb[0].mxu0
      %v1290 = vadd.f32 %v316, %v1289
      %v1291 = vpop.f32.mrb[0].mxu0
      %1292 = vmatprep.mubr.f32.mxu0 0.0
      %1293 = vmatmul.mubr.f32.gmra.mrb[0].mxu0 %v635
      %v1294 = vpop.f32.mrb[0].mxu0
      %v1295 = vadd.f32 %v316, %v1294
      %v1296 = vpop.f32.mrb[0].mxu0
      %1297 = vmatprep.mubr.f32.mxu0 0.0
      %1298 = vmatmul.mubr.f32.gmra.mrb[0].mxu0 %v638
      %v1299 = vpop.f32.mrb[0].mxu0
      %v1300 = vadd.f32 %v316, %v1299
      %v1301 = vpop.f32.mrb[0].mxu0
      %1302 = vmatprep.mubr.f32.mxu0 0.0
      %1303 = vmatmul.mubr.f32.gmra.mrb[0].mxu0 %v641
      %v1304 = vpop.f32.mrb[0].mxu0
      %v1305 = vadd.f32 %v316, %v1304
      %v1306 = vpop.f32.mrb[0].mxu0
      %1307 = vmatprep.mubr.f32.mxu0 0.0
      %1308 = vmatmul.mubr.f32.gmra.mrb[0].mxu0 %v644
      %v1309 = vpop.f32.mrb[0].mxu0
      %v1310 = vadd.f32 %v316, %v1309
      %v1311 = vpop.f32.mrb[0].mxu0
      %1312 = vmatprep.mubr.f32.mxu0 0.0
      %1313 = vmatmul.mubr.f32.gmra.mrb[0].mxu0 %v647
      %v1314 = vpop.f32.mrb[0].mxu0
      %v1315 = vadd.f32 %v316, %v1314
      %v1316 = vpop.f32.mrb[0].mxu0
      %1317 = vmatprep.mubr.f32.mxu0 0.0
      %1318 = vmatmul.mubr.f32.gmra.mrb[0].mxu0 %v650
      %v1319 = vpop.f32.mrb[0].mxu0
      %v1320 = vadd.f32 %v316, %v1319
      %v1321 = vpop.f32.mrb[0].mxu0
      %1322 = vmatprep.mubr.f32.mxu0 0.0
      %1323 = vmatmul.mubr.f32.gmra.mrb[0].mxu0 %v653
      %v1324 = vpop.f32.mrb[0].mxu0
      %v1325 = vadd.f32 %v316, %v1324
      %v1326 = vpop.f32.mrb[0].mxu0
      %1327 = vmatprep.mubr.f32.mxu0 0.0
      %1328 = vmatmul.mubr.f32.gmra.mrb[0].mxu0 %v656
      %v1329 = vpop.f32.mrb[0].mxu0
      %v1330 = vadd.f32 %v316, %v1329
      %v1331 = vpop.f32.mrb[0].mxu0
      %1332 = vmatprep.mubr.f32.mxu0 0.0
      %1333 = vmatmul.mubr.f32.gmra.mrb[0].mxu0 %v659
      %v1334 = vpop.f32.mrb[0].mxu0
      %v1335 = vadd.f32 %v316, %v1334
      %v1336 = vpop.f32.mrb[0].mxu0
      %1337 = vmatprep.mubr.f32.mxu0 0.0
      %1338 = vmatmul.mubr.f32.gmra.mrb[0].mxu0 %v662
      %v1339 = vpop.f32.mrb[0].mxu0
      %v1340 = vadd.f32 %v316, %v1339
      %v1341 = vpop.f32.mrb[0].mxu0
      %1342 = vmatprep.mubr.f32.mxu0 0.0
      %1343 = vmatmul.mubr.f32.gmra.mrb[0].mxu0 %v665
      %v1344 = vpop.f32.mrb[0].mxu0
      %v1345 = vadd.f32 %v316, %v1344
      %v1346 = vpop.f32.mrb[0].mxu0
      %1347 = vmatprep.mubr.f32.mxu0 0.0
      %1348 = vmatmul.mubr.f32.gmra.mrb[0].mxu0 %v668
      %v1349 = vpop.f32.mrb[0].mxu0
      %v1350 = vadd.f32 %v316, %v1349
      %v1351 = vpop.f32.mrb[0].mxu0
      %1352 = vmatprep.mubr.f32.mxu0 0.0
      %1353 = vmatmul.mubr.f32.gmra.mrb[0].mxu0 %v671
      %v1354 = vpop.f32.mrb[0].mxu0
      %v1355 = vadd.f32 %v316, %v1354
      %v1356 = vpop.f32.mrb[0].mxu0
      %1357 = vmatprep.mubr.f32.mxu0 0.0
      %1358 = vmatmul.mubr.f32.gmra.mrb[0].mxu0 %v674
      %v1359 = vpop.f32.mrb[0].mxu0
      %v1360 = vadd.f32 %v316, %v1359
      %v1361 = vpop.f32.mrb[0].mxu0
      %1362 = vmatprep.mubr.f32.mxu0 0.0
      %1363 = vmatmul.mubr.f32.gmra.mrb[0].mxu0 %v677
      %v1364 = vpop.f32.mrb[0].mxu0
      %v1365 = vadd.f32 %v316, %v1364
      %v1366 = vpop.f32.mrb[0].mxu0
      %1367 = vmatprep.mubr.f32.mxu0 0.0
      %1368 = vmatmul.mubr.f32.gmra.mrb[0].mxu0 %v680
      %v1369 = vpop.f32.mrb[0].mxu0
      %v1370 = vadd.f32 %v316, %v1369
      %v1371 = vpop.f32.mrb[0].mxu0
      %1372 = vmatprep.mubr.f32.mxu0 0.0
      %1373 = vmatmul.mubr.f32.gmra.mrb[0].mxu0 %v683
      %v1374 = vpop.f32.mrb[0].mxu0
      %v1375 = vadd.f32 %v316, %v1374
      %v1376 = vpop.f32.mrb[0].mxu0
      %1377 = vmatprep.mubr.f32.mxu0 0.0
      %1378 = vmatmul.mubr.f32.gmra.mrb[0].mxu0 %v686
      %v1379 = vpop.f32.mrb[0].mxu0
      %v1380 = vadd.f32 %v316, %v1379
      %v1381 = vpop.f32.mrb[0].mxu0
      %1382 = vmatprep.mubr.f32.mxu0 0.0
      %1383 = vmatmul.mubr.f32.gmra.mrb[0].mxu0 %v689
      %v1384 = vpop.f32.mrb[0].mxu0
      %v1385 = vadd.f32 %v316, %v1384
      %v1386 = vpop.f32.mrb[0].mxu0
      %1387 = vmatprep.mubr.f32.mxu0 0.0
      %1388 = vmatmul.mubr.f32.gmra.mrb[0].mxu0 %v692
      %v1389 = vpop.f32.mrb[0].mxu0
      %v1390 = vadd.f32 %v316, %v1389
      %v1391 = vpop.f32.mrb[0].mxu0
      %1392 = vmatprep.mubr.f32.mxu0 0.0
      %1393 = vmatmul.mubr.f32.gmra.mrb[0].mxu0 %v695
      %v1394 = vpop.f32.mrb[0].mxu0
      %v1395 = vadd.f32 %v316, %v1394
      %v1396 = vpop.f32.mrb[0].mxu0
      %1397 = vmatprep.mubr.f32.mxu0 0.0
      %1398 = vmatmul.mubr.f32.gmra.mrb[0].mxu0 %v698
      %v1399 = vpop.f32.mrb[0].mxu0
      %v1400 = vadd.f32 %v316, %v1399
      %v1401 = vpop.f32.mrb[0].mxu0
      %1402 = vmatprep.mubr.f32.mxu0 0.0
      %1403 = vmatmul.mubr.f32.gmra.mrb[0].mxu0 %v701
      %v1404 = vpop.f32.mrb[0].mxu0
      %v1405 = vadd.f32 %v316, %v1404
      %v1406 = vpop.f32.mrb[0].mxu0
      %1407 = vdwg.mxu0
      %v1408 = vmax.f32 %v770, 0.0
      %v1409 = vmax.f32 %v775, 0.0
      %v1410 = vmax.f32 %v780, 0.0
      %v1411 = vmax.f32 %v785, 0.0
      %v1412 = vmax.f32 %v790, 0.0
      %v1413 = vmax.f32 %v795, 0.0
      %v1414 = vmax.f32 %v800, 0.0
      %v1415 = vmax.f32 %v805, 0.0
      %v1416 = vmax.f32 %v810, 0.0
      %v1417 = vmax.f32 %v815, 0.0
      %v1418 = vmax.f32 %v820, 0.0
      %v1419 = vmax.f32 %v825, 0.0
      %v1420 = vmax.f32 %v830, 0.0
      %v1421 = vmax.f32 %v835, 0.0
      %v1422 = vmax.f32 %v840, 0.0
      %v1423 = vmax.f32 %v845, 0.0
      %v1424 = vmax.f32 %v850, 0.0
      %v1425 = vmax.f32 %v855, 0.0
      %v1426 = vmax.f32 %v860, 0.0
      %v1427 = vmax.f32 %v865, 0.0
      %v1428 = vmax.f32 %v870, 0.0
      %v1429 = vmax.f32 %v875, 0.0
      %v1430 = vmax.f32 %v880, 0.0
      %v1431 = vmax.f32 %v885, 0.0
      %v1432 = vmax.f32 %v890, 0.0
      %v1433 = vmax.f32 %v895, 0.0
      %v1434 = vmax.f32 %v900, 0.0
      %v1435 = vmax.f32 %v905, 0.0
      %v1436 = vmax.f32 %v910, 0.0
      %v1437 = vmax.f32 %v915, 0.0
      %v1438 = vmax.f32 %v920, 0.0
      %v1439 = vmax.f32 %v925, 0.0
      %v1440 = vmax.f32 %v930, 0.0
      %v1441 = vmax.f32 %v935, 0.0
      %v1442 = vmax.f32 %v940, 0.0
      %v1443 = vmax.f32 %v945, 0.0
      %v1444 = vmax.f32 %v950, 0.0
      %v1445 = vmax.f32 %v955, 0.0
      %v1446 = vmax.f32 %v960, 0.0
      %v1447 = vmax.f32 %v965, 0.0
      %v1448 = vmax.f32 %v970, 0.0
      %v1449 = vmax.f32 %v975, 0.0
      %v1450 = vmax.f32 %v980, 0.0
      %v1451 = vmax.f32 %v985, 0.0
      %v1452 = vmax.f32 %v990, 0.0
      %v1453 = vmax.f32 %v995, 0.0
      %v1454 = vmax.f32 %v1000, 0.0
      %v1455 = vmax.f32 %v1005, 0.0
      %v1456 = vmax.f32 %v1010, 0.0
      %v1457 = vmax.f32 %v1015, 0.0
      %v1458 = vmax.f32 %v1020, 0.0
      %v1459 = vmax.f32 %v1025, 0.0
      %v1460 = vmax.f32 %v1030, 0.0
      %v1461 = vmax.f32 %v1035, 0.0
      %v1462 = vmax.f32 %v1040, 0.0
      %v1463 = vmax.f32 %v1045, 0.0
      %v1464 = vmax.f32 %v1050, 0.0
      %v1465 = vmax.f32 %v1055, 0.0
      %v1466 = vmax.f32 %v1060, 0.0
      %v1467 = vmax.f32 %v1065, 0.0
      %v1468 = vmax.f32 %v1070, 0.0
      %v1469 = vmax.f32 %v1075, 0.0
      %v1470 = vmax.f32 %v1080, 0.0
      %v1471 = vmax.f32 %v1085, 0.0
      %v1472 = vmax.f32 %v1090, 0.0
      %v1473 = vmax.f32 %v1095, 0.0
      %v1474 = vmax.f32 %v1100, 0.0
      %v1475 = vmax.f32 %v1105, 0.0
      %v1476 = vmax.f32 %v1110, 0.0
      %v1477 = vmax.f32 %v1115, 0.0
      %v1478 = vmax.f32 %v1120, 0.0
      %v1479 = vmax.f32 %v1125, 0.0
      %v1480 = vmax.f32 %v1130, 0.0
      %v1481 = vmax.f32 %v1135, 0.0
      %v1482 = vmax.f32 %v1140, 0.0
      %v1483 = vmax.f32 %v1145, 0.0
      %v1484 = vmax.f32 %v1150, 0.0
      %v1485 = vmax.f32 %v1155, 0.0
      %v1486 = vmax.f32 %v1160, 0.0
      %v1487 = vmax.f32 %v1165, 0.0
      %v1488 = vmax.f32 %v1170, 0.0
      %v1489 = vmax.f32 %v1175, 0.0
      %v1490 = vmax.f32 %v1180, 0.0
      %v1491 = vmax.f32 %v1185, 0.0
      %v1492 = vmax.f32 %v1190, 0.0
      %v1493 = vmax.f32 %v1195, 0.0
      %v1494 = vmax.f32 %v1200, 0.0
      %v1495 = vmax.f32 %v1205, 0.0
      %v1496 = vmax.f32 %v1210, 0.0
      %v1497 = vmax.f32 %v1215, 0.0
      %v1498 = vmax.f32 %v1220, 0.0
      %v1499 = vmax.f32 %v1225, 0.0
      %v1500 = vmax.f32 %v1230, 0.0
      %v1501 = vmax.f32 %v1235, 0.0
      %v1502 = vmax.f32 %v1240, 0.0
      %v1503 = vmax.f32 %v1245, 0.0
      %v1504 = vmax.f32 %v1250, 0.0
      %v1505 = vmax.f32 %v1255, 0.0
      %v1506 = vmax.f32 %v1260, 0.0
      %v1507 = vmax.f32 %v1265, 0.0
      %v1508 = vmax.f32 %v1270, 0.0
      %v1509 = vmax.f32 %v1275, 0.0
      %v1510 = vmax.f32 %v1280, 0.0
      %v1511 = vmax.f32 %v1285, 0.0
      %v1512 = vmax.f32 %v1290, 0.0
      %v1513 = vmax.f32 %v1295, 0.0
      %v1514 = vmax.f32 %v1300, 0.0
      %v1515 = vmax.f32 %v1305, 0.0
      %v1516 = vmax.f32 %v1310, 0.0
      %v1517 = vmax.f32 %v1315, 0.0
      %v1518 = vmax.f32 %v1320, 0.0
      %v1519 = vmax.f32 %v1325, 0.0
      %v1520 = vmax.f32 %v1330, 0.0
      %v1521 = vmax.f32 %v1335, 0.0
      %v1522 = vmax.f32 %v1340, 0.0
      %v1523 = vmax.f32 %v1345, 0.0
      %v1524 = vmax.f32 %v1350, 0.0
      %v1525 = vmax.f32 %v1355, 0.0
      %v1526 = vmax.f32 %v1360, 0.0
      %v1527 = vmax.f32 %v1365, 0.0
      %v1528 = vmax.f32 %v1370, 0.0
      %v1529 = vmax.f32 %v1375, 0.0
      %v1530 = vmax.f32 %v1380, 0.0
      %v1531 = vmax.f32 %v1385, 0.0
      %v1532 = vmax.f32 %v1390, 0.0
      %v1533 = vmax.f32 %v1395, 0.0
      %v1534 = vmax.f32 %v1400, 0.0
      %v1535 = vmax.f32 %v1405, 0.0
      %vm1536 = vcmask 64512
      %1537 = vst.msk [vmem:[%s172] sm:$0xff] %vm1536, %v1408
      %1538 = vst.msk [vmem:[%s172 + $0x8] sm:$0xff] %vm1536, %v1409
      %1539 = vst.msk [vmem:[%s172 + $0x10] sm:$0xff] %vm1536, %v1410
      %1540 = vst.msk [vmem:[%s172 + $0x18] sm:$0xff] %vm1536, %v1411
      %1541 = vst.msk [vmem:[%s172 + $0x20] sm:$0xff] %vm1536, %v1412
      %1542 = vst.msk [vmem:[%s172 + $0x28] sm:$0xff] %vm1536, %v1413
      %1543 = vst.msk [vmem:[%s172 + $0x30] sm:$0xff] %vm1536, %v1414
      %1544 = vst.msk [vmem:[%s172 + $0x38] sm:$0xff] %vm1536, %v1415
      %1545 = vst.msk [vmem:[%s172 + $0x40] sm:$0xff] %vm1536, %v1416
      %1546 = vst.msk [vmem:[%s172 + $0x48] sm:$0xff] %vm1536, %v1417
      %1547 = vst.msk [vmem:[%s172 + $0x50] sm:$0xff] %vm1536, %v1418
      %1548 = vst.msk [vmem:[%s172 + $0x58] sm:$0xff] %vm1536, %v1419
      %1549 = vst.msk [vmem:[%s172 + $0x60] sm:$0xff] %vm1536, %v1420
      %1550 = vst.msk [vmem:[%s172 + $0x68] sm:$0xff] %vm1536, %v1421
      %1551 = vst.msk [vmem:[%s172 + $0x70] sm:$0xff] %vm1536, %v1422
      %1552 = vst.msk [vmem:[%s172 + $0x78] sm:$0xff] %vm1536, %v1423
      %1553 = vst.msk [vmem:[%s172 + $0x80] sm:$0xff] %vm1536, %v1424
      %1554 = vst.msk [vmem:[%s172 + $0x88] sm:$0xff] %vm1536, %v1425
      %1555 = vst.msk [vmem:[%s172 + $0x90] sm:$0xff] %vm1536, %v1426
      %1556 = vst.msk [vmem:[%s172 + $0x98] sm:$0xff] %vm1536, %v1427
      %1557 = vst.msk [vmem:[%s172 + $0xa0] sm:$0xff] %vm1536, %v1428
      %1558 = vst.msk [vmem:[%s172 + $0xa8] sm:$0xff] %vm1536, %v1429
      %1559 = vst.msk [vmem:[%s172 + $0xb0] sm:$0xff] %vm1536, %v1430
      %1560 = vst.msk [vmem:[%s172 + $0xb8] sm:$0xff] %vm1536, %v1431
      %1561 = vst.msk [vmem:[%s172 + $0xc0] sm:$0xff] %vm1536, %v1432
      %1562 = vst.msk [vmem:[%s172 + $0xc8] sm:$0xff] %vm1536, %v1433
      %1563 = vst.msk [vmem:[%s172 + $0xd0] sm:$0xff] %vm1536, %v1434
      %1564 = vst.msk [vmem:[%s172 + $0xd8] sm:$0xff] %vm1536, %v1435
      %1565 = vst.msk [vmem:[%s172 + $0xe0] sm:$0xff] %vm1536, %v1436
      %1566 = vst.msk [vmem:[%s172 + $0xe8] sm:$0xff] %vm1536, %v1437
      %1567 = vst.msk [vmem:[%s172 + $0xf0] sm:$0xff] %vm1536, %v1438
      %1568 = vst.msk [vmem:[%s172 + $0xf8] sm:$0xff] %vm1536, %v1439
      %1569 = vst.msk [vmem:[%s172 + $0x100] sm:$0xff] %vm1536, %v1440
      %1570 = vst.msk [vmem:[%s172 + $0x108] sm:$0xff] %vm1536, %v1441
      %1571 = vst.msk [vmem:[%s172 + $0x110] sm:$0xff] %vm1536, %v1442
      %1572 = vst.msk [vmem:[%s172 + $0x118] sm:$0xff] %vm1536, %v1443
      %1573 = vst.msk [vmem:[%s172 + $0x120] sm:$0xff] %vm1536, %v1444
      %1574 = vst.msk [vmem:[%s172 + $0x128] sm:$0xff] %vm1536, %v1445
      %1575 = vst.msk [vmem:[%s172 + $0x130] sm:$0xff] %vm1536, %v1446
      %1576 = vst.msk [vmem:[%s172 + $0x138] sm:$0xff] %vm1536, %v1447
      %1577 = vst.msk [vmem:[%s172 + $0x140] sm:$0xff] %vm1536, %v1448
      %1578 = vst.msk [vmem:[%s172 + $0x148] sm:$0xff] %vm1536, %v1449
      %1579 = vst.msk [vmem:[%s172 + $0x150] sm:$0xff] %vm1536, %v1450
      %1580 = vst.msk [vmem:[%s172 + $0x158] sm:$0xff] %vm1536, %v1451
      %1581 = vst.msk [vmem:[%s172 + $0x160] sm:$0xff] %vm1536, %v1452
      %1582 = vst.msk [vmem:[%s172 + $0x168] sm:$0xff] %vm1536, %v1453
      %1583 = vst.msk [vmem:[%s172 + $0x170] sm:$0xff] %vm1536, %v1454
      %1584 = vst.msk [vmem:[%s172 + $0x178] sm:$0xff] %vm1536, %v1455
      %1585 = vst.msk [vmem:[%s172 + $0x180] sm:$0xff] %vm1536, %v1456
      %1586 = vst.msk [vmem:[%s172 + $0x188] sm:$0xff] %vm1536, %v1457
      %1587 = vst.msk [vmem:[%s172 + $0x190] sm:$0xff] %vm1536, %v1458
      %1588 = vst.msk [vmem:[%s172 + $0x198] sm:$0xff] %vm1536, %v1459
      %1589 = vst.msk [vmem:[%s172 + $0x1a0] sm:$0xff] %vm1536, %v1460
      %1590 = vst.msk [vmem:[%s172 + $0x1a8] sm:$0xff] %vm1536, %v1461
      %1591 = vst.msk [vmem:[%s172 + $0x1b0] sm:$0xff] %vm1536, %v1462
      %1592 = vst.msk [vmem:[%s172 + $0x1b8] sm:$0xff] %vm1536, %v1463
      %1593 = vst.msk [vmem:[%s172 + $0x1c0] sm:$0xff] %vm1536, %v1464
      %1594 = vst.msk [vmem:[%s172 + $0x1c8] sm:$0xff] %vm1536, %v1465
      %1595 = vst.msk [vmem:[%s172 + $0x1d0] sm:$0xff] %vm1536, %v1466
      %1596 = vst.msk [vmem:[%s172 + $0x1d8] sm:$0xff] %vm1536, %v1467
      %1597 = vst.msk [vmem:[%s172 + $0x1e0] sm:$0xff] %vm1536, %v1468
      %1598 = vst.msk [vmem:[%s172 + $0x1e8] sm:$0xff] %vm1536, %v1469
      %1599 = vst.msk [vmem:[%s172 + $0x1f0] sm:$0xff] %vm1536, %v1470
      %1600 = vst.msk [vmem:[%s172 + $0x1f8] sm:$0xff] %vm1536, %v1471
      %1601 = vst.msk [vmem:[%s172 + $0x200] sm:$0xff] %vm1536, %v1472
      %1602 = vst.msk [vmem:[%s172 + $0x208] sm:$0xff] %vm1536, %v1473
      %1603 = vst.msk [vmem:[%s172 + $0x210] sm:$0xff] %vm1536, %v1474
      %1604 = vst.msk [vmem:[%s172 + $0x218] sm:$0xff] %vm1536, %v1475
      %1605 = vst.msk [vmem:[%s172 + $0x220] sm:$0xff] %vm1536, %v1476
      %1606 = vst.msk [vmem:[%s172 + $0x228] sm:$0xff] %vm1536, %v1477
      %1607 = vst.msk [vmem:[%s172 + $0x230] sm:$0xff] %vm1536, %v1478
      %1608 = vst.msk [vmem:[%s172 + $0x238] sm:$0xff] %vm1536, %v1479
      %1609 = vst.msk [vmem:[%s172 + $0x240] sm:$0xff] %vm1536, %v1480
      %1610 = vst.msk [vmem:[%s172 + $0x248] sm:$0xff] %vm1536, %v1481
      %1611 = vst.msk [vmem:[%s172 + $0x250] sm:$0xff] %vm1536, %v1482
      %1612 = vst.msk [vmem:[%s172 + $0x258] sm:$0xff] %vm1536, %v1483
      %1613 = vst.msk [vmem:[%s172 + $0x260] sm:$0xff] %vm1536, %v1484
      %1614 = vst.msk [vmem:[%s172 + $0x268] sm:$0xff] %vm1536, %v1485
      %1615 = vst.msk [vmem:[%s172 + $0x270] sm:$0xff] %vm1536, %v1486
      %1616 = vst.msk [vmem:[%s172 + $0x278] sm:$0xff] %vm1536, %v1487
      %1617 = vst.msk [vmem:[%s172 + $0x280] sm:$0xff] %vm1536, %v1488
      %1618 = vst.msk [vmem:[%s172 + $0x288] sm:$0xff] %vm1536, %v1489
      %1619 = vst.msk [vmem:[%s172 + $0x290] sm:$0xff] %vm1536, %v1490
      %1620 = vst.msk [vmem:[%s172 + $0x298] sm:$0xff] %vm1536, %v1491
      %1621 = vst.msk [vmem:[%s172 + $0x2a0] sm:$0xff] %vm1536, %v1492
      %1622 = vst.msk [vmem:[%s172 + $0x2a8] sm:$0xff] %vm1536, %v1493
      %1623 = vst.msk [vmem:[%s172 + $0x2b0] sm:$0xff] %vm1536, %v1494
      %1624 = vst.msk [vmem:[%s172 + $0x2b8] sm:$0xff] %vm1536, %v1495
      %1625 = vst.msk [vmem:[%s172 + $0x2c0] sm:$0xff] %vm1536, %v1496
      %1626 = vst.msk [vmem:[%s172 + $0x2c8] sm:$0xff] %vm1536, %v1497
      %1627 = vst.msk [vmem:[%s172 + $0x2d0] sm:$0xff] %vm1536, %v1498
      %1628 = vst.msk [vmem:[%s172 + $0x2d8] sm:$0xff] %vm1536, %v1499
      %1629 = vst.msk [vmem:[%s172 + $0x2e0] sm:$0xff] %vm1536, %v1500
      %1630 = vst.msk [vmem:[%s172 + $0x2e8] sm:$0xff] %vm1536, %v1501
      %1631 = vst.msk [vmem:[%s172 + $0x2f0] sm:$0xff] %vm1536, %v1502
      %1632 = vst.msk [vmem:[%s172 + $0x2f8] sm:$0xff] %vm1536, %v1503
      %1633 = vst.msk [vmem:[%s172 + $0x300] sm:$0xff] %vm1536, %v1504
      %1634 = vst.msk [vmem:[%s172 + $0x308] sm:$0xff] %vm1536, %v1505
      %1635 = vst.msk [vmem:[%s172 + $0x310] sm:$0xff] %vm1536, %v1506
      %1636 = vst.msk [vmem:[%s172 + $0x318] sm:$0xff] %vm1536, %v1507
      %1637 = vst.msk [vmem:[%s172 + $0x320] sm:$0xff] %vm1536, %v1508
      %1638 = vst.msk [vmem:[%s172 + $0x328] sm:$0xff] %vm1536, %v1509
      %1639 = vst.msk [vmem:[%s172 + $0x330] sm:$0xff] %vm1536, %v1510
      %1640 = vst.msk [vmem:[%s172 + $0x338] sm:$0xff] %vm1536, %v1511
      %1641 = vst.msk [vmem:[%s172 + $0x340] sm:$0xff] %vm1536, %v1512
      %1642 = vst.msk [vmem:[%s172 + $0x348] sm:$0xff] %vm1536, %v1513
      %1643 = vst.msk [vmem:[%s172 + $0x350] sm:$0xff] %vm1536, %v1514
      %1644 = vst.msk [vmem:[%s172 + $0x358] sm:$0xff] %vm1536, %v1515
      %1645 = vst.msk [vmem:[%s172 + $0x360] sm:$0xff] %vm1536, %v1516
      %1646 = vst.msk [vmem:[%s172 + $0x368] sm:$0xff] %vm1536, %v1517
      %1647 = vst.msk [vmem:[%s172 + $0x370] sm:$0xff] %vm1536, %v1518
      %1648 = vst.msk [vmem:[%s172 + $0x378] sm:$0xff] %vm1536, %v1519
      %1649 = vst.msk [vmem:[%s172 + $0x380] sm:$0xff] %vm1536, %v1520
      %1650 = vst.msk [vmem:[%s172 + $0x388] sm:$0xff] %vm1536, %v1521
      %1651 = vst.msk [vmem:[%s172 + $0x390] sm:$0xff] %vm1536, %v1522
      %1652 = vst.msk [vmem:[%s172 + $0x398] sm:$0xff] %vm1536, %v1523
      %1653 = vst.msk [vmem:[%s172 + $0x3a0] sm:$0xff] %vm1536, %v1524
      %1654 = vst.msk [vmem:[%s172 + $0x3a8] sm:$0xff] %vm1536, %v1525
      %1655 = vst.msk [vmem:[%s172 + $0x3b0] sm:$0xff] %vm1536, %v1526
      %1656 = vst.msk [vmem:[%s172 + $0x3b8] sm:$0xff] %vm1536, %v1527
      %1657 = vst.msk [vmem:[%s172 + $0x3c0] sm:$0xff] %vm1536, %v1528
      %1658 = vst.msk [vmem:[%s172 + $0x3c8] sm:$0xff] %vm1536, %v1529
      %1659 = vst.msk [vmem:[%s172 + $0x3d0] sm:$0xff] %vm1536, %v1530
      %1660 = vst.msk [vmem:[%s172 + $0x3d8] sm:$0xff] %vm1536, %v1531
      %1661 = vst.msk [vmem:[%s172 + $0x3e0] sm:$0xff] %vm1536, %v1532
      %1662 = vst.msk [vmem:[%s172 + $0x3e8] sm:$0xff] %vm1536, %v1533
      %1663 = vst.msk [vmem:[%s172 + $0x3f0] sm:$0xff] %vm1536, %v1534
      %1664 = vst.msk [vmem:[%s172 + $0x3f8] sm:$0xff] %vm1536, %v1535
      %s1665 = smul.u32 128, %s14
      %p1666 = scmp.lt.s32.totalorder %s1665, 255
      %s1667 = scalar_select %p1666, %s1665, 255
      %s1668 = smul.addr %s1667, 8
      %s1669 = scalar_lea.vmem %s3, %s1668
      // Predicated region
      $region33: #{_lambda_.17} parent=31 // pred_check
        %p1670 = pneg %p100
      $region34: #{_lambda_.17} parent=31 // pred_check_branch
        %1672 = sbr.rel (%p1670) target = $region36
      $region35: #{_lambda_.17} parent=31 // pred_region
        %s1673 = smul.u32 128, %s14
      $region36: #{_lambda_.17} parent=31 // pred_fallthru
        _
    $region32: #{_lambda_.17} parent=5 // pred_fallthru
      _
    %p1674 = scmp.le.s32.totalorder 2, %s9
    // Predicated region
    $region37: #{_lambda_.17} parent=5 // pred_check
      %p1675 = pneg %p1674
    $region38: #{_lambda_.17} parent=5 // pred_check_branch
      %1677 = sbr.rel (%p1675) target = $region40
    $region39: #{_lambda_.17} parent=5 // pred_region
      %s1678 = ssub.s32 %s9, 2
      // Predicated region
      $region41: #{_lambda_.17} parent=39 // pred_check
        %p1679 = pneg %p106
      $region42: #{_lambda_.17} parent=39 // pred_check_branch
        %1681 = sbr.rel (%p1679) target = $region44
      $region43: #{_lambda_.17} parent=39 // pred_region
        %s1682 = smul.u32 128, %s15
        %p1683 = scmp.lt.s32.totalorder %s1682, 255
        %s1684 = scalar_select %p1683, %s1682, 255
        %s1685 = smul.addr %s1684, 8
        %s1686 = scalar_lea.vmem %s3, %s1685
      $region44: #{_lambda_.17} parent=39 // pred_fallthru
        _
    $region40: #{_lambda_.17} parent=5 // pred_fallthru
      _
  $region6: #{_lambda_.17} parent=0 // loop_footer
    %s13 = sadd.s32 1, %s9
  $region7: #{_lambda_.17} parent=0 // loop_footer_branch
    %8 = sbr.rel target = $region3
  $region8: #{_lambda_.17} parent=0 // loop_exit
    _

// kernel: _lambda_.18
$region0: #{_lambda_.18}
  #allocation0 [shape = 'u32[]', space=smem, size = 0x4, offset = 0x4, fixed_abs, tag = 'smem constant byte address 0x4 - core index']
  #allocation1 [shape = 'u32[144,128]{1,0:T(1,128)}', space=vmem, size = 0x12000, scoped, tag = 'internal scratch']
  %s0 = inlined_call_operand.vmem [shape: f32[512,200], index: 0, kind: input, shape index: {}]
  %s1 = inlined_call_operand.vmem [shape: f32[200,16], index: 1, kind: input, shape index: {}]
  %s2 = inlined_call_operand.vmem [shape: f32[1,16], index: 2, kind: input, shape index: {}]
  %s3 = inlined_call_operand.vmem [shape: f32[512,16], index: 3, kind: output, shape index: {}]
  %s4 = sld [smem:[#allocation0]]
  $region45: #{_lambda_.18} parent=0
    _
  %s6 = ssub.s32 1, %s4
  %s7 = scalar_select 0, %s6, %s4
  loop: start=0, step=1, limit=4
  $region2: #{_lambda_.18} parent=0 // loop_pre_header
    _
  $region3: #{_lambda_.18} parent=0 // loop_header
    %s9 = sphi 0, %s13
    %p10 = scmp.ge.s32.totalorder %s9, 4
    %s19 = sphi 0, %s21
    %s22 = sphi 0, %s19
    %s23 = sphi 0, %s22
    %s39 = sphi 0, %s23
    %s43 = sphi 0, %s43
    %s45 = sphi 0, %s43
    %s46 = sphi 0, %s45
    %s60 = sphi 0, %s46
    %s64 = sphi 0, %s64
    %s66 = sphi 0, %s64
    %s67 = sphi 0, %s66
    %s81 = sphi 0, %s67
    %s87 = sphi 0, %s89
    %s90 = sphi 0, %s87
    %s91 = sphi 0, %s90
    %s107 = sphi 0, %s91
  $region4: #{_lambda_.18} parent=0 // loop_header_branch
    %12 = sbr.rel (%p10) target = $region8
  $region5: #{_lambda_.18} parent=0 // loop_body
    %s14 = ssub.s32 %s9, 1
    %s15 = ssub.s32 %s9, 2
    %s16 = sadd.s32 %s9, 1
    %s17 = ssub.s32 %s9, %s16
    %p18 = scmp.eq.s32.totalorder %s17, 0
    %s20 = sadd.s32 %s19, 1
    %s21 = scalar_select %p18, %s19, %s20
    %p24 = pneg %p18
    %p25 = scmp.eq.s32.totalorder %s9, 1
    %p26 = por %p24, %p25
    %p27 = scmp.ne.s32.totalorder %s19, %s22
    %p28 = scmp.eq.s32.totalorder %s9, 0
    %p29 = por %p27, %p28
    %p30 = scmp.ne.s32.totalorder %s19, %s22
    %p31 = scmp.eq.s32.totalorder %s14, 1
    %p32 = por %p30, %p31
    %p33 = scmp.ne.s32.totalorder %s22, %s23
    %p34 = scmp.eq.s32.totalorder %s14, 0
    %p35 = por %p33, %p34
    %p36 = scmp.ne.s32.totalorder %s22, %s23
    %p37 = scmp.eq.s32.totalorder %s15, 1
    %p38 = por %p36, %p37
    %p40 = scmp.ne.s32.totalorder %s23, %s39
    %p41 = scmp.eq.s32.totalorder %s15, 0
    %p42 = por %p40, %p41
    %s44 = sadd.s32 %s43, 1
    %p47 = scmp.eq.s32.totalorder %s9, 1
    %p48 = scmp.ne.s32.totalorder %s43, %s45
    %p49 = scmp.eq.s32.totalorder %s9, 0
    %p50 = por %p48, %p49
    %p51 = scmp.ne.s32.totalorder %s43, %s45
    %p52 = scmp.eq.s32.totalorder %s14, 1
    %p53 = por %p51, %p52
    %p54 = scmp.ne.s32.totalorder %s45, %s46
    %p55 = scmp.eq.s32.totalorder %s14, 0
    %p56 = por %p54, %p55
    %p57 = scmp.ne.s32.totalorder %s45, %s46
    %p58 = scmp.eq.s32.totalorder %s15, 1
    %p59 = por %p57, %p58
    %p61 = scmp.ne.s32.totalorder %s46, %s60
    %p62 = scmp.eq.s32.totalorder %s15, 0
    %p63 = por %p61, %p62
    %s65 = sadd.s32 %s64, 1
    %p68 = scmp.eq.s32.totalorder %s9, 1
    %p69 = scmp.ne.s32.totalorder %s64, %s66
    %p70 = scmp.eq.s32.totalorder %s9, 0
    %p71 = por %p69, %p70
    %p72 = scmp.ne.s32.totalorder %s64, %s66
    %p73 = scmp.eq.s32.totalorder %s14, 1
    %p74 = por %p72, %p73
    %p75 = scmp.ne.s32.totalorder %s66, %s67
    %p76 = scmp.eq.s32.totalorder %s14, 0
    %p77 = por %p75, %p76
    %p78 = scmp.ne.s32.totalorder %s66, %s67
    %p79 = scmp.eq.s32.totalorder %s15, 1
    %p80 = por %p78, %p79
    %p82 = scmp.ne.s32.totalorder %s67, %s81
    %p83 = scmp.eq.s32.totalorder %s15, 0
    %p84 = por %p82, %p83
    %s85 = ssub.s32 %s9, %s16
    %p86 = scmp.eq.s32.totalorder %s85, 0
    %s88 = sadd.s32 %s87, 1
    %s89 = scalar_select %p86, %s87, %s88
    %p92 = pneg %p86
    %p93 = scmp.eq.s32.totalorder %s9, 1
    %p94 = por %p92, %p93
    %p95 = scmp.ne.s32.totalorder %s87, %s90
    %p96 = scmp.eq.s32.totalorder %s9, 0
    %p97 = por %p95, %p96
    %p98 = scmp.ne.s32.totalorder %s87, %s90
    %p99 = scmp.eq.s32.totalorder %s14, 1
    %p100 = por %p98, %p99
    %p101 = scmp.ne.s32.totalorder %s90, %s91
    %p102 = scmp.eq.s32.totalorder %s14, 0
    %p103 = por %p101, %p102
    %p104 = scmp.ne.s32.totalorder %s90, %s91
    %p105 = scmp.eq.s32.totalorder %s15, 1
    %p106 = por %p104, %p105
    %p108 = scmp.ne.s32.totalorder %s91, %s107
    %p109 = scmp.eq.s32.totalorder %s15, 0
    %p110 = por %p108, %p109
    %p111 = scmp.le.s32.totalorder 1, %s9
    %p112 = scmp.lt.s32.totalorder %s9, 3
    %p113 = pnand %p111, %p112
    %p114 = pneg %p113
    // Predicated region
    $region9: #{_lambda_.18} parent=5 // pred_check
      _
    $region10: #{_lambda_.18} parent=5 // pred_check_branch
      %116 = sbr.rel (%p113) target = $region12
    $region11: #{_lambda_.18} parent=5 // pred_region
      %s117 = ssub.s32 %s9, 1
      // Predicated region
      $region13: #{_lambda_.18} parent=11 // pred_check
        %p118 = pneg %p56
      $region14: #{_lambda_.18} parent=11 // pred_check_branch
        %120 = sbr.rel (%p118) target = $region16
      $region15: #{_lambda_.18} parent=11 // pred_region
        _
      $region16: #{_lambda_.18} parent=11 // pred_fallthru
        _
      // Predicated region
      $region17: #{_lambda_.18} parent=11 // pred_check
        %p121 = pneg %p77
      $region18: #{_lambda_.18} parent=11 // pred_check_branch
        %123 = sbr.rel (%p121) target = $region20
      $region19: #{_lambda_.18} parent=11 // pred_region
        _
      $region20: #{_lambda_.18} parent=11 // pred_fallthru
        _
    $region12: #{_lambda_.18} parent=5 // pred_fallthru
      _
    %p124 = scmp.lt.s32.totalorder %s9, 2
    // Predicated region
    $region21: #{_lambda_.18} parent=5 // pred_check
      %p125 = pneg %p124
    $region22: #{_lambda_.18} parent=5 // pred_check_branch
      %127 = sbr.rel (%p125) target = $region24
    $region23: #{_lambda_.18} parent=5 // pred_region
      // Predicated region
      $region25: #{_lambda_.18} parent=23 // pred_check
        %p128 = pneg %p29
      $region26: #{_lambda_.18} parent=23 // pred_check_branch
        %130 = sbr.rel (%p128) target = $region28
      $region27: #{_lambda_.18} parent=23 // pred_region
        %s131 = smul.u32 32, %s9
        %p132 = scmp.lt.s32.totalorder %s131, 63
        %s133 = scalar_select %p132, %s131, 63
        %s134 = smul.addr %s133, 2
        %s135 = smul.addr %s134, 8
        %s136 = scalar_lea.vmem %s0, %s135
        %s137 = smul.u32 32, %s9
      $region28: #{_lambda_.18} parent=23 // pred_fallthru
        _
    $region24: #{_lambda_.18} parent=5 // pred_fallthru
      _
    %p138 = scmp.le.s32.totalorder 1, %s9
    %p139 = scmp.lt.s32.totalorder %s9, 3
    %p140 = pnand %p138, %p139
    %p141 = pneg %p140
    // Predicated region
    $region29: #{_lambda_.18} parent=5 // pred_check
      _
    $region30: #{_lambda_.18} parent=5 // pred_check_branch
      %143 = sbr.rel (%p140) target = $region32
    $region31: #{_lambda_.18} parent=5 // pred_region
      %s144 = ssub.s32 %s9, 1
      %s145 = smul.u32 32, %s14
      %p146 = scmp.lt.s32.totalorder %s145, 63
      %s147 = scalar_select %p146, %s145, 63
      %s148 = smul.addr %s147, 2
      %s149 = smul.addr %s148, 8
      %s150 = scalar_lea.vmem %s0, %s149
      %p151 = pneg %p35
      %p152 = pneg %p32
      %p153 = pneg %p56
      %p154 = pneg %p53
      %p155 = pneg %p77
      %p156 = pneg %p74
      %p157 = pneg %p103
      %p158 = pneg %p100
      %s159 = smul.u32 32, %s14
      %p160 = scmp.lt.s32.totalorder %s159, 63
      %s161 = scalar_select %p160, %s159, 63
      %s162 = smul.addr %s161, 8
      %s163 = scalar_lea.vmem %s3, %s162
      %s164 = smul.u32 32, %s14
      %p165 = scmp.lt.s32.totalorder %s164, 63
      %s166 = scalar_select %p165, %s164, 63
      %s167 = smul.addr %s166, 2
      %s168 = smul.addr %s167, 8
      %s169 = scalar_lea.vmem %s0, %s168
      %s170 = smul.u32 32, %s14
      %s171 = smul.u32 32, %s14
      %p172 = scmp.lt.s32.totalorder %s171, 63
      %s173 = scalar_select %p172, %s171, 63
      %s174 = smul.addr %s173, 8
      %s175 = scalar_lea.vmem %s3, %s174
      %s176 = smul.u32 32, %s14
      %v177 = vld [vmem:[%s169] sm:$0xff]
      %v178 = vld [vmem:[%s169 + $0x8] sm:$0xff]
      %v179 = vld [vmem:[%s169 + $0x10] sm:$0xff]
      %v180 = vld [vmem:[%s169 + $0x18] sm:$0xff]
      %v181 = vld [vmem:[%s169 + $0x20] sm:$0xff]
      %v182 = vld [vmem:[%s169 + $0x28] sm:$0xff]
      %v183 = vld [vmem:[%s169 + $0x30] sm:$0xff]
      %v184 = vld [vmem:[%s169 + $0x38] sm:$0xff]
      %v185 = vld [vmem:[%s169 + $0x40] sm:$0xff]
      %v186 = vld [vmem:[%s169 + $0x48] sm:$0xff]
      %v187 = vld [vmem:[%s169 + $0x50] sm:$0xff]
      %v188 = vld [vmem:[%s169 + $0x58] sm:$0xff]
      %v189 = vld [vmem:[%s169 + $0x60] sm:$0xff]
      %v190 = vld [vmem:[%s169 + $0x68] sm:$0xff]
      %v191 = vld [vmem:[%s169 + $0x70] sm:$0xff]
      %v192 = vld [vmem:[%s169 + $0x78] sm:$0xff]
      %v193 = vld [vmem:[%s169 + $0x80] sm:$0xff]
      %v194 = vld [vmem:[%s169 + $0x88] sm:$0xff]
      %v195 = vld [vmem:[%s169 + $0x90] sm:$0xff]
      %v196 = vld [vmem:[%s169 + $0x98] sm:$0xff]
      %v197 = vld [vmem:[%s169 + $0xa0] sm:$0xff]
      %v198 = vld [vmem:[%s169 + $0xa8] sm:$0xff]
      %v199 = vld [vmem:[%s169 + $0xb0] sm:$0xff]
      %v200 = vld [vmem:[%s169 + $0xb8] sm:$0xff]
      %v201 = vld [vmem:[%s169 + $0xc0] sm:$0xff]
      %v202 = vld [vmem:[%s169 + $0xc8] sm:$0xff]
      %v203 = vld [vmem:[%s169 + $0xd0] sm:$0xff]
      %v204 = vld [vmem:[%s169 + $0xd8] sm:$0xff]
      %v205 = vld [vmem:[%s169 + $0xe0] sm:$0xff]
      %v206 = vld [vmem:[%s169 + $0xe8] sm:$0xff]
      %v207 = vld [vmem:[%s169 + $0xf0] sm:$0xff]
      %v208 = vld [vmem:[%s169 + $0xf8] sm:$0xff]
      %v209 = vld [vmem:[%s169 + $0x100] sm:$0xff]
      %v210 = vld [vmem:[%s169 + $0x108] sm:$0xff]
      %v211 = vld [vmem:[%s169 + $0x110] sm:$0xff]
      %v212 = vld [vmem:[%s169 + $0x118] sm:$0xff]
      %v213 = vld [vmem:[%s169 + $0x120] sm:$0xff]
      %v214 = vld [vmem:[%s169 + $0x128] sm:$0xff]
      %v215 = vld [vmem:[%s169 + $0x130] sm:$0xff]
      %v216 = vld [vmem:[%s169 + $0x138] sm:$0xff]
      %v217 = vld [vmem:[%s169 + $0x140] sm:$0xff]
      %v218 = vld [vmem:[%s169 + $0x148] sm:$0xff]
      %v219 = vld [vmem:[%s169 + $0x150] sm:$0xff]
      %v220 = vld [vmem:[%s169 + $0x158] sm:$0xff]
      %v221 = vld [vmem:[%s169 + $0x160] sm:$0xff]
      %v222 = vld [vmem:[%s169 + $0x168] sm:$0xff]
      %v223 = vld [vmem:[%s169 + $0x170] sm:$0xff]
      %v224 = vld [vmem:[%s169 + $0x178] sm:$0xff]
      %v225 = vld [vmem:[%s169 + $0x180] sm:$0xff]
      %v226 = vld [vmem:[%s169 + $0x188] sm:$0xff]
      %v227 = vld [vmem:[%s169 + $0x190] sm:$0xff]
      %v228 = vld [vmem:[%s169 + $0x198] sm:$0xff]
      %v229 = vld [vmem:[%s169 + $0x1a0] sm:$0xff]
      %v230 = vld [vmem:[%s169 + $0x1a8] sm:$0xff]
      %v231 = vld [vmem:[%s169 + $0x1b0] sm:$0xff]
      %v232 = vld [vmem:[%s169 + $0x1b8] sm:$0xff]
      %v233 = vld [vmem:[%s169 + $0x1c0] sm:$0xff]
      %v234 = vld [vmem:[%s169 + $0x1c8] sm:$0xff]
      %v235 = vld [vmem:[%s169 + $0x1d0] sm:$0xff]
      %v236 = vld [vmem:[%s169 + $0x1d8] sm:$0xff]
      %v237 = vld [vmem:[%s169 + $0x1e0] sm:$0xff]
      %v238 = vld [vmem:[%s169 + $0x1e8] sm:$0xff]
      %v239 = vld [vmem:[%s169 + $0x1f0] sm:$0xff]
      %v240 = vld [vmem:[%s169 + $0x1f8] sm:$0xff]
      %v241 = vld [vmem:[%s1] sm:$0xff]
      %v242 = vld [vmem:[%s1 + $0x8] sm:$0xff]
      %v243 = vld [vmem:[%s1 + $0x10] sm:$0xff]
      %v244 = vld [vmem:[%s1 + $0x18] sm:$0xff]
      %v245 = vld [vmem:[%s1 + $0x20] sm:$0xff]
      %v246 = vld [vmem:[%s1 + $0x28] sm:$0xff]
      %v247 = vld [vmem:[%s1 + $0x30] sm:$0xff]
      %v248 = vld [vmem:[%s1 + $0x38] sm:$0xff]
      %v249 = vld [vmem:[%s1 + $0x40] sm:$0xff]
      %v250 = vld [vmem:[%s1 + $0x48] sm:$0xff]
      %v251 = vld [vmem:[%s1 + $0x50] sm:$0xff]
      %v252 = vld [vmem:[%s1 + $0x58] sm:$0xff]
      %v253 = vld [vmem:[%s1 + $0x60] sm:$0xff]
      %v254 = vld [vmem:[%s1 + $0x68] sm:$0xff]
      %v255 = vld [vmem:[%s1 + $0x70] sm:$0xff]
      %v256 = vld [vmem:[%s1 + $0x78] sm:$0xff]
      %v257 = vld [vmem:[%s1 + $0x80] sm:$0xff]
      %v258 = vld [vmem:[%s1 + $0x88] sm:$0xff]
      %v259 = vld [vmem:[%s1 + $0x90] sm:$0xff]
      %v260 = vld [vmem:[%s1 + $0x98] sm:$0xff]
      %v261 = vld [vmem:[%s1 + $0xa0] sm:$0xff]
      %v262 = vld [vmem:[%s1 + $0xa8] sm:$0xff]
      %v263 = vld [vmem:[%s1 + $0xb0] sm:$0xff]
      %v264 = vld [vmem:[%s1 + $0xb8] sm:$0xff]
      %v265 = vld [vmem:[%s1 + $0xc0] sm:$0xff]
      %v266 = vld [vmem:[%s2] sm:$0x1]
      %v268 = vlaneseq
      %v269 = vshrl.u32 %v268, 7
      %v270 = vsub.s32 0, %v269
      %v271 = vrot.slane %v266, %v270
      %vm273 = vcmask 588800
      %v275 = vsel %vm273, %v178, 0
      %v278 = vsel %vm273, %v180, 0
      %v281 = vsel %vm273, %v182, 0
      %v284 = vsel %vm273, %v184, 0
      %v287 = vsel %vm273, %v186, 0
      %v290 = vsel %vm273, %v188, 0
      %v293 = vsel %vm273, %v190, 0
      %v296 = vsel %vm273, %v192, 0
      %v299 = vsel %vm273, %v194, 0
      %v302 = vsel %vm273, %v196, 0
      %v305 = vsel %vm273, %v198, 0
      %v308 = vsel %vm273, %v200, 0
      %v311 = vsel %vm273, %v202, 0
      %v314 = vsel %vm273, %v204, 0
      %v317 = vsel %vm273, %v206, 0
      %v320 = vsel %vm273, %v208, 0
      %v323 = vsel %vm273, %v210, 0
      %v326 = vsel %vm273, %v212, 0
      %v329 = vsel %vm273, %v214, 0
      %v332 = vsel %vm273, %v216, 0
      %v335 = vsel %vm273, %v218, 0
      %v338 = vsel %vm273, %v220, 0
      %v341 = vsel %vm273, %v222, 0
      %v344 = vsel %vm273, %v224, 0
      %v347 = vsel %vm273, %v226, 0
      %v350 = vsel %vm273, %v228, 0
      %v353 = vsel %vm273, %v230, 0
      %v356 = vsel %vm273, %v232, 0
      %v359 = vsel %vm273, %v234, 0
      %v362 = vsel %vm273, %v236, 0
      %v365 = vsel %vm273, %v238, 0
      %v368 = vsel %vm273, %v240, 0
      %370 = vmatprep.subr.mxu0 0.0
      %371 = vmatpush1.msra.mxu0 %v241
      %372 = vmatprep.subr.mxu0 0.0
      %373 = vmatpush1.msra.mxu0 %v242
      %374 = vmatprep.subr.mxu0 0.0
      %375 = vmatpush1.msra.mxu0 %v243
      %376 = vmatprep.subr.mxu0 0.0
      %377 = vmatpush1.msra.mxu0 %v244
      %378 = vmatprep.subr.mxu0 0.0
      %379 = vmatpush1.msra.mxu0 %v245
      %380 = vmatprep.subr.mxu0 0.0
      %381 = vmatpush1.msra.mxu0 %v246
      %382 = vmatprep.subr.mxu0 0.0
      %383 = vmatpush1.msra.mxu0 %v247
      %384 = vmatprep.subr.mxu0 0.0
      %385 = vmatpush1.msra.mxu0 %v248
      %386 = vmatprep.subr.mxu0 0.0
      %387 = vmatpush1.msra.mxu0 %v249
      %388 = vmatprep.subr.mxu0 0.0
      %389 = vmatpush1.msra.mxu0 %v250
      %390 = vmatprep.subr.mxu0 0.0
      %391 = vmatpush1.msra.mxu0 %v251
      %392 = vmatprep.subr.mxu0 0.0
      %393 = vmatpush1.msra.mxu0 %v252
      %394 = vmatprep.subr.mxu0 0.0
      %395 = vmatpush1.msra.mxu0 %v253
      %396 = vmatprep.subr.mxu0 0.0
      %397 = vmatpush1.msra.mxu0 %v254
      %398 = vmatprep.subr.mxu0 0.0
      %399 = vmatpush1.msra.mxu0 %v255
      %400 = vmatprep.subr.mxu0 0.0
      %401 = vmatpush1.msra.mxu0 %v256
      %402 = vmatprep.subr.mxu0 0.0
      %403 = vmatpush1.msra.mxu0 %v257
      %404 = vmatprep.subr.mxu0 0.0
      %405 = vmatpush1.msra.mxu0 %v258
      %406 = vmatprep.subr.mxu0 0.0
      %407 = vmatpush1.msra.mxu0 %v259
      %408 = vmatprep.subr.mxu0 0.0
      %409 = vmatpush1.msra.mxu0 %v260
      %410 = vmatprep.subr.mxu0 0.0
      %411 = vmatpush1.msra.mxu0 %v261
      %412 = vmatprep.subr.mxu0 0.0
      %413 = vmatpush1.msra.mxu0 %v262
      %414 = vmatprep.subr.mxu0 0.0
      %415 = vmatpush1.msra.mxu0 %v263
      %416 = vmatprep.subr.mxu0 0.0
      %417 = vmatpush1.msra.mxu0 %v264
      %418 = vmatprep.subr.mxu0 0.0
      %419 = vmatpush1.msra.mxu0 %v265
      %420 = vmatprep.subr.mxu0 0.0
      %421 = vmatpush1.msra.mxu0 0.0
      %422 = vmatprep.subr.mxu0 0.0
      %423 = vmatpush1.msra.mxu0 0.0
      %424 = vmatprep.subr.mxu0 0.0
      %425 = vmatpush1.msra.mxu0 0.0
      %426 = vmatprep.subr.mxu0 0.0
      %427 = vmatpush1.msra.mxu0 0.0
      %428 = vmatprep.subr.mxu0 0.0
      %429 = vmatpush1.msra.mxu0 0.0
      %430 = vmatprep.subr.mxu0 0.0
      %431 = vmatpush1.msra.mxu0 0.0
      %432 = vmatprep.subr.mxu0 0.0
      %433 = vmatpush1.msra.mxu0 0.0
      %434 = vmatprep.mubr.f32.mxu0 %v275
      %435 = vmatmul.mubr.f32.gmra.mrb[0].mxu0 %v177
      %v436 = vpop.f32.mrb[0].mxu0
      %v437 = vadd.f32 %v271, %v436
      %v438 = vpop.f32.mrb[0].mxu0
      %439 = vmatprep.mubr.f32.mxu0 %v278
      %440 = vmatmul.mubr.f32.gmra.mrb[0].mxu0 %v179
      %v441 = vpop.f32.mrb[0].mxu0
      %v442 = vadd.f32 %v271, %v441
      %v443 = vpop.f32.mrb[0].mxu0
      %444 = vmatprep.mubr.f32.mxu0 %v281
      %445 = vmatmul.mubr.f32.gmra.mrb[0].mxu0 %v181
      %v446 = vpop.f32.mrb[0].mxu0
      %v447 = vadd.f32 %v271, %v446
      %v448 = vpop.f32.mrb[0].mxu0
      %449 = vmatprep.mubr.f32.mxu0 %v284
      %450 = vmatmul.mubr.f32.gmra.mrb[0].mxu0 %v183
      %v451 = vpop.f32.mrb[0].mxu0
      %v452 = vadd.f32 %v271, %v451
      %v453 = vpop.f32.mrb[0].mxu0
      %454 = vmatprep.mubr.f32.mxu0 %v287
      %455 = vmatmul.mubr.f32.gmra.mrb[0].mxu0 %v185
      %v456 = vpop.f32.mrb[0].mxu0
      %v457 = vadd.f32 %v271, %v456
      %v458 = vpop.f32.mrb[0].mxu0
      %459 = vmatprep.mubr.f32.mxu0 %v290
      %460 = vmatmul.mubr.f32.gmra.mrb[0].mxu0 %v187
      %v461 = vpop.f32.mrb[0].mxu0
      %v462 = vadd.f32 %v271, %v461
      %v463 = vpop.f32.mrb[0].mxu0
      %464 = vmatprep.mubr.f32.mxu0 %v293
      %465 = vmatmul.mubr.f32.gmra.mrb[0].mxu0 %v189
      %v466 = vpop.f32.mrb[0].mxu0
      %v467 = vadd.f32 %v271, %v466
      %v468 = vpop.f32.mrb[0].mxu0
      %469 = vmatprep.mubr.f32.mxu0 %v296
      %470 = vmatmul.mubr.f32.gmra.mrb[0].mxu0 %v191
      %v471 = vpop.f32.mrb[0].mxu0
      %v472 = vadd.f32 %v271, %v471
      %v473 = vpop.f32.mrb[0].mxu0
      %474 = vmatprep.mubr.f32.mxu0 %v299
      %475 = vmatmul.mubr.f32.gmra.mrb[0].mxu0 %v193
      %v476 = vpop.f32.mrb[0].mxu0
      %v477 = vadd.f32 %v271, %v476
      %v478 = vpop.f32.mrb[0].mxu0
      %479 = vmatprep.mubr.f32.mxu0 %v302
      %480 = vmatmul.mubr.f32.gmra.mrb[0].mxu0 %v195
      %v481 = vpop.f32.mrb[0].mxu0
      %v482 = vadd.f32 %v271, %v481
      %v483 = vpop.f32.mrb[0].mxu0
      %484 = vmatprep.mubr.f32.mxu0 %v305
      %485 = vmatmul.mubr.f32.gmra.mrb[0].mxu0 %v197
      %v486 = vpop.f32.mrb[0].mxu0
      %v487 = vadd.f32 %v271, %v486
      %v488 = vpop.f32.mrb[0].mxu0
      %489 = vmatprep.mubr.f32.mxu0 %v308
      %490 = vmatmul.mubr.f32.gmra.mrb[0].mxu0 %v199
      %v491 = vpop.f32.mrb[0].mxu0
      %v492 = vadd.f32 %v271, %v491
      %v493 = vpop.f32.mrb[0].mxu0
      %494 = vmatprep.mubr.f32.mxu0 %v311
      %495 = vmatmul.mubr.f32.gmra.mrb[0].mxu0 %v201
      %v496 = vpop.f32.mrb[0].mxu0
      %v497 = vadd.f32 %v271, %v496
      %v498 = vpop.f32.mrb[0].mxu0
      %499 = vmatprep.mubr.f32.mxu0 %v314
      %500 = vmatmul.mubr.f32.gmra.mrb[0].mxu0 %v203
      %v501 = vpop.f32.mrb[0].mxu0
      %v502 = vadd.f32 %v271, %v501
      %v503 = vpop.f32.mrb[0].mxu0
      %504 = vmatprep.mubr.f32.mxu0 %v317
      %505 = vmatmul.mubr.f32.gmra.mrb[0].mxu0 %v205
      %v506 = vpop.f32.mrb[0].mxu0
      %v507 = vadd.f32 %v271, %v506
      %v508 = vpop.f32.mrb[0].mxu0
      %509 = vmatprep.mubr.f32.mxu0 %v320
      %510 = vmatmul.mubr.f32.gmra.mrb[0].mxu0 %v207
      %v511 = vpop.f32.mrb[0].mxu0
      %v512 = vadd.f32 %v271, %v511
      %v513 = vpop.f32.mrb[0].mxu0
      %514 = vmatprep.mubr.f32.mxu0 %v323
      %515 = vmatmul.mubr.f32.gmra.mrb[0].mxu0 %v209
      %v516 = vpop.f32.mrb[0].mxu0
      %v517 = vadd.f32 %v271, %v516
      %v518 = vpop.f32.mrb[0].mxu0
      %519 = vmatprep.mubr.f32.mxu0 %v326
      %520 = vmatmul.mubr.f32.gmra.mrb[0].mxu0 %v211
      %v521 = vpop.f32.mrb[0].mxu0
      %v522 = vadd.f32 %v271, %v521
      %v523 = vpop.f32.mrb[0].mxu0
      %524 = vmatprep.mubr.f32.mxu0 %v329
      %525 = vmatmul.mubr.f32.gmra.mrb[0].mxu0 %v213
      %v526 = vpop.f32.mrb[0].mxu0
      %v527 = vadd.f32 %v271, %v526
      %v528 = vpop.f32.mrb[0].mxu0
      %529 = vmatprep.mubr.f32.mxu0 %v332
      %530 = vmatmul.mubr.f32.gmra.mrb[0].mxu0 %v215
      %v531 = vpop.f32.mrb[0].mxu0
      %v532 = vadd.f32 %v271, %v531
      %v533 = vpop.f32.mrb[0].mxu0
      %534 = vmatprep.mubr.f32.mxu0 %v335
      %535 = vmatmul.mubr.f32.gmra.mrb[0].mxu0 %v217
      %v536 = vpop.f32.mrb[0].mxu0
      %v537 = vadd.f32 %v271, %v536
      %v538 = vpop.f32.mrb[0].mxu0
      %539 = vmatprep.mubr.f32.mxu0 %v338
      %540 = vmatmul.mubr.f32.gmra.mrb[0].mxu0 %v219
      %v541 = vpop.f32.mrb[0].mxu0
      %v542 = vadd.f32 %v271, %v541
      %v543 = vpop.f32.mrb[0].mxu0
      %544 = vmatprep.mubr.f32.mxu0 %v341
      %545 = vmatmul.mubr.f32.gmra.mrb[0].mxu0 %v221
      %v546 = vpop.f32.mrb[0].mxu0
      %v547 = vadd.f32 %v271, %v546
      %v548 = vpop.f32.mrb[0].mxu0
      %549 = vmatprep.mubr.f32.mxu0 %v344
      %550 = vmatmul.mubr.f32.gmra.mrb[0].mxu0 %v223
      %v551 = vpop.f32.mrb[0].mxu0
      %v552 = vadd.f32 %v271, %v551
      %v553 = vpop.f32.mrb[0].mxu0
      %554 = vmatprep.mubr.f32.mxu0 %v347
      %555 = vmatmul.mubr.f32.gmra.mrb[0].mxu0 %v225
      %v556 = vpop.f32.mrb[0].mxu0
      %v557 = vadd.f32 %v271, %v556
      %v558 = vpop.f32.mrb[0].mxu0
      %559 = vmatprep.mubr.f32.mxu0 %v350
      %560 = vmatmul.mubr.f32.gmra.mrb[0].mxu0 %v227
      %v561 = vpop.f32.mrb[0].mxu0
      %v562 = vadd.f32 %v271, %v561
      %v563 = vpop.f32.mrb[0].mxu0
      %564 = vmatprep.mubr.f32.mxu0 %v353
      %565 = vmatmul.mubr.f32.gmra.mrb[0].mxu0 %v229
      %v566 = vpop.f32.mrb[0].mxu0
      %v567 = vadd.f32 %v271, %v566
      %v568 = vpop.f32.mrb[0].mxu0
      %569 = vmatprep.mubr.f32.mxu0 %v356
      %570 = vmatmul.mubr.f32.gmra.mrb[0].mxu0 %v231
      %v571 = vpop.f32.mrb[0].mxu0
      %v572 = vadd.f32 %v271, %v571
      %v573 = vpop.f32.mrb[0].mxu0
      %574 = vmatprep.mubr.f32.mxu0 %v359
      %575 = vmatmul.mubr.f32.gmra.mrb[0].mxu0 %v233
      %v576 = vpop.f32.mrb[0].mxu0
      %v577 = vadd.f32 %v271, %v576
      %v578 = vpop.f32.mrb[0].mxu0
      %579 = vmatprep.mubr.f32.mxu0 %v362
      %580 = vmatmul.mubr.f32.gmra.mrb[0].mxu0 %v235
      %v581 = vpop.f32.mrb[0].mxu0
      %v582 = vadd.f32 %v271, %v581
      %v583 = vpop.f32.mrb[0].mxu0
      %584 = vmatprep.mubr.f32.mxu0 %v365
      %585 = vmatmul.mubr.f32.gmra.mrb[0].mxu0 %v237
      %v586 = vpop.f32.mrb[0].mxu0
      %v587 = vadd.f32 %v271, %v586
      %v588 = vpop.f32.mrb[0].mxu0
      %589 = vmatprep.mubr.f32.mxu0 %v368
      %590 = vmatmul.mubr.f32.gmra.mrb[0].mxu0 %v239
      %v591 = vpop.f32.mrb[0].mxu0
      %v592 = vadd.f32 %v271, %v591
      %v593 = vpop.f32.mrb[0].mxu0
      %594 = vdwg.mxu0
      %v595 = vmax.f32 %v437, 0.0
      %v596 = vmax.f32 %v442, 0.0
      %v597 = vmax.f32 %v447, 0.0
      %v598 = vmax.f32 %v452, 0.0
      %v599 = vmax.f32 %v457, 0.0
      %v600 = vmax.f32 %v462, 0.0
      %v601 = vmax.f32 %v467, 0.0
      %v602 = vmax.f32 %v472, 0.0
      %v603 = vmax.f32 %v477, 0.0
      %v604 = vmax.f32 %v482, 0.0
      %v605 = vmax.f32 %v487, 0.0
      %v606 = vmax.f32 %v492, 0.0
      %v607 = vmax.f32 %v497, 0.0
      %v608 = vmax.f32 %v502, 0.0
      %v609 = vmax.f32 %v507, 0.0
      %v610 = vmax.f32 %v512, 0.0
      %v611 = vmax.f32 %v517, 0.0
      %v612 = vmax.f32 %v522, 0.0
      %v613 = vmax.f32 %v527, 0.0
      %v614 = vmax.f32 %v532, 0.0
      %v615 = vmax.f32 %v537, 0.0
      %v616 = vmax.f32 %v542, 0.0
      %v617 = vmax.f32 %v547, 0.0
      %v618 = vmax.f32 %v552, 0.0
      %v619 = vmax.f32 %v557, 0.0
      %v620 = vmax.f32 %v562, 0.0
      %v621 = vmax.f32 %v567, 0.0
      %v622 = vmax.f32 %v572, 0.0
      %v623 = vmax.f32 %v577, 0.0
      %v624 = vmax.f32 %v582, 0.0
      %v625 = vmax.f32 %v587, 0.0
      %v626 = vmax.f32 %v592, 0.0
      %vm627 = vcmask 130048
      %628 = vst.msk [vmem:[%s175] sm:$0xff] %vm627, %v595
      %629 = vst.msk [vmem:[%s175 + $0x8] sm:$0xff] %vm627, %v596
      %630 = vst.msk [vmem:[%s175 + $0x10] sm:$0xff] %vm627, %v597
      %631 = vst.msk [vmem:[%s175 + $0x18] sm:$0xff] %vm627, %v598
      %632 = vst.msk [vmem:[%s175 + $0x20] sm:$0xff] %vm627, %v599
      %633 = vst.msk [vmem:[%s175 + $0x28] sm:$0xff] %vm627, %v600
      %634 = vst.msk [vmem:[%s175 + $0x30] sm:$0xff] %vm627, %v601
      %635 = vst.msk [vmem:[%s175 + $0x38] sm:$0xff] %vm627, %v602
      %636 = vst.msk [vmem:[%s175 + $0x40] sm:$0xff] %vm627, %v603
      %637 = vst.msk [vmem:[%s175 + $0x48] sm:$0xff] %vm627, %v604
      %638 = vst.msk [vmem:[%s175 + $0x50] sm:$0xff] %vm627, %v605
      %639 = vst.msk [vmem:[%s175 + $0x58] sm:$0xff] %vm627, %v606
      %640 = vst.msk [vmem:[%s175 + $0x60] sm:$0xff] %vm627, %v607
      %641 = vst.msk [vmem:[%s175 + $0x68] sm:$0xff] %vm627, %v608
      %642 = vst.msk [vmem:[%s175 + $0x70] sm:$0xff] %vm627, %v609
      %643 = vst.msk [vmem:[%s175 + $0x78] sm:$0xff] %vm627, %v610
      %644 = vst.msk [vmem:[%s175 + $0x80] sm:$0xff] %vm627, %v611
      %645 = vst.msk [vmem:[%s175 + $0x88] sm:$0xff] %vm627, %v612
      %646 = vst.msk [vmem:[%s175 + $0x90] sm:$0xff] %vm627, %v613
      %647 = vst.msk [vmem:[%s175 + $0x98] sm:$0xff] %vm627, %v614
      %648 = vst.msk [vmem:[%s175 + $0xa0] sm:$0xff] %vm627, %v615
      %649 = vst.msk [vmem:[%s175 + $0xa8] sm:$0xff] %vm627, %v616
      %650 = vst.msk [vmem:[%s175 + $0xb0] sm:$0xff] %vm627, %v617
      %651 = vst.msk [vmem:[%s175 + $0xb8] sm:$0xff] %vm627, %v618
      %652 = vst.msk [vmem:[%s175 + $0xc0] sm:$0xff] %vm627, %v619
      %653 = vst.msk [vmem:[%s175 + $0xc8] sm:$0xff] %vm627, %v620
      %654 = vst.msk [vmem:[%s175 + $0xd0] sm:$0xff] %vm627, %v621
      %655 = vst.msk [vmem:[%s175 + $0xd8] sm:$0xff] %vm627, %v622
      %656 = vst.msk [vmem:[%s175 + $0xe0] sm:$0xff] %vm627, %v623
      %657 = vst.msk [vmem:[%s175 + $0xe8] sm:$0xff] %vm627, %v624
      %658 = vst.msk [vmem:[%s175 + $0xf0] sm:$0xff] %vm627, %v625
      %659 = vst.msk [vmem:[%s175 + $0xf8] sm:$0xff] %vm627, %v626
      %s660 = smul.u32 32, %s14
      %p661 = scmp.lt.s32.totalorder %s660, 63
      %s662 = scalar_select %p661, %s660, 63
      %s663 = smul.addr %s662, 8
      %s664 = scalar_lea.vmem %s3, %s663
      // Predicated region
      $region33: #{_lambda_.18} parent=31 // pred_check
        %p665 = pneg %p100
      $region34: #{_lambda_.18} parent=31 // pred_check_branch
        %667 = sbr.rel (%p665) target = $region36
      $region35: #{_lambda_.18} parent=31 // pred_region
        %s668 = smul.u32 32, %s14
      $region36: #{_lambda_.18} parent=31 // pred_fallthru
        _
    $region32: #{_lambda_.18} parent=5 // pred_fallthru
      _
    %p669 = scmp.le.s32.totalorder 2, %s9
    // Predicated region
    $region37: #{_lambda_.18} parent=5 // pred_check
      %p670 = pneg %p669
    $region38: #{_lambda_.18} parent=5 // pred_check_branch
      %672 = sbr.rel (%p670) target = $region40
    $region39: #{_lambda_.18} parent=5 // pred_region
      %s673 = ssub.s32 %s9, 2
      // Predicated region
      $region41: #{_lambda_.18} parent=39 // pred_check
        %p674 = pneg %p106
      $region42: #{_lambda_.18} parent=39 // pred_check_branch
        %676 = sbr.rel (%p674) target = $region44
      $region43: #{_lambda_.18} parent=39 // pred_region
        %s677 = smul.u32 32, %s15
        %p678 = scmp.lt.s32.totalorder %s677, 63
        %s679 = scalar_select %p678, %s677, 63
        %s680 = smul.addr %s679, 8
        %s681 = scalar_lea.vmem %s3, %s680
      $region44: #{_lambda_.18} parent=39 // pred_fallthru
        _
    $region40: #{_lambda_.18} parent=5 // pred_fallthru
      _
  $region6: #{_lambda_.18} parent=0 // loop_footer
    %s13 = sadd.s32 1, %s9
  $region7: #{_lambda_.18} parent=0 // loop_footer_branch
    %8 = sbr.rel target = $region3
  $region8: #{_lambda_.18} parent=0 // loop_exit
    _

// kernel: _lambda_.19
$region0: #{_lambda_.19}
  #allocation0 [shape = 'u32[]', space=smem, size = 0x4, offset = 0x4, fixed_abs, tag = 'smem constant byte address 0x4 - core index']
  #allocation1 [shape = 'u32[144,128]{1,0:T(1,128)}', space=vmem, size = 0x12000, scoped, tag = 'internal scratch']
  %s0 = inlined_call_operand.vmem [shape: f32[512,144], index: 0, kind: input, shape index: {}]
  %s1 = inlined_call_operand.vmem [shape: f32[144,16], index: 1, kind: input, shape index: {}]
  %s2 = inlined_call_operand.vmem [shape: f32[1,16], index: 2, kind: input, shape index: {}]
  %s3 = inlined_call_operand.vmem [shape: f32[512,16], index: 3, kind: output, shape index: {}]
  %s4 = sld [smem:[#allocation0]]
  $region45: #{_lambda_.19} parent=0
    _
  %s6 = ssub.s32 1, %s4
  %s7 = scalar_select 0, %s6, %s4
  loop: start=0, step=1, limit=4
  $region2: #{_lambda_.19} parent=0 // loop_pre_header
    _
  $region3: #{_lambda_.19} parent=0 // loop_header
    %s9 = sphi 0, %s13
    %p10 = scmp.ge.s32.totalorder %s9, 4
    %s19 = sphi 0, %s21
    %s22 = sphi 0, %s19
    %s23 = sphi 0, %s22
    %s39 = sphi 0, %s23
    %s43 = sphi 0, %s43
    %s45 = sphi 0, %s43
    %s46 = sphi 0, %s45
    %s60 = sphi 0, %s46
    %s64 = sphi 0, %s64
    %s66 = sphi 0, %s64
    %s67 = sphi 0, %s66
    %s81 = sphi 0, %s67
    %s87 = sphi 0, %s89
    %s90 = sphi 0, %s87
    %s91 = sphi 0, %s90
    %s107 = sphi 0, %s91
  $region4: #{_lambda_.19} parent=0 // loop_header_branch
    %12 = sbr.rel (%p10) target = $region8
  $region5: #{_lambda_.19} parent=0 // loop_body
    %s14 = ssub.s32 %s9, 1
    %s15 = ssub.s32 %s9, 2
    %s16 = sadd.s32 %s9, 1
    %s17 = ssub.s32 %s9, %s16
    %p18 = scmp.eq.s32.totalorder %s17, 0
    %s20 = sadd.s32 %s19, 1
    %s21 = scalar_select %p18, %s19, %s20
    %p24 = pneg %p18
    %p25 = scmp.eq.s32.totalorder %s9, 1
    %p26 = por %p24, %p25
    %p27 = scmp.ne.s32.totalorder %s19, %s22
    %p28 = scmp.eq.s32.totalorder %s9, 0
    %p29 = por %p27, %p28
    %p30 = scmp.ne.s32.totalorder %s19, %s22
    %p31 = scmp.eq.s32.totalorder %s14, 1
    %p32 = por %p30, %p31
    %p33 = scmp.ne.s32.totalorder %s22, %s23
    %p34 = scmp.eq.s32.totalorder %s14, 0
    %p35 = por %p33, %p34
    %p36 = scmp.ne.s32.totalorder %s22, %s23
    %p37 = scmp.eq.s32.totalorder %s15, 1
    %p38 = por %p36, %p37
    %p40 = scmp.ne.s32.totalorder %s23, %s39
    %p41 = scmp.eq.s32.totalorder %s15, 0
    %p42 = por %p40, %p41
    %s44 = sadd.s32 %s43, 1
    %p47 = scmp.eq.s32.totalorder %s9, 1
    %p48 = scmp.ne.s32.totalorder %s43, %s45
    %p49 = scmp.eq.s32.totalorder %s9, 0
    %p50 = por %p48, %p49
    %p51 = scmp.ne.s32.totalorder %s43, %s45
    %p52 = scmp.eq.s32.totalorder %s14, 1
    %p53 = por %p51, %p52
    %p54 = scmp.ne.s32.totalorder %s45, %s46
    %p55 = scmp.eq.s32.totalorder %s14, 0
    %p56 = por %p54, %p55
    %p57 = scmp.ne.s32.totalorder %s45, %s46
    %p58 = scmp.eq.s32.totalorder %s15, 1
    %p59 = por %p57, %p58
    %p61 = scmp.ne.s32.totalorder %s46, %s60
    %p62 = scmp.eq.s32.totalorder %s15, 0
    %p63 = por %p61, %p62
    %s65 = sadd.s32 %s64, 1
    %p68 = scmp.eq.s32.totalorder %s9, 1
    %p69 = scmp.ne.s32.totalorder %s64, %s66
    %p70 = scmp.eq.s32.totalorder %s9, 0
    %p71 = por %p69, %p70
    %p72 = scmp.ne.s32.totalorder %s64, %s66
    %p73 = scmp.eq.s32.totalorder %s14, 1
    %p74 = por %p72, %p73
    %p75 = scmp.ne.s32.totalorder %s66, %s67
    %p76 = scmp.eq.s32.totalorder %s14, 0
    %p77 = por %p75, %p76
    %p78 = scmp.ne.s32.totalorder %s66, %s67
    %p79 = scmp.eq.s32.totalorder %s15, 1
    %p80 = por %p78, %p79
    %p82 = scmp.ne.s32.totalorder %s67, %s81
    %p83 = scmp.eq.s32.totalorder %s15, 0
    %p84 = por %p82, %p83
    %s85 = ssub.s32 %s9, %s16
    %p86 = scmp.eq.s32.totalorder %s85, 0
    %s88 = sadd.s32 %s87, 1
    %s89 = scalar_select %p86, %s87, %s88
    %p92 = pneg %p86
    %p93 = scmp.eq.s32.totalorder %s9, 1
    %p94 = por %p92, %p93
    %p95 = scmp.ne.s32.totalorder %s87, %s90
    %p96 = scmp.eq.s32.totalorder %s9, 0
    %p97 = por %p95, %p96
    %p98 = scmp.ne.s32.totalorder %s87, %s90
    %p99 = scmp.eq.s32.totalorder %s14, 1
    %p100 = por %p98, %p99
    %p101 = scmp.ne.s32.totalorder %s90, %s91
    %p102 = scmp.eq.s32.totalorder %s14, 0
    %p103 = por %p101, %p102
    %p104 = scmp.ne.s32.totalorder %s90, %s91
    %p105 = scmp.eq.s32.totalorder %s15, 1
    %p106 = por %p104, %p105
    %p108 = scmp.ne.s32.totalorder %s91, %s107
    %p109 = scmp.eq.s32.totalorder %s15, 0
    %p110 = por %p108, %p109
    %p111 = scmp.le.s32.totalorder 1, %s9
    %p112 = scmp.lt.s32.totalorder %s9, 3
    %p113 = pnand %p111, %p112
    %p114 = pneg %p113
    // Predicated region
    $region9: #{_lambda_.19} parent=5 // pred_check
      _
    $region10: #{_lambda_.19} parent=5 // pred_check_branch
      %116 = sbr.rel (%p113) target = $region12
    $region11: #{_lambda_.19} parent=5 // pred_region
      %s117 = ssub.s32 %s9, 1
      // Predicated region
      $region13: #{_lambda_.19} parent=11 // pred_check
        %p118 = pneg %p56
      $region14: #{_lambda_.19} parent=11 // pred_check_branch
        %120 = sbr.rel (%p118) target = $region16
      $region15: #{_lambda_.19} parent=11 // pred_region
        _
      $region16: #{_lambda_.19} parent=11 // pred_fallthru
        _
      // Predicated region
      $region17: #{_lambda_.19} parent=11 // pred_check
        %p121 = pneg %p77
      $region18: #{_lambda_.19} parent=11 // pred_check_branch
        %123 = sbr.rel (%p121) target = $region20
      $region19: #{_lambda_.19} parent=11 // pred_region
        _
      $region20: #{_lambda_.19} parent=11 // pred_fallthru
        _
    $region12: #{_lambda_.19} parent=5 // pred_fallthru
      _
    %p124 = scmp.lt.s32.totalorder %s9, 2
    // Predicated region
    $region21: #{_lambda_.19} parent=5 // pred_check
      %p125 = pneg %p124
    $region22: #{_lambda_.19} parent=5 // pred_check_branch
      %127 = sbr.rel (%p125) target = $region24
    $region23: #{_lambda_.19} parent=5 // pred_region
      // Predicated region
      $region25: #{_lambda_.19} parent=23 // pred_check
        %p128 = pneg %p29
      $region26: #{_lambda_.19} parent=23 // pred_check_branch
        %130 = sbr.rel (%p128) target = $region28
      $region27: #{_lambda_.19} parent=23 // pred_region
        %s131 = smul.u32 32, %s9
        %p132 = scmp.lt.s32.totalorder %s131, 63
        %s133 = scalar_select %p132, %s131, 63
        %s134 = smul.addr %s133, 2
        %s135 = smul.addr %s134, 8
        %s136 = scalar_lea.vmem %s0, %s135
        %s137 = smul.u32 32, %s9
      $region28: #{_lambda_.19} parent=23 // pred_fallthru
        _
    $region24: #{_lambda_.19} parent=5 // pred_fallthru
      _
    %p138 = scmp.le.s32.totalorder 1, %s9
    %p139 = scmp.lt.s32.totalorder %s9, 3
    %p140 = pnand %p138, %p139
    %p141 = pneg %p140
    // Predicated region
    $region29: #{_lambda_.19} parent=5 // pred_check
      _
    $region30: #{_lambda_.19} parent=5 // pred_check_branch
      %143 = sbr.rel (%p140) target = $region32
    $region31: #{_lambda_.19} parent=5 // pred_region
      %s144 = ssub.s32 %s9, 1
      %s145 = smul.u32 32, %s14
      %p146 = scmp.lt.s32.totalorder %s145, 63
      %s147 = scalar_select %p146, %s145, 63
      %s148 = smul.addr %s147, 2
      %s149 = smul.addr %s148, 8
      %s150 = scalar_lea.vmem %s0, %s149
      %p151 = pneg %p35
      %p152 = pneg %p32
      %p153 = pneg %p56
      %p154 = pneg %p53
      %p155 = pneg %p77
      %p156 = pneg %p74
      %p157 = pneg %p103
      %p158 = pneg %p100
      %s159 = smul.u32 32, %s14
      %p160 = scmp.lt.s32.totalorder %s159, 63
      %s161 = scalar_select %p160, %s159, 63
      %s162 = smul.addr %s161, 8
      %s163 = scalar_lea.vmem %s3, %s162
      %s164 = smul.u32 32, %s14
      %p165 = scmp.lt.s32.totalorder %s164, 63
      %s166 = scalar_select %p165, %s164, 63
      %s167 = smul.addr %s166, 2
      %s168 = smul.addr %s167, 8
      %s169 = scalar_lea.vmem %s0, %s168
      %s170 = smul.u32 32, %s14
      %s171 = smul.u32 32, %s14
      %p172 = scmp.lt.s32.totalorder %s171, 63
      %s173 = scalar_select %p172, %s171, 63
      %s174 = smul.addr %s173, 8
      %s175 = scalar_lea.vmem %s3, %s174
      %s176 = smul.u32 32, %s14
      %v177 = vld [vmem:[%s169] sm:$0xff]
      %v178 = vld [vmem:[%s169 + $0x8] sm:$0xff]
      %v179 = vld [vmem:[%s169 + $0x10] sm:$0xff]
      %v180 = vld [vmem:[%s169 + $0x18] sm:$0xff]
      %v181 = vld [vmem:[%s169 + $0x20] sm:$0xff]
      %v182 = vld [vmem:[%s169 + $0x28] sm:$0xff]
      %v183 = vld [vmem:[%s169 + $0x30] sm:$0xff]
      %v184 = vld [vmem:[%s169 + $0x38] sm:$0xff]
      %v185 = vld [vmem:[%s169 + $0x40] sm:$0xff]
      %v186 = vld [vmem:[%s169 + $0x48] sm:$0xff]
      %v187 = vld [vmem:[%s169 + $0x50] sm:$0xff]
      %v188 = vld [vmem:[%s169 + $0x58] sm:$0xff]
      %v189 = vld [vmem:[%s169 + $0x60] sm:$0xff]
      %v190 = vld [vmem:[%s169 + $0x68] sm:$0xff]
      %v191 = vld [vmem:[%s169 + $0x70] sm:$0xff]
      %v192 = vld [vmem:[%s169 + $0x78] sm:$0xff]
      %v193 = vld [vmem:[%s169 + $0x80] sm:$0xff]
      %v194 = vld [vmem:[%s169 + $0x88] sm:$0xff]
      %v195 = vld [vmem:[%s169 + $0x90] sm:$0xff]
      %v196 = vld [vmem:[%s169 + $0x98] sm:$0xff]
      %v197 = vld [vmem:[%s169 + $0xa0] sm:$0xff]
      %v198 = vld [vmem:[%s169 + $0xa8] sm:$0xff]
      %v199 = vld [vmem:[%s169 + $0xb0] sm:$0xff]
      %v200 = vld [vmem:[%s169 + $0xb8] sm:$0xff]
      %v201 = vld [vmem:[%s169 + $0xc0] sm:$0xff]
      %v202 = vld [vmem:[%s169 + $0xc8] sm:$0xff]
      %v203 = vld [vmem:[%s169 + $0xd0] sm:$0xff]
      %v204 = vld [vmem:[%s169 + $0xd8] sm:$0xff]
      %v205 = vld [vmem:[%s169 + $0xe0] sm:$0xff]
      %v206 = vld [vmem:[%s169 + $0xe8] sm:$0xff]
      %v207 = vld [vmem:[%s169 + $0xf0] sm:$0xff]
      %v208 = vld [vmem:[%s169 + $0xf8] sm:$0xff]
      %v209 = vld [vmem:[%s169 + $0x100] sm:$0xff]
      %v210 = vld [vmem:[%s169 + $0x108] sm:$0xff]
      %v211 = vld [vmem:[%s169 + $0x110] sm:$0xff]
      %v212 = vld [vmem:[%s169 + $0x118] sm:$0xff]
      %v213 = vld [vmem:[%s169 + $0x120] sm:$0xff]
      %v214 = vld [vmem:[%s169 + $0x128] sm:$0xff]
      %v215 = vld [vmem:[%s169 + $0x130] sm:$0xff]
      %v216 = vld [vmem:[%s169 + $0x138] sm:$0xff]
      %v217 = vld [vmem:[%s169 + $0x140] sm:$0xff]
      %v218 = vld [vmem:[%s169 + $0x148] sm:$0xff]
      %v219 = vld [vmem:[%s169 + $0x150] sm:$0xff]
      %v220 = vld [vmem:[%s169 + $0x158] sm:$0xff]
      %v221 = vld [vmem:[%s169 + $0x160] sm:$0xff]
      %v222 = vld [vmem:[%s169 + $0x168] sm:$0xff]
      %v223 = vld [vmem:[%s169 + $0x170] sm:$0xff]
      %v224 = vld [vmem:[%s169 + $0x178] sm:$0xff]
      %v225 = vld [vmem:[%s169 + $0x180] sm:$0xff]
      %v226 = vld [vmem:[%s169 + $0x188] sm:$0xff]
      %v227 = vld [vmem:[%s169 + $0x190] sm:$0xff]
      %v228 = vld [vmem:[%s169 + $0x198] sm:$0xff]
      %v229 = vld [vmem:[%s169 + $0x1a0] sm:$0xff]
      %v230 = vld [vmem:[%s169 + $0x1a8] sm:$0xff]
      %v231 = vld [vmem:[%s169 + $0x1b0] sm:$0xff]
      %v232 = vld [vmem:[%s169 + $0x1b8] sm:$0xff]
      %v233 = vld [vmem:[%s169 + $0x1c0] sm:$0xff]
      %v234 = vld [vmem:[%s169 + $0x1c8] sm:$0xff]
      %v235 = vld [vmem:[%s169 + $0x1d0] sm:$0xff]
      %v236 = vld [vmem:[%s169 + $0x1d8] sm:$0xff]
      %v237 = vld [vmem:[%s169 + $0x1e0] sm:$0xff]
      %v238 = vld [vmem:[%s169 + $0x1e8] sm:$0xff]
      %v239 = vld [vmem:[%s169 + $0x1f0] sm:$0xff]
      %v240 = vld [vmem:[%s169 + $0x1f8] sm:$0xff]
      %v241 = vld [vmem:[%s1] sm:$0xff]
      %v242 = vld [vmem:[%s1 + $0x8] sm:$0xff]
      %v243 = vld [vmem:[%s1 + $0x10] sm:$0xff]
      %v244 = vld [vmem:[%s1 + $0x18] sm:$0xff]
      %v245 = vld [vmem:[%s1 + $0x20] sm:$0xff]
      %v246 = vld [vmem:[%s1 + $0x28] sm:$0xff]
      %v247 = vld [vmem:[%s1 + $0x30] sm:$0xff]
      %v248 = vld [vmem:[%s1 + $0x38] sm:$0xff]
      %v249 = vld [vmem:[%s1 + $0x40] sm:$0xff]
      %v250 = vld [vmem:[%s1 + $0x48] sm:$0xff]
      %v251 = vld [vmem:[%s1 + $0x50] sm:$0xff]
      %v252 = vld [vmem:[%s1 + $0x58] sm:$0xff]
      %v253 = vld [vmem:[%s1 + $0x60] sm:$0xff]
      %v254 = vld [vmem:[%s1 + $0x68] sm:$0xff]
      %v255 = vld [vmem:[%s1 + $0x70] sm:$0xff]
      %v256 = vld [vmem:[%s1 + $0x78] sm:$0xff]
      %v257 = vld [vmem:[%s1 + $0x80] sm:$0xff]
      %v258 = vld [vmem:[%s1 + $0x88] sm:$0xff]
      %v259 = vld [vmem:[%s2] sm:$0x1]
      %v261 = vlaneseq
      %v262 = vshrl.u32 %v261, 7
      %v263 = vsub.s32 0, %v262
      %v264 = vrot.slane %v259, %v263
      %vm266 = vcmask 130048
      %v268 = vsel %vm266, %v178, 0
      %v271 = vsel %vm266, %v180, 0
      %v274 = vsel %vm266, %v182, 0
      %v277 = vsel %vm266, %v184, 0
      %v280 = vsel %vm266, %v186, 0
      %v283 = vsel %vm266, %v188, 0
      %v286 = vsel %vm266, %v190, 0
      %v289 = vsel %vm266, %v192, 0
      %v292 = vsel %vm266, %v194, 0
      %v295 = vsel %vm266, %v196, 0
      %v298 = vsel %vm266, %v198, 0
      %v301 = vsel %vm266, %v200, 0
      %v304 = vsel %vm266, %v202, 0
      %v307 = vsel %vm266, %v204, 0
      %v310 = vsel %vm266, %v206, 0
      %v313 = vsel %vm266, %v208, 0
      %v316 = vsel %vm266, %v210, 0
      %v319 = vsel %vm266, %v212, 0
      %v322 = vsel %vm266, %v214, 0
      %v325 = vsel %vm266, %v216, 0
      %v328 = vsel %vm266, %v218, 0
      %v331 = vsel %vm266, %v220, 0
      %v334 = vsel %vm266, %v222, 0
      %v337 = vsel %vm266, %v224, 0
      %v340 = vsel %vm266, %v226, 0
      %v343 = vsel %vm266, %v228, 0
      %v346 = vsel %vm266, %v230, 0
      %v349 = vsel %vm266, %v232, 0
      %v352 = vsel %vm266, %v234, 0
      %v355 = vsel %vm266, %v236, 0
      %v358 = vsel %vm266, %v238, 0
      %v361 = vsel %vm266, %v240, 0
      %363 = vmatprep.subr.mxu0 0.0
      %364 = vmatpush1.msra.mxu0 %v241
      %365 = vmatprep.subr.mxu0 0.0
      %366 = vmatpush1.msra.mxu0 %v242
      %367 = vmatprep.subr.mxu0 0.0
      %368 = vmatpush1.msra.mxu0 %v243
      %369 = vmatprep.subr.mxu0 0.0
      %370 = vmatpush1.msra.mxu0 %v244
      %371 = vmatprep.subr.mxu0 0.0
      %372 = vmatpush1.msra.mxu0 %v245
      %373 = vmatprep.subr.mxu0 0.0
      %374 = vmatpush1.msra.mxu0 %v246
      %375 = vmatprep.subr.mxu0 0.0
      %376 = vmatpush1.msra.mxu0 %v247
      %377 = vmatprep.subr.mxu0 0.0
      %378 = vmatpush1.msra.mxu0 %v248
      %379 = vmatprep.subr.mxu0 0.0
      %380 = vmatpush1.msra.mxu0 %v249
      %381 = vmatprep.subr.mxu0 0.0
      %382 = vmatpush1.msra.mxu0 %v250
      %383 = vmatprep.subr.mxu0 0.0
      %384 = vmatpush1.msra.mxu0 %v251
      %385 = vmatprep.subr.mxu0 0.0
      %386 = vmatpush1.msra.mxu0 %v252
      %387 = vmatprep.subr.mxu0 0.0
      %388 = vmatpush1.msra.mxu0 %v253
      %389 = vmatprep.subr.mxu0 0.0
      %390 = vmatpush1.msra.mxu0 %v254
      %391 = vmatprep.subr.mxu0 0.0
      %392 = vmatpush1.msra.mxu0 %v255
      %393 = vmatprep.subr.mxu0 0.0
      %394 = vmatpush1.msra.mxu0 %v256
      %395 = vmatprep.subr.mxu0 0.0
      %396 = vmatpush1.msra.mxu0 %v257
      %397 = vmatprep.subr.mxu0 0.0
      %398 = vmatpush1.msra.mxu0 %v258
      %399 = vmatprep.subr.mxu0 0.0
      %400 = vmatpush1.msra.mxu0 0.0
      %401 = vmatprep.subr.mxu0 0.0
      %402 = vmatpush1.msra.mxu0 0.0
      %403 = vmatprep.subr.mxu0 0.0
      %404 = vmatpush1.msra.mxu0 0.0
      %405 = vmatprep.subr.mxu0 0.0
      %406 = vmatpush1.msra.mxu0 0.0
      %407 = vmatprep.subr.mxu0 0.0
      %408 = vmatpush1.msra.mxu0 0.0
      %409 = vmatprep.subr.mxu0 0.0
      %410 = vmatpush1.msra.mxu0 0.0
      %411 = vmatprep.subr.mxu0 0.0
      %412 = vmatpush1.msra.mxu0 0.0
      %413 = vmatprep.subr.mxu0 0.0
      %414 = vmatpush1.msra.mxu0 0.0
      %415 = vmatprep.subr.mxu0 0.0
      %416 = vmatpush1.msra.mxu0 0.0
      %417 = vmatprep.subr.mxu0 0.0
      %418 = vmatpush1.msra.mxu0 0.0
      %419 = vmatprep.subr.mxu0 0.0
      %420 = vmatpush1.msra.mxu0 0.0
      %421 = vmatprep.subr.mxu0 0.0
      %422 = vmatpush1.msra.mxu0 0.0
      %423 = vmatprep.subr.mxu0 0.0
      %424 = vmatpush1.msra.mxu0 0.0
      %425 = vmatprep.subr.mxu0 0.0
      %426 = vmatpush1.msra.mxu0 0.0
      %427 = vmatprep.mubr.f32.mxu0 %v268
      %428 = vmatmul.mubr.f32.gmra.mrb[0].mxu0 %v177
      %v429 = vpop.f32.mrb[0].mxu0
      %v430 = vadd.f32 %v264, %v429
      %v431 = vpop.f32.mrb[0].mxu0
      %432 = vmatprep.mubr.f32.mxu0 %v271
      %433 = vmatmul.mubr.f32.gmra.mrb[0].mxu0 %v179
      %v434 = vpop.f32.mrb[0].mxu0
      %v435 = vadd.f32 %v264, %v434
      %v436 = vpop.f32.mrb[0].mxu0
      %437 = vmatprep.mubr.f32.mxu0 %v274
      %438 = vmatmul.mubr.f32.gmra.mrb[0].mxu0 %v181
      %v439 = vpop.f32.mrb[0].mxu0
      %v440 = vadd.f32 %v264, %v439
      %v441 = vpop.f32.mrb[0].mxu0
      %442 = vmatprep.mubr.f32.mxu0 %v277
      %443 = vmatmul.mubr.f32.gmra.mrb[0].mxu0 %v183
      %v444 = vpop.f32.mrb[0].mxu0
      %v445 = vadd.f32 %v264, %v444
      %v446 = vpop.f32.mrb[0].mxu0
      %447 = vmatprep.mubr.f32.mxu0 %v280
      %448 = vmatmul.mubr.f32.gmra.mrb[0].mxu0 %v185
      %v449 = vpop.f32.mrb[0].mxu0
      %v450 = vadd.f32 %v264, %v449
      %v451 = vpop.f32.mrb[0].mxu0
      %452 = vmatprep.mubr.f32.mxu0 %v283
      %453 = vmatmul.mubr.f32.gmra.mrb[0].mxu0 %v187
      %v454 = vpop.f32.mrb[0].mxu0
      %v455 = vadd.f32 %v264, %v454
      %v456 = vpop.f32.mrb[0].mxu0
      %457 = vmatprep.mubr.f32.mxu0 %v286
      %458 = vmatmul.mubr.f32.gmra.mrb[0].mxu0 %v189
      %v459 = vpop.f32.mrb[0].mxu0
      %v460 = vadd.f32 %v264, %v459
      %v461 = vpop.f32.mrb[0].mxu0
      %462 = vmatprep.mubr.f32.mxu0 %v289
      %463 = vmatmul.mubr.f32.gmra.mrb[0].mxu0 %v191
      %v464 = vpop.f32.mrb[0].mxu0
      %v465 = vadd.f32 %v264, %v464
      %v466 = vpop.f32.mrb[0].mxu0
      %467 = vmatprep.mubr.f32.mxu0 %v292
      %468 = vmatmul.mubr.f32.gmra.mrb[0].mxu0 %v193
      %v469 = vpop.f32.mrb[0].mxu0
      %v470 = vadd.f32 %v264, %v469
      %v471 = vpop.f32.mrb[0].mxu0
      %472 = vmatprep.mubr.f32.mxu0 %v295
      %473 = vmatmul.mubr.f32.gmra.mrb[0].mxu0 %v195
      %v474 = vpop.f32.mrb[0].mxu0
      %v475 = vadd.f32 %v264, %v474
      %v476 = vpop.f32.mrb[0].mxu0
      %477 = vmatprep.mubr.f32.mxu0 %v298
      %478 = vmatmul.mubr.f32.gmra.mrb[0].mxu0 %v197
      %v479 = vpop.f32.mrb[0].mxu0
      %v480 = vadd.f32 %v264, %v479
      %v481 = vpop.f32.mrb[0].mxu0
      %482 = vmatprep.mubr.f32.mxu0 %v301
      %483 = vmatmul.mubr.f32.gmra.mrb[0].mxu0 %v199
      %v484 = vpop.f32.mrb[0].mxu0
      %v485 = vadd.f32 %v264, %v484
      %v486 = vpop.f32.mrb[0].mxu0
      %487 = vmatprep.mubr.f32.mxu0 %v304
      %488 = vmatmul.mubr.f32.gmra.mrb[0].mxu0 %v201
      %v489 = vpop.f32.mrb[0].mxu0
      %v490 = vadd.f32 %v264, %v489
      %v491 = vpop.f32.mrb[0].mxu0
      %492 = vmatprep.mubr.f32.mxu0 %v307
      %493 = vmatmul.mubr.f32.gmra.mrb[0].mxu0 %v203
      %v494 = vpop.f32.mrb[0].mxu0
      %v495 = vadd.f32 %v264, %v494
      %v496 = vpop.f32.mrb[0].mxu0
      %497 = vmatprep.mubr.f32.mxu0 %v310
      %498 = vmatmul.mubr.f32.gmra.mrb[0].mxu0 %v205
      %v499 = vpop.f32.mrb[0].mxu0
      %v500 = vadd.f32 %v264, %v499
      %v501 = vpop.f32.mrb[0].mxu0
      %502 = vmatprep.mubr.f32.mxu0 %v313
      %503 = vmatmul.mubr.f32.gmra.mrb[0].mxu0 %v207
      %v504 = vpop.f32.mrb[0].mxu0
      %v505 = vadd.f32 %v264, %v504
      %v506 = vpop.f32.mrb[0].mxu0
      %507 = vmatprep.mubr.f32.mxu0 %v316
      %508 = vmatmul.mubr.f32.gmra.mrb[0].mxu0 %v209
      %v509 = vpop.f32.mrb[0].mxu0
      %v510 = vadd.f32 %v264, %v509
      %v511 = vpop.f32.mrb[0].mxu0
      %512 = vmatprep.mubr.f32.mxu0 %v319
      %513 = vmatmul.mubr.f32.gmra.mrb[0].mxu0 %v211
      %v514 = vpop.f32.mrb[0].mxu0
      %v515 = vadd.f32 %v264, %v514
      %v516 = vpop.f32.mrb[0].mxu0
      %517 = vmatprep.mubr.f32.mxu0 %v322
      %518 = vmatmul.mubr.f32.gmra.mrb[0].mxu0 %v213
      %v519 = vpop.f32.mrb[0].mxu0
      %v520 = vadd.f32 %v264, %v519
      %v521 = vpop.f32.mrb[0].mxu0
      %522 = vmatprep.mubr.f32.mxu0 %v325
      %523 = vmatmul.mubr.f32.gmra.mrb[0].mxu0 %v215
      %v524 = vpop.f32.mrb[0].mxu0
      %v525 = vadd.f32 %v264, %v524
      %v526 = vpop.f32.mrb[0].mxu0
      %527 = vmatprep.mubr.f32.mxu0 %v328
      %528 = vmatmul.mubr.f32.gmra.mrb[0].mxu0 %v217
      %v529 = vpop.f32.mrb[0].mxu0
      %v530 = vadd.f32 %v264, %v529
      %v531 = vpop.f32.mrb[0].mxu0
      %532 = vmatprep.mubr.f32.mxu0 %v331
      %533 = vmatmul.mubr.f32.gmra.mrb[0].mxu0 %v219
      %v534 = vpop.f32.mrb[0].mxu0
      %v535 = vadd.f32 %v264, %v534
      %v536 = vpop.f32.mrb[0].mxu0
      %537 = vmatprep.mubr.f32.mxu0 %v334
      %538 = vmatmul.mubr.f32.gmra.mrb[0].mxu0 %v221
      %v539 = vpop.f32.mrb[0].mxu0
      %v540 = vadd.f32 %v264, %v539
      %v541 = vpop.f32.mrb[0].mxu0
      %542 = vmatprep.mubr.f32.mxu0 %v337
      %543 = vmatmul.mubr.f32.gmra.mrb[0].mxu0 %v223
      %v544 = vpop.f32.mrb[0].mxu0
      %v545 = vadd.f32 %v264, %v544
      %v546 = vpop.f32.mrb[0].mxu0
      %547 = vmatprep.mubr.f32.mxu0 %v340
      %548 = vmatmul.mubr.f32.gmra.mrb[0].mxu0 %v225
      %v549 = vpop.f32.mrb[0].mxu0
      %v550 = vadd.f32 %v264, %v549
      %v551 = vpop.f32.mrb[0].mxu0
      %552 = vmatprep.mubr.f32.mxu0 %v343
      %553 = vmatmul.mubr.f32.gmra.mrb[0].mxu0 %v227
      %v554 = vpop.f32.mrb[0].mxu0
      %v555 = vadd.f32 %v264, %v554
      %v556 = vpop.f32.mrb[0].mxu0
      %557 = vmatprep.mubr.f32.mxu0 %v346
      %558 = vmatmul.mubr.f32.gmra.mrb[0].mxu0 %v229
      %v559 = vpop.f32.mrb[0].mxu0
      %v560 = vadd.f32 %v264, %v559
      %v561 = vpop.f32.mrb[0].mxu0
      %562 = vmatprep.mubr.f32.mxu0 %v349
      %563 = vmatmul.mubr.f32.gmra.mrb[0].mxu0 %v231
      %v564 = vpop.f32.mrb[0].mxu0
      %v565 = vadd.f32 %v264, %v564
      %v566 = vpop.f32.mrb[0].mxu0
      %567 = vmatprep.mubr.f32.mxu0 %v352
      %568 = vmatmul.mubr.f32.gmra.mrb[0].mxu0 %v233
      %v569 = vpop.f32.mrb[0].mxu0
      %v570 = vadd.f32 %v264, %v569
      %v571 = vpop.f32.mrb[0].mxu0
      %572 = vmatprep.mubr.f32.mxu0 %v355
      %573 = vmatmul.mubr.f32.gmra.mrb[0].mxu0 %v235
      %v574 = vpop.f32.mrb[0].mxu0
      %v575 = vadd.f32 %v264, %v574
      %v576 = vpop.f32.mrb[0].mxu0
      %577 = vmatprep.mubr.f32.mxu0 %v358
      %578 = vmatmul.mubr.f32.gmra.mrb[0].mxu0 %v237
      %v579 = vpop.f32.mrb[0].mxu0
      %v580 = vadd.f32 %v264, %v579
      %v581 = vpop.f32.mrb[0].mxu0
      %582 = vmatprep.mubr.f32.mxu0 %v361
      %583 = vmatmul.mubr.f32.gmra.mrb[0].mxu0 %v239
      %v584 = vpop.f32.mrb[0].mxu0
      %v585 = vadd.f32 %v264, %v584
      %v586 = vpop.f32.mrb[0].mxu0
      %587 = vdwg.mxu0
      %v588 = vmax.f32 %v430, 0.0
      %v589 = vmax.f32 %v435, 0.0
      %v590 = vmax.f32 %v440, 0.0
      %v591 = vmax.f32 %v445, 0.0
      %v592 = vmax.f32 %v450, 0.0
      %v593 = vmax.f32 %v455, 0.0
      %v594 = vmax.f32 %v460, 0.0
      %v595 = vmax.f32 %v465, 0.0
      %v596 = vmax.f32 %v470, 0.0
      %v597 = vmax.f32 %v475, 0.0
      %v598 = vmax.f32 %v480, 0.0
      %v599 = vmax.f32 %v485, 0.0
      %v600 = vmax.f32 %v490, 0.0
      %v601 = vmax.f32 %v495, 0.0
      %v602 = vmax.f32 %v500, 0.0
      %v603 = vmax.f32 %v505, 0.0
      %v604 = vmax.f32 %v510, 0.0
      %v605 = vmax.f32 %v515, 0.0
      %v606 = vmax.f32 %v520, 0.0
      %v607 = vmax.f32 %v525, 0.0
      %v608 = vmax.f32 %v530, 0.0
      %v609 = vmax.f32 %v535, 0.0
      %v610 = vmax.f32 %v540, 0.0
      %v611 = vmax.f32 %v545, 0.0
      %v612 = vmax.f32 %v550, 0.0
      %v613 = vmax.f32 %v555, 0.0
      %v614 = vmax.f32 %v560, 0.0
      %v615 = vmax.f32 %v565, 0.0
      %v616 = vmax.f32 %v570, 0.0
      %v617 = vmax.f32 %v575, 0.0
      %v618 = vmax.f32 %v580, 0.0
      %v619 = vmax.f32 %v585, 0.0
      %620 = vst.msk [vmem:[%s175] sm:$0xff] %vm266, %v588
      %621 = vst.msk [vmem:[%s175 + $0x8] sm:$0xff] %vm266, %v589
      %622 = vst.msk [vmem:[%s175 + $0x10] sm:$0xff] %vm266, %v590
      %623 = vst.msk [vmem:[%s175 + $0x18] sm:$0xff] %vm266, %v591
      %624 = vst.msk [vmem:[%s175 + $0x20] sm:$0xff] %vm266, %v592
      %625 = vst.msk [vmem:[%s175 + $0x28] sm:$0xff] %vm266, %v593
      %626 = vst.msk [vmem:[%s175 + $0x30] sm:$0xff] %vm266, %v594
      %627 = vst.msk [vmem:[%s175 + $0x38] sm:$0xff] %vm266, %v595
      %628 = vst.msk [vmem:[%s175 + $0x40] sm:$0xff] %vm266, %v596
      %629 = vst.msk [vmem:[%s175 + $0x48] sm:$0xff] %vm266, %v597
      %630 = vst.msk [vmem:[%s175 + $0x50] sm:$0xff] %vm266, %v598
      %631 = vst.msk [vmem:[%s175 + $0x58] sm:$0xff] %vm266, %v599
      %632 = vst.msk [vmem:[%s175 + $0x60] sm:$0xff] %vm266, %v600
      %633 = vst.msk [vmem:[%s175 + $0x68] sm:$0xff] %vm266, %v601
      %634 = vst.msk [vmem:[%s175 + $0x70] sm:$0xff] %vm266, %v602
      %635 = vst.msk [vmem:[%s175 + $0x78] sm:$0xff] %vm266, %v603
      %636 = vst.msk [vmem:[%s175 + $0x80] sm:$0xff] %vm266, %v604
      %637 = vst.msk [vmem:[%s175 + $0x88] sm:$0xff] %vm266, %v605
      %638 = vst.msk [vmem:[%s175 + $0x90] sm:$0xff] %vm266, %v606
      %639 = vst.msk [vmem:[%s175 + $0x98] sm:$0xff] %vm266, %v607
      %640 = vst.msk [vmem:[%s175 + $0xa0] sm:$0xff] %vm266, %v608
      %641 = vst.msk [vmem:[%s175 + $0xa8] sm:$0xff] %vm266, %v609
      %642 = vst.msk [vmem:[%s175 + $0xb0] sm:$0xff] %vm266, %v610
      %643 = vst.msk [vmem:[%s175 + $0xb8] sm:$0xff] %vm266, %v611
      %644 = vst.msk [vmem:[%s175 + $0xc0] sm:$0xff] %vm266, %v612
      %645 = vst.msk [vmem:[%s175 + $0xc8] sm:$0xff] %vm266, %v613
      %646 = vst.msk [vmem:[%s175 + $0xd0] sm:$0xff] %vm266, %v614
      %647 = vst.msk [vmem:[%s175 + $0xd8] sm:$0xff] %vm266, %v615
      %648 = vst.msk [vmem:[%s175 + $0xe0] sm:$0xff] %vm266, %v616
      %649 = vst.msk [vmem:[%s175 + $0xe8] sm:$0xff] %vm266, %v617
      %650 = vst.msk [vmem:[%s175 + $0xf0] sm:$0xff] %vm266, %v618
      %651 = vst.msk [vmem:[%s175 + $0xf8] sm:$0xff] %vm266, %v619
      %s652 = smul.u32 32, %s14
      %p653 = scmp.lt.s32.totalorder %s652, 63
      %s654 = scalar_select %p653, %s652, 63
      %s655 = smul.addr %s654, 8
      %s656 = scalar_lea.vmem %s3, %s655
      // Predicated region
      $region33: #{_lambda_.19} parent=31 // pred_check
        %p657 = pneg %p100
      $region34: #{_lambda_.19} parent=31 // pred_check_branch
        %659 = sbr.rel (%p657) target = $region36
      $region35: #{_lambda_.19} parent=31 // pred_region
        %s660 = smul.u32 32, %s14
      $region36: #{_lambda_.19} parent=31 // pred_fallthru
        _
    $region32: #{_lambda_.19} parent=5 // pred_fallthru
      _
    %p661 = scmp.le.s32.totalorder 2, %s9
    // Predicated region
    $region37: #{_lambda_.19} parent=5 // pred_check
      %p662 = pneg %p661
    $region38: #{_lambda_.19} parent=5 // pred_check_branch
      %664 = sbr.rel (%p662) target = $region40
    $region39: #{_lambda_.19} parent=5 // pred_region
      %s665 = ssub.s32 %s9, 2
      // Predicated region
      $region41: #{_lambda_.19} parent=39 // pred_check
        %p666 = pneg %p106
      $region42: #{_lambda_.19} parent=39 // pred_check_branch
        %668 = sbr.rel (%p666) target = $region44
      $region43: #{_lambda_.19} parent=39 // pred_region
        %s669 = smul.u32 32, %s15
        %p670 = scmp.lt.s32.totalorder %s669, 63
        %s671 = scalar_select %p670, %s669, 63
        %s672 = smul.addr %s671, 8
        %s673 = scalar_lea.vmem %s3, %s672
      $region44: #{_lambda_.19} parent=39 // pred_fallthru
        _
    $region40: #{_lambda_.19} parent=5 // pred_fallthru
      _
  $region6: #{_lambda_.19} parent=0 // loop_footer
    %s13 = sadd.s32 1, %s9
  $region7: #{_lambda_.19} parent=0 // loop_footer_branch
    %8 = sbr.rel target = $region3
  $region8: #{_lambda_.19} parent=0 // loop_exit
    _

// kernel: _lambda_.21
$region0: #{_lambda_.21}
  #allocation0 [shape = 'u32[]', space=smem, size = 0x4, offset = 0x4, fixed_abs, tag = 'smem constant byte address 0x4 - core index']
  #allocation1 [shape = 'u32[144,128]{1,0:T(1,128)}', space=vmem, size = 0x12000, scoped, tag = 'internal scratch']
  %s0 = inlined_call_operand.vmem [shape: f32[128,400], index: 0, kind: input, shape index: {}]
  %s1 = inlined_call_operand.vmem [shape: f32[400,32], index: 1, kind: input, shape index: {}]
  %s2 = inlined_call_operand.vmem [shape: f32[1,32], index: 2, kind: input, shape index: {}]
  %s3 = inlined_call_operand.vmem [shape: f32[128,32], index: 3, kind: output, shape index: {}]
  %s4 = sld [smem:[#allocation0]]
  $region45: #{_lambda_.21} parent=0
    _
  %s6 = ssub.s32 1, %s4
  %s7 = scalar_select 0, %s6, %s4
  loop: start=0, step=1, limit=4
  $region2: #{_lambda_.21} parent=0 // loop_pre_header
    _
  $region3: #{_lambda_.21} parent=0 // loop_header
    %s9 = sphi 0, %s13
    %p10 = scmp.ge.s32.totalorder %s9, 4
    %s19 = sphi 0, %s21
    %s22 = sphi 0, %s19
    %s23 = sphi 0, %s22
    %s39 = sphi 0, %s23
    %s43 = sphi 0, %s43
    %s45 = sphi 0, %s43
    %s46 = sphi 0, %s45
    %s60 = sphi 0, %s46
    %s64 = sphi 0, %s64
    %s66 = sphi 0, %s64
    %s67 = sphi 0, %s66
    %s81 = sphi 0, %s67
    %s87 = sphi 0, %s89
    %s90 = sphi 0, %s87
    %s91 = sphi 0, %s90
    %s107 = sphi 0, %s91
  $region4: #{_lambda_.21} parent=0 // loop_header_branch
    %12 = sbr.rel (%p10) target = $region8
  $region5: #{_lambda_.21} parent=0 // loop_body
    %s14 = ssub.s32 %s9, 1
    %s15 = ssub.s32 %s9, 2
    %s16 = sadd.s32 %s9, 1
    %s17 = ssub.s32 %s9, %s16
    %p18 = scmp.eq.s32.totalorder %s17, 0
    %s20 = sadd.s32 %s19, 1
    %s21 = scalar_select %p18, %s19, %s20
    %p24 = pneg %p18
    %p25 = scmp.eq.s32.totalorder %s9, 1
    %p26 = por %p24, %p25
    %p27 = scmp.ne.s32.totalorder %s19, %s22
    %p28 = scmp.eq.s32.totalorder %s9, 0
    %p29 = por %p27, %p28
    %p30 = scmp.ne.s32.totalorder %s19, %s22
    %p31 = scmp.eq.s32.totalorder %s14, 1
    %p32 = por %p30, %p31
    %p33 = scmp.ne.s32.totalorder %s22, %s23
    %p34 = scmp.eq.s32.totalorder %s14, 0
    %p35 = por %p33, %p34
    %p36 = scmp.ne.s32.totalorder %s22, %s23
    %p37 = scmp.eq.s32.totalorder %s15, 1
    %p38 = por %p36, %p37
    %p40 = scmp.ne.s32.totalorder %s23, %s39
    %p41 = scmp.eq.s32.totalorder %s15, 0
    %p42 = por %p40, %p41
    %s44 = sadd.s32 %s43, 1
    %p47 = scmp.eq.s32.totalorder %s9, 1
    %p48 = scmp.ne.s32.totalorder %s43, %s45
    %p49 = scmp.eq.s32.totalorder %s9, 0
    %p50 = por %p48, %p49
    %p51 = scmp.ne.s32.totalorder %s43, %s45
    %p52 = scmp.eq.s32.totalorder %s14, 1
    %p53 = por %p51, %p52
    %p54 = scmp.ne.s32.totalorder %s45, %s46
    %p55 = scmp.eq.s32.totalorder %s14, 0
    %p56 = por %p54, %p55
    %p57 = scmp.ne.s32.totalorder %s45, %s46
    %p58 = scmp.eq.s32.totalorder %s15, 1
    %p59 = por %p57, %p58
    %p61 = scmp.ne.s32.totalorder %s46, %s60
    %p62 = scmp.eq.s32.totalorder %s15, 0
    %p63 = por %p61, %p62
    %s65 = sadd.s32 %s64, 1
    %p68 = scmp.eq.s32.totalorder %s9, 1
    %p69 = scmp.ne.s32.totalorder %s64, %s66
    %p70 = scmp.eq.s32.totalorder %s9, 0
    %p71 = por %p69, %p70
    %p72 = scmp.ne.s32.totalorder %s64, %s66
    %p73 = scmp.eq.s32.totalorder %s14, 1
    %p74 = por %p72, %p73
    %p75 = scmp.ne.s32.totalorder %s66, %s67
    %p76 = scmp.eq.s32.totalorder %s14, 0
    %p77 = por %p75, %p76
    %p78 = scmp.ne.s32.totalorder %s66, %s67
    %p79 = scmp.eq.s32.totalorder %s15, 1
    %p80 = por %p78, %p79
    %p82 = scmp.ne.s32.totalorder %s67, %s81
    %p83 = scmp.eq.s32.totalorder %s15, 0
    %p84 = por %p82, %p83
    %s85 = ssub.s32 %s9, %s16
    %p86 = scmp.eq.s32.totalorder %s85, 0
    %s88 = sadd.s32 %s87, 1
    %s89 = scalar_select %p86, %s87, %s88
    %p92 = pneg %p86
    %p93 = scmp.eq.s32.totalorder %s9, 1
    %p94 = por %p92, %p93
    %p95 = scmp.ne.s32.totalorder %s87, %s90
    %p96 = scmp.eq.s32.totalorder %s9, 0
    %p97 = por %p95, %p96
    %p98 = scmp.ne.s32.totalorder %s87, %s90
    %p99 = scmp.eq.s32.totalorder %s14, 1
    %p100 = por %p98, %p99
    %p101 = scmp.ne.s32.totalorder %s90, %s91
    %p102 = scmp.eq.s32.totalorder %s14, 0
    %p103 = por %p101, %p102
    %p104 = scmp.ne.s32.totalorder %s90, %s91
    %p105 = scmp.eq.s32.totalorder %s15, 1
    %p106 = por %p104, %p105
    %p108 = scmp.ne.s32.totalorder %s91, %s107
    %p109 = scmp.eq.s32.totalorder %s15, 0
    %p110 = por %p108, %p109
    %p111 = scmp.le.s32.totalorder 1, %s9
    %p112 = scmp.lt.s32.totalorder %s9, 3
    %p113 = pnand %p111, %p112
    %p114 = pneg %p113
    // Predicated region
    $region9: #{_lambda_.21} parent=5 // pred_check
      _
    $region10: #{_lambda_.21} parent=5 // pred_check_branch
      %116 = sbr.rel (%p113) target = $region12
    $region11: #{_lambda_.21} parent=5 // pred_region
      %s117 = ssub.s32 %s9, 1
      // Predicated region
      $region13: #{_lambda_.21} parent=11 // pred_check
        %p118 = pneg %p56
      $region14: #{_lambda_.21} parent=11 // pred_check_branch
        %120 = sbr.rel (%p118) target = $region16
      $region15: #{_lambda_.21} parent=11 // pred_region
        _
      $region16: #{_lambda_.21} parent=11 // pred_fallthru
        _
      // Predicated region
      $region17: #{_lambda_.21} parent=11 // pred_check
        %p121 = pneg %p77
      $region18: #{_lambda_.21} parent=11 // pred_check_branch
        %123 = sbr.rel (%p121) target = $region20
      $region19: #{_lambda_.21} parent=11 // pred_region
        _
      $region20: #{_lambda_.21} parent=11 // pred_fallthru
        _
    $region12: #{_lambda_.21} parent=5 // pred_fallthru
      _
    %p124 = scmp.lt.s32.totalorder %s9, 2
    // Predicated region
    $region21: #{_lambda_.21} parent=5 // pred_check
      %p125 = pneg %p124
    $region22: #{_lambda_.21} parent=5 // pred_check_branch
      %127 = sbr.rel (%p125) target = $region24
    $region23: #{_lambda_.21} parent=5 // pred_region
      // Predicated region
      $region25: #{_lambda_.21} parent=23 // pred_check
        %p128 = pneg %p29
      $region26: #{_lambda_.21} parent=23 // pred_check_branch
        %130 = sbr.rel (%p128) target = $region28
      $region27: #{_lambda_.21} parent=23 // pred_region
        %s131 = smul.u32 8, %s9
        %p132 = scmp.lt.s32.totalorder %s131, 15
        %s133 = scalar_select %p132, %s131, 15
        %s134 = smul.addr %s133, 4
        %s135 = smul.addr %s134, 8
        %s136 = scalar_lea.vmem %s0, %s135
        %s137 = smul.u32 8, %s9
      $region28: #{_lambda_.21} parent=23 // pred_fallthru
        _
    $region24: #{_lambda_.21} parent=5 // pred_fallthru
      _
    %p138 = scmp.le.s32.totalorder 1, %s9
    %p139 = scmp.lt.s32.totalorder %s9, 3
    %p140 = pnand %p138, %p139
    %p141 = pneg %p140
    // Predicated region
    $region29: #{_lambda_.21} parent=5 // pred_check
      _
    $region30: #{_lambda_.21} parent=5 // pred_check_branch
      %143 = sbr.rel (%p140) target = $region32
    $region31: #{_lambda_.21} parent=5 // pred_region
      %s144 = ssub.s32 %s9, 1
      %s145 = smul.u32 8, %s14
      %p146 = scmp.lt.s32.totalorder %s145, 15
      %s147 = scalar_select %p146, %s145, 15
      %s148 = smul.addr %s147, 4
      %s149 = smul.addr %s148, 8
      %s150 = scalar_lea.vmem %s0, %s149
      %p151 = pneg %p35
      %p152 = pneg %p32
      %p153 = pneg %p56
      %p154 = pneg %p53
      %p155 = pneg %p77
      %p156 = pneg %p74
      %p157 = pneg %p103
      %p158 = pneg %p100
      %s159 = smul.u32 8, %s14
      %p160 = scmp.lt.s32.totalorder %s159, 15
      %s161 = scalar_select %p160, %s159, 15
      %s162 = smul.addr %s161, 8
      %s163 = scalar_lea.vmem %s3, %s162
      %s164 = smul.u32 8, %s14
      %p165 = scmp.lt.s32.totalorder %s164, 15
      %s166 = scalar_select %p165, %s164, 15
      %s167 = smul.addr %s166, 4
      %s168 = smul.addr %s167, 8
      %s169 = scalar_lea.vmem %s0, %s168
      %s170 = smul.u32 8, %s14
      %s171 = smul.u32 8, %s14
      %p172 = scmp.lt.s32.totalorder %s171, 15
      %s173 = scalar_select %p172, %s171, 15
      %s174 = smul.addr %s173, 8
      %s175 = scalar_lea.vmem %s3, %s174
      %s176 = smul.u32 8, %s14
      %v177 = vld [vmem:[%s169] sm:$0xff]
      %v178 = vld [vmem:[%s169 + $0x8] sm:$0xff]
      %v179 = vld [vmem:[%s169 + $0x10] sm:$0xff]
      %v180 = vld [vmem:[%s169 + $0x18] sm:$0xff]
      %v181 = vld [vmem:[%s169 + $0x20] sm:$0xff]
      %v182 = vld [vmem:[%s169 + $0x28] sm:$0xff]
      %v183 = vld [vmem:[%s169 + $0x30] sm:$0xff]
      %v184 = vld [vmem:[%s169 + $0x38] sm:$0xff]
      %v185 = vld [vmem:[%s169 + $0x40] sm:$0xff]
      %v186 = vld [vmem:[%s169 + $0x48] sm:$0xff]
      %v187 = vld [vmem:[%s169 + $0x50] sm:$0xff]
      %v188 = vld [vmem:[%s169 + $0x58] sm:$0xff]
      %v189 = vld [vmem:[%s169 + $0x60] sm:$0xff]
      %v190 = vld [vmem:[%s169 + $0x68] sm:$0xff]
      %v191 = vld [vmem:[%s169 + $0x70] sm:$0xff]
      %v192 = vld [vmem:[%s169 + $0x78] sm:$0xff]
      %v193 = vld [vmem:[%s169 + $0x80] sm:$0xff]
      %v194 = vld [vmem:[%s169 + $0x88] sm:$0xff]
      %v195 = vld [vmem:[%s169 + $0x90] sm:$0xff]
      %v196 = vld [vmem:[%s169 + $0x98] sm:$0xff]
      %v197 = vld [vmem:[%s169 + $0xa0] sm:$0xff]
      %v198 = vld [vmem:[%s169 + $0xa8] sm:$0xff]
      %v199 = vld [vmem:[%s169 + $0xb0] sm:$0xff]
      %v200 = vld [vmem:[%s169 + $0xb8] sm:$0xff]
      %v201 = vld [vmem:[%s169 + $0xc0] sm:$0xff]
      %v202 = vld [vmem:[%s169 + $0xc8] sm:$0xff]
      %v203 = vld [vmem:[%s169 + $0xd0] sm:$0xff]
      %v204 = vld [vmem:[%s169 + $0xd8] sm:$0xff]
      %v205 = vld [vmem:[%s169 + $0xe0] sm:$0xff]
      %v206 = vld [vmem:[%s169 + $0xe8] sm:$0xff]
      %v207 = vld [vmem:[%s169 + $0xf0] sm:$0xff]
      %v208 = vld [vmem:[%s169 + $0xf8] sm:$0xff]
      %v209 = vld [vmem:[%s1] sm:$0xff]
      %v210 = vld [vmem:[%s1 + $0x8] sm:$0xff]
      %v211 = vld [vmem:[%s1 + $0x10] sm:$0xff]
      %v212 = vld [vmem:[%s1 + $0x18] sm:$0xff]
      %v213 = vld [vmem:[%s1 + $0x20] sm:$0xff]
      %v214 = vld [vmem:[%s1 + $0x28] sm:$0xff]
      %v215 = vld [vmem:[%s1 + $0x30] sm:$0xff]
      %v216 = vld [vmem:[%s1 + $0x38] sm:$0xff]
      %v217 = vld [vmem:[%s1 + $0x40] sm:$0xff]
      %v218 = vld [vmem:[%s1 + $0x48] sm:$0xff]
      %v219 = vld [vmem:[%s1 + $0x50] sm:$0xff]
      %v220 = vld [vmem:[%s1 + $0x58] sm:$0xff]
      %v221 = vld [vmem:[%s1 + $0x60] sm:$0xff]
      %v222 = vld [vmem:[%s1 + $0x68] sm:$0xff]
      %v223 = vld [vmem:[%s1 + $0x70] sm:$0xff]
      %v224 = vld [vmem:[%s1 + $0x78] sm:$0xff]
      %v225 = vld [vmem:[%s1 + $0x80] sm:$0xff]
      %v226 = vld [vmem:[%s1 + $0x88] sm:$0xff]
      %v227 = vld [vmem:[%s1 + $0x90] sm:$0xff]
      %v228 = vld [vmem:[%s1 + $0x98] sm:$0xff]
      %v229 = vld [vmem:[%s1 + $0xa0] sm:$0xff]
      %v230 = vld [vmem:[%s1 + $0xa8] sm:$0xff]
      %v231 = vld [vmem:[%s1 + $0xb0] sm:$0xff]
      %v232 = vld [vmem:[%s1 + $0xb8] sm:$0xff]
      %v233 = vld [vmem:[%s1 + $0xc0] sm:$0xff]
      %v234 = vld [vmem:[%s1 + $0xc8] sm:$0xff]
      %v235 = vld [vmem:[%s1 + $0xd0] sm:$0xff]
      %v236 = vld [vmem:[%s1 + $0xd8] sm:$0xff]
      %v237 = vld [vmem:[%s1 + $0xe0] sm:$0xff]
      %v238 = vld [vmem:[%s1 + $0xe8] sm:$0xff]
      %v239 = vld [vmem:[%s1 + $0xf0] sm:$0xff]
      %v240 = vld [vmem:[%s1 + $0xf8] sm:$0xff]
      %v241 = vld [vmem:[%s1 + $0x100] sm:$0xff]
      %v242 = vld [vmem:[%s1 + $0x108] sm:$0xff]
      %v243 = vld [vmem:[%s1 + $0x110] sm:$0xff]
      %v244 = vld [vmem:[%s1 + $0x118] sm:$0xff]
      %v245 = vld [vmem:[%s1 + $0x120] sm:$0xff]
      %v246 = vld [vmem:[%s1 + $0x128] sm:$0xff]
      %v247 = vld [vmem:[%s1 + $0x130] sm:$0xff]
      %v248 = vld [vmem:[%s1 + $0x138] sm:$0xff]
      %v249 = vld [vmem:[%s1 + $0x140] sm:$0xff]
      %v250 = vld [vmem:[%s1 + $0x148] sm:$0xff]
      %v251 = vld [vmem:[%s1 + $0x150] sm:$0xff]
      %v252 = vld [vmem:[%s1 + $0x158] sm:$0xff]
      %v253 = vld [vmem:[%s1 + $0x160] sm:$0xff]
      %v254 = vld [vmem:[%s1 + $0x168] sm:$0xff]
      %v255 = vld [vmem:[%s1 + $0x170] sm:$0xff]
      %v256 = vld [vmem:[%s1 + $0x178] sm:$0xff]
      %v257 = vld [vmem:[%s1 + $0x180] sm:$0xff]
      %v258 = vld [vmem:[%s1 + $0x188] sm:$0xff]
      %v259 = vld [vmem:[%s2] sm:$0x1]
      %v261 = vlaneseq
      %v262 = vshrl.u32 %v261, 7
      %v263 = vsub.s32 0, %v262
      %v264 = vrot.slane %v259, %v263
      %vm266 = vcmask 130048
      %v268 = vsel %vm266, %v180, 0
      %v271 = vsel %vm266, %v184, 0
      %v274 = vsel %vm266, %v188, 0
      %v277 = vsel %vm266, %v192, 0
      %v280 = vsel %vm266, %v196, 0
      %v283 = vsel %vm266, %v200, 0
      %v286 = vsel %vm266, %v204, 0
      %v289 = vsel %vm266, %v208, 0
      %291 = vmatprep.subr.mxu0 0.0
      %292 = vmatpush1.msra.mxu0 %v209
      %293 = vmatprep.subr.mxu0 0.0
      %294 = vmatpush1.msra.mxu0 %v210
      %295 = vmatprep.subr.mxu0 0.0
      %296 = vmatpush1.msra.mxu0 %v211
      %297 = vmatprep.subr.mxu0 0.0
      %298 = vmatpush1.msra.mxu0 %v212
      %299 = vmatprep.subr.mxu0 0.0
      %300 = vmatpush1.msra.mxu0 %v213
      %301 = vmatprep.subr.mxu0 0.0
      %302 = vmatpush1.msra.mxu0 %v214
      %303 = vmatprep.subr.mxu0 0.0
      %304 = vmatpush1.msra.mxu0 %v215
      %305 = vmatprep.subr.mxu0 0.0
      %306 = vmatpush1.msra.mxu0 %v216
      %307 = vmatprep.subr.mxu0 0.0
      %308 = vmatpush1.msra.mxu0 %v217
      %309 = vmatprep.subr.mxu0 0.0
      %310 = vmatpush1.msra.mxu0 %v218
      %311 = vmatprep.subr.mxu0 0.0
      %312 = vmatpush1.msra.mxu0 %v219
      %313 = vmatprep.subr.mxu0 0.0
      %314 = vmatpush1.msra.mxu0 %v220
      %315 = vmatprep.subr.mxu0 0.0
      %316 = vmatpush1.msra.mxu0 %v221
      %317 = vmatprep.subr.mxu0 0.0
      %318 = vmatpush1.msra.mxu0 %v222
      %319 = vmatprep.subr.mxu0 0.0
      %320 = vmatpush1.msra.mxu0 %v223
      %321 = vmatprep.subr.mxu0 0.0
      %322 = vmatpush1.msra.mxu0 %v224
      %323 = vmatprep.subr.mxu0 0.0
      %324 = vmatpush1.msra.mxu0 %v225
      %325 = vmatprep.subr.mxu0 0.0
      %326 = vmatpush1.msra.mxu0 %v226
      %327 = vmatprep.subr.mxu0 0.0
      %328 = vmatpush1.msra.mxu0 %v227
      %329 = vmatprep.subr.mxu0 0.0
      %330 = vmatpush1.msra.mxu0 %v228
      %331 = vmatprep.subr.mxu0 0.0
      %332 = vmatpush1.msra.mxu0 %v229
      %333 = vmatprep.subr.mxu0 0.0
      %334 = vmatpush1.msra.mxu0 %v230
      %335 = vmatprep.subr.mxu0 0.0
      %336 = vmatpush1.msra.mxu0 %v231
      %337 = vmatprep.subr.mxu0 0.0
      %338 = vmatpush1.msra.mxu0 %v232
      %339 = vmatprep.subr.mxu0 0.0
      %340 = vmatpush1.msra.mxu0 %v233
      %341 = vmatprep.subr.mxu0 0.0
      %342 = vmatpush1.msra.mxu0 %v234
      %343 = vmatprep.subr.mxu0 0.0
      %344 = vmatpush1.msra.mxu0 %v235
      %345 = vmatprep.subr.mxu0 0.0
      %346 = vmatpush1.msra.mxu0 %v236
      %347 = vmatprep.subr.mxu0 0.0
      %348 = vmatpush1.msra.mxu0 %v237
      %349 = vmatprep.subr.mxu0 0.0
      %350 = vmatpush1.msra.mxu0 %v238
      %351 = vmatprep.subr.mxu0 0.0
      %352 = vmatpush1.msra.mxu0 %v239
      %353 = vmatprep.subr.mxu0 0.0
      %354 = vmatpush1.msra.mxu0 %v240
      %355 = vmatprep.mubr.f32.mxu0 %v178
      %356 = vmatmul.mubr.f32.gmra.mrb[0].mxu0 %v177
      %v357 = vpop.f32.mrb[0].mxu0
      %v358 = vadd.f32 %v264, %v357
      %v359 = vpop.f32.mrb[0].mxu0
      %360 = vmatprep.mubr.f32.mxu0 %v182
      %361 = vmatmul.mubr.f32.gmra.mrb[0].mxu0 %v181
      %v362 = vpop.f32.mrb[0].mxu0
      %v363 = vadd.f32 %v264, %v362
      %v364 = vpop.f32.mrb[0].mxu0
      %365 = vmatprep.mubr.f32.mxu0 %v186
      %366 = vmatmul.mubr.f32.gmra.mrb[0].mxu0 %v185
      %v367 = vpop.f32.mrb[0].mxu0
      %v368 = vadd.f32 %v264, %v367
      %v369 = vpop.f32.mrb[0].mxu0
      %370 = vmatprep.mubr.f32.mxu0 %v190
      %371 = vmatmul.mubr.f32.gmra.mrb[0].mxu0 %v189
      %v372 = vpop.f32.mrb[0].mxu0
      %v373 = vadd.f32 %v264, %v372
      %v374 = vpop.f32.mrb[0].mxu0
      %375 = vmatprep.mubr.f32.mxu0 %v194
      %376 = vmatmul.mubr.f32.gmra.mrb[0].mxu0 %v193
      %v377 = vpop.f32.mrb[0].mxu0
      %v378 = vadd.f32 %v264, %v377
      %v379 = vpop.f32.mrb[0].mxu0
      %380 = vmatprep.mubr.f32.mxu0 %v198
      %381 = vmatmul.mubr.f32.gmra.mrb[0].mxu0 %v197
      %v382 = vpop.f32.mrb[0].mxu0
      %v383 = vadd.f32 %v264, %v382
      %v384 = vpop.f32.mrb[0].mxu0
      %385 = vmatprep.mubr.f32.mxu0 %v202
      %386 = vmatmul.mubr.f32.gmra.mrb[0].mxu0 %v201
      %v387 = vpop.f32.mrb[0].mxu0
      %v388 = vadd.f32 %v264, %v387
      %v389 = vpop.f32.mrb[0].mxu0
      %390 = vmatprep.mubr.f32.mxu0 %v206
      %391 = vmatmul.mubr.f32.gmra.mrb[0].mxu0 %v205
      %v392 = vpop.f32.mrb[0].mxu0
      %v393 = vadd.f32 %v264, %v392
      %v394 = vpop.f32.mrb[0].mxu0
      %395 = vdwg.mxu0
      %396 = vmatprep.subr.mxu0 0.0
      %397 = vmatpush1.msra.mxu0 %v241
      %398 = vmatprep.subr.mxu0 0.0
      %399 = vmatpush1.msra.mxu0 %v242
      %400 = vmatprep.subr.mxu0 0.0
      %401 = vmatpush1.msra.mxu0 %v243
      %402 = vmatprep.subr.mxu0 0.0
      %403 = vmatpush1.msra.mxu0 %v244
      %404 = vmatprep.subr.mxu0 0.0
      %405 = vmatpush1.msra.mxu0 %v245
      %406 = vmatprep.subr.mxu0 0.0
      %407 = vmatpush1.msra.mxu0 %v246
      %408 = vmatprep.subr.mxu0 0.0
      %409 = vmatpush1.msra.mxu0 %v247
      %410 = vmatprep.subr.mxu0 0.0
      %411 = vmatpush1.msra.mxu0 %v248
      %412 = vmatprep.subr.mxu0 0.0
      %413 = vmatpush1.msra.mxu0 %v249
      %414 = vmatprep.subr.mxu0 0.0
      %415 = vmatpush1.msra.mxu0 %v250
      %416 = vmatprep.subr.mxu0 0.0
      %417 = vmatpush1.msra.mxu0 %v251
      %418 = vmatprep.subr.mxu0 0.0
      %419 = vmatpush1.msra.mxu0 %v252
      %420 = vmatprep.subr.mxu0 0.0
      %421 = vmatpush1.msra.mxu0 %v253
      %422 = vmatprep.subr.mxu0 0.0
      %423 = vmatpush1.msra.mxu0 %v254
      %424 = vmatprep.subr.mxu0 0.0
      %425 = vmatpush1.msra.mxu0 %v255
      %426 = vmatprep.subr.mxu0 0.0
      %427 = vmatpush1.msra.mxu0 %v256
      %428 = vmatprep.subr.mxu0 0.0
      %429 = vmatpush1.msra.mxu0 %v257
      %430 = vmatprep.subr.mxu0 0.0
      %431 = vmatpush1.msra.mxu0 %v258
      %432 = vmatprep.subr.mxu0 0.0
      %433 = vmatpush1.msra.mxu0 0.0
      %434 = vmatprep.subr.mxu0 0.0
      %435 = vmatpush1.msra.mxu0 0.0
      %436 = vmatprep.subr.mxu0 0.0
      %437 = vmatpush1.msra.mxu0 0.0
      %438 = vmatprep.subr.mxu0 0.0
      %439 = vmatpush1.msra.mxu0 0.0
      %440 = vmatprep.subr.mxu0 0.0
      %441 = vmatpush1.msra.mxu0 0.0
      %442 = vmatprep.subr.mxu0 0.0
      %443 = vmatpush1.msra.mxu0 0.0
      %444 = vmatprep.subr.mxu0 0.0
      %445 = vmatpush1.msra.mxu0 0.0
      %446 = vmatprep.subr.mxu0 0.0
      %447 = vmatpush1.msra.mxu0 0.0
      %448 = vmatprep.subr.mxu0 0.0
      %449 = vmatpush1.msra.mxu0 0.0
      %450 = vmatprep.subr.mxu0 0.0
      %451 = vmatpush1.msra.mxu0 0.0
      %452 = vmatprep.subr.mxu0 0.0
      %453 = vmatpush1.msra.mxu0 0.0
      %454 = vmatprep.subr.mxu0 0.0
      %455 = vmatpush1.msra.mxu0 0.0
      %456 = vmatprep.subr.mxu0 0.0
      %457 = vmatpush1.msra.mxu0 0.0
      %458 = vmatprep.subr.mxu0 0.0
      %459 = vmatpush1.msra.mxu0 0.0
      %460 = vmatprep.mubr.f32.mxu0 %v268
      %461 = vmatmul.mubr.f32.gmra.mrb[0].mxu0 %v179
      %v462 = vpop.f32.mrb[0].mxu0
      %v463 = vadd.f32 %v358, %v462
      %v464 = vpop.f32.mrb[0].mxu0
      %465 = vmatprep.mubr.f32.mxu0 %v271
      %466 = vmatmul.mubr.f32.gmra.mrb[0].mxu0 %v183
      %v467 = vpop.f32.mrb[0].mxu0
      %v468 = vadd.f32 %v363, %v467
      %v469 = vpop.f32.mrb[0].mxu0
      %470 = vmatprep.mubr.f32.mxu0 %v274
      %471 = vmatmul.mubr.f32.gmra.mrb[0].mxu0 %v187
      %v472 = vpop.f32.mrb[0].mxu0
      %v473 = vadd.f32 %v368, %v472
      %v474 = vpop.f32.mrb[0].mxu0
      %475 = vmatprep.mubr.f32.mxu0 %v277
      %476 = vmatmul.mubr.f32.gmra.mrb[0].mxu0 %v191
      %v477 = vpop.f32.mrb[0].mxu0
      %v478 = vadd.f32 %v373, %v477
      %v479 = vpop.f32.mrb[0].mxu0
      %480 = vmatprep.mubr.f32.mxu0 %v280
      %481 = vmatmul.mubr.f32.gmra.mrb[0].mxu0 %v195
      %v482 = vpop.f32.mrb[0].mxu0
      %v483 = vadd.f32 %v378, %v482
      %v484 = vpop.f32.mrb[0].mxu0
      %485 = vmatprep.mubr.f32.mxu0 %v283
      %486 = vmatmul.mubr.f32.gmra.mrb[0].mxu0 %v199
      %v487 = vpop.f32.mrb[0].mxu0
      %v488 = vadd.f32 %v383, %v487
      %v489 = vpop.f32.mrb[0].mxu0
      %490 = vmatprep.mubr.f32.mxu0 %v286
      %491 = vmatmul.mubr.f32.gmra.mrb[0].mxu0 %v203
      %v492 = vpop.f32.mrb[0].mxu0
      %v493 = vadd.f32 %v388, %v492
      %v494 = vpop.f32.mrb[0].mxu0
      %495 = vmatprep.mubr.f32.mxu0 %v289
      %496 = vmatmul.mubr.f32.gmra.mrb[0].mxu0 %v207
      %v497 = vpop.f32.mrb[0].mxu0
      %v498 = vadd.f32 %v393, %v497
      %v499 = vpop.f32.mrb[0].mxu0
      %500 = vdwg.mxu0
      %v501 = vmax.f32 %v463, 0.0
      %v502 = vmax.f32 %v468, 0.0
      %v503 = vmax.f32 %v473, 0.0
      %v504 = vmax.f32 %v478, 0.0
      %v505 = vmax.f32 %v483, 0.0
      %v506 = vmax.f32 %v488, 0.0
      %v507 = vmax.f32 %v493, 0.0
      %v508 = vmax.f32 %v498, 0.0
      %vm509 = vcmask 261120
      %510 = vst.msk [vmem:[%s175] sm:$0xff] %vm509, %v501
      %511 = vst.msk [vmem:[%s175 + $0x8] sm:$0xff] %vm509, %v502
      %512 = vst.msk [vmem:[%s175 + $0x10] sm:$0xff] %vm509, %v503
      %513 = vst.msk [vmem:[%s175 + $0x18] sm:$0xff] %vm509, %v504
      %514 = vst.msk [vmem:[%s175 + $0x20] sm:$0xff] %vm509, %v505
      %515 = vst.msk [vmem:[%s175 + $0x28] sm:$0xff] %vm509, %v506
      %516 = vst.msk [vmem:[%s175 + $0x30] sm:$0xff] %vm509, %v507
      %517 = vst.msk [vmem:[%s175 + $0x38] sm:$0xff] %vm509, %v508
      %s518 = smul.u32 8, %s14
      %p519 = scmp.lt.s32.totalorder %s518, 15
      %s520 = scalar_select %p519, %s518, 15
      %s521 = smul.addr %s520, 8
      %s522 = scalar_lea.vmem %s3, %s521
      // Predicated region
      $region33: #{_lambda_.21} parent=31 // pred_check
        %p523 = pneg %p100
      $region34: #{_lambda_.21} parent=31 // pred_check_branch
        %525 = sbr.rel (%p523) target = $region36
      $region35: #{_lambda_.21} parent=31 // pred_region
        %s526 = smul.u32 8, %s14
      $region36: #{_lambda_.21} parent=31 // pred_fallthru
        _
    $region32: #{_lambda_.21} parent=5 // pred_fallthru
      _
    %p527 = scmp.le.s32.totalorder 2, %s9
    // Predicated region
    $region37: #{_lambda_.21} parent=5 // pred_check
      %p528 = pneg %p527
    $region38: #{_lambda_.21} parent=5 // pred_check_branch
      %530 = sbr.rel (%p528) target = $region40
    $region39: #{_lambda_.21} parent=5 // pred_region
      %s531 = ssub.s32 %s9, 2
      // Predicated region
      $region41: #{_lambda_.21} parent=39 // pred_check
        %p532 = pneg %p106
      $region42: #{_lambda_.21} parent=39 // pred_check_branch
        %534 = sbr.rel (%p532) target = $region44
      $region43: #{_lambda_.21} parent=39 // pred_region
        %s535 = smul.u32 8, %s15
        %p536 = scmp.lt.s32.totalorder %s535, 15
        %s537 = scalar_select %p536, %s535, 15
        %s538 = smul.addr %s537, 8
        %s539 = scalar_lea.vmem %s3, %s538
      $region44: #{_lambda_.21} parent=39 // pred_fallthru
        _
    $region40: #{_lambda_.21} parent=5 // pred_fallthru
      _
  $region6: #{_lambda_.21} parent=0 // loop_footer
    %s13 = sadd.s32 1, %s9
  $region7: #{_lambda_.21} parent=0 // loop_footer_branch
    %8 = sbr.rel target = $region3
  $region8: #{_lambda_.21} parent=0 // loop_exit
    _

// kernel: _lambda_.22
$region0: #{_lambda_.22}
  #allocation0 [shape = 'u32[]', space=smem, size = 0x4, offset = 0x4, fixed_abs, tag = 'smem constant byte address 0x4 - core index']
  #allocation1 [shape = 'u32[144,128]{1,0:T(1,128)}', space=vmem, size = 0x12000, scoped, tag = 'internal scratch']
  %s0 = inlined_call_operand.vmem [shape: f32[128,288], index: 0, kind: input, shape index: {}]
  %s1 = inlined_call_operand.vmem [shape: f32[288,32], index: 1, kind: input, shape index: {}]
  %s2 = inlined_call_operand.vmem [shape: f32[1,32], index: 2, kind: input, shape index: {}]
  %s3 = inlined_call_operand.vmem [shape: f32[128,32], index: 3, kind: output, shape index: {}]
  %s4 = sld [smem:[#allocation0]]
  $region45: #{_lambda_.22} parent=0
    _
  %s6 = ssub.s32 1, %s4
  %s7 = scalar_select 0, %s6, %s4
  loop: start=0, step=1, limit=4
  $region2: #{_lambda_.22} parent=0 // loop_pre_header
    _
  $region3: #{_lambda_.22} parent=0 // loop_header
    %s9 = sphi 0, %s13
    %p10 = scmp.ge.s32.totalorder %s9, 4
    %s19 = sphi 0, %s21
    %s22 = sphi 0, %s19
    %s23 = sphi 0, %s22
    %s39 = sphi 0, %s23
    %s43 = sphi 0, %s43
    %s45 = sphi 0, %s43
    %s46 = sphi 0, %s45
    %s60 = sphi 0, %s46
    %s64 = sphi 0, %s64
    %s66 = sphi 0, %s64
    %s67 = sphi 0, %s66
    %s81 = sphi 0, %s67
    %s87 = sphi 0, %s89
    %s90 = sphi 0, %s87
    %s91 = sphi 0, %s90
    %s107 = sphi 0, %s91
  $region4: #{_lambda_.22} parent=0 // loop_header_branch
    %12 = sbr.rel (%p10) target = $region8
  $region5: #{_lambda_.22} parent=0 // loop_body
    %s14 = ssub.s32 %s9, 1
    %s15 = ssub.s32 %s9, 2
    %s16 = sadd.s32 %s9, 1
    %s17 = ssub.s32 %s9, %s16
    %p18 = scmp.eq.s32.totalorder %s17, 0
    %s20 = sadd.s32 %s19, 1
    %s21 = scalar_select %p18, %s19, %s20
    %p24 = pneg %p18
    %p25 = scmp.eq.s32.totalorder %s9, 1
    %p26 = por %p24, %p25
    %p27 = scmp.ne.s32.totalorder %s19, %s22
    %p28 = scmp.eq.s32.totalorder %s9, 0
    %p29 = por %p27, %p28
    %p30 = scmp.ne.s32.totalorder %s19, %s22
    %p31 = scmp.eq.s32.totalorder %s14, 1
    %p32 = por %p30, %p31
    %p33 = scmp.ne.s32.totalorder %s22, %s23
    %p34 = scmp.eq.s32.totalorder %s14, 0
    %p35 = por %p33, %p34
    %p36 = scmp.ne.s32.totalorder %s22, %s23
    %p37 = scmp.eq.s32.totalorder %s15, 1
    %p38 = por %p36, %p37
    %p40 = scmp.ne.s32.totalorder %s23, %s39
    %p41 = scmp.eq.s32.totalorder %s15, 0
    %p42 = por %p40, %p41
    %s44 = sadd.s32 %s43, 1
    %p47 = scmp.eq.s32.totalorder %s9, 1
    %p48 = scmp.ne.s32.totalorder %s43, %s45
    %p49 = scmp.eq.s32.totalorder %s9, 0
    %p50 = por %p48, %p49
    %p51 = scmp.ne.s32.totalorder %s43, %s45
    %p52 = scmp.eq.s32.totalorder %s14, 1
    %p53 = por %p51, %p52
    %p54 = scmp.ne.s32.totalorder %s45, %s46
    %p55 = scmp.eq.s32.totalorder %s14, 0
    %p56 = por %p54, %p55
    %p57 = scmp.ne.s32.totalorder %s45, %s46
    %p58 = scmp.eq.s32.totalorder %s15, 1
    %p59 = por %p57, %p58
    %p61 = scmp.ne.s32.totalorder %s46, %s60
    %p62 = scmp.eq.s32.totalorder %s15, 0
    %p63 = por %p61, %p62
    %s65 = sadd.s32 %s64, 1
    %p68 = scmp.eq.s32.totalorder %s9, 1
    %p69 = scmp.ne.s32.totalorder %s64, %s66
    %p70 = scmp.eq.s32.totalorder %s9, 0
    %p71 = por %p69, %p70
    %p72 = scmp.ne.s32.totalorder %s64, %s66
    %p73 = scmp.eq.s32.totalorder %s14, 1
    %p74 = por %p72, %p73
    %p75 = scmp.ne.s32.totalorder %s66, %s67
    %p76 = scmp.eq.s32.totalorder %s14, 0
    %p77 = por %p75, %p76
    %p78 = scmp.ne.s32.totalorder %s66, %s67
    %p79 = scmp.eq.s32.totalorder %s15, 1
    %p80 = por %p78, %p79
    %p82 = scmp.ne.s32.totalorder %s67, %s81
    %p83 = scmp.eq.s32.totalorder %s15, 0
    %p84 = por %p82, %p83
    %s85 = ssub.s32 %s9, %s16
    %p86 = scmp.eq.s32.totalorder %s85, 0
    %s88 = sadd.s32 %s87, 1
    %s89 = scalar_select %p86, %s87, %s88
    %p92 = pneg %p86
    %p93 = scmp.eq.s32.totalorder %s9, 1
    %p94 = por %p92, %p93
    %p95 = scmp.ne.s32.totalorder %s87, %s90
    %p96 = scmp.eq.s32.totalorder %s9, 0
    %p97 = por %p95, %p96
    %p98 = scmp.ne.s32.totalorder %s87, %s90
    %p99 = scmp.eq.s32.totalorder %s14, 1
    %p100 = por %p98, %p99
    %p101 = scmp.ne.s32.totalorder %s90, %s91
    %p102 = scmp.eq.s32.totalorder %s14, 0
    %p103 = por %p101, %p102
    %p104 = scmp.ne.s32.totalorder %s90, %s91
    %p105 = scmp.eq.s32.totalorder %s15, 1
    %p106 = por %p104, %p105
    %p108 = scmp.ne.s32.totalorder %s91, %s107
    %p109 = scmp.eq.s32.totalorder %s15, 0
    %p110 = por %p108, %p109
    %p111 = scmp.le.s32.totalorder 1, %s9
    %p112 = scmp.lt.s32.totalorder %s9, 3
    %p113 = pnand %p111, %p112
    %p114 = pneg %p113
    // Predicated region
    $region9: #{_lambda_.22} parent=5 // pred_check
      _
    $region10: #{_lambda_.22} parent=5 // pred_check_branch
      %116 = sbr.rel (%p113) target = $region12
    $region11: #{_lambda_.22} parent=5 // pred_region
      %s117 = ssub.s32 %s9, 1
      // Predicated region
      $region13: #{_lambda_.22} parent=11 // pred_check
        %p118 = pneg %p56
      $region14: #{_lambda_.22} parent=11 // pred_check_branch
        %120 = sbr.rel (%p118) target = $region16
      $region15: #{_lambda_.22} parent=11 // pred_region
        _
      $region16: #{_lambda_.22} parent=11 // pred_fallthru
        _
      // Predicated region
      $region17: #{_lambda_.22} parent=11 // pred_check
        %p121 = pneg %p77
      $region18: #{_lambda_.22} parent=11 // pred_check_branch
        %123 = sbr.rel (%p121) target = $region20
      $region19: #{_lambda_.22} parent=11 // pred_region
        _
      $region20: #{_lambda_.22} parent=11 // pred_fallthru
        _
    $region12: #{_lambda_.22} parent=5 // pred_fallthru
      _
    %p124 = scmp.lt.s32.totalorder %s9, 2
    // Predicated region
    $region21: #{_lambda_.22} parent=5 // pred_check
      %p125 = pneg %p124
    $region22: #{_lambda_.22} parent=5 // pred_check_branch
      %127 = sbr.rel (%p125) target = $region24
    $region23: #{_lambda_.22} parent=5 // pred_region
      // Predicated region
      $region25: #{_lambda_.22} parent=23 // pred_check
        %p128 = pneg %p29
      $region26: #{_lambda_.22} parent=23 // pred_check_branch
        %130 = sbr.rel (%p128) target = $region28
      $region27: #{_lambda_.22} parent=23 // pred_region
        %s131 = smul.u32 8, %s9
        %p132 = scmp.lt.s32.totalorder %s131, 15
        %s133 = scalar_select %p132, %s131, 15
        %s134 = smul.addr %s133, 3
        %s135 = smul.addr %s134, 8
        %s136 = scalar_lea.vmem %s0, %s135
        %s137 = smul.u32 8, %s9
      $region28: #{_lambda_.22} parent=23 // pred_fallthru
        _
    $region24: #{_lambda_.22} parent=5 // pred_fallthru
      _
    %p138 = scmp.le.s32.totalorder 1, %s9
    %p139 = scmp.lt.s32.totalorder %s9, 3
    %p140 = pnand %p138, %p139
    %p141 = pneg %p140
    // Predicated region
    $region29: #{_lambda_.22} parent=5 // pred_check
      _
    $region30: #{_lambda_.22} parent=5 // pred_check_branch
      %143 = sbr.rel (%p140) target = $region32
    $region31: #{_lambda_.22} parent=5 // pred_region
      %s144 = ssub.s32 %s9, 1
      %s145 = smul.u32 8, %s14
      %p146 = scmp.lt.s32.totalorder %s145, 15
      %s147 = scalar_select %p146, %s145, 15
      %s148 = smul.addr %s147, 3
      %s149 = smul.addr %s148, 8
      %s150 = scalar_lea.vmem %s0, %s149
      %p151 = pneg %p35
      %p152 = pneg %p32
      %p153 = pneg %p56
      %p154 = pneg %p53
      %p155 = pneg %p77
      %p156 = pneg %p74
      %p157 = pneg %p103
      %p158 = pneg %p100
      %s159 = smul.u32 8, %s14
      %p160 = scmp.lt.s32.totalorder %s159, 15
      %s161 = scalar_select %p160, %s159, 15
      %s162 = smul.addr %s161, 8
      %s163 = scalar_lea.vmem %s3, %s162
      %s164 = smul.u32 8, %s14
      %p165 = scmp.lt.s32.totalorder %s164, 15
      %s166 = scalar_select %p165, %s164, 15
      %s167 = smul.addr %s166, 3
      %s168 = smul.addr %s167, 8
      %s169 = scalar_lea.vmem %s0, %s168
      %s170 = smul.u32 8, %s14
      %s171 = smul.u32 8, %s14
      %p172 = scmp.lt.s32.totalorder %s171, 15
      %s173 = scalar_select %p172, %s171, 15
      %s174 = smul.addr %s173, 8
      %s175 = scalar_lea.vmem %s3, %s174
      %s176 = smul.u32 8, %s14
      %v177 = vld [vmem:[%s169] sm:$0xff]
      %v178 = vld [vmem:[%s169 + $0x8] sm:$0xff]
      %v179 = vld [vmem:[%s169 + $0x10] sm:$0xff]
      %v180 = vld [vmem:[%s169 + $0x18] sm:$0xff]
      %v181 = vld [vmem:[%s169 + $0x20] sm:$0xff]
      %v182 = vld [vmem:[%s169 + $0x28] sm:$0xff]
      %v183 = vld [vmem:[%s169 + $0x30] sm:$0xff]
      %v184 = vld [vmem:[%s169 + $0x38] sm:$0xff]
      %v185 = vld [vmem:[%s169 + $0x40] sm:$0xff]
      %v186 = vld [vmem:[%s169 + $0x48] sm:$0xff]
      %v187 = vld [vmem:[%s169 + $0x50] sm:$0xff]
      %v188 = vld [vmem:[%s169 + $0x58] sm:$0xff]
      %v189 = vld [vmem:[%s169 + $0x60] sm:$0xff]
      %v190 = vld [vmem:[%s169 + $0x68] sm:$0xff]
      %v191 = vld [vmem:[%s169 + $0x70] sm:$0xff]
      %v192 = vld [vmem:[%s169 + $0x78] sm:$0xff]
      %v193 = vld [vmem:[%s169 + $0x80] sm:$0xff]
      %v194 = vld [vmem:[%s169 + $0x88] sm:$0xff]
      %v195 = vld [vmem:[%s169 + $0x90] sm:$0xff]
      %v196 = vld [vmem:[%s169 + $0x98] sm:$0xff]
      %v197 = vld [vmem:[%s169 + $0xa0] sm:$0xff]
      %v198 = vld [vmem:[%s169 + $0xa8] sm:$0xff]
      %v199 = vld [vmem:[%s169 + $0xb0] sm:$0xff]
      %v200 = vld [vmem:[%s169 + $0xb8] sm:$0xff]
      %v201 = vld [vmem:[%s1] sm:$0xff]
      %v202 = vld [vmem:[%s1 + $0x8] sm:$0xff]
      %v203 = vld [vmem:[%s1 + $0x10] sm:$0xff]
      %v204 = vld [vmem:[%s1 + $0x18] sm:$0xff]
      %v205 = vld [vmem:[%s1 + $0x20] sm:$0xff]
      %v206 = vld [vmem:[%s1 + $0x28] sm:$0xff]
      %v207 = vld [vmem:[%s1 + $0x30] sm:$0xff]
      %v208 = vld [vmem:[%s1 + $0x38] sm:$0xff]
      %v209 = vld [vmem:[%s1 + $0x40] sm:$0xff]
      %v210 = vld [vmem:[%s1 + $0x48] sm:$0xff]
      %v211 = vld [vmem:[%s1 + $0x50] sm:$0xff]
      %v212 = vld [vmem:[%s1 + $0x58] sm:$0xff]
      %v213 = vld [vmem:[%s1 + $0x60] sm:$0xff]
      %v214 = vld [vmem:[%s1 + $0x68] sm:$0xff]
      %v215 = vld [vmem:[%s1 + $0x70] sm:$0xff]
      %v216 = vld [vmem:[%s1 + $0x78] sm:$0xff]
      %v217 = vld [vmem:[%s1 + $0x80] sm:$0xff]
      %v218 = vld [vmem:[%s1 + $0x88] sm:$0xff]
      %v219 = vld [vmem:[%s1 + $0x90] sm:$0xff]
      %v220 = vld [vmem:[%s1 + $0x98] sm:$0xff]
      %v221 = vld [vmem:[%s1 + $0xa0] sm:$0xff]
      %v222 = vld [vmem:[%s1 + $0xa8] sm:$0xff]
      %v223 = vld [vmem:[%s1 + $0xb0] sm:$0xff]
      %v224 = vld [vmem:[%s1 + $0xb8] sm:$0xff]
      %v225 = vld [vmem:[%s1 + $0xc0] sm:$0xff]
      %v226 = vld [vmem:[%s1 + $0xc8] sm:$0xff]
      %v227 = vld [vmem:[%s1 + $0xd0] sm:$0xff]
      %v228 = vld [vmem:[%s1 + $0xd8] sm:$0xff]
      %v229 = vld [vmem:[%s1 + $0xe0] sm:$0xff]
      %v230 = vld [vmem:[%s1 + $0xe8] sm:$0xff]
      %v231 = vld [vmem:[%s1 + $0xf0] sm:$0xff]
      %v232 = vld [vmem:[%s1 + $0xf8] sm:$0xff]
      %v233 = vld [vmem:[%s1 + $0x100] sm:$0xff]
      %v234 = vld [vmem:[%s1 + $0x108] sm:$0xff]
      %v235 = vld [vmem:[%s1 + $0x110] sm:$0xff]
      %v236 = vld [vmem:[%s1 + $0x118] sm:$0xff]
      %v237 = vld [vmem:[%s2] sm:$0x1]
      %v239 = vlaneseq
      %v240 = vshrl.u32 %v239, 7
      %v241 = vsub.s32 0, %v240
      %v242 = vrot.slane %v237, %v241
      %vm244 = vcmask 261120
      %v246 = vsel %vm244, %v179, 0
      %v249 = vsel %vm244, %v182, 0
      %v252 = vsel %vm244, %v185, 0
      %v255 = vsel %vm244, %v188, 0
      %v258 = vsel %vm244, %v191, 0
      %v261 = vsel %vm244, %v194, 0
      %v264 = vsel %vm244, %v197, 0
      %v267 = vsel %vm244, %v200, 0
      %269 = vmatprep.subr.mxu0 0.0
      %270 = vmatpush1.msra.mxu0 %v201
      %271 = vmatprep.subr.mxu0 0.0
      %272 = vmatpush1.msra.mxu0 %v202
      %273 = vmatprep.subr.mxu0 0.0
      %274 = vmatpush1.msra.mxu0 %v203
      %275 = vmatprep.subr.mxu0 0.0
      %276 = vmatpush1.msra.mxu0 %v204
      %277 = vmatprep.subr.mxu0 0.0
      %278 = vmatpush1.msra.mxu0 %v205
      %279 = vmatprep.subr.mxu0 0.0
      %280 = vmatpush1.msra.mxu0 %v206
      %281 = vmatprep.subr.mxu0 0.0
      %282 = vmatpush1.msra.mxu0 %v207
      %283 = vmatprep.subr.mxu0 0.0
      %284 = vmatpush1.msra.mxu0 %v208
      %285 = vmatprep.subr.mxu0 0.0
      %286 = vmatpush1.msra.mxu0 %v209
      %287 = vmatprep.subr.mxu0 0.0
      %288 = vmatpush1.msra.mxu0 %v210
      %289 = vmatprep.subr.mxu0 0.0
      %290 = vmatpush1.msra.mxu0 %v211
      %291 = vmatprep.subr.mxu0 0.0
      %292 = vmatpush1.msra.mxu0 %v212
      %293 = vmatprep.subr.mxu0 0.0
      %294 = vmatpush1.msra.mxu0 %v213
      %295 = vmatprep.subr.mxu0 0.0
      %296 = vmatpush1.msra.mxu0 %v214
      %297 = vmatprep.subr.mxu0 0.0
      %298 = vmatpush1.msra.mxu0 %v215
      %299 = vmatprep.subr.mxu0 0.0
      %300 = vmatpush1.msra.mxu0 %v216
      %301 = vmatprep.subr.mxu0 0.0
      %302 = vmatpush1.msra.mxu0 %v217
      %303 = vmatprep.subr.mxu0 0.0
      %304 = vmatpush1.msra.mxu0 %v218
      %305 = vmatprep.subr.mxu0 0.0
      %306 = vmatpush1.msra.mxu0 %v219
      %307 = vmatprep.subr.mxu0 0.0
      %308 = vmatpush1.msra.mxu0 %v220
      %309 = vmatprep.subr.mxu0 0.0
      %310 = vmatpush1.msra.mxu0 %v221
      %311 = vmatprep.subr.mxu0 0.0
      %312 = vmatpush1.msra.mxu0 %v222
      %313 = vmatprep.subr.mxu0 0.0
      %314 = vmatpush1.msra.mxu0 %v223
      %315 = vmatprep.subr.mxu0 0.0
      %316 = vmatpush1.msra.mxu0 %v224
      %317 = vmatprep.subr.mxu0 0.0
      %318 = vmatpush1.msra.mxu0 %v225
      %319 = vmatprep.subr.mxu0 0.0
      %320 = vmatpush1.msra.mxu0 %v226
      %321 = vmatprep.subr.mxu0 0.0
      %322 = vmatpush1.msra.mxu0 %v227
      %323 = vmatprep.subr.mxu0 0.0
      %324 = vmatpush1.msra.mxu0 %v228
      %325 = vmatprep.subr.mxu0 0.0
      %326 = vmatpush1.msra.mxu0 %v229
      %327 = vmatprep.subr.mxu0 0.0
      %328 = vmatpush1.msra.mxu0 %v230
      %329 = vmatprep.subr.mxu0 0.0
      %330 = vmatpush1.msra.mxu0 %v231
      %331 = vmatprep.subr.mxu0 0.0
      %332 = vmatpush1.msra.mxu0 %v232
      %333 = vmatprep.mubr.f32.mxu0 %v178
      %334 = vmatmul.mubr.f32.gmra.mrb[0].mxu0 %v177
      %v335 = vpop.f32.mrb[0].mxu0
      %v336 = vadd.f32 %v242, %v335
      %v337 = vpop.f32.mrb[0].mxu0
      %338 = vmatprep.mubr.f32.mxu0 %v181
      %339 = vmatmul.mubr.f32.gmra.mrb[0].mxu0 %v180
      %v340 = vpop.f32.mrb[0].mxu0
      %v341 = vadd.f32 %v242, %v340
      %v342 = vpop.f32.mrb[0].mxu0
      %343 = vmatprep.mubr.f32.mxu0 %v184
      %344 = vmatmul.mubr.f32.gmra.mrb[0].mxu0 %v183
      %v345 = vpop.f32.mrb[0].mxu0
      %v346 = vadd.f32 %v242, %v345
      %v347 = vpop.f32.mrb[0].mxu0
      %348 = vmatprep.mubr.f32.mxu0 %v187
      %349 = vmatmul.mubr.f32.gmra.mrb[0].mxu0 %v186
      %v350 = vpop.f32.mrb[0].mxu0
      %v351 = vadd.f32 %v242, %v350
      %v352 = vpop.f32.mrb[0].mxu0
      %353 = vmatprep.mubr.f32.mxu0 %v190
      %354 = vmatmul.mubr.f32.gmra.mrb[0].mxu0 %v189
      %v355 = vpop.f32.mrb[0].mxu0
      %v356 = vadd.f32 %v242, %v355
      %v357 = vpop.f32.mrb[0].mxu0
      %358 = vmatprep.mubr.f32.mxu0 %v193
      %359 = vmatmul.mubr.f32.gmra.mrb[0].mxu0 %v192
      %v360 = vpop.f32.mrb[0].mxu0
      %v361 = vadd.f32 %v242, %v360
      %v362 = vpop.f32.mrb[0].mxu0
      %363 = vmatprep.mubr.f32.mxu0 %v196
      %364 = vmatmul.mubr.f32.gmra.mrb[0].mxu0 %v195
      %v365 = vpop.f32.mrb[0].mxu0
      %v366 = vadd.f32 %v242, %v365
      %v367 = vpop.f32.mrb[0].mxu0
      %368 = vmatprep.mubr.f32.mxu0 %v199
      %369 = vmatmul.mubr.f32.gmra.mrb[0].mxu0 %v198
      %v370 = vpop.f32.mrb[0].mxu0
      %v371 = vadd.f32 %v242, %v370
      %v372 = vpop.f32.mrb[0].mxu0
      %373 = vdwg.mxu0
      %374 = vmatprep.subr.mxu0 0.0
      %375 = vmatpush1.msra.mxu0 %v233
      %376 = vmatprep.subr.mxu0 0.0
      %377 = vmatpush1.msra.mxu0 %v234
      %378 = vmatprep.subr.mxu0 0.0
      %379 = vmatpush1.msra.mxu0 %v235
      %380 = vmatprep.subr.mxu0 0.0
      %381 = vmatpush1.msra.mxu0 %v236
      %382 = vmatprep.subr.mxu0 0.0
      %383 = vmatpush1.msra.mxu0 0.0
      %384 = vmatprep.subr.mxu0 0.0
      %385 = vmatpush1.msra.mxu0 0.0
      %386 = vmatprep.subr.mxu0 0.0
      %387 = vmatpush1.msra.mxu0 0.0
      %388 = vmatprep.subr.mxu0 0.0
      %389 = vmatpush1.msra.mxu0 0.0
      %390 = vmatprep.subr.mxu0 0.0
      %391 = vmatpush1.msra.mxu0 0.0
      %392 = vmatprep.subr.mxu0 0.0
      %393 = vmatpush1.msra.mxu0 0.0
      %394 = vmatprep.subr.mxu0 0.0
      %395 = vmatpush1.msra.mxu0 0.0
      %396 = vmatprep.subr.mxu0 0.0
      %397 = vmatpush1.msra.mxu0 0.0
      %398 = vmatprep.subr.mxu0 0.0
      %399 = vmatpush1.msra.mxu0 0.0
      %400 = vmatprep.subr.mxu0 0.0
      %401 = vmatpush1.msra.mxu0 0.0
      %402 = vmatprep.subr.mxu0 0.0
      %403 = vmatpush1.msra.mxu0 0.0
      %404 = vmatprep.subr.mxu0 0.0
      %405 = vmatpush1.msra.mxu0 0.0
      %406 = vmatprep.subr.mxu0 0.0
      %407 = vmatpush1.msra.mxu0 0.0
      %408 = vmatprep.subr.mxu0 0.0
      %409 = vmatpush1.msra.mxu0 0.0
      %410 = vmatprep.subr.mxu0 0.0
      %411 = vmatpush1.msra.mxu0 0.0
      %412 = vmatprep.subr.mxu0 0.0
      %413 = vmatpush1.msra.mxu0 0.0
      %414 = vmatprep.subr.mxu0 0.0
      %415 = vmatpush1.msra.mxu0 0.0
      %416 = vmatprep.subr.mxu0 0.0
      %417 = vmatpush1.msra.mxu0 0.0
      %418 = vmatprep.subr.mxu0 0.0
      %419 = vmatpush1.msra.mxu0 0.0
      %420 = vmatprep.subr.mxu0 0.0
      %421 = vmatpush1.msra.mxu0 0.0
      %422 = vmatprep.subr.mxu0 0.0
      %423 = vmatpush1.msra.mxu0 0.0
      %424 = vmatprep.subr.mxu0 0.0
      %425 = vmatpush1.msra.mxu0 0.0
      %426 = vmatprep.subr.mxu0 0.0
      %427 = vmatpush1.msra.mxu0 0.0
      %428 = vmatprep.subr.mxu0 0.0
      %429 = vmatpush1.msra.mxu0 0.0
      %430 = vmatprep.subr.mxu0 0.0
      %431 = vmatpush1.msra.mxu0 0.0
      %432 = vmatprep.subr.mxu0 0.0
      %433 = vmatpush1.msra.mxu0 0.0
      %434 = vmatprep.subr.mxu0 0.0
      %435 = vmatpush1.msra.mxu0 0.0
      %436 = vmatprep.subr.mxu0 0.0
      %437 = vmatpush1.msra.mxu0 0.0
      %438 = vmatprep.mubr.f32.mxu0 0.0
      %439 = vmatmul.mubr.f32.gmra.mrb[0].mxu0 %v246
      %v440 = vpop.f32.mrb[0].mxu0
      %v441 = vadd.f32 %v336, %v440
      %v442 = vpop.f32.mrb[0].mxu0
      %443 = vmatprep.mubr.f32.mxu0 0.0
      %444 = vmatmul.mubr.f32.gmra.mrb[0].mxu0 %v249
      %v445 = vpop.f32.mrb[0].mxu0
      %v446 = vadd.f32 %v341, %v445
      %v447 = vpop.f32.mrb[0].mxu0
      %448 = vmatprep.mubr.f32.mxu0 0.0
      %449 = vmatmul.mubr.f32.gmra.mrb[0].mxu0 %v252
      %v450 = vpop.f32.mrb[0].mxu0
      %v451 = vadd.f32 %v346, %v450
      %v452 = vpop.f32.mrb[0].mxu0
      %453 = vmatprep.mubr.f32.mxu0 0.0
      %454 = vmatmul.mubr.f32.gmra.mrb[0].mxu0 %v255
      %v455 = vpop.f32.mrb[0].mxu0
      %v456 = vadd.f32 %v351, %v455
      %v457 = vpop.f32.mrb[0].mxu0
      %458 = vmatprep.mubr.f32.mxu0 0.0
      %459 = vmatmul.mubr.f32.gmra.mrb[0].mxu0 %v258
      %v460 = vpop.f32.mrb[0].mxu0
      %v461 = vadd.f32 %v356, %v460
      %v462 = vpop.f32.mrb[0].mxu0
      %463 = vmatprep.mubr.f32.mxu0 0.0
      %464 = vmatmul.mubr.f32.gmra.mrb[0].mxu0 %v261
      %v465 = vpop.f32.mrb[0].mxu0
      %v466 = vadd.f32 %v361, %v465
      %v467 = vpop.f32.mrb[0].mxu0
      %468 = vmatprep.mubr.f32.mxu0 0.0
      %469 = vmatmul.mubr.f32.gmra.mrb[0].mxu0 %v264
      %v470 = vpop.f32.mrb[0].mxu0
      %v471 = vadd.f32 %v366, %v470
      %v472 = vpop.f32.mrb[0].mxu0
      %473 = vmatprep.mubr.f32.mxu0 0.0
      %474 = vmatmul.mubr.f32.gmra.mrb[0].mxu0 %v267
      %v475 = vpop.f32.mrb[0].mxu0
      %v476 = vadd.f32 %v371, %v475
      %v477 = vpop.f32.mrb[0].mxu0
      %478 = vdwg.mxu0
      %v479 = vmax.f32 %v441, 0.0
      %v480 = vmax.f32 %v446, 0.0
      %v481 = vmax.f32 %v451, 0.0
      %v482 = vmax.f32 %v456, 0.0
      %v483 = vmax.f32 %v461, 0.0
      %v484 = vmax.f32 %v466, 0.0
      %v485 = vmax.f32 %v471, 0.0
      %v486 = vmax.f32 %v476, 0.0
      %487 = vst.msk [vmem:[%s175] sm:$0xff] %vm244, %v479
      %488 = vst.msk [vmem:[%s175 + $0x8] sm:$0xff] %vm244, %v480
      %489 = vst.msk [vmem:[%s175 + $0x10] sm:$0xff] %vm244, %v481
      %490 = vst.msk [vmem:[%s175 + $0x18] sm:$0xff] %vm244, %v482
      %491 = vst.msk [vmem:[%s175 + $0x20] sm:$0xff] %vm244, %v483
      %492 = vst.msk [vmem:[%s175 + $0x28] sm:$0xff] %vm244, %v484
      %493 = vst.msk [vmem:[%s175 + $0x30] sm:$0xff] %vm244, %v485
      %494 = vst.msk [vmem:[%s175 + $0x38] sm:$0xff] %vm244, %v486
      %s495 = smul.u32 8, %s14
      %p496 = scmp.lt.s32.totalorder %s495, 15
      %s497 = scalar_select %p496, %s495, 15
      %s498 = smul.addr %s497, 8
      %s499 = scalar_lea.vmem %s3, %s498
      // Predicated region
      $region33: #{_lambda_.22} parent=31 // pred_check
        %p500 = pneg %p100
      $region34: #{_lambda_.22} parent=31 // pred_check_branch
        %502 = sbr.rel (%p500) target = $region36
      $region35: #{_lambda_.22} parent=31 // pred_region
        %s503 = smul.u32 8, %s14
      $region36: #{_lambda_.22} parent=31 // pred_fallthru
        _
    $region32: #{_lambda_.22} parent=5 // pred_fallthru
      _
    %p504 = scmp.le.s32.totalorder 2, %s9
    // Predicated region
    $region37: #{_lambda_.22} parent=5 // pred_check
      %p505 = pneg %p504
    $region38: #{_lambda_.22} parent=5 // pred_check_branch
      %507 = sbr.rel (%p505) target = $region40
    $region39: #{_lambda_.22} parent=5 // pred_region
      %s508 = ssub.s32 %s9, 2
      // Predicated region
      $region41: #{_lambda_.22} parent=39 // pred_check
        %p509 = pneg %p106
      $region42: #{_lambda_.22} parent=39 // pred_check_branch
        %511 = sbr.rel (%p509) target = $region44
      $region43: #{_lambda_.22} parent=39 // pred_region
        %s512 = smul.u32 8, %s15
        %p513 = scmp.lt.s32.totalorder %s512, 15
        %s514 = scalar_select %p513, %s512, 15
        %s515 = smul.addr %s514, 8
        %s516 = scalar_lea.vmem %s3, %s515
      $region44: #{_lambda_.22} parent=39 // pred_fallthru
        _
    $region40: #{_lambda_.22} parent=5 // pred_fallthru
      _
  $region6: #{_lambda_.22} parent=0 // loop_footer
    %s13 = sadd.s32 1, %s9
  $region7: #{_lambda_.22} parent=0 // loop_footer_branch
    %8 = sbr.rel target = $region3
  $region8: #{_lambda_.22} parent=0 // loop_exit
    _

// kernel: _lambda_.24
$region0: #{_lambda_.24}
  #allocation0 [shape = 'u32[]', space=smem, size = 0x4, offset = 0x4, fixed_abs, tag = 'smem constant byte address 0x4 - core index']
  #allocation1 [shape = 'u32[144,128]{1,0:T(1,128)}', space=vmem, size = 0x12000, scoped, tag = 'internal scratch']
  %s0 = inlined_call_operand.vmem [shape: f32[32,800], index: 0, kind: input, shape index: {}]
  %s1 = inlined_call_operand.vmem [shape: f32[800,64], index: 1, kind: input, shape index: {}]
  %s2 = inlined_call_operand.vmem [shape: f32[1,64], index: 2, kind: input, shape index: {}]
  %s3 = inlined_call_operand.vmem [shape: f32[32,64], index: 3, kind: output, shape index: {}]
  %s4 = sld [smem:[#allocation0]]
  $region45: #{_lambda_.24} parent=0
    _
  %s6 = ssub.s32 1, %s4
  %s7 = scalar_select 0, %s6, %s4
  loop: start=0, step=1, limit=4
  $region2: #{_lambda_.24} parent=0 // loop_pre_header
    _
  $region3: #{_lambda_.24} parent=0 // loop_header
    %s9 = sphi 0, %s13
    %p10 = scmp.ge.s32.totalorder %s9, 4
    %s19 = sphi 0, %s21
    %s22 = sphi 0, %s19
    %s23 = sphi 0, %s22
    %s39 = sphi 0, %s23
    %s43 = sphi 0, %s43
    %s45 = sphi 0, %s43
    %s46 = sphi 0, %s45
    %s60 = sphi 0, %s46
    %s64 = sphi 0, %s64
    %s66 = sphi 0, %s64
    %s67 = sphi 0, %s66
    %s81 = sphi 0, %s67
    %s87 = sphi 0, %s89
    %s90 = sphi 0, %s87
    %s91 = sphi 0, %s90
    %s107 = sphi 0, %s91
  $region4: #{_lambda_.24} parent=0 // loop_header_branch
    %12 = sbr.rel (%p10) target = $region8
  $region5: #{_lambda_.24} parent=0 // loop_body
    %s14 = ssub.s32 %s9, 1
    %s15 = ssub.s32 %s9, 2
    %s16 = sadd.s32 %s9, 1
    %s17 = ssub.s32 %s9, %s16
    %p18 = scmp.eq.s32.totalorder %s17, 0
    %s20 = sadd.s32 %s19, 1
    %s21 = scalar_select %p18, %s19, %s20
    %p24 = pneg %p18
    %p25 = scmp.eq.s32.totalorder %s9, 1
    %p26 = por %p24, %p25
    %p27 = scmp.ne.s32.totalorder %s19, %s22
    %p28 = scmp.eq.s32.totalorder %s9, 0
    %p29 = por %p27, %p28
    %p30 = scmp.ne.s32.totalorder %s19, %s22
    %p31 = scmp.eq.s32.totalorder %s14, 1
    %p32 = por %p30, %p31
    %p33 = scmp.ne.s32.totalorder %s22, %s23
    %p34 = scmp.eq.s32.totalorder %s14, 0
    %p35 = por %p33, %p34
    %p36 = scmp.ne.s32.totalorder %s22, %s23
    %p37 = scmp.eq.s32.totalorder %s15, 1
    %p38 = por %p36, %p37
    %p40 = scmp.ne.s32.totalorder %s23, %s39
    %p41 = scmp.eq.s32.totalorder %s15, 0
    %p42 = por %p40, %p41
    %s44 = sadd.s32 %s43, 1
    %p47 = scmp.eq.s32.totalorder %s9, 1
    %p48 = scmp.ne.s32.totalorder %s43, %s45
    %p49 = scmp.eq.s32.totalorder %s9, 0
    %p50 = por %p48, %p49
    %p51 = scmp.ne.s32.totalorder %s43, %s45
    %p52 = scmp.eq.s32.totalorder %s14, 1
    %p53 = por %p51, %p52
    %p54 = scmp.ne.s32.totalorder %s45, %s46
    %p55 = scmp.eq.s32.totalorder %s14, 0
    %p56 = por %p54, %p55
    %p57 = scmp.ne.s32.totalorder %s45, %s46
    %p58 = scmp.eq.s32.totalorder %s15, 1
    %p59 = por %p57, %p58
    %p61 = scmp.ne.s32.totalorder %s46, %s60
    %p62 = scmp.eq.s32.totalorder %s15, 0
    %p63 = por %p61, %p62
    %s65 = sadd.s32 %s64, 1
    %p68 = scmp.eq.s32.totalorder %s9, 1
    %p69 = scmp.ne.s32.totalorder %s64, %s66
    %p70 = scmp.eq.s32.totalorder %s9, 0
    %p71 = por %p69, %p70
    %p72 = scmp.ne.s32.totalorder %s64, %s66
    %p73 = scmp.eq.s32.totalorder %s14, 1
    %p74 = por %p72, %p73
    %p75 = scmp.ne.s32.totalorder %s66, %s67
    %p76 = scmp.eq.s32.totalorder %s14, 0
    %p77 = por %p75, %p76
    %p78 = scmp.ne.s32.totalorder %s66, %s67
    %p79 = scmp.eq.s32.totalorder %s15, 1
    %p80 = por %p78, %p79
    %p82 = scmp.ne.s32.totalorder %s67, %s81
    %p83 = scmp.eq.s32.totalorder %s15, 0
    %p84 = por %p82, %p83
    %s85 = ssub.s32 %s9, %s16
    %p86 = scmp.eq.s32.totalorder %s85, 0
    %s88 = sadd.s32 %s87, 1
    %s89 = scalar_select %p86, %s87, %s88
    %p92 = pneg %p86
    %p93 = scmp.eq.s32.totalorder %s9, 1
    %p94 = por %p92, %p93
    %p95 = scmp.ne.s32.totalorder %s87, %s90
    %p96 = scmp.eq.s32.totalorder %s9, 0
    %p97 = por %p95, %p96
    %p98 = scmp.ne.s32.totalorder %s87, %s90
    %p99 = scmp.eq.s32.totalorder %s14, 1
    %p100 = por %p98, %p99
    %p101 = scmp.ne.s32.totalorder %s90, %s91
    %p102 = scmp.eq.s32.totalorder %s14, 0
    %p103 = por %p101, %p102
    %p104 = scmp.ne.s32.totalorder %s90, %s91
    %p105 = scmp.eq.s32.totalorder %s15, 1
    %p106 = por %p104, %p105
    %p108 = scmp.ne.s32.totalorder %s91, %s107
    %p109 = scmp.eq.s32.totalorder %s15, 0
    %p110 = por %p108, %p109
    %p111 = scmp.le.s32.totalorder 1, %s9
    %p112 = scmp.lt.s32.totalorder %s9, 3
    %p113 = pnand %p111, %p112
    %p114 = pneg %p113
    // Predicated region
    $region9: #{_lambda_.24} parent=5 // pred_check
      _
    $region10: #{_lambda_.24} parent=5 // pred_check_branch
      %116 = sbr.rel (%p113) target = $region12
    $region11: #{_lambda_.24} parent=5 // pred_region
      %s117 = ssub.s32 %s9, 1
      // Predicated region
      $region13: #{_lambda_.24} parent=11 // pred_check
        %p118 = pneg %p56
      $region14: #{_lambda_.24} parent=11 // pred_check_branch
        %120 = sbr.rel (%p118) target = $region16
      $region15: #{_lambda_.24} parent=11 // pred_region
        _
      $region16: #{_lambda_.24} parent=11 // pred_fallthru
        _
      // Predicated region
      $region17: #{_lambda_.24} parent=11 // pred_check
        %p121 = pneg %p77
      $region18: #{_lambda_.24} parent=11 // pred_check_branch
        %123 = sbr.rel (%p121) target = $region20
      $region19: #{_lambda_.24} parent=11 // pred_region
        _
      $region20: #{_lambda_.24} parent=11 // pred_fallthru
        _
    $region12: #{_lambda_.24} parent=5 // pred_fallthru
      _
    %p124 = scmp.lt.s32.totalorder %s9, 2
    // Predicated region
    $region21: #{_lambda_.24} parent=5 // pred_check
      %p125 = pneg %p124
    $region22: #{_lambda_.24} parent=5 // pred_check_branch
      %127 = sbr.rel (%p125) target = $region24
    $region23: #{_lambda_.24} parent=5 // pred_region
      // Predicated region
      $region25: #{_lambda_.24} parent=23 // pred_check
        %p128 = pneg %p29
      $region26: #{_lambda_.24} parent=23 // pred_check_branch
        %130 = sbr.rel (%p128) target = $region28
      $region27: #{_lambda_.24} parent=23 // pred_region
        %s131 = smul.u32 2, %s9
        %p132 = scmp.lt.s32.totalorder %s131, 3
        %s133 = scalar_select %p132, %s131, 3
        %s134 = smul.addr %s133, 7
        %s135 = smul.addr %s134, 8
        %s136 = scalar_lea.vmem %s0, %s135
        %s137 = smul.u32 2, %s9
      $region28: #{_lambda_.24} parent=23 // pred_fallthru
        _
    $region24: #{_lambda_.24} parent=5 // pred_fallthru
      _
    %p138 = scmp.le.s32.totalorder 1, %s9
    %p139 = scmp.lt.s32.totalorder %s9, 3
    %p140 = pnand %p138, %p139
    %p141 = pneg %p140
    // Predicated region
    $region29: #{_lambda_.24} parent=5 // pred_check
      _
    $region30: #{_lambda_.24} parent=5 // pred_check_branch
      %143 = sbr.rel (%p140) target = $region32
    $region31: #{_lambda_.24} parent=5 // pred_region
      %s144 = ssub.s32 %s9, 1
      %s145 = smul.u32 2, %s14
      %p146 = scmp.lt.s32.totalorder %s145, 3
      %s147 = scalar_select %p146, %s145, 3
      %s148 = smul.addr %s147, 7
      %s149 = smul.addr %s148, 8
      %s150 = scalar_lea.vmem %s0, %s149
      %p151 = pneg %p35
      %p152 = pneg %p32
      %p153 = pneg %p56
      %p154 = pneg %p53
      %p155 = pneg %p77
      %p156 = pneg %p74
      %p157 = pneg %p103
      %p158 = pneg %p100
      %s159 = smul.u32 2, %s14
      %p160 = scmp.lt.s32.totalorder %s159, 3
      %s161 = scalar_select %p160, %s159, 3
      %s162 = smul.addr %s161, 8
      %s163 = scalar_lea.vmem %s3, %s162
      %s164 = smul.u32 2, %s14
      %p165 = scmp.lt.s32.totalorder %s164, 3
      %s166 = scalar_select %p165, %s164, 3
      %s167 = smul.addr %s166, 7
      %s168 = smul.addr %s167, 8
      %s169 = scalar_lea.vmem %s0, %s168
      %s170 = smul.u32 2, %s14
      %s171 = smul.u32 2, %s14
      %p172 = scmp.lt.s32.totalorder %s171, 3
      %s173 = scalar_select %p172, %s171, 3
      %s174 = smul.addr %s173, 8
      %s175 = scalar_lea.vmem %s3, %s174
      %s176 = smul.u32 2, %s14
      %v177 = vld [vmem:[%s169] sm:$0xff]
      %v178 = vld [vmem:[%s169 + $0x8] sm:$0xff]
      %v179 = vld [vmem:[%s169 + $0x10] sm:$0xff]
      %v180 = vld [vmem:[%s169 + $0x18] sm:$0xff]
      %v181 = vld [vmem:[%s169 + $0x20] sm:$0xff]
      %v182 = vld [vmem:[%s169 + $0x28] sm:$0xff]
      %v183 = vld [vmem:[%s169 + $0x30] sm:$0xff]
      %v184 = vld [vmem:[%s169 + $0x38] sm:$0xff]
      %v185 = vld [vmem:[%s169 + $0x40] sm:$0xff]
      %v186 = vld [vmem:[%s169 + $0x48] sm:$0xff]
      %v187 = vld [vmem:[%s169 + $0x50] sm:$0xff]
      %v188 = vld [vmem:[%s169 + $0x58] sm:$0xff]
      %v189 = vld [vmem:[%s169 + $0x60] sm:$0xff]
      %v190 = vld [vmem:[%s169 + $0x68] sm:$0xff]
      %v191 = vld [vmem:[%s1] sm:$0xff]
      %v192 = vld [vmem:[%s1 + $0x8] sm:$0xff]
      %v193 = vld [vmem:[%s1 + $0x10] sm:$0xff]
      %v194 = vld [vmem:[%s1 + $0x18] sm:$0xff]
      %v195 = vld [vmem:[%s1 + $0x20] sm:$0xff]
      %v196 = vld [vmem:[%s1 + $0x28] sm:$0xff]
      %v197 = vld [vmem:[%s1 + $0x30] sm:$0xff]
      %v198 = vld [vmem:[%s1 + $0x38] sm:$0xff]
      %v199 = vld [vmem:[%s1 + $0x40] sm:$0xff]
      %v200 = vld [vmem:[%s1 + $0x48] sm:$0xff]
      %v201 = vld [vmem:[%s1 + $0x50] sm:$0xff]
      %v202 = vld [vmem:[%s1 + $0x58] sm:$0xff]
      %v203 = vld [vmem:[%s1 + $0x60] sm:$0xff]
      %v204 = vld [vmem:[%s1 + $0x68] sm:$0xff]
      %v205 = vld [vmem:[%s1 + $0x70] sm:$0xff]
      %v206 = vld [vmem:[%s1 + $0x78] sm:$0xff]
      %v207 = vld [vmem:[%s1 + $0x80] sm:$0xff]
      %v208 = vld [vmem:[%s1 + $0x88] sm:$0xff]
      %v209 = vld [vmem:[%s1 + $0x90] sm:$0xff]
      %v210 = vld [vmem:[%s1 + $0x98] sm:$0xff]
      %v211 = vld [vmem:[%s1 + $0xa0] sm:$0xff]
      %v212 = vld [vmem:[%s1 + $0xa8] sm:$0xff]
      %v213 = vld [vmem:[%s1 + $0xb0] sm:$0xff]
      %v214 = vld [vmem:[%s1 + $0xb8] sm:$0xff]
      %v215 = vld [vmem:[%s1 + $0xc0] sm:$0xff]
      %v216 = vld [vmem:[%s1 + $0xc8] sm:$0xff]
      %v217 = vld [vmem:[%s1 + $0xd0] sm:$0xff]
      %v218 = vld [vmem:[%s1 + $0xd8] sm:$0xff]
      %v219 = vld [vmem:[%s1 + $0xe0] sm:$0xff]
      %v220 = vld [vmem:[%s1 + $0xe8] sm:$0xff]
      %v221 = vld [vmem:[%s1 + $0xf0] sm:$0xff]
      %v222 = vld [vmem:[%s1 + $0xf8] sm:$0xff]
      %v223 = vld [vmem:[%s1 + $0x100] sm:$0xff]
      %v224 = vld [vmem:[%s1 + $0x108] sm:$0xff]
      %v225 = vld [vmem:[%s1 + $0x110] sm:$0xff]
      %v226 = vld [vmem:[%s1 + $0x118] sm:$0xff]
      %v227 = vld [vmem:[%s1 + $0x120] sm:$0xff]
      %v228 = vld [vmem:[%s1 + $0x128] sm:$0xff]
      %v229 = vld [vmem:[%s1 + $0x130] sm:$0xff]
      %v230 = vld [vmem:[%s1 + $0x138] sm:$0xff]
      %v231 = vld [vmem:[%s1 + $0x140] sm:$0xff]
      %v232 = vld [vmem:[%s1 + $0x148] sm:$0xff]
      %v233 = vld [vmem:[%s1 + $0x150] sm:$0xff]
      %v234 = vld [vmem:[%s1 + $0x158] sm:$0xff]
      %v235 = vld [vmem:[%s1 + $0x160] sm:$0xff]
      %v236 = vld [vmem:[%s1 + $0x168] sm:$0xff]
      %v237 = vld [vmem:[%s1 + $0x170] sm:$0xff]
      %v238 = vld [vmem:[%s1 + $0x178] sm:$0xff]
      %v239 = vld [vmem:[%s1 + $0x180] sm:$0xff]
      %v240 = vld [vmem:[%s1 + $0x188] sm:$0xff]
      %v241 = vld [vmem:[%s1 + $0x190] sm:$0xff]
      %v242 = vld [vmem:[%s1 + $0x198] sm:$0xff]
      %v243 = vld [vmem:[%s1 + $0x1a0] sm:$0xff]
      %v244 = vld [vmem:[%s1 + $0x1a8] sm:$0xff]
      %v245 = vld [vmem:[%s1 + $0x1b0] sm:$0xff]
      %v246 = vld [vmem:[%s1 + $0x1b8] sm:$0xff]
      %v247 = vld [vmem:[%s1 + $0x1c0] sm:$0xff]
      %v248 = vld [vmem:[%s1 + $0x1c8] sm:$0xff]
      %v249 = vld [vmem:[%s1 + $0x1d0] sm:$0xff]
      %v250 = vld [vmem:[%s1 + $0x1d8] sm:$0xff]
      %v251 = vld [vmem:[%s1 + $0x1e0] sm:$0xff]
      %v252 = vld [vmem:[%s1 + $0x1e8] sm:$0xff]
      %v253 = vld [vmem:[%s1 + $0x1f0] sm:$0xff]
      %v254 = vld [vmem:[%s1 + $0x1f8] sm:$0xff]
      %v255 = vld [vmem:[%s1 + $0x200] sm:$0xff]
      %v256 = vld [vmem:[%s1 + $0x208] sm:$0xff]
      %v257 = vld [vmem:[%s1 + $0x210] sm:$0xff]
      %v258 = vld [vmem:[%s1 + $0x218] sm:$0xff]
      %v259 = vld [vmem:[%s1 + $0x220] sm:$0xff]
      %v260 = vld [vmem:[%s1 + $0x228] sm:$0xff]
      %v261 = vld [vmem:[%s1 + $0x230] sm:$0xff]
      %v262 = vld [vmem:[%s1 + $0x238] sm:$0xff]
      %v263 = vld [vmem:[%s1 + $0x240] sm:$0xff]
      %v264 = vld [vmem:[%s1 + $0x248] sm:$0xff]
      %v265 = vld [vmem:[%s1 + $0x250] sm:$0xff]
      %v266 = vld [vmem:[%s1 + $0x258] sm:$0xff]
      %v267 = vld [vmem:[%s1 + $0x260] sm:$0xff]
      %v268 = vld [vmem:[%s1 + $0x268] sm:$0xff]
      %v269 = vld [vmem:[%s1 + $0x270] sm:$0xff]
      %v270 = vld [vmem:[%s1 + $0x278] sm:$0xff]
      %v271 = vld [vmem:[%s1 + $0x280] sm:$0xff]
      %v272 = vld [vmem:[%s1 + $0x288] sm:$0xff]
      %v273 = vld [vmem:[%s1 + $0x290] sm:$0xff]
      %v274 = vld [vmem:[%s1 + $0x298] sm:$0xff]
      %v275 = vld [vmem:[%s1 + $0x2a0] sm:$0xff]
      %v276 = vld [vmem:[%s1 + $0x2a8] sm:$0xff]
      %v277 = vld [vmem:[%s1 + $0x2b0] sm:$0xff]
      %v278 = vld [vmem:[%s1 + $0x2b8] sm:$0xff]
      %v279 = vld [vmem:[%s1 + $0x2c0] sm:$0xff]
      %v280 = vld [vmem:[%s1 + $0x2c8] sm:$0xff]
      %v281 = vld [vmem:[%s1 + $0x2d0] sm:$0xff]
      %v282 = vld [vmem:[%s1 + $0x2d8] sm:$0xff]
      %v283 = vld [vmem:[%s1 + $0x2e0] sm:$0xff]
      %v284 = vld [vmem:[%s1 + $0x2e8] sm:$0xff]
      %v285 = vld [vmem:[%s1 + $0x2f0] sm:$0xff]
      %v286 = vld [vmem:[%s1 + $0x2f8] sm:$0xff]
      %v287 = vld [vmem:[%s1 + $0x300] sm:$0xff]
      %v288 = vld [vmem:[%s1 + $0x308] sm:$0xff]
      %v289 = vld [vmem:[%s1 + $0x310] sm:$0xff]
      %v290 = vld [vmem:[%s1 + $0x318] sm:$0xff]
      %v291 = vld [vmem:[%s2] sm:$0x1]
      %v293 = vlaneseq
      %v294 = vshrl.u32 %v293, 7
      %v295 = vsub.s32 0, %v294
      %v296 = vrot.slane %v291, %v295
      %vm298 = vcmask 261120
      %v300 = vsel %vm298, %v183, 0
      %v303 = vsel %vm298, %v190, 0
      %305 = vmatprep.subr.mxu0 0.0
      %306 = vmatpush1.msra.mxu0 %v191
      %307 = vmatprep.subr.mxu0 0.0
      %308 = vmatpush1.msra.mxu0 %v192
      %309 = vmatprep.subr.mxu0 0.0
      %310 = vmatpush1.msra.mxu0 %v193
      %311 = vmatprep.subr.mxu0 0.0
      %312 = vmatpush1.msra.mxu0 %v194
      %313 = vmatprep.subr.mxu0 0.0
      %314 = vmatpush1.msra.mxu0 %v195
      %315 = vmatprep.subr.mxu0 0.0
      %316 = vmatpush1.msra.mxu0 %v196
      %317 = vmatprep.subr.mxu0 0.0
      %318 = vmatpush1.msra.mxu0 %v197
      %319 = vmatprep.subr.mxu0 0.0
      %320 = vmatpush1.msra.mxu0 %v198
      %321 = vmatprep.subr.mxu0 0.0
      %322 = vmatpush1.msra.mxu0 %v199
      %323 = vmatprep.subr.mxu0 0.0
      %324 = vmatpush1.msra.mxu0 %v200
      %325 = vmatprep.subr.mxu0 0.0
      %326 = vmatpush1.msra.mxu0 %v201
      %327 = vmatprep.subr.mxu0 0.0
      %328 = vmatpush1.msra.mxu0 %v202
      %329 = vmatprep.subr.mxu0 0.0
      %330 = vmatpush1.msra.mxu0 %v203
      %331 = vmatprep.subr.mxu0 0.0
      %332 = vmatpush1.msra.mxu0 %v204
      %333 = vmatprep.subr.mxu0 0.0
      %334 = vmatpush1.msra.mxu0 %v205
      %335 = vmatprep.subr.mxu0 0.0
      %336 = vmatpush1.msra.mxu0 %v206
      %337 = vmatprep.subr.mxu0 0.0
      %338 = vmatpush1.msra.mxu0 %v207
      %339 = vmatprep.subr.mxu0 0.0
      %340 = vmatpush1.msra.mxu0 %v208
      %341 = vmatprep.subr.mxu0 0.0
      %342 = vmatpush1.msra.mxu0 %v209
      %343 = vmatprep.subr.mxu0 0.0
      %344 = vmatpush1.msra.mxu0 %v210
      %345 = vmatprep.subr.mxu0 0.0
      %346 = vmatpush1.msra.mxu0 %v211
      %347 = vmatprep.subr.mxu0 0.0
      %348 = vmatpush1.msra.mxu0 %v212
      %349 = vmatprep.subr.mxu0 0.0
      %350 = vmatpush1.msra.mxu0 %v213
      %351 = vmatprep.subr.mxu0 0.0
      %352 = vmatpush1.msra.mxu0 %v214
      %353 = vmatprep.subr.mxu0 0.0
      %354 = vmatpush1.msra.mxu0 %v215
      %355 = vmatprep.subr.mxu0 0.0
      %356 = vmatpush1.msra.mxu0 %v216
      %357 = vmatprep.subr.mxu0 0.0
      %358 = vmatpush1.msra.mxu0 %v217
      %359 = vmatprep.subr.mxu0 0.0
      %360 = vmatpush1.msra.mxu0 %v218
      %361 = vmatprep.subr.mxu0 0.0
      %362 = vmatpush1.msra.mxu0 %v219
      %363 = vmatprep.subr.mxu0 0.0
      %364 = vmatpush1.msra.mxu0 %v220
      %365 = vmatprep.subr.mxu0 0.0
      %366 = vmatpush1.msra.mxu0 %v221
      %367 = vmatprep.subr.mxu0 0.0
      %368 = vmatpush1.msra.mxu0 %v222
      %369 = vmatprep.mubr.f32.mxu0 %v178
      %370 = vmatmul.mubr.f32.gmra.mrb[0].mxu0 %v177
      %v371 = vpop.f32.mrb[0].mxu0
      %v372 = vadd.f32 %v296, %v371
      %v373 = vpop.f32.mrb[0].mxu0
      %374 = vmatprep.mubr.f32.mxu0 %v185
      %375 = vmatmul.mubr.f32.gmra.mrb[0].mxu0 %v184
      %v376 = vpop.f32.mrb[0].mxu0
      %v377 = vadd.f32 %v296, %v376
      %v378 = vpop.f32.mrb[0].mxu0
      %379 = vdwg.mxu0
      %380 = vmatprep.subr.mxu0 0.0
      %381 = vmatpush1.msra.mxu0 %v223
      %382 = vmatprep.subr.mxu0 0.0
      %383 = vmatpush1.msra.mxu0 %v224
      %384 = vmatprep.subr.mxu0 0.0
      %385 = vmatpush1.msra.mxu0 %v225
      %386 = vmatprep.subr.mxu0 0.0
      %387 = vmatpush1.msra.mxu0 %v226
      %388 = vmatprep.subr.mxu0 0.0
      %389 = vmatpush1.msra.mxu0 %v227
      %390 = vmatprep.subr.mxu0 0.0
      %391 = vmatpush1.msra.mxu0 %v228
      %392 = vmatprep.subr.mxu0 0.0
      %393 = vmatpush1.msra.mxu0 %v229
      %394 = vmatprep.subr.mxu0 0.0
      %395 = vmatpush1.msra.mxu0 %v230
      %396 = vmatprep.subr.mxu0 0.0
      %397 = vmatpush1.msra.mxu0 %v231
      %398 = vmatprep.subr.mxu0 0.0
      %399 = vmatpush1.msra.mxu0 %v232
      %400 = vmatprep.subr.mxu0 0.0
      %401 = vmatpush1.msra.mxu0 %v233
      %402 = vmatprep.subr.mxu0 0.0
      %403 = vmatpush1.msra.mxu0 %v234
      %404 = vmatprep.subr.mxu0 0.0
      %405 = vmatpush1.msra.mxu0 %v235
      %406 = vmatprep.subr.mxu0 0.0
      %407 = vmatpush1.msra.mxu0 %v236
      %408 = vmatprep.subr.mxu0 0.0
      %409 = vmatpush1.msra.mxu0 %v237
      %410 = vmatprep.subr.mxu0 0.0
      %411 = vmatpush1.msra.mxu0 %v238
      %412 = vmatprep.subr.mxu0 0.0
      %413 = vmatpush1.msra.mxu0 %v239
      %414 = vmatprep.subr.mxu0 0.0
      %415 = vmatpush1.msra.mxu0 %v240
      %416 = vmatprep.subr.mxu0 0.0
      %417 = vmatpush1.msra.mxu0 %v241
      %418 = vmatprep.subr.mxu0 0.0
      %419 = vmatpush1.msra.mxu0 %v242
      %420 = vmatprep.subr.mxu0 0.0
      %421 = vmatpush1.msra.mxu0 %v243
      %422 = vmatprep.subr.mxu0 0.0
      %423 = vmatpush1.msra.mxu0 %v244
      %424 = vmatprep.subr.mxu0 0.0
      %425 = vmatpush1.msra.mxu0 %v245
      %426 = vmatprep.subr.mxu0 0.0
      %427 = vmatpush1.msra.mxu0 %v246
      %428 = vmatprep.subr.mxu0 0.0
      %429 = vmatpush1.msra.mxu0 %v247
      %430 = vmatprep.subr.mxu0 0.0
      %431 = vmatpush1.msra.mxu0 %v248
      %432 = vmatprep.subr.mxu0 0.0
      %433 = vmatpush1.msra.mxu0 %v249
      %434 = vmatprep.subr.mxu0 0.0
      %435 = vmatpush1.msra.mxu0 %v250
      %436 = vmatprep.subr.mxu0 0.0
      %437 = vmatpush1.msra.mxu0 %v251
      %438 = vmatprep.subr.mxu0 0.0
      %439 = vmatpush1.msra.mxu0 %v252
      %440 = vmatprep.subr.mxu0 0.0
      %441 = vmatpush1.msra.mxu0 %v253
      %442 = vmatprep.subr.mxu0 0.0
      %443 = vmatpush1.msra.mxu0 %v254
      %444 = vmatprep.mubr.f32.mxu0 %v180
      %445 = vmatmul.mubr.f32.gmra.mrb[0].mxu0 %v179
      %v446 = vpop.f32.mrb[0].mxu0
      %v447 = vadd.f32 %v372, %v446
      %v448 = vpop.f32.mrb[0].mxu0
      %449 = vmatprep.mubr.f32.mxu0 %v187
      %450 = vmatmul.mubr.f32.gmra.mrb[0].mxu0 %v186
      %v451 = vpop.f32.mrb[0].mxu0
      %v452 = vadd.f32 %v377, %v451
      %v453 = vpop.f32.mrb[0].mxu0
      %454 = vdwg.mxu0
      %455 = vmatprep.subr.mxu0 0.0
      %456 = vmatpush1.msra.mxu0 %v255
      %457 = vmatprep.subr.mxu0 0.0
      %458 = vmatpush1.msra.mxu0 %v256
      %459 = vmatprep.subr.mxu0 0.0
      %460 = vmatpush1.msra.mxu0 %v257
      %461 = vmatprep.subr.mxu0 0.0
      %462 = vmatpush1.msra.mxu0 %v258
      %463 = vmatprep.subr.mxu0 0.0
      %464 = vmatpush1.msra.mxu0 %v259
      %465 = vmatprep.subr.mxu0 0.0
      %466 = vmatpush1.msra.mxu0 %v260
      %467 = vmatprep.subr.mxu0 0.0
      %468 = vmatpush1.msra.mxu0 %v261
      %469 = vmatprep.subr.mxu0 0.0
      %470 = vmatpush1.msra.mxu0 %v262
      %471 = vmatprep.subr.mxu0 0.0
      %472 = vmatpush1.msra.mxu0 %v263
      %473 = vmatprep.subr.mxu0 0.0
      %474 = vmatpush1.msra.mxu0 %v264
      %475 = vmatprep.subr.mxu0 0.0
      %476 = vmatpush1.msra.mxu0 %v265
      %477 = vmatprep.subr.mxu0 0.0
      %478 = vmatpush1.msra.mxu0 %v266
      %479 = vmatprep.subr.mxu0 0.0
      %480 = vmatpush1.msra.mxu0 %v267
      %481 = vmatprep.subr.mxu0 0.0
      %482 = vmatpush1.msra.mxu0 %v268
      %483 = vmatprep.subr.mxu0 0.0
      %484 = vmatpush1.msra.mxu0 %v269
      %485 = vmatprep.subr.mxu0 0.0
      %486 = vmatpush1.msra.mxu0 %v270
      %487 = vmatprep.subr.mxu0 0.0
      %488 = vmatpush1.msra.mxu0 %v271
      %489 = vmatprep.subr.mxu0 0.0
      %490 = vmatpush1.msra.mxu0 %v272
      %491 = vmatprep.subr.mxu0 0.0
      %492 = vmatpush1.msra.mxu0 %v273
      %493 = vmatprep.subr.mxu0 0.0
      %494 = vmatpush1.msra.mxu0 %v274
      %495 = vmatprep.subr.mxu0 0.0
      %496 = vmatpush1.msra.mxu0 %v275
      %497 = vmatprep.subr.mxu0 0.0
      %498 = vmatpush1.msra.mxu0 %v276
      %499 = vmatprep.subr.mxu0 0.0
      %500 = vmatpush1.msra.mxu0 %v277
      %501 = vmatprep.subr.mxu0 0.0
      %502 = vmatpush1.msra.mxu0 %v278
      %503 = vmatprep.subr.mxu0 0.0
      %504 = vmatpush1.msra.mxu0 %v279
      %505 = vmatprep.subr.mxu0 0.0
      %506 = vmatpush1.msra.mxu0 %v280
      %507 = vmatprep.subr.mxu0 0.0
      %508 = vmatpush1.msra.mxu0 %v281
      %509 = vmatprep.subr.mxu0 0.0
      %510 = vmatpush1.msra.mxu0 %v282
      %511 = vmatprep.subr.mxu0 0.0
      %512 = vmatpush1.msra.mxu0 %v283
      %513 = vmatprep.subr.mxu0 0.0
      %514 = vmatpush1.msra.mxu0 %v284
      %515 = vmatprep.subr.mxu0 0.0
      %516 = vmatpush1.msra.mxu0 %v285
      %517 = vmatprep.subr.mxu0 0.0
      %518 = vmatpush1.msra.mxu0 %v286
      %519 = vmatprep.mubr.f32.mxu0 %v182
      %520 = vmatmul.mubr.f32.gmra.mrb[0].mxu0 %v181
      %v521 = vpop.f32.mrb[0].mxu0
      %v522 = vadd.f32 %v447, %v521
      %v523 = vpop.f32.mrb[0].mxu0
      %524 = vmatprep.mubr.f32.mxu0 %v189
      %525 = vmatmul.mubr.f32.gmra.mrb[0].mxu0 %v188
      %v526 = vpop.f32.mrb[0].mxu0
      %v527 = vadd.f32 %v452, %v526
      %v528 = vpop.f32.mrb[0].mxu0
      %529 = vdwg.mxu0
      %530 = vmatprep.subr.mxu0 0.0
      %531 = vmatpush1.msra.mxu0 %v287
      %532 = vmatprep.subr.mxu0 0.0
      %533 = vmatpush1.msra.mxu0 %v288
      %534 = vmatprep.subr.mxu0 0.0
      %535 = vmatpush1.msra.mxu0 %v289
      %536 = vmatprep.subr.mxu0 0.0
      %537 = vmatpush1.msra.mxu0 %v290
      %538 = vmatprep.subr.mxu0 0.0
      %539 = vmatpush1.msra.mxu0 0.0
      %540 = vmatprep.subr.mxu0 0.0
      %541 = vmatpush1.msra.mxu0 0.0
      %542 = vmatprep.subr.mxu0 0.0
      %543 = vmatpush1.msra.mxu0 0.0
      %544 = vmatprep.subr.mxu0 0.0
      %545 = vmatpush1.msra.mxu0 0.0
      %546 = vmatprep.subr.mxu0 0.0
      %547 = vmatpush1.msra.mxu0 0.0
      %548 = vmatprep.subr.mxu0 0.0
      %549 = vmatpush1.msra.mxu0 0.0
      %550 = vmatprep.subr.mxu0 0.0
      %551 = vmatpush1.msra.mxu0 0.0
      %552 = vmatprep.subr.mxu0 0.0
      %553 = vmatpush1.msra.mxu0 0.0
      %554 = vmatprep.subr.mxu0 0.0
      %555 = vmatpush1.msra.mxu0 0.0
      %556 = vmatprep.subr.mxu0 0.0
      %557 = vmatpush1.msra.mxu0 0.0
      %558 = vmatprep.subr.mxu0 0.0
      %559 = vmatpush1.msra.mxu0 0.0
      %560 = vmatprep.subr.mxu0 0.0
      %561 = vmatpush1.msra.mxu0 0.0
      %562 = vmatprep.subr.mxu0 0.0
      %563 = vmatpush1.msra.mxu0 0.0
      %564 = vmatprep.subr.mxu0 0.0
      %565 = vmatpush1.msra.mxu0 0.0
      %566 = vmatprep.subr.mxu0 0.0
      %567 = vmatpush1.msra.mxu0 0.0
      %568 = vmatprep.subr.mxu0 0.0
      %569 = vmatpush1.msra.mxu0 0.0
      %570 = vmatprep.subr.mxu0 0.0
      %571 = vmatpush1.msra.mxu0 0.0
      %572 = vmatprep.subr.mxu0 0.0
      %573 = vmatpush1.msra.mxu0 0.0
      %574 = vmatprep.subr.mxu0 0.0
      %575 = vmatpush1.msra.mxu0 0.0
      %576 = vmatprep.subr.mxu0 0.0
      %577 = vmatpush1.msra.mxu0 0.0
      %578 = vmatprep.subr.mxu0 0.0
      %579 = vmatpush1.msra.mxu0 0.0
      %580 = vmatprep.subr.mxu0 0.0
      %581 = vmatpush1.msra.mxu0 0.0
      %582 = vmatprep.subr.mxu0 0.0
      %583 = vmatpush1.msra.mxu0 0.0
      %584 = vmatprep.subr.mxu0 0.0
      %585 = vmatpush1.msra.mxu0 0.0
      %586 = vmatprep.subr.mxu0 0.0
      %587 = vmatpush1.msra.mxu0 0.0
      %588 = vmatprep.subr.mxu0 0.0
      %589 = vmatpush1.msra.mxu0 0.0
      %590 = vmatprep.subr.mxu0 0.0
      %591 = vmatpush1.msra.mxu0 0.0
      %592 = vmatprep.subr.mxu0 0.0
      %593 = vmatpush1.msra.mxu0 0.0
      %594 = vmatprep.mubr.f32.mxu0 0.0
      %595 = vmatmul.mubr.f32.gmra.mrb[0].mxu0 %v300
      %v596 = vpop.f32.mrb[0].mxu0
      %v597 = vadd.f32 %v522, %v596
      %v598 = vpop.f32.mrb[0].mxu0
      %599 = vmatprep.mubr.f32.mxu0 0.0
      %600 = vmatmul.mubr.f32.gmra.mrb[0].mxu0 %v303
      %v601 = vpop.f32.mrb[0].mxu0
      %v602 = vadd.f32 %v527, %v601
      %v603 = vpop.f32.mrb[0].mxu0
      %604 = vdwg.mxu0
      %v605 = vmax.f32 %v597, 0.0
      %v606 = vmax.f32 %v602, 0.0
      %vm607 = vcmask 523264
      %608 = vst.msk [vmem:[%s175] sm:$0xff] %vm607, %v605
      %609 = vst.msk [vmem:[%s175 + $0x8] sm:$0xff] %vm607, %v606
      %s610 = smul.u32 2, %s14
      %p611 = scmp.lt.s32.totalorder %s610, 3
      %s612 = scalar_select %p611, %s610, 3
      %s613 = smul.addr %s612, 8
      %s614 = scalar_lea.vmem %s3, %s613
      // Predicated region
      $region33: #{_lambda_.24} parent=31 // pred_check
        %p615 = pneg %p100
      $region34: #{_lambda_.24} parent=31 // pred_check_branch
        %617 = sbr.rel (%p615) target = $region36
      $region35: #{_lambda_.24} parent=31 // pred_region
        %s618 = smul.u32 2, %s14
      $region36: #{_lambda_.24} parent=31 // pred_fallthru
        _
    $region32: #{_lambda_.24} parent=5 // pred_fallthru
      _
    %p619 = scmp.le.s32.totalorder 2, %s9
    // Predicated region
    $region37: #{_lambda_.24} parent=5 // pred_check
      %p620 = pneg %p619
    $region38: #{_lambda_.24} parent=5 // pred_check_branch
      %622 = sbr.rel (%p620) target = $region40
    $region39: #{_lambda_.24} parent=5 // pred_region
      %s623 = ssub.s32 %s9, 2
      // Predicated region
      $region41: #{_lambda_.24} parent=39 // pred_check
        %p624 = pneg %p106
      $region42: #{_lambda_.24} parent=39 // pred_check_branch
        %626 = sbr.rel (%p624) target = $region44
      $region43: #{_lambda_.24} parent=39 // pred_region
        %s627 = smul.u32 2, %s15
        %p628 = scmp.lt.s32.totalorder %s627, 3
        %s629 = scalar_select %p628, %s627, 3
        %s630 = smul.addr %s629, 8
        %s631 = scalar_lea.vmem %s3, %s630
      $region44: #{_lambda_.24} parent=39 // pred_fallthru
        _
    $region40: #{_lambda_.24} parent=5 // pred_fallthru
      _
  $region6: #{_lambda_.24} parent=0 // loop_footer
    %s13 = sadd.s32 1, %s9
  $region7: #{_lambda_.24} parent=0 // loop_footer_branch
    %8 = sbr.rel target = $region3
  $region8: #{_lambda_.24} parent=0 // loop_exit
    _

// kernel: _lambda_.25
$region0: #{_lambda_.25}
  #allocation0 [shape = 'u32[]', space=smem, size = 0x4, offset = 0x4, fixed_abs, tag = 'smem constant byte address 0x4 - core index']
  #allocation1 [shape = 'u32[144,128]{1,0:T(1,128)}', space=vmem, size = 0x12000, scoped, tag = 'internal scratch']
  %s0 = inlined_call_operand.vmem [shape: f32[32,576], index: 0, kind: input, shape index: {}]
  %s1 = inlined_call_operand.vmem [shape: f32[576,64], index: 1, kind: input, shape index: {}]
  %s2 = inlined_call_operand.vmem [shape: f32[1,64], index: 2, kind: input, shape index: {}]
  %s3 = inlined_call_operand.vmem [shape: f32[32,64], index: 3, kind: output, shape index: {}]
  %s4 = sld [smem:[#allocation0]]
  $region45: #{_lambda_.25} parent=0
    _
  %s6 = ssub.s32 1, %s4
  %s7 = scalar_select 0, %s6, %s4
  loop: start=0, step=1, limit=4
  $region2: #{_lambda_.25} parent=0 // loop_pre_header
    _
  $region3: #{_lambda_.25} parent=0 // loop_header
    %s9 = sphi 0, %s13
    %p10 = scmp.ge.s32.totalorder %s9, 4
    %s19 = sphi 0, %s21
    %s22 = sphi 0, %s19
    %s23 = sphi 0, %s22
    %s39 = sphi 0, %s23
    %s43 = sphi 0, %s43
    %s45 = sphi 0, %s43
    %s46 = sphi 0, %s45
    %s60 = sphi 0, %s46
    %s64 = sphi 0, %s64
    %s66 = sphi 0, %s64
    %s67 = sphi 0, %s66
    %s81 = sphi 0, %s67
    %s87 = sphi 0, %s89
    %s90 = sphi 0, %s87
    %s91 = sphi 0, %s90
    %s107 = sphi 0, %s91
  $region4: #{_lambda_.25} parent=0 // loop_header_branch
    %12 = sbr.rel (%p10) target = $region8
  $region5: #{_lambda_.25} parent=0 // loop_body
    %s14 = ssub.s32 %s9, 1
    %s15 = ssub.s32 %s9, 2
    %s16 = sadd.s32 %s9, 1
    %s17 = ssub.s32 %s9, %s16
    %p18 = scmp.eq.s32.totalorder %s17, 0
    %s20 = sadd.s32 %s19, 1
    %s21 = scalar_select %p18, %s19, %s20
    %p24 = pneg %p18
    %p25 = scmp.eq.s32.totalorder %s9, 1
    %p26 = por %p24, %p25
    %p27 = scmp.ne.s32.totalorder %s19, %s22
    %p28 = scmp.eq.s32.totalorder %s9, 0
    %p29 = por %p27, %p28
    %p30 = scmp.ne.s32.totalorder %s19, %s22
    %p31 = scmp.eq.s32.totalorder %s14, 1
    %p32 = por %p30, %p31
    %p33 = scmp.ne.s32.totalorder %s22, %s23
    %p34 = scmp.eq.s32.totalorder %s14, 0
    %p35 = por %p33, %p34
    %p36 = scmp.ne.s32.totalorder %s22, %s23
    %p37 = scmp.eq.s32.totalorder %s15, 1
    %p38 = por %p36, %p37
    %p40 = scmp.ne.s32.totalorder %s23, %s39
    %p41 = scmp.eq.s32.totalorder %s15, 0
    %p42 = por %p40, %p41
    %s44 = sadd.s32 %s43, 1
    %p47 = scmp.eq.s32.totalorder %s9, 1
    %p48 = scmp.ne.s32.totalorder %s43, %s45
    %p49 = scmp.eq.s32.totalorder %s9, 0
    %p50 = por %p48, %p49
    %p51 = scmp.ne.s32.totalorder %s43, %s45
    %p52 = scmp.eq.s32.totalorder %s14, 1
    %p53 = por %p51, %p52
    %p54 = scmp.ne.s32.totalorder %s45, %s46
    %p55 = scmp.eq.s32.totalorder %s14, 0
    %p56 = por %p54, %p55
    %p57 = scmp.ne.s32.totalorder %s45, %s46
    %p58 = scmp.eq.s32.totalorder %s15, 1
    %p59 = por %p57, %p58
    %p61 = scmp.ne.s32.totalorder %s46, %s60
    %p62 = scmp.eq.s32.totalorder %s15, 0
    %p63 = por %p61, %p62
    %s65 = sadd.s32 %s64, 1
    %p68 = scmp.eq.s32.totalorder %s9, 1
    %p69 = scmp.ne.s32.totalorder %s64, %s66
    %p70 = scmp.eq.s32.totalorder %s9, 0
    %p71 = por %p69, %p70
    %p72 = scmp.ne.s32.totalorder %s64, %s66
    %p73 = scmp.eq.s32.totalorder %s14, 1
    %p74 = por %p72, %p73
    %p75 = scmp.ne.s32.totalorder %s66, %s67
    %p76 = scmp.eq.s32.totalorder %s14, 0
    %p77 = por %p75, %p76
    %p78 = scmp.ne.s32.totalorder %s66, %s67
    %p79 = scmp.eq.s32.totalorder %s15, 1
    %p80 = por %p78, %p79
    %p82 = scmp.ne.s32.totalorder %s67, %s81
    %p83 = scmp.eq.s32.totalorder %s15, 0
    %p84 = por %p82, %p83
    %s85 = ssub.s32 %s9, %s16
    %p86 = scmp.eq.s32.totalorder %s85, 0
    %s88 = sadd.s32 %s87, 1
    %s89 = scalar_select %p86, %s87, %s88
    %p92 = pneg %p86
    %p93 = scmp.eq.s32.totalorder %s9, 1
    %p94 = por %p92, %p93
    %p95 = scmp.ne.s32.totalorder %s87, %s90
    %p96 = scmp.eq.s32.totalorder %s9, 0
    %p97 = por %p95, %p96
    %p98 = scmp.ne.s32.totalorder %s87, %s90
    %p99 = scmp.eq.s32.totalorder %s14, 1
    %p100 = por %p98, %p99
    %p101 = scmp.ne.s32.totalorder %s90, %s91
    %p102 = scmp.eq.s32.totalorder %s14, 0
    %p103 = por %p101, %p102
    %p104 = scmp.ne.s32.totalorder %s90, %s91
    %p105 = scmp.eq.s32.totalorder %s15, 1
    %p106 = por %p104, %p105
    %p108 = scmp.ne.s32.totalorder %s91, %s107
    %p109 = scmp.eq.s32.totalorder %s15, 0
    %p110 = por %p108, %p109
    %p111 = scmp.le.s32.totalorder 1, %s9
    %p112 = scmp.lt.s32.totalorder %s9, 3
    %p113 = pnand %p111, %p112
    %p114 = pneg %p113
    // Predicated region
    $region9: #{_lambda_.25} parent=5 // pred_check
      _
    $region10: #{_lambda_.25} parent=5 // pred_check_branch
      %116 = sbr.rel (%p113) target = $region12
    $region11: #{_lambda_.25} parent=5 // pred_region
      %s117 = ssub.s32 %s9, 1
      // Predicated region
      $region13: #{_lambda_.25} parent=11 // pred_check
        %p118 = pneg %p56
      $region14: #{_lambda_.25} parent=11 // pred_check_branch
        %120 = sbr.rel (%p118) target = $region16
      $region15: #{_lambda_.25} parent=11 // pred_region
        _
      $region16: #{_lambda_.25} parent=11 // pred_fallthru
        _
      // Predicated region
      $region17: #{_lambda_.25} parent=11 // pred_check
        %p121 = pneg %p77
      $region18: #{_lambda_.25} parent=11 // pred_check_branch
        %123 = sbr.rel (%p121) target = $region20
      $region19: #{_lambda_.25} parent=11 // pred_region
        _
      $region20: #{_lambda_.25} parent=11 // pred_fallthru
        _
    $region12: #{_lambda_.25} parent=5 // pred_fallthru
      _
    %p124 = scmp.lt.s32.totalorder %s9, 2
    // Predicated region
    $region21: #{_lambda_.25} parent=5 // pred_check
      %p125 = pneg %p124
    $region22: #{_lambda_.25} parent=5 // pred_check_branch
      %127 = sbr.rel (%p125) target = $region24
    $region23: #{_lambda_.25} parent=5 // pred_region
      // Predicated region
      $region25: #{_lambda_.25} parent=23 // pred_check
        %p128 = pneg %p29
      $region26: #{_lambda_.25} parent=23 // pred_check_branch
        %130 = sbr.rel (%p128) target = $region28
      $region27: #{_lambda_.25} parent=23 // pred_region
        %s131 = smul.u32 2, %s9
        %p132 = scmp.lt.s32.totalorder %s131, 3
        %s133 = scalar_select %p132, %s131, 3
        %s134 = smul.addr %s133, 5
        %s135 = smul.addr %s134, 8
        %s136 = scalar_lea.vmem %s0, %s135
        %s137 = smul.u32 2, %s9
      $region28: #{_lambda_.25} parent=23 // pred_fallthru
        _
    $region24: #{_lambda_.25} parent=5 // pred_fallthru
      _
    %p138 = scmp.le.s32.totalorder 1, %s9
    %p139 = scmp.lt.s32.totalorder %s9, 3
    %p140 = pnand %p138, %p139
    %p141 = pneg %p140
    // Predicated region
    $region29: #{_lambda_.25} parent=5 // pred_check
      _
    $region30: #{_lambda_.25} parent=5 // pred_check_branch
      %143 = sbr.rel (%p140) target = $region32
    $region31: #{_lambda_.25} parent=5 // pred_region
      %s144 = ssub.s32 %s9, 1
      %s145 = smul.u32 2, %s14
      %p146 = scmp.lt.s32.totalorder %s145, 3
      %s147 = scalar_select %p146, %s145, 3
      %s148 = smul.addr %s147, 5
      %s149 = smul.addr %s148, 8
      %s150 = scalar_lea.vmem %s0, %s149
      %p151 = pneg %p35
      %p152 = pneg %p32
      %p153 = pneg %p56
      %p154 = pneg %p53
      %p155 = pneg %p77
      %p156 = pneg %p74
      %p157 = pneg %p103
      %p158 = pneg %p100
      %s159 = smul.u32 2, %s14
      %p160 = scmp.lt.s32.totalorder %s159, 3
      %s161 = scalar_select %p160, %s159, 3
      %s162 = smul.addr %s161, 8
      %s163 = scalar_lea.vmem %s3, %s162
      %s164 = smul.u32 2, %s14
      %p165 = scmp.lt.s32.totalorder %s164, 3
      %s166 = scalar_select %p165, %s164, 3
      %s167 = smul.addr %s166, 5
      %s168 = smul.addr %s167, 8
      %s169 = scalar_lea.vmem %s0, %s168
      %s170 = smul.u32 2, %s14
      %s171 = smul.u32 2, %s14
      %p172 = scmp.lt.s32.totalorder %s171, 3
      %s173 = scalar_select %p172, %s171, 3
      %s174 = smul.addr %s173, 8
      %s175 = scalar_lea.vmem %s3, %s174
      %s176 = smul.u32 2, %s14
      %v177 = vld [vmem:[%s169] sm:$0xff]
      %v178 = vld [vmem:[%s169 + $0x8] sm:$0xff]
      %v179 = vld [vmem:[%s169 + $0x10] sm:$0xff]
      %v180 = vld [vmem:[%s169 + $0x18] sm:$0xff]
      %v181 = vld [vmem:[%s169 + $0x20] sm:$0xff]
      %v182 = vld [vmem:[%s169 + $0x28] sm:$0xff]
      %v183 = vld [vmem:[%s169 + $0x30] sm:$0xff]
      %v184 = vld [vmem:[%s169 + $0x38] sm:$0xff]
      %v185 = vld [vmem:[%s169 + $0x40] sm:$0xff]
      %v186 = vld [vmem:[%s169 + $0x48] sm:$0xff]
      %v187 = vld [vmem:[%s1] sm:$0xff]
      %v188 = vld [vmem:[%s1 + $0x8] sm:$0xff]
      %v189 = vld [vmem:[%s1 + $0x10] sm:$0xff]
      %v190 = vld [vmem:[%s1 + $0x18] sm:$0xff]
      %v191 = vld [vmem:[%s1 + $0x20] sm:$0xff]
      %v192 = vld [vmem:[%s1 + $0x28] sm:$0xff]
      %v193 = vld [vmem:[%s1 + $0x30] sm:$0xff]
      %v194 = vld [vmem:[%s1 + $0x38] sm:$0xff]
      %v195 = vld [vmem:[%s1 + $0x40] sm:$0xff]
      %v196 = vld [vmem:[%s1 + $0x48] sm:$0xff]
      %v197 = vld [vmem:[%s1 + $0x50] sm:$0xff]
      %v198 = vld [vmem:[%s1 + $0x58] sm:$0xff]
      %v199 = vld [vmem:[%s1 + $0x60] sm:$0xff]
      %v200 = vld [vmem:[%s1 + $0x68] sm:$0xff]
      %v201 = vld [vmem:[%s1 + $0x70] sm:$0xff]
      %v202 = vld [vmem:[%s1 + $0x78] sm:$0xff]
      %v203 = vld [vmem:[%s1 + $0x80] sm:$0xff]
      %v204 = vld [vmem:[%s1 + $0x88] sm:$0xff]
      %v205 = vld [vmem:[%s1 + $0x90] sm:$0xff]
      %v206 = vld [vmem:[%s1 + $0x98] sm:$0xff]
      %v207 = vld [vmem:[%s1 + $0xa0] sm:$0xff]
      %v208 = vld [vmem:[%s1 + $0xa8] sm:$0xff]
      %v209 = vld [vmem:[%s1 + $0xb0] sm:$0xff]
      %v210 = vld [vmem:[%s1 + $0xb8] sm:$0xff]
      %v211 = vld [vmem:[%s1 + $0xc0] sm:$0xff]
      %v212 = vld [vmem:[%s1 + $0xc8] sm:$0xff]
      %v213 = vld [vmem:[%s1 + $0xd0] sm:$0xff]
      %v214 = vld [vmem:[%s1 + $0xd8] sm:$0xff]
      %v215 = vld [vmem:[%s1 + $0xe0] sm:$0xff]
      %v216 = vld [vmem:[%s1 + $0xe8] sm:$0xff]
      %v217 = vld [vmem:[%s1 + $0xf0] sm:$0xff]
      %v218 = vld [vmem:[%s1 + $0xf8] sm:$0xff]
      %v219 = vld [vmem:[%s1 + $0x100] sm:$0xff]
      %v220 = vld [vmem:[%s1 + $0x108] sm:$0xff]
      %v221 = vld [vmem:[%s1 + $0x110] sm:$0xff]
      %v222 = vld [vmem:[%s1 + $0x118] sm:$0xff]
      %v223 = vld [vmem:[%s1 + $0x120] sm:$0xff]
      %v224 = vld [vmem:[%s1 + $0x128] sm:$0xff]
      %v225 = vld [vmem:[%s1 + $0x130] sm:$0xff]
      %v226 = vld [vmem:[%s1 + $0x138] sm:$0xff]
      %v227 = vld [vmem:[%s1 + $0x140] sm:$0xff]
      %v228 = vld [vmem:[%s1 + $0x148] sm:$0xff]
      %v229 = vld [vmem:[%s1 + $0x150] sm:$0xff]
      %v230 = vld [vmem:[%s1 + $0x158] sm:$0xff]
      %v231 = vld [vmem:[%s1 + $0x160] sm:$0xff]
      %v232 = vld [vmem:[%s1 + $0x168] sm:$0xff]
      %v233 = vld [vmem:[%s1 + $0x170] sm:$0xff]
      %v234 = vld [vmem:[%s1 + $0x178] sm:$0xff]
      %v235 = vld [vmem:[%s1 + $0x180] sm:$0xff]
      %v236 = vld [vmem:[%s1 + $0x188] sm:$0xff]
      %v237 = vld [vmem:[%s1 + $0x190] sm:$0xff]
      %v238 = vld [vmem:[%s1 + $0x198] sm:$0xff]
      %v239 = vld [vmem:[%s1 + $0x1a0] sm:$0xff]
      %v240 = vld [vmem:[%s1 + $0x1a8] sm:$0xff]
      %v241 = vld [vmem:[%s1 + $0x1b0] sm:$0xff]
      %v242 = vld [vmem:[%s1 + $0x1b8] sm:$0xff]
      %v243 = vld [vmem:[%s1 + $0x1c0] sm:$0xff]
      %v244 = vld [vmem:[%s1 + $0x1c8] sm:$0xff]
      %v245 = vld [vmem:[%s1 + $0x1d0] sm:$0xff]
      %v246 = vld [vmem:[%s1 + $0x1d8] sm:$0xff]
      %v247 = vld [vmem:[%s1 + $0x1e0] sm:$0xff]
      %v248 = vld [vmem:[%s1 + $0x1e8] sm:$0xff]
      %v249 = vld [vmem:[%s1 + $0x1f0] sm:$0xff]
      %v250 = vld [vmem:[%s1 + $0x1f8] sm:$0xff]
      %v251 = vld [vmem:[%s1 + $0x200] sm:$0xff]
      %v252 = vld [vmem:[%s1 + $0x208] sm:$0xff]
      %v253 = vld [vmem:[%s1 + $0x210] sm:$0xff]
      %v254 = vld [vmem:[%s1 + $0x218] sm:$0xff]
      %v255 = vld [vmem:[%s1 + $0x220] sm:$0xff]
      %v256 = vld [vmem:[%s1 + $0x228] sm:$0xff]
      %v257 = vld [vmem:[%s1 + $0x230] sm:$0xff]
      %v258 = vld [vmem:[%s1 + $0x238] sm:$0xff]
      %v259 = vld [vmem:[%s2] sm:$0x1]
      %v261 = vlaneseq
      %v262 = vshrl.u32 %v261, 7
      %v263 = vsub.s32 0, %v262
      %v264 = vrot.slane %v259, %v263
      %vm266 = vcmask 523264
      %v268 = vsel %vm266, %v181, 0
      %v271 = vsel %vm266, %v186, 0
      %273 = vmatprep.subr.mxu0 0.0
      %274 = vmatpush1.msra.mxu0 %v187
      %275 = vmatprep.subr.mxu0 0.0
      %276 = vmatpush1.msra.mxu0 %v188
      %277 = vmatprep.subr.mxu0 0.0
      %278 = vmatpush1.msra.mxu0 %v189
      %279 = vmatprep.subr.mxu0 0.0
      %280 = vmatpush1.msra.mxu0 %v190
      %281 = vmatprep.subr.mxu0 0.0
      %282 = vmatpush1.msra.mxu0 %v191
      %283 = vmatprep.subr.mxu0 0.0
      %284 = vmatpush1.msra.mxu0 %v192
      %285 = vmatprep.subr.mxu0 0.0
      %286 = vmatpush1.msra.mxu0 %v193
      %287 = vmatprep.subr.mxu0 0.0
      %288 = vmatpush1.msra.mxu0 %v194
      %289 = vmatprep.subr.mxu0 0.0
      %290 = vmatpush1.msra.mxu0 %v195
      %291 = vmatprep.subr.mxu0 0.0
      %292 = vmatpush1.msra.mxu0 %v196
      %293 = vmatprep.subr.mxu0 0.0
      %294 = vmatpush1.msra.mxu0 %v197
      %295 = vmatprep.subr.mxu0 0.0
      %296 = vmatpush1.msra.mxu0 %v198
      %297 = vmatprep.subr.mxu0 0.0
      %298 = vmatpush1.msra.mxu0 %v199
      %299 = vmatprep.subr.mxu0 0.0
      %300 = vmatpush1.msra.mxu0 %v200
      %301 = vmatprep.subr.mxu0 0.0
      %302 = vmatpush1.msra.mxu0 %v201
      %303 = vmatprep.subr.mxu0 0.0
      %304 = vmatpush1.msra.mxu0 %v202
      %305 = vmatprep.subr.mxu0 0.0
      %306 = vmatpush1.msra.mxu0 %v203
      %307 = vmatprep.subr.mxu0 0.0
      %308 = vmatpush1.msra.mxu0 %v204
      %309 = vmatprep.subr.mxu0 0.0
      %310 = vmatpush1.msra.mxu0 %v205
      %311 = vmatprep.subr.mxu0 0.0
      %312 = vmatpush1.msra.mxu0 %v206
      %313 = vmatprep.subr.mxu0 0.0
      %314 = vmatpush1.msra.mxu0 %v207
      %315 = vmatprep.subr.mxu0 0.0
      %316 = vmatpush1.msra.mxu0 %v208
      %317 = vmatprep.subr.mxu0 0.0
      %318 = vmatpush1.msra.mxu0 %v209
      %319 = vmatprep.subr.mxu0 0.0
      %320 = vmatpush1.msra.mxu0 %v210
      %321 = vmatprep.subr.mxu0 0.0
      %322 = vmatpush1.msra.mxu0 %v211
      %323 = vmatprep.subr.mxu0 0.0
      %324 = vmatpush1.msra.mxu0 %v212
      %325 = vmatprep.subr.mxu0 0.0
      %326 = vmatpush1.msra.mxu0 %v213
      %327 = vmatprep.subr.mxu0 0.0
      %328 = vmatpush1.msra.mxu0 %v214
      %329 = vmatprep.subr.mxu0 0.0
      %330 = vmatpush1.msra.mxu0 %v215
      %331 = vmatprep.subr.mxu0 0.0
      %332 = vmatpush1.msra.mxu0 %v216
      %333 = vmatprep.subr.mxu0 0.0
      %334 = vmatpush1.msra.mxu0 %v217
      %335 = vmatprep.subr.mxu0 0.0
      %336 = vmatpush1.msra.mxu0 %v218
      %337 = vmatprep.mubr.f32.mxu0 %v178
      %338 = vmatmul.mubr.f32.gmra.mrb[0].mxu0 %v177
      %v339 = vpop.f32.mrb[0].mxu0
      %v340 = vadd.f32 %v264, %v339
      %v341 = vpop.f32.mrb[0].mxu0
      %342 = vmatprep.mubr.f32.mxu0 %v183
      %343 = vmatmul.mubr.f32.gmra.mrb[0].mxu0 %v182
      %v344 = vpop.f32.mrb[0].mxu0
      %v345 = vadd.f32 %v264, %v344
      %v346 = vpop.f32.mrb[0].mxu0
      %347 = vdwg.mxu0
      %348 = vmatprep.subr.mxu0 0.0
      %349 = vmatpush1.msra.mxu0 %v219
      %350 = vmatprep.subr.mxu0 0.0
      %351 = vmatpush1.msra.mxu0 %v220
      %352 = vmatprep.subr.mxu0 0.0
      %353 = vmatpush1.msra.mxu0 %v221
      %354 = vmatprep.subr.mxu0 0.0
      %355 = vmatpush1.msra.mxu0 %v222
      %356 = vmatprep.subr.mxu0 0.0
      %357 = vmatpush1.msra.mxu0 %v223
      %358 = vmatprep.subr.mxu0 0.0
      %359 = vmatpush1.msra.mxu0 %v224
      %360 = vmatprep.subr.mxu0 0.0
      %361 = vmatpush1.msra.mxu0 %v225
      %362 = vmatprep.subr.mxu0 0.0
      %363 = vmatpush1.msra.mxu0 %v226
      %364 = vmatprep.subr.mxu0 0.0
      %365 = vmatpush1.msra.mxu0 %v227
      %366 = vmatprep.subr.mxu0 0.0
      %367 = vmatpush1.msra.mxu0 %v228
      %368 = vmatprep.subr.mxu0 0.0
      %369 = vmatpush1.msra.mxu0 %v229
      %370 = vmatprep.subr.mxu0 0.0
      %371 = vmatpush1.msra.mxu0 %v230
      %372 = vmatprep.subr.mxu0 0.0
      %373 = vmatpush1.msra.mxu0 %v231
      %374 = vmatprep.subr.mxu0 0.0
      %375 = vmatpush1.msra.mxu0 %v232
      %376 = vmatprep.subr.mxu0 0.0
      %377 = vmatpush1.msra.mxu0 %v233
      %378 = vmatprep.subr.mxu0 0.0
      %379 = vmatpush1.msra.mxu0 %v234
      %380 = vmatprep.subr.mxu0 0.0
      %381 = vmatpush1.msra.mxu0 %v235
      %382 = vmatprep.subr.mxu0 0.0
      %383 = vmatpush1.msra.mxu0 %v236
      %384 = vmatprep.subr.mxu0 0.0
      %385 = vmatpush1.msra.mxu0 %v237
      %386 = vmatprep.subr.mxu0 0.0
      %387 = vmatpush1.msra.mxu0 %v238
      %388 = vmatprep.subr.mxu0 0.0
      %389 = vmatpush1.msra.mxu0 %v239
      %390 = vmatprep.subr.mxu0 0.0
      %391 = vmatpush1.msra.mxu0 %v240
      %392 = vmatprep.subr.mxu0 0.0
      %393 = vmatpush1.msra.mxu0 %v241
      %394 = vmatprep.subr.mxu0 0.0
      %395 = vmatpush1.msra.mxu0 %v242
      %396 = vmatprep.subr.mxu0 0.0
      %397 = vmatpush1.msra.mxu0 %v243
      %398 = vmatprep.subr.mxu0 0.0
      %399 = vmatpush1.msra.mxu0 %v244
      %400 = vmatprep.subr.mxu0 0.0
      %401 = vmatpush1.msra.mxu0 %v245
      %402 = vmatprep.subr.mxu0 0.0
      %403 = vmatpush1.msra.mxu0 %v246
      %404 = vmatprep.subr.mxu0 0.0
      %405 = vmatpush1.msra.mxu0 %v247
      %406 = vmatprep.subr.mxu0 0.0
      %407 = vmatpush1.msra.mxu0 %v248
      %408 = vmatprep.subr.mxu0 0.0
      %409 = vmatpush1.msra.mxu0 %v249
      %410 = vmatprep.subr.mxu0 0.0
      %411 = vmatpush1.msra.mxu0 %v250
      %412 = vmatprep.mubr.f32.mxu0 %v180
      %413 = vmatmul.mubr.f32.gmra.mrb[0].mxu0 %v179
      %v414 = vpop.f32.mrb[0].mxu0
      %v415 = vadd.f32 %v340, %v414
      %v416 = vpop.f32.mrb[0].mxu0
      %417 = vmatprep.mubr.f32.mxu0 %v185
      %418 = vmatmul.mubr.f32.gmra.mrb[0].mxu0 %v184
      %v419 = vpop.f32.mrb[0].mxu0
      %v420 = vadd.f32 %v345, %v419
      %v421 = vpop.f32.mrb[0].mxu0
      %422 = vdwg.mxu0
      %423 = vmatprep.subr.mxu0 0.0
      %424 = vmatpush1.msra.mxu0 %v251
      %425 = vmatprep.subr.mxu0 0.0
      %426 = vmatpush1.msra.mxu0 %v252
      %427 = vmatprep.subr.mxu0 0.0
      %428 = vmatpush1.msra.mxu0 %v253
      %429 = vmatprep.subr.mxu0 0.0
      %430 = vmatpush1.msra.mxu0 %v254
      %431 = vmatprep.subr.mxu0 0.0
      %432 = vmatpush1.msra.mxu0 %v255
      %433 = vmatprep.subr.mxu0 0.0
      %434 = vmatpush1.msra.mxu0 %v256
      %435 = vmatprep.subr.mxu0 0.0
      %436 = vmatpush1.msra.mxu0 %v257
      %437 = vmatprep.subr.mxu0 0.0
      %438 = vmatpush1.msra.mxu0 %v258
      %439 = vmatprep.subr.mxu0 0.0
      %440 = vmatpush1.msra.mxu0 0.0
      %441 = vmatprep.subr.mxu0 0.0
      %442 = vmatpush1.msra.mxu0 0.0
      %443 = vmatprep.subr.mxu0 0.0
      %444 = vmatpush1.msra.mxu0 0.0
      %445 = vmatprep.subr.mxu0 0.0
      %446 = vmatpush1.msra.mxu0 0.0
      %447 = vmatprep.subr.mxu0 0.0
      %448 = vmatpush1.msra.mxu0 0.0
      %449 = vmatprep.subr.mxu0 0.0
      %450 = vmatpush1.msra.mxu0 0.0
      %451 = vmatprep.subr.mxu0 0.0
      %452 = vmatpush1.msra.mxu0 0.0
      %453 = vmatprep.subr.mxu0 0.0
      %454 = vmatpush1.msra.mxu0 0.0
      %455 = vmatprep.subr.mxu0 0.0
      %456 = vmatpush1.msra.mxu0 0.0
      %457 = vmatprep.subr.mxu0 0.0
      %458 = vmatpush1.msra.mxu0 0.0
      %459 = vmatprep.subr.mxu0 0.0
      %460 = vmatpush1.msra.mxu0 0.0
      %461 = vmatprep.subr.mxu0 0.0
      %462 = vmatpush1.msra.mxu0 0.0
      %463 = vmatprep.subr.mxu0 0.0
      %464 = vmatpush1.msra.mxu0 0.0
      %465 = vmatprep.subr.mxu0 0.0
      %466 = vmatpush1.msra.mxu0 0.0
      %467 = vmatprep.subr.mxu0 0.0
      %468 = vmatpush1.msra.mxu0 0.0
      %469 = vmatprep.subr.mxu0 0.0
      %470 = vmatpush1.msra.mxu0 0.0
      %471 = vmatprep.subr.mxu0 0.0
      %472 = vmatpush1.msra.mxu0 0.0
      %473 = vmatprep.subr.mxu0 0.0
      %474 = vmatpush1.msra.mxu0 0.0
      %475 = vmatprep.subr.mxu0 0.0
      %476 = vmatpush1.msra.mxu0 0.0
      %477 = vmatprep.subr.mxu0 0.0
      %478 = vmatpush1.msra.mxu0 0.0
      %479 = vmatprep.subr.mxu0 0.0
      %480 = vmatpush1.msra.mxu0 0.0
      %481 = vmatprep.subr.mxu0 0.0
      %482 = vmatpush1.msra.mxu0 0.0
      %483 = vmatprep.subr.mxu0 0.0
      %484 = vmatpush1.msra.mxu0 0.0
      %485 = vmatprep.subr.mxu0 0.0
      %486 = vmatpush1.msra.mxu0 0.0
      %487 = vmatprep.mubr.f32.mxu0 0.0
      %488 = vmatmul.mubr.f32.gmra.mrb[0].mxu0 %v268
      %v489 = vpop.f32.mrb[0].mxu0
      %v490 = vadd.f32 %v415, %v489
      %v491 = vpop.f32.mrb[0].mxu0
      %492 = vmatprep.mubr.f32.mxu0 0.0
      %493 = vmatmul.mubr.f32.gmra.mrb[0].mxu0 %v271
      %v494 = vpop.f32.mrb[0].mxu0
      %v495 = vadd.f32 %v420, %v494
      %v496 = vpop.f32.mrb[0].mxu0
      %497 = vdwg.mxu0
      %v498 = vmax.f32 %v490, 0.0
      %v499 = vmax.f32 %v495, 0.0
      %500 = vst.msk [vmem:[%s175] sm:$0xff] %vm266, %v498
      %501 = vst.msk [vmem:[%s175 + $0x8] sm:$0xff] %vm266, %v499
      %s502 = smul.u32 2, %s14
      %p503 = scmp.lt.s32.totalorder %s502, 3
      %s504 = scalar_select %p503, %s502, 3
      %s505 = smul.addr %s504, 8
      %s506 = scalar_lea.vmem %s3, %s505
      // Predicated region
      $region33: #{_lambda_.25} parent=31 // pred_check
        %p507 = pneg %p100
      $region34: #{_lambda_.25} parent=31 // pred_check_branch
        %509 = sbr.rel (%p507) target = $region36
      $region35: #{_lambda_.25} parent=31 // pred_region
        %s510 = smul.u32 2, %s14
      $region36: #{_lambda_.25} parent=31 // pred_fallthru
        _
    $region32: #{_lambda_.25} parent=5 // pred_fallthru
      _
    %p511 = scmp.le.s32.totalorder 2, %s9
    // Predicated region
    $region37: #{_lambda_.25} parent=5 // pred_check
      %p512 = pneg %p511
    $region38: #{_lambda_.25} parent=5 // pred_check_branch
      %514 = sbr.rel (%p512) target = $region40
    $region39: #{_lambda_.25} parent=5 // pred_region
      %s515 = ssub.s32 %s9, 2
      // Predicated region
      $region41: #{_lambda_.25} parent=39 // pred_check
        %p516 = pneg %p106
      $region42: #{_lambda_.25} parent=39 // pred_check_branch
        %518 = sbr.rel (%p516) target = $region44
      $region43: #{_lambda_.25} parent=39 // pred_region
        %s519 = smul.u32 2, %s15
        %p520 = scmp.lt.s32.totalorder %s519, 3
        %s521 = scalar_select %p520, %s519, 3
        %s522 = smul.addr %s521, 8
        %s523 = scalar_lea.vmem %s3, %s522
      $region44: #{_lambda_.25} parent=39 // pred_fallthru
        _
    $region40: #{_lambda_.25} parent=5 // pred_fallthru
      _
  $region6: #{_lambda_.25} parent=0 // loop_footer
    %s13 = sadd.s32 1, %s9
  $region7: #{_lambda_.25} parent=0 // loop_footer_branch
    %8 = sbr.rel target = $region3
  $region8: #{_lambda_.25} parent=0 // loop_exit
    _

// kernel: _lambda_.27
$region0: #{_lambda_.27}
  #allocation0 [shape = 'u32[]', space=smem, size = 0x4, offset = 0x4, fixed_abs, tag = 'smem constant byte address 0x4 - core index']
  #allocation1 [shape = 'u32[144,128]{1,0:T(1,128)}', space=vmem, size = 0x12000, scoped, tag = 'internal scratch']
  %s0 = inlined_call_operand.vmem [shape: f32[32,64], index: 0, kind: input, shape index: {}]
  %s1 = inlined_call_operand.vmem [shape: f32[64,32], index: 1, kind: input, shape index: {}]
  %s2 = inlined_call_operand.vmem [shape: f32[1,32], index: 2, kind: input, shape index: {}]
  %s3 = inlined_call_operand.hbm [shape: f32[32,32], index: 3, kind: output, shape index: {}]
  %s4 = sld [smem:[#allocation0]]
  $region45: #{_lambda_.27} parent=0
    _
  %s6 = ssub.s32 1, %s4
  %s7 = scalar_select 0, %s6, %s4
  $region1: #{_lambda_.27} parent=0
    #allocation2 [shape = 'u8[16384]{0}', space=vmem, size = 0x4000, scoped, tag = 'output window, operand 0']
    #allocation3 [shape = 's32[2]{0}', space=sflag, size = 0x8, scoped, tag = 'scoped memory for _lambda_.27']
    %8 = vsyncpa [#allocation3], 0
    %s9 = scalar_lea.sflag [#allocation3], 1
    %10 = vsyncpa %s9, 0
    loop: start=0, step=1, limit=4
    $region2: #{_lambda_.27} parent=1 // loop_pre_header
      _
    $region3: #{_lambda_.27} parent=1 // loop_header
      %s12 = sphi 0, %s16
      %p13 = scmp.ge.s32.totalorder %s12, 4
      %s22 = sphi 0, %s24
      %s25 = sphi 0, %s22
      %s26 = sphi 0, %s25
      %s42 = sphi 0, %s26
      %s46 = sphi 0, %s46
      %s48 = sphi 0, %s46
      %s49 = sphi 0, %s48
      %s63 = sphi 0, %s49
      %s67 = sphi 0, %s67
      %s69 = sphi 0, %s67
      %s70 = sphi 0, %s69
      %s84 = sphi 0, %s70
      %s90 = sphi 0, %s92
      %s93 = sphi 0, %s90
      %s94 = sphi 0, %s93
      %s110 = sphi 0, %s94
    $region4: #{_lambda_.27} parent=1 // loop_header_branch
      %15 = sbr.rel (%p13) target = $region8
    $region5: #{_lambda_.27} parent=1 // loop_body
      %s17 = ssub.s32 %s12, 1
      %s18 = ssub.s32 %s12, 2
      %s19 = sadd.s32 %s12, 1
      %s20 = ssub.s32 %s12, %s19
      %p21 = scmp.eq.s32.totalorder %s20, 0
      %s23 = sadd.s32 %s22, 1
      %s24 = scalar_select %p21, %s22, %s23
      %p27 = pneg %p21
      %p28 = scmp.eq.s32.totalorder %s12, 1
      %p29 = por %p27, %p28
      %p30 = scmp.ne.s32.totalorder %s22, %s25
      %p31 = scmp.eq.s32.totalorder %s12, 0
      %p32 = por %p30, %p31
      %p33 = scmp.ne.s32.totalorder %s22, %s25
      %p34 = scmp.eq.s32.totalorder %s17, 1
      %p35 = por %p33, %p34
      %p36 = scmp.ne.s32.totalorder %s25, %s26
      %p37 = scmp.eq.s32.totalorder %s17, 0
      %p38 = por %p36, %p37
      %p39 = scmp.ne.s32.totalorder %s25, %s26
      %p40 = scmp.eq.s32.totalorder %s18, 1
      %p41 = por %p39, %p40
      %p43 = scmp.ne.s32.totalorder %s26, %s42
      %p44 = scmp.eq.s32.totalorder %s18, 0
      %p45 = por %p43, %p44
      %s47 = sadd.s32 %s46, 1
      %p50 = scmp.eq.s32.totalorder %s12, 1
      %p51 = scmp.ne.s32.totalorder %s46, %s48
      %p52 = scmp.eq.s32.totalorder %s12, 0
      %p53 = por %p51, %p52
      %p54 = scmp.ne.s32.totalorder %s46, %s48
      %p55 = scmp.eq.s32.totalorder %s17, 1
      %p56 = por %p54, %p55
      %p57 = scmp.ne.s32.totalorder %s48, %s49
      %p58 = scmp.eq.s32.totalorder %s17, 0
      %p59 = por %p57, %p58
      %p60 = scmp.ne.s32.totalorder %s48, %s49
      %p61 = scmp.eq.s32.totalorder %s18, 1
      %p62 = por %p60, %p61
      %p64 = scmp.ne.s32.totalorder %s49, %s63
      %p65 = scmp.eq.s32.totalorder %s18, 0
      %p66 = por %p64, %p65
      %s68 = sadd.s32 %s67, 1
      %p71 = scmp.eq.s32.totalorder %s12, 1
      %p72 = scmp.ne.s32.totalorder %s67, %s69
      %p73 = scmp.eq.s32.totalorder %s12, 0
      %p74 = por %p72, %p73
      %p75 = scmp.ne.s32.totalorder %s67, %s69
      %p76 = scmp.eq.s32.totalorder %s17, 1
      %p77 = por %p75, %p76
      %p78 = scmp.ne.s32.totalorder %s69, %s70
      %p79 = scmp.eq.s32.totalorder %s17, 0
      %p80 = por %p78, %p79
      %p81 = scmp.ne.s32.totalorder %s69, %s70
      %p82 = scmp.eq.s32.totalorder %s18, 1
      %p83 = por %p81, %p82
      %p85 = scmp.ne.s32.totalorder %s70, %s84
      %p86 = scmp.eq.s32.totalorder %s18, 0
      %p87 = por %p85, %p86
      %s88 = ssub.s32 %s12, %s19
      %p89 = scmp.eq.s32.totalorder %s88, 0
      %s91 = sadd.s32 %s90, 1
      %s92 = scalar_select %p89, %s90, %s91
      %p95 = pneg %p89
      %p96 = scmp.eq.s32.totalorder %s12, 1
      %p97 = por %p95, %p96
      %p98 = scmp.ne.s32.totalorder %s90, %s93
      %p99 = scmp.eq.s32.totalorder %s12, 0
      %p100 = por %p98, %p99
      %p101 = scmp.ne.s32.totalorder %s90, %s93
      %p102 = scmp.eq.s32.totalorder %s17, 1
      %p103 = por %p101, %p102
      %p104 = scmp.ne.s32.totalorder %s93, %s94
      %p105 = scmp.eq.s32.totalorder %s17, 0
      %p106 = por %p104, %p105
      %p107 = scmp.ne.s32.totalorder %s93, %s94
      %p108 = scmp.eq.s32.totalorder %s18, 1
      %p109 = por %p107, %p108
      %p111 = scmp.ne.s32.totalorder %s94, %s110
      %p112 = scmp.eq.s32.totalorder %s18, 0
      %p113 = por %p111, %p112
      %p114 = scmp.le.s32.totalorder 1, %s12
      %p115 = scmp.lt.s32.totalorder %s12, 3
      %p116 = pnand %p114, %p115
      %p117 = pneg %p116
      // Predicated region
      $region9: #{_lambda_.27} parent=5 // pred_check
        _
      $region10: #{_lambda_.27} parent=5 // pred_check_branch
        %119 = sbr.rel (%p116) target = $region12
      $region11: #{_lambda_.27} parent=5 // pred_region
        %s120 = ssub.s32 %s12, 1
        // Predicated region
        $region13: #{_lambda_.27} parent=11 // pred_check
          %p121 = pneg %p59
        $region14: #{_lambda_.27} parent=11 // pred_check_branch
          %123 = sbr.rel (%p121) target = $region16
        $region15: #{_lambda_.27} parent=11 // pred_region
          _
        $region16: #{_lambda_.27} parent=11 // pred_fallthru
          _
        // Predicated region
        $region17: #{_lambda_.27} parent=11 // pred_check
          %p124 = pneg %p80
        $region18: #{_lambda_.27} parent=11 // pred_check_branch
          %126 = sbr.rel (%p124) target = $region20
        $region19: #{_lambda_.27} parent=11 // pred_region
          _
        $region20: #{_lambda_.27} parent=11 // pred_fallthru
          _
      $region12: #{_lambda_.27} parent=5 // pred_fallthru
        _
      %p127 = scmp.lt.s32.totalorder %s12, 2
      // Predicated region
      $region21: #{_lambda_.27} parent=5 // pred_check
        %p128 = pneg %p127
      $region22: #{_lambda_.27} parent=5 // pred_check_branch
        %130 = sbr.rel (%p128) target = $region24
      $region23: #{_lambda_.27} parent=5 // pred_region
        // Predicated region
        $region25: #{_lambda_.27} parent=23 // pred_check
          %p131 = pneg %p32
        $region26: #{_lambda_.27} parent=23 // pred_check_branch
          %133 = sbr.rel (%p131) target = $region28
        $region27: #{_lambda_.27} parent=23 // pred_region
          %s134 = smul.u32 2, %s12
          %p135 = scmp.lt.s32.totalorder %s134, 3
          %s136 = scalar_select %p135, %s134, 3
          %s137 = smul.addr %s136, 8
          %s138 = scalar_lea.vmem %s0, %s137
          %s139 = smul.u32 2, %s12
        $region28: #{_lambda_.27} parent=23 // pred_fallthru
          _
      $region24: #{_lambda_.27} parent=5 // pred_fallthru
        _
      %p140 = scmp.le.s32.totalorder 1, %s12
      %p141 = scmp.lt.s32.totalorder %s12, 3
      %p142 = pnand %p140, %p141
      %p143 = pneg %p142
      // Predicated region
      $region29: #{_lambda_.27} parent=5 // pred_check
        _
      $region30: #{_lambda_.27} parent=5 // pred_check_branch
        %145 = sbr.rel (%p142) target = $region32
      $region31: #{_lambda_.27} parent=5 // pred_region
        %s146 = ssub.s32 %s12, 1
        %s147 = smul.u32 2, %s17
        %p148 = scmp.lt.s32.totalorder %s147, 3
        %s149 = scalar_select %p148, %s147, 3
        %s150 = smul.addr %s149, 8
        %s151 = scalar_lea.vmem %s0, %s150
        %p152 = pneg %p38
        %p153 = pneg %p35
        %p154 = pneg %p59
        %p155 = pneg %p56
        %p156 = pneg %p80
        %p157 = pneg %p77
        %p158 = pneg %p106
        %p159 = pneg %p103
        %s160 = sand.u32 %s93, 1
        %s161 = scalar_lea.sflag [#allocation3], %s160
        %s162 = sand.u32 %s93, 1
        %s163 = smul.addr %s162, 16
        %s164 = scalar_lea.vmem [#allocation2], %s163
        %s165 = smul.u32 2, %s17
        %p166 = scmp.lt.s32.totalorder %s165, 3
        %s167 = scalar_select %p166, %s165, 3
        %s168 = smul.addr %s167, 8
        %s169 = scalar_lea.vmem %s0, %s168
        %s170 = smul.u32 2, %s17
        %s171 = smul.u32 2, %s17
        %v172 = vld [vmem:[%s169] sm:$0xff]
        %v173 = vld [vmem:[%s169 + $0x8] sm:$0xff]
        %v174 = vld [vmem:[%s1] sm:$0xff]
        %v175 = vld [vmem:[%s1 + $0x8] sm:$0xff]
        %v176 = vld [vmem:[%s1 + $0x10] sm:$0xff]
        %v177 = vld [vmem:[%s1 + $0x18] sm:$0xff]
        %v178 = vld [vmem:[%s1 + $0x20] sm:$0xff]
        %v179 = vld [vmem:[%s1 + $0x28] sm:$0xff]
        %v180 = vld [vmem:[%s1 + $0x30] sm:$0xff]
        %v181 = vld [vmem:[%s1 + $0x38] sm:$0xff]
        %v182 = vld [vmem:[%s2] sm:$0x1]
        %v184 = vlaneseq
        %v185 = vshrl.u32 %v184, 7
        %v186 = vsub.s32 0, %v185
        %v187 = vrot.slane %v182, %v186
        %vm189 = vcmask 523264
        %v191 = vsel %vm189, %v172, 0
        %v194 = vsel %vm189, %v173, 0
        %196 = vmatprep.subr.mxu0 0.0
        %197 = vmatpush1.msra.mxu0 %v174
        %198 = vmatprep.subr.mxu0 0.0
        %199 = vmatpush1.msra.mxu0 %v175
        %200 = vmatprep.subr.mxu0 0.0
        %201 = vmatpush1.msra.mxu0 %v176
        %202 = vmatprep.subr.mxu0 0.0
        %203 = vmatpush1.msra.mxu0 %v177
        %204 = vmatprep.subr.mxu0 0.0
        %205 = vmatpush1.msra.mxu0 %v178
        %206 = vmatprep.subr.mxu0 0.0
        %207 = vmatpush1.msra.mxu0 %v179
        %208 = vmatprep.subr.mxu0 0.0
        %209 = vmatpush1.msra.mxu0 %v180
        %210 = vmatprep.subr.mxu0 0.0
        %211 = vmatpush1.msra.mxu0 %v181
        %212 = vmatprep.subr.mxu0 0.0
        %213 = vmatpush1.msra.mxu0 0.0
        %214 = vmatprep.subr.mxu0 0.0
        %215 = vmatpush1.msra.mxu0 0.0
        %216 = vmatprep.subr.mxu0 0.0
        %217 = vmatpush1.msra.mxu0 0.0
        %218 = vmatprep.subr.mxu0 0.0
        %219 = vmatpush1.msra.mxu0 0.0
        %220 = vmatprep.subr.mxu0 0.0
        %221 = vmatpush1.msra.mxu0 0.0
        %222 = vmatprep.subr.mxu0 0.0
        %223 = vmatpush1.msra.mxu0 0.0
        %224 = vmatprep.subr.mxu0 0.0
        %225 = vmatpush1.msra.mxu0 0.0
        %226 = vmatprep.subr.mxu0 0.0
        %227 = vmatpush1.msra.mxu0 0.0
        %228 = vmatprep.subr.mxu0 0.0
        %229 = vmatpush1.msra.mxu0 0.0
        %230 = vmatprep.subr.mxu0 0.0
        %231 = vmatpush1.msra.mxu0 0.0
        %232 = vmatprep.subr.mxu0 0.0
        %233 = vmatpush1.msra.mxu0 0.0
        %234 = vmatprep.subr.mxu0 0.0
        %235 = vmatpush1.msra.mxu0 0.0
        %236 = vmatprep.subr.mxu0 0.0
        %237 = vmatpush1.msra.mxu0 0.0
        %238 = vmatprep.subr.mxu0 0.0
        %239 = vmatpush1.msra.mxu0 0.0
        %240 = vmatprep.subr.mxu0 0.0
        %241 = vmatpush1.msra.mxu0 0.0
        %242 = vmatprep.subr.mxu0 0.0
        %243 = vmatpush1.msra.mxu0 0.0
        %244 = vmatprep.subr.mxu0 0.0
        %245 = vmatpush1.msra.mxu0 0.0
        %246 = vmatprep.subr.mxu0 0.0
        %247 = vmatpush1.msra.mxu0 0.0
        %248 = vmatprep.subr.mxu0 0.0
        %249 = vmatpush1.msra.mxu0 0.0
        %250 = vmatprep.subr.mxu0 0.0
        %251 = vmatpush1.msra.mxu0 0.0
        %252 = vmatprep.subr.mxu0 0.0
        %253 = vmatpush1.msra.mxu0 0.0
        %254 = vmatprep.subr.mxu0 0.0
        %255 = vmatpush1.msra.mxu0 0.0
        %256 = vmatprep.subr.mxu0 0.0
        %257 = vmatpush1.msra.mxu0 0.0
        %258 = vmatprep.subr.mxu0 0.0
        %259 = vmatpush1.msra.mxu0 0.0
        %260 = vmatprep.mubr.f32.mxu0 0.0
        %261 = vmatmul.mubr.f32.gmra.mrb[0].mxu0 %v191
        %v262 = vpop.f32.mrb[0].mxu0
        %v263 = vadd.f32 %v187, %v262
        %v264 = vpop.f32.mrb[0].mxu0
        %265 = vmatprep.mubr.f32.mxu0 0.0
        %266 = vmatmul.mubr.f32.gmra.mrb[0].mxu0 %v194
        %v267 = vpop.f32.mrb[0].mxu0
        %v268 = vadd.f32 %v187, %v267
        %v269 = vpop.f32.mrb[0].mxu0
        %270 = vdwg.mxu0
        %vm271 = vcmask 261120
        %272 = vst.msk [vmem:[%s164] sm:$0xff] %vm271, %v263
        %273 = vst.msk [vmem:[%s164 + $0x8] sm:$0xff] %vm271, %v268
        %s274 = sand.u32 %s93, 1
        %s275 = scalar_lea.sflag [#allocation3], %s274
        %s276 = sand.u32 %s93, 1
        %s277 = smul.addr %s276, 16
        %s278 = scalar_lea.vmem [#allocation2], %s277
        // Predicated region
        $region33: #{_lambda_.27} parent=31 // pred_check
          %p279 = pneg %p103
        $region34: #{_lambda_.27} parent=31 // pred_check_branch
          %281 = sbr.rel (%p279) target = $region36
        $region35: #{_lambda_.27} parent=31 // pred_region
          %s282 = smul.u32 2, %s17
          %s284 = ssub.s32 256, 256
          %285 = vsyncadd %s275, %s284
          %s286 = smul.addr %s282, 128
          %s287 = scalar_lea.hbm %s3, %s286
          %s288 = sshll.u32 %s278, 4
          %s289 = int_to_ptr.vmem [resolvable:$true] %s288
          %294 = dma.vmem_to_hbm [thread:$0]  %s289, 256, %s287, %s275, 128, 128, 8
        $region36: #{_lambda_.27} parent=31 // pred_fallthru
          _
      $region32: #{_lambda_.27} parent=5 // pred_fallthru
        _
      %p295 = scmp.le.s32.totalorder 2, %s12
      // Predicated region
      $region37: #{_lambda_.27} parent=5 // pred_check
        %p296 = pneg %p295
      $region38: #{_lambda_.27} parent=5 // pred_check_branch
        %298 = sbr.rel (%p296) target = $region40
      $region39: #{_lambda_.27} parent=5 // pred_region
        %s299 = ssub.s32 %s12, 2
        // Predicated region
        $region41: #{_lambda_.27} parent=39 // pred_check
          %p300 = pneg %p109
        $region42: #{_lambda_.27} parent=39 // pred_check_branch
          %302 = sbr.rel (%p300) target = $region44
        $region43: #{_lambda_.27} parent=39 // pred_region
          %s303 = sand.u32 %s94, 1
          %s304 = scalar_lea.sflag [#allocation3], %s303
          %s305 = sand.u32 %s94, 1
          %s306 = smul.addr %s305, 16
          %s307 = scalar_lea.vmem [#allocation2], %s306
          %308 = dma.done %s304, 256
        $region44: #{_lambda_.27} parent=39 // pred_fallthru
          _
      $region40: #{_lambda_.27} parent=5 // pred_fallthru
        _
    $region6: #{_lambda_.27} parent=1 // loop_footer
      %s16 = sadd.s32 1, %s12
    $region7: #{_lambda_.27} parent=1 // loop_footer_branch
      %11 = sbr.rel target = $region3
    $region8: #{_lambda_.27} parent=1 // loop_exit
      _
    %309 = vsyncpa [#allocation3], 1
    %s310 = scalar_lea.sflag [#allocation3], 1
    %311 = vsyncpa %s310, 1

// kernel: _lambda_.28
$region0: #{_lambda_.28}
  #allocation0 [shape = 'u32[]', space=smem, size = 0x4, offset = 0x4, fixed_abs, tag = 'smem constant byte address 0x4 - core index']
  #allocation1 [shape = 'u32[144,128]{1,0:T(1,128)}', space=vmem, size = 0x12000, scoped, tag = 'internal scratch']
  %s0 = inlined_call_operand.vmem [shape: f32[128,32], index: 0, kind: input, shape index: {}]
  %s1 = inlined_call_operand.vmem [shape: f32[32,64], index: 1, kind: input, shape index: {}]
  %s2 = inlined_call_operand.vmem [shape: f32[1,64], index: 2, kind: input, shape index: {}]
  %s3 = inlined_call_operand.vmem [shape: f32[128,64], index: 3, kind: output, shape index: {}]
  %s4 = sld [smem:[#allocation0]]
  $region45: #{_lambda_.28} parent=0
    _
  %s6 = ssub.s32 1, %s4
  %s7 = scalar_select 0, %s6, %s4
  loop: start=0, step=1, limit=4
  $region2: #{_lambda_.28} parent=0 // loop_pre_header
    _
  $region3: #{_lambda_.28} parent=0 // loop_header
    %s9 = sphi 0, %s13
    %p10 = scmp.ge.s32.totalorder %s9, 4
    %s19 = sphi 0, %s21
    %s22 = sphi 0, %s19
    %s23 = sphi 0, %s22
    %s39 = sphi 0, %s23
    %s43 = sphi 0, %s43
    %s45 = sphi 0, %s43
    %s46 = sphi 0, %s45
    %s60 = sphi 0, %s46
    %s64 = sphi 0, %s64
    %s66 = sphi 0, %s64
    %s67 = sphi 0, %s66
    %s81 = sphi 0, %s67
    %s87 = sphi 0, %s89
    %s90 = sphi 0, %s87
    %s91 = sphi 0, %s90
    %s107 = sphi 0, %s91
  $region4: #{_lambda_.28} parent=0 // loop_header_branch
    %12 = sbr.rel (%p10) target = $region8
  $region5: #{_lambda_.28} parent=0 // loop_body
    %s14 = ssub.s32 %s9, 1
    %s15 = ssub.s32 %s9, 2
    %s16 = sadd.s32 %s9, 1
    %s17 = ssub.s32 %s9, %s16
    %p18 = scmp.eq.s32.totalorder %s17, 0
    %s20 = sadd.s32 %s19, 1
    %s21 = scalar_select %p18, %s19, %s20
    %p24 = pneg %p18
    %p25 = scmp.eq.s32.totalorder %s9, 1
    %p26 = por %p24, %p25
    %p27 = scmp.ne.s32.totalorder %s19, %s22
    %p28 = scmp.eq.s32.totalorder %s9, 0
    %p29 = por %p27, %p28
    %p30 = scmp.ne.s32.totalorder %s19, %s22
    %p31 = scmp.eq.s32.totalorder %s14, 1
    %p32 = por %p30, %p31
    %p33 = scmp.ne.s32.totalorder %s22, %s23
    %p34 = scmp.eq.s32.totalorder %s14, 0
    %p35 = por %p33, %p34
    %p36 = scmp.ne.s32.totalorder %s22, %s23
    %p37 = scmp.eq.s32.totalorder %s15, 1
    %p38 = por %p36, %p37
    %p40 = scmp.ne.s32.totalorder %s23, %s39
    %p41 = scmp.eq.s32.totalorder %s15, 0
    %p42 = por %p40, %p41
    %s44 = sadd.s32 %s43, 1
    %p47 = scmp.eq.s32.totalorder %s9, 1
    %p48 = scmp.ne.s32.totalorder %s43, %s45
    %p49 = scmp.eq.s32.totalorder %s9, 0
    %p50 = por %p48, %p49
    %p51 = scmp.ne.s32.totalorder %s43, %s45
    %p52 = scmp.eq.s32.totalorder %s14, 1
    %p53 = por %p51, %p52
    %p54 = scmp.ne.s32.totalorder %s45, %s46
    %p55 = scmp.eq.s32.totalorder %s14, 0
    %p56 = por %p54, %p55
    %p57 = scmp.ne.s32.totalorder %s45, %s46
    %p58 = scmp.eq.s32.totalorder %s15, 1
    %p59 = por %p57, %p58
    %p61 = scmp.ne.s32.totalorder %s46, %s60
    %p62 = scmp.eq.s32.totalorder %s15, 0
    %p63 = por %p61, %p62
    %s65 = sadd.s32 %s64, 1
    %p68 = scmp.eq.s32.totalorder %s9, 1
    %p69 = scmp.ne.s32.totalorder %s64, %s66
    %p70 = scmp.eq.s32.totalorder %s9, 0
    %p71 = por %p69, %p70
    %p72 = scmp.ne.s32.totalorder %s64, %s66
    %p73 = scmp.eq.s32.totalorder %s14, 1
    %p74 = por %p72, %p73
    %p75 = scmp.ne.s32.totalorder %s66, %s67
    %p76 = scmp.eq.s32.totalorder %s14, 0
    %p77 = por %p75, %p76
    %p78 = scmp.ne.s32.totalorder %s66, %s67
    %p79 = scmp.eq.s32.totalorder %s15, 1
    %p80 = por %p78, %p79
    %p82 = scmp.ne.s32.totalorder %s67, %s81
    %p83 = scmp.eq.s32.totalorder %s15, 0
    %p84 = por %p82, %p83
    %s85 = ssub.s32 %s9, %s16
    %p86 = scmp.eq.s32.totalorder %s85, 0
    %s88 = sadd.s32 %s87, 1
    %s89 = scalar_select %p86, %s87, %s88
    %p92 = pneg %p86
    %p93 = scmp.eq.s32.totalorder %s9, 1
    %p94 = por %p92, %p93
    %p95 = scmp.ne.s32.totalorder %s87, %s90
    %p96 = scmp.eq.s32.totalorder %s9, 0
    %p97 = por %p95, %p96
    %p98 = scmp.ne.s32.totalorder %s87, %s90
    %p99 = scmp.eq.s32.totalorder %s14, 1
    %p100 = por %p98, %p99
    %p101 = scmp.ne.s32.totalorder %s90, %s91
    %p102 = scmp.eq.s32.totalorder %s14, 0
    %p103 = por %p101, %p102
    %p104 = scmp.ne.s32.totalorder %s90, %s91
    %p105 = scmp.eq.s32.totalorder %s15, 1
    %p106 = por %p104, %p105
    %p108 = scmp.ne.s32.totalorder %s91, %s107
    %p109 = scmp.eq.s32.totalorder %s15, 0
    %p110 = por %p108, %p109
    %p111 = scmp.le.s32.totalorder 1, %s9
    %p112 = scmp.lt.s32.totalorder %s9, 3
    %p113 = pnand %p111, %p112
    %p114 = pneg %p113
    // Predicated region
    $region9: #{_lambda_.28} parent=5 // pred_check
      _
    $region10: #{_lambda_.28} parent=5 // pred_check_branch
      %116 = sbr.rel (%p113) target = $region12
    $region11: #{_lambda_.28} parent=5 // pred_region
      %s117 = ssub.s32 %s9, 1
      // Predicated region
      $region13: #{_lambda_.28} parent=11 // pred_check
        %p118 = pneg %p56
      $region14: #{_lambda_.28} parent=11 // pred_check_branch
        %120 = sbr.rel (%p118) target = $region16
      $region15: #{_lambda_.28} parent=11 // pred_region
        _
      $region16: #{_lambda_.28} parent=11 // pred_fallthru
        _
      // Predicated region
      $region17: #{_lambda_.28} parent=11 // pred_check
        %p121 = pneg %p77
      $region18: #{_lambda_.28} parent=11 // pred_check_branch
        %123 = sbr.rel (%p121) target = $region20
      $region19: #{_lambda_.28} parent=11 // pred_region
        _
      $region20: #{_lambda_.28} parent=11 // pred_fallthru
        _
    $region12: #{_lambda_.28} parent=5 // pred_fallthru
      _
    %p124 = scmp.lt.s32.totalorder %s9, 2
    // Predicated region
    $region21: #{_lambda_.28} parent=5 // pred_check
      %p125 = pneg %p124
    $region22: #{_lambda_.28} parent=5 // pred_check_branch
      %127 = sbr.rel (%p125) target = $region24
    $region23: #{_lambda_.28} parent=5 // pred_region
      // Predicated region
      $region25: #{_lambda_.28} parent=23 // pred_check
        %p128 = pneg %p29
      $region26: #{_lambda_.28} parent=23 // pred_check_branch
        %130 = sbr.rel (%p128) target = $region28
      $region27: #{_lambda_.28} parent=23 // pred_region
        %s131 = smul.u32 8, %s9
        %p132 = scmp.lt.s32.totalorder %s131, 15
        %s133 = scalar_select %p132, %s131, 15
        %s134 = smul.addr %s133, 8
        %s135 = scalar_lea.vmem %s0, %s134
        %s136 = smul.u32 8, %s9
      $region28: #{_lambda_.28} parent=23 // pred_fallthru
        _
    $region24: #{_lambda_.28} parent=5 // pred_fallthru
      _
    %p137 = scmp.le.s32.totalorder 1, %s9
    %p138 = scmp.lt.s32.totalorder %s9, 3
    %p139 = pnand %p137, %p138
    %p140 = pneg %p139
    // Predicated region
    $region29: #{_lambda_.28} parent=5 // pred_check
      _
    $region30: #{_lambda_.28} parent=5 // pred_check_branch
      %142 = sbr.rel (%p139) target = $region32
    $region31: #{_lambda_.28} parent=5 // pred_region
      %s143 = ssub.s32 %s9, 1
      %s144 = smul.u32 8, %s14
      %p145 = scmp.lt.s32.totalorder %s144, 15
      %s146 = scalar_select %p145, %s144, 15
      %s147 = smul.addr %s146, 8
      %s148 = scalar_lea.vmem %s0, %s147
      %p149 = pneg %p35
      %p150 = pneg %p32
      %p151 = pneg %p56
      %p152 = pneg %p53
      %p153 = pneg %p77
      %p154 = pneg %p74
      %p155 = pneg %p103
      %p156 = pneg %p100
      %s157 = smul.u32 8, %s14
      %p158 = scmp.lt.s32.totalorder %s157, 15
      %s159 = scalar_select %p158, %s157, 15
      %s160 = smul.addr %s159, 8
      %s161 = scalar_lea.vmem %s3, %s160
      %s162 = smul.u32 8, %s14
      %p163 = scmp.lt.s32.totalorder %s162, 15
      %s164 = scalar_select %p163, %s162, 15
      %s165 = smul.addr %s164, 8
      %s166 = scalar_lea.vmem %s0, %s165
      %s167 = smul.u32 8, %s14
      %s168 = smul.u32 8, %s14
      %p169 = scmp.lt.s32.totalorder %s168, 15
      %s170 = scalar_select %p169, %s168, 15
      %s171 = smul.addr %s170, 8
      %s172 = scalar_lea.vmem %s3, %s171
      %s173 = smul.u32 8, %s14
      %v174 = vld [vmem:[%s166] sm:$0xff]
      %v175 = vld [vmem:[%s166 + $0x8] sm:$0xff]
      %v176 = vld [vmem:[%s166 + $0x10] sm:$0xff]
      %v177 = vld [vmem:[%s166 + $0x18] sm:$0xff]
      %v178 = vld [vmem:[%s166 + $0x20] sm:$0xff]
      %v179 = vld [vmem:[%s166 + $0x28] sm:$0xff]
      %v180 = vld [vmem:[%s166 + $0x30] sm:$0xff]
      %v181 = vld [vmem:[%s166 + $0x38] sm:$0xff]
      %v182 = vld [vmem:[%s1] sm:$0xff]
      %v183 = vld [vmem:[%s1 + $0x8] sm:$0xff]
      %v184 = vld [vmem:[%s1 + $0x10] sm:$0xff]
      %v185 = vld [vmem:[%s1 + $0x18] sm:$0xff]
      %v186 = vld [vmem:[%s2] sm:$0x1]
      %v188 = vlaneseq
      %v189 = vshrl.u32 %v188, 7
      %v190 = vsub.s32 0, %v189
      %v191 = vrot.slane %v186, %v190
      %vm193 = vcmask 261120
      %v195 = vsel %vm193, %v174, 0
      %v198 = vsel %vm193, %v175, 0
      %v201 = vsel %vm193, %v176, 0
      %v204 = vsel %vm193, %v177, 0
      %v207 = vsel %vm193, %v178, 0
      %v210 = vsel %vm193, %v179, 0
      %v213 = vsel %vm193, %v180, 0
      %v216 = vsel %vm193, %v181, 0
      %218 = vmatprep.subr.mxu0 0.0
      %219 = vmatpush1.msra.mxu0 %v182
      %220 = vmatprep.subr.mxu0 0.0
      %221 = vmatpush1.msra.mxu0 %v183
      %222 = vmatprep.subr.mxu0 0.0
      %223 = vmatpush1.msra.mxu0 %v184
      %224 = vmatprep.subr.mxu0 0.0
      %225 = vmatpush1.msra.mxu0 %v185
      %226 = vmatprep.subr.mxu0 0.0
      %227 = vmatpush1.msra.mxu0 0.0
      %228 = vmatprep.subr.mxu0 0.0
      %229 = vmatpush1.msra.mxu0 0.0
      %230 = vmatprep.subr.mxu0 0.0
      %231 = vmatpush1.msra.mxu0 0.0
      %232 = vmatprep.subr.mxu0 0.0
      %233 = vmatpush1.msra.mxu0 0.0
      %234 = vmatprep.subr.mxu0 0.0
      %235 = vmatpush1.msra.mxu0 0.0
      %236 = vmatprep.subr.mxu0 0.0
      %237 = vmatpush1.msra.mxu0 0.0
      %238 = vmatprep.subr.mxu0 0.0
      %239 = vmatpush1.msra.mxu0 0.0
      %240 = vmatprep.subr.mxu0 0.0
      %241 = vmatpush1.msra.mxu0 0.0
      %242 = vmatprep.subr.mxu0 0.0
      %243 = vmatpush1.msra.mxu0 0.0
      %244 = vmatprep.subr.mxu0 0.0
      %245 = vmatpush1.msra.mxu0 0.0
      %246 = vmatprep.subr.mxu0 0.0
      %247 = vmatpush1.msra.mxu0 0.0
      %248 = vmatprep.subr.mxu0 0.0
      %249 = vmatpush1.msra.mxu0 0.0
      %250 = vmatprep.subr.mxu0 0.0
      %251 = vmatpush1.msra.mxu0 0.0
      %252 = vmatprep.subr.mxu0 0.0
      %253 = vmatpush1.msra.mxu0 0.0
      %254 = vmatprep.subr.mxu0 0.0
      %255 = vmatpush1.msra.mxu0 0.0
      %256 = vmatprep.subr.mxu0 0.0
      %257 = vmatpush1.msra.mxu0 0.0
      %258 = vmatprep.subr.mxu0 0.0
      %259 = vmatpush1.msra.mxu0 0.0
      %260 = vmatprep.subr.mxu0 0.0
      %261 = vmatpush1.msra.mxu0 0.0
      %262 = vmatprep.subr.mxu0 0.0
      %263 = vmatpush1.msra.mxu0 0.0
      %264 = vmatprep.subr.mxu0 0.0
      %265 = vmatpush1.msra.mxu0 0.0
      %266 = vmatprep.subr.mxu0 0.0
      %267 = vmatpush1.msra.mxu0 0.0
      %268 = vmatprep.subr.mxu0 0.0
      %269 = vmatpush1.msra.mxu0 0.0
      %270 = vmatprep.subr.mxu0 0.0
      %271 = vmatpush1.msra.mxu0 0.0
      %272 = vmatprep.subr.mxu0 0.0
      %273 = vmatpush1.msra.mxu0 0.0
      %274 = vmatprep.subr.mxu0 0.0
      %275 = vmatpush1.msra.mxu0 0.0
      %276 = vmatprep.subr.mxu0 0.0
      %277 = vmatpush1.msra.mxu0 0.0
      %278 = vmatprep.subr.mxu0 0.0
      %279 = vmatpush1.msra.mxu0 0.0
      %280 = vmatprep.subr.mxu0 0.0
      %281 = vmatpush1.msra.mxu0 0.0
      %282 = vmatprep.mubr.f32.mxu0 0.0
      %283 = vmatmul.mubr.f32.gmra.mrb[0].mxu0 %v195
      %v284 = vpop.f32.mrb[0].mxu0
      %v285 = vadd.f32 %v191, %v284
      %v286 = vpop.f32.mrb[0].mxu0
      %287 = vmatprep.mubr.f32.mxu0 0.0
      %288 = vmatmul.mubr.f32.gmra.mrb[0].mxu0 %v198
      %v289 = vpop.f32.mrb[0].mxu0
      %v290 = vadd.f32 %v191, %v289
      %v291 = vpop.f32.mrb[0].mxu0
      %292 = vmatprep.mubr.f32.mxu0 0.0
      %293 = vmatmul.mubr.f32.gmra.mrb[0].mxu0 %v201
      %v294 = vpop.f32.mrb[0].mxu0
      %v295 = vadd.f32 %v191, %v294
      %v296 = vpop.f32.mrb[0].mxu0
      %297 = vmatprep.mubr.f32.mxu0 0.0
      %298 = vmatmul.mubr.f32.gmra.mrb[0].mxu0 %v204
      %v299 = vpop.f32.mrb[0].mxu0
      %v300 = vadd.f32 %v191, %v299
      %v301 = vpop.f32.mrb[0].mxu0
      %302 = vmatprep.mubr.f32.mxu0 0.0
      %303 = vmatmul.mubr.f32.gmra.mrb[0].mxu0 %v207
      %v304 = vpop.f32.mrb[0].mxu0
      %v305 = vadd.f32 %v191, %v304
      %v306 = vpop.f32.mrb[0].mxu0
      %307 = vmatprep.mubr.f32.mxu0 0.0
      %308 = vmatmul.mubr.f32.gmra.mrb[0].mxu0 %v210
      %v309 = vpop.f32.mrb[0].mxu0
      %v310 = vadd.f32 %v191, %v309
      %v311 = vpop.f32.mrb[0].mxu0
      %312 = vmatprep.mubr.f32.mxu0 0.0
      %313 = vmatmul.mubr.f32.gmra.mrb[0].mxu0 %v213
      %v314 = vpop.f32.mrb[0].mxu0
      %v315 = vadd.f32 %v191, %v314
      %v316 = vpop.f32.mrb[0].mxu0
      %317 = vmatprep.mubr.f32.mxu0 0.0
      %318 = vmatmul.mubr.f32.gmra.mrb[0].mxu0 %v216
      %v319 = vpop.f32.mrb[0].mxu0
      %v320 = vadd.f32 %v191, %v319
      %v321 = vpop.f32.mrb[0].mxu0
      %322 = vdwg.mxu0
      %vm323 = vcmask 523264
      %324 = vst.msk [vmem:[%s172] sm:$0xff] %vm323, %v285
      %325 = vst.msk [vmem:[%s172 + $0x8] sm:$0xff] %vm323, %v290
      %326 = vst.msk [vmem:[%s172 + $0x10] sm:$0xff] %vm323, %v295
      %327 = vst.msk [vmem:[%s172 + $0x18] sm:$0xff] %vm323, %v300
      %328 = vst.msk [vmem:[%s172 + $0x20] sm:$0xff] %vm323, %v305
      %329 = vst.msk [vmem:[%s172 + $0x28] sm:$0xff] %vm323, %v310
      %330 = vst.msk [vmem:[%s172 + $0x30] sm:$0xff] %vm323, %v315
      %331 = vst.msk [vmem:[%s172 + $0x38] sm:$0xff] %vm323, %v320
      %s332 = smul.u32 8, %s14
      %p333 = scmp.lt.s32.totalorder %s332, 15
      %s334 = scalar_select %p333, %s332, 15
      %s335 = smul.addr %s334, 8
      %s336 = scalar_lea.vmem %s3, %s335
      // Predicated region
      $region33: #{_lambda_.28} parent=31 // pred_check
        %p337 = pneg %p100
      $region34: #{_lambda_.28} parent=31 // pred_check_branch
        %339 = sbr.rel (%p337) target = $region36
      $region35: #{_lambda_.28} parent=31 // pred_region
        %s340 = smul.u32 8, %s14
      $region36: #{_lambda_.28} parent=31 // pred_fallthru
        _
    $region32: #{_lambda_.28} parent=5 // pred_fallthru
      _
    %p341 = scmp.le.s32.totalorder 2, %s9
    // Predicated region
    $region37: #{_lambda_.28} parent=5 // pred_check
      %p342 = pneg %p341
    $region38: #{_lambda_.28} parent=5 // pred_check_branch
      %344 = sbr.rel (%p342) target = $region40
    $region39: #{_lambda_.28} parent=5 // pred_region
      %s345 = ssub.s32 %s9, 2
      // Predicated region
      $region41: #{_lambda_.28} parent=39 // pred_check
        %p346 = pneg %p106
      $region42: #{_lambda_.28} parent=39 // pred_check_branch
        %348 = sbr.rel (%p346) target = $region44
      $region43: #{_lambda_.28} parent=39 // pred_region
        %s349 = smul.u32 8, %s15
        %p350 = scmp.lt.s32.totalorder %s349, 15
        %s351 = scalar_select %p350, %s349, 15
        %s352 = smul.addr %s351, 8
        %s353 = scalar_lea.vmem %s3, %s352
      $region44: #{_lambda_.28} parent=39 // pred_fallthru
        _
    $region40: #{_lambda_.28} parent=5 // pred_fallthru
      _
  $region6: #{_lambda_.28} parent=0 // loop_footer
    %s13 = sadd.s32 1, %s9
  $region7: #{_lambda_.28} parent=0 // loop_footer_branch
    %8 = sbr.rel target = $region3
  $region8: #{_lambda_.28} parent=0 // loop_exit
    _

// kernel: _lambda_.29
$region0: #{_lambda_.29}
  #allocation0 [shape = 'u32[]', space=smem, size = 0x4, offset = 0x4, fixed_abs, tag = 'smem constant byte address 0x4 - core index']
  #allocation1 [shape = 'u32[144,128]{1,0:T(1,128)}', space=vmem, size = 0x12000, scoped, tag = 'internal scratch']
  %s0 = inlined_call_operand.vmem [shape: f32[128,576], index: 0, kind: input, shape index: {}]
  %s1 = inlined_call_operand.vmem [shape: f32[576,16], index: 1, kind: input, shape index: {}]
  %s2 = inlined_call_operand.vmem [shape: f32[1,16], index: 2, kind: input, shape index: {}]
  %s3 = inlined_call_operand.hbm [shape: f32[128,16], index: 3, kind: output, shape index: {}]
  %s4 = sld [smem:[#allocation0]]
  $region45: #{_lambda_.29} parent=0
    _
  %s6 = ssub.s32 1, %s4
  %s7 = scalar_select 0, %s6, %s4
  $region1: #{_lambda_.29} parent=0
    #allocation2 [shape = 'u8[65536]{0}', space=vmem, size = 0x10000, scoped, tag = 'output window, operand 0']
    #allocation3 [shape = 's32[2]{0}', space=sflag, size = 0x8, scoped, tag = 'scoped memory for _lambda_.29']
    %8 = vsyncpa [#allocation3], 0
    %s9 = scalar_lea.sflag [#allocation3], 1
    %10 = vsyncpa %s9, 0
    loop: start=0, step=1, limit=4
    $region2: #{_lambda_.29} parent=1 // loop_pre_header
      _
    $region3: #{_lambda_.29} parent=1 // loop_header
      %s12 = sphi 0, %s16
      %p13 = scmp.ge.s32.totalorder %s12, 4
      %s22 = sphi 0, %s24
      %s25 = sphi 0, %s22
      %s26 = sphi 0, %s25
      %s42 = sphi 0, %s26
      %s46 = sphi 0, %s46
      %s48 = sphi 0, %s46
      %s49 = sphi 0, %s48
      %s63 = sphi 0, %s49
      %s67 = sphi 0, %s67
      %s69 = sphi 0, %s67
      %s70 = sphi 0, %s69
      %s84 = sphi 0, %s70
      %s90 = sphi 0, %s92
      %s93 = sphi 0, %s90
      %s94 = sphi 0, %s93
      %s110 = sphi 0, %s94
    $region4: #{_lambda_.29} parent=1 // loop_header_branch
      %15 = sbr.rel (%p13) target = $region8
    $region5: #{_lambda_.29} parent=1 // loop_body
      %s17 = ssub.s32 %s12, 1
      %s18 = ssub.s32 %s12, 2
      %s19 = sadd.s32 %s12, 1
      %s20 = ssub.s32 %s12, %s19
      %p21 = scmp.eq.s32.totalorder %s20, 0
      %s23 = sadd.s32 %s22, 1
      %s24 = scalar_select %p21, %s22, %s23
      %p27 = pneg %p21
      %p28 = scmp.eq.s32.totalorder %s12, 1
      %p29 = por %p27, %p28
      %p30 = scmp.ne.s32.totalorder %s22, %s25
      %p31 = scmp.eq.s32.totalorder %s12, 0
      %p32 = por %p30, %p31
      %p33 = scmp.ne.s32.totalorder %s22, %s25
      %p34 = scmp.eq.s32.totalorder %s17, 1
      %p35 = por %p33, %p34
      %p36 = scmp.ne.s32.totalorder %s25, %s26
      %p37 = scmp.eq.s32.totalorder %s17, 0
      %p38 = por %p36, %p37
      %p39 = scmp.ne.s32.totalorder %s25, %s26
      %p40 = scmp.eq.s32.totalorder %s18, 1
      %p41 = por %p39, %p40
      %p43 = scmp.ne.s32.totalorder %s26, %s42
      %p44 = scmp.eq.s32.totalorder %s18, 0
      %p45 = por %p43, %p44
      %s47 = sadd.s32 %s46, 1
      %p50 = scmp.eq.s32.totalorder %s12, 1
      %p51 = scmp.ne.s32.totalorder %s46, %s48
      %p52 = scmp.eq.s32.totalorder %s12, 0
      %p53 = por %p51, %p52
      %p54 = scmp.ne.s32.totalorder %s46, %s48
      %p55 = scmp.eq.s32.totalorder %s17, 1
      %p56 = por %p54, %p55
      %p57 = scmp.ne.s32.totalorder %s48, %s49
      %p58 = scmp.eq.s32.totalorder %s17, 0
      %p59 = por %p57, %p58
      %p60 = scmp.ne.s32.totalorder %s48, %s49
      %p61 = scmp.eq.s32.totalorder %s18, 1
      %p62 = por %p60, %p61
      %p64 = scmp.ne.s32.totalorder %s49, %s63
      %p65 = scmp.eq.s32.totalorder %s18, 0
      %p66 = por %p64, %p65
      %s68 = sadd.s32 %s67, 1
      %p71 = scmp.eq.s32.totalorder %s12, 1
      %p72 = scmp.ne.s32.totalorder %s67, %s69
      %p73 = scmp.eq.s32.totalorder %s12, 0
      %p74 = por %p72, %p73
      %p75 = scmp.ne.s32.totalorder %s67, %s69
      %p76 = scmp.eq.s32.totalorder %s17, 1
      %p77 = por %p75, %p76
      %p78 = scmp.ne.s32.totalorder %s69, %s70
      %p79 = scmp.eq.s32.totalorder %s17, 0
      %p80 = por %p78, %p79
      %p81 = scmp.ne.s32.totalorder %s69, %s70
      %p82 = scmp.eq.s32.totalorder %s18, 1
      %p83 = por %p81, %p82
      %p85 = scmp.ne.s32.totalorder %s70, %s84
      %p86 = scmp.eq.s32.totalorder %s18, 0
      %p87 = por %p85, %p86
      %s88 = ssub.s32 %s12, %s19
      %p89 = scmp.eq.s32.totalorder %s88, 0
      %s91 = sadd.s32 %s90, 1
      %s92 = scalar_select %p89, %s90, %s91
      %p95 = pneg %p89
      %p96 = scmp.eq.s32.totalorder %s12, 1
      %p97 = por %p95, %p96
      %p98 = scmp.ne.s32.totalorder %s90, %s93
      %p99 = scmp.eq.s32.totalorder %s12, 0
      %p100 = por %p98, %p99
      %p101 = scmp.ne.s32.totalorder %s90, %s93
      %p102 = scmp.eq.s32.totalorder %s17, 1
      %p103 = por %p101, %p102
      %p104 = scmp.ne.s32.totalorder %s93, %s94
      %p105 = scmp.eq.s32.totalorder %s17, 0
      %p106 = por %p104, %p105
      %p107 = scmp.ne.s32.totalorder %s93, %s94
      %p108 = scmp.eq.s32.totalorder %s18, 1
      %p109 = por %p107, %p108
      %p111 = scmp.ne.s32.totalorder %s94, %s110
      %p112 = scmp.eq.s32.totalorder %s18, 0
      %p113 = por %p111, %p112
      %p114 = scmp.le.s32.totalorder 1, %s12
      %p115 = scmp.lt.s32.totalorder %s12, 3
      %p116 = pnand %p114, %p115
      %p117 = pneg %p116
      // Predicated region
      $region9: #{_lambda_.29} parent=5 // pred_check
        _
      $region10: #{_lambda_.29} parent=5 // pred_check_branch
        %119 = sbr.rel (%p116) target = $region12
      $region11: #{_lambda_.29} parent=5 // pred_region
        %s120 = ssub.s32 %s12, 1
        // Predicated region
        $region13: #{_lambda_.29} parent=11 // pred_check
          %p121 = pneg %p59
        $region14: #{_lambda_.29} parent=11 // pred_check_branch
          %123 = sbr.rel (%p121) target = $region16
        $region15: #{_lambda_.29} parent=11 // pred_region
          _
        $region16: #{_lambda_.29} parent=11 // pred_fallthru
          _
        // Predicated region
        $region17: #{_lambda_.29} parent=11 // pred_check
          %p124 = pneg %p80
        $region18: #{_lambda_.29} parent=11 // pred_check_branch
          %126 = sbr.rel (%p124) target = $region20
        $region19: #{_lambda_.29} parent=11 // pred_region
          _
        $region20: #{_lambda_.29} parent=11 // pred_fallthru
          _
      $region12: #{_lambda_.29} parent=5 // pred_fallthru
        _
      %p127 = scmp.lt.s32.totalorder %s12, 2
      // Predicated region
      $region21: #{_lambda_.29} parent=5 // pred_check
        %p128 = pneg %p127
      $region22: #{_lambda_.29} parent=5 // pred_check_branch
        %130 = sbr.rel (%p128) target = $region24
      $region23: #{_lambda_.29} parent=5 // pred_region
        // Predicated region
        $region25: #{_lambda_.29} parent=23 // pred_check
          %p131 = pneg %p32
        $region26: #{_lambda_.29} parent=23 // pred_check_branch
          %133 = sbr.rel (%p131) target = $region28
        $region27: #{_lambda_.29} parent=23 // pred_region
          %s134 = smul.u32 8, %s12
          %p135 = scmp.lt.s32.totalorder %s134, 15
          %s136 = scalar_select %p135, %s134, 15
          %s137 = smul.addr %s136, 5
          %s138 = smul.addr %s137, 8
          %s139 = scalar_lea.vmem %s0, %s138
          %s140 = smul.u32 8, %s12
        $region28: #{_lambda_.29} parent=23 // pred_fallthru
          _
      $region24: #{_lambda_.29} parent=5 // pred_fallthru
        _
      %p141 = scmp.le.s32.totalorder 1, %s12
      %p142 = scmp.lt.s32.totalorder %s12, 3
      %p143 = pnand %p141, %p142
      %p144 = pneg %p143
      // Predicated region
      $region29: #{_lambda_.29} parent=5 // pred_check
        _
      $region30: #{_lambda_.29} parent=5 // pred_check_branch
        %146 = sbr.rel (%p143) target = $region32
      $region31: #{_lambda_.29} parent=5 // pred_region
        %s147 = ssub.s32 %s12, 1
        %s148 = smul.u32 8, %s17
        %p149 = scmp.lt.s32.totalorder %s148, 15
        %s150 = scalar_select %p149, %s148, 15
        %s151 = smul.addr %s150, 5
        %s152 = smul.addr %s151, 8
        %s153 = scalar_lea.vmem %s0, %s152
        %p154 = pneg %p38
        %p155 = pneg %p35
        %p156 = pneg %p59
        %p157 = pneg %p56
        %p158 = pneg %p80
        %p159 = pneg %p77
        %p160 = pneg %p106
        %p161 = pneg %p103
        %s162 = sand.u32 %s93, 1
        %s163 = scalar_lea.sflag [#allocation3], %s162
        %s164 = sand.u32 %s93, 1
        %s165 = smul.addr %s164, 64
        %s166 = scalar_lea.vmem [#allocation2], %s165
        %s167 = smul.u32 8, %s17
        %p168 = scmp.lt.s32.totalorder %s167, 15
        %s169 = scalar_select %p168, %s167, 15
        %s170 = smul.addr %s169, 5
        %s171 = smul.addr %s170, 8
        %s172 = scalar_lea.vmem %s0, %s171
        %s173 = smul.u32 8, %s17
        %s174 = smul.u32 8, %s17
        %v175 = vld [vmem:[%s172] sm:$0xff]
        %v176 = vld [vmem:[%s172 + $0x8] sm:$0xff]
        %v177 = vld [vmem:[%s172 + $0x10] sm:$0xff]
        %v178 = vld [vmem:[%s172 + $0x18] sm:$0xff]
        %v179 = vld [vmem:[%s172 + $0x20] sm:$0xff]
        %v180 = vld [vmem:[%s172 + $0x28] sm:$0xff]
        %v181 = vld [vmem:[%s172 + $0x30] sm:$0xff]
        %v182 = vld [vmem:[%s172 + $0x38] sm:$0xff]
        %v183 = vld [vmem:[%s172 + $0x40] sm:$0xff]
        %v184 = vld [vmem:[%s172 + $0x48] sm:$0xff]
        %v185 = vld [vmem:[%s172 + $0x50] sm:$0xff]
        %v186 = vld [vmem:[%s172 + $0x58] sm:$0xff]
        %v187 = vld [vmem:[%s172 + $0x60] sm:$0xff]
        %v188 = vld [vmem:[%s172 + $0x68] sm:$0xff]
        %v189 = vld [vmem:[%s172 + $0x70] sm:$0xff]
        %v190 = vld [vmem:[%s172 + $0x78] sm:$0xff]
        %v191 = vld [vmem:[%s172 + $0x80] sm:$0xff]
        %v192 = vld [vmem:[%s172 + $0x88] sm:$0xff]
        %v193 = vld [vmem:[%s172 + $0x90] sm:$0xff]
        %v194 = vld [vmem:[%s172 + $0x98] sm:$0xff]
        %v195 = vld [vmem:[%s172 + $0xa0] sm:$0xff]
        %v196 = vld [vmem:[%s172 + $0xa8] sm:$0xff]
        %v197 = vld [vmem:[%s172 + $0xb0] sm:$0xff]
        %v198 = vld [vmem:[%s172 + $0xb8] sm:$0xff]
        %v199 = vld [vmem:[%s172 + $0xc0] sm:$0xff]
        %v200 = vld [vmem:[%s172 + $0xc8] sm:$0xff]
        %v201 = vld [vmem:[%s172 + $0xd0] sm:$0xff]
        %v202 = vld [vmem:[%s172 + $0xd8] sm:$0xff]
        %v203 = vld [vmem:[%s172 + $0xe0] sm:$0xff]
        %v204 = vld [vmem:[%s172 + $0xe8] sm:$0xff]
        %v205 = vld [vmem:[%s172 + $0xf0] sm:$0xff]
        %v206 = vld [vmem:[%s172 + $0xf8] sm:$0xff]
        %v207 = vld [vmem:[%s172 + $0x100] sm:$0xff]
        %v208 = vld [vmem:[%s172 + $0x108] sm:$0xff]
        %v209 = vld [vmem:[%s172 + $0x110] sm:$0xff]
        %v210 = vld [vmem:[%s172 + $0x118] sm:$0xff]
        %v211 = vld [vmem:[%s172 + $0x120] sm:$0xff]
        %v212 = vld [vmem:[%s172 + $0x128] sm:$0xff]
        %v213 = vld [vmem:[%s172 + $0x130] sm:$0xff]
        %v214 = vld [vmem:[%s172 + $0x138] sm:$0xff]
        %v215 = vld [vmem:[%s1] sm:$0xff]
        %v216 = vld [vmem:[%s1 + $0x8] sm:$0xff]
        %v217 = vld [vmem:[%s1 + $0x10] sm:$0xff]
        %v218 = vld [vmem:[%s1 + $0x18] sm:$0xff]
        %v219 = vld [vmem:[%s1 + $0x20] sm:$0xff]
        %v220 = vld [vmem:[%s1 + $0x28] sm:$0xff]
        %v221 = vld [vmem:[%s1 + $0x30] sm:$0xff]
        %v222 = vld [vmem:[%s1 + $0x38] sm:$0xff]
        %v223 = vld [vmem:[%s1 + $0x40] sm:$0xff]
        %v224 = vld [vmem:[%s1 + $0x48] sm:$0xff]
        %v225 = vld [vmem:[%s1 + $0x50] sm:$0xff]
        %v226 = vld [vmem:[%s1 + $0x58] sm:$0xff]
        %v227 = vld [vmem:[%s1 + $0x60] sm:$0xff]
        %v228 = vld [vmem:[%s1 + $0x68] sm:$0xff]
        %v229 = vld [vmem:[%s1 + $0x70] sm:$0xff]
        %v230 = vld [vmem:[%s1 + $0x78] sm:$0xff]
        %v231 = vld [vmem:[%s1 + $0x80] sm:$0xff]
        %v232 = vld [vmem:[%s1 + $0x88] sm:$0xff]
        %v233 = vld [vmem:[%s1 + $0x90] sm:$0xff]
        %v234 = vld [vmem:[%s1 + $0x98] sm:$0xff]
        %v235 = vld [vmem:[%s1 + $0xa0] sm:$0xff]
        %v236 = vld [vmem:[%s1 + $0xa8] sm:$0xff]
        %v237 = vld [vmem:[%s1 + $0xb0] sm:$0xff]
        %v238 = vld [vmem:[%s1 + $0xb8] sm:$0xff]
        %v239 = vld [vmem:[%s1 + $0xc0] sm:$0xff]
        %v240 = vld [vmem:[%s1 + $0xc8] sm:$0xff]
        %v241 = vld [vmem:[%s1 + $0xd0] sm:$0xff]
        %v242 = vld [vmem:[%s1 + $0xd8] sm:$0xff]
        %v243 = vld [vmem:[%s1 + $0xe0] sm:$0xff]
        %v244 = vld [vmem:[%s1 + $0xe8] sm:$0xff]
        %v245 = vld [vmem:[%s1 + $0xf0] sm:$0xff]
        %v246 = vld [vmem:[%s1 + $0xf8] sm:$0xff]
        %v247 = vld [vmem:[%s1 + $0x100] sm:$0xff]
        %v248 = vld [vmem:[%s1 + $0x108] sm:$0xff]
        %v249 = vld [vmem:[%s1 + $0x110] sm:$0xff]
        %v250 = vld [vmem:[%s1 + $0x118] sm:$0xff]
        %v251 = vld [vmem:[%s1 + $0x120] sm:$0xff]
        %v252 = vld [vmem:[%s1 + $0x128] sm:$0xff]
        %v253 = vld [vmem:[%s1 + $0x130] sm:$0xff]
        %v254 = vld [vmem:[%s1 + $0x138] sm:$0xff]
        %v255 = vld [vmem:[%s1 + $0x140] sm:$0xff]
        %v256 = vld [vmem:[%s1 + $0x148] sm:$0xff]
        %v257 = vld [vmem:[%s1 + $0x150] sm:$0xff]
        %v258 = vld [vmem:[%s1 + $0x158] sm:$0xff]
        %v259 = vld [vmem:[%s1 + $0x160] sm:$0xff]
        %v260 = vld [vmem:[%s1 + $0x168] sm:$0xff]
        %v261 = vld [vmem:[%s1 + $0x170] sm:$0xff]
        %v262 = vld [vmem:[%s1 + $0x178] sm:$0xff]
        %v263 = vld [vmem:[%s1 + $0x180] sm:$0xff]
        %v264 = vld [vmem:[%s1 + $0x188] sm:$0xff]
        %v265 = vld [vmem:[%s1 + $0x190] sm:$0xff]
        %v266 = vld [vmem:[%s1 + $0x198] sm:$0xff]
        %v267 = vld [vmem:[%s1 + $0x1a0] sm:$0xff]
        %v268 = vld [vmem:[%s1 + $0x1a8] sm:$0xff]
        %v269 = vld [vmem:[%s1 + $0x1b0] sm:$0xff]
        %v270 = vld [vmem:[%s1 + $0x1b8] sm:$0xff]
        %v271 = vld [vmem:[%s1 + $0x1c0] sm:$0xff]
        %v272 = vld [vmem:[%s1 + $0x1c8] sm:$0xff]
        %v273 = vld [vmem:[%s1 + $0x1d0] sm:$0xff]
        %v274 = vld [vmem:[%s1 + $0x1d8] sm:$0xff]
        %v275 = vld [vmem:[%s1 + $0x1e0] sm:$0xff]
        %v276 = vld [vmem:[%s1 + $0x1e8] sm:$0xff]
        %v277 = vld [vmem:[%s1 + $0x1f0] sm:$0xff]
        %v278 = vld [vmem:[%s1 + $0x1f8] sm:$0xff]
        %v279 = vld [vmem:[%s1 + $0x200] sm:$0xff]
        %v280 = vld [vmem:[%s1 + $0x208] sm:$0xff]
        %v281 = vld [vmem:[%s1 + $0x210] sm:$0xff]
        %v282 = vld [vmem:[%s1 + $0x218] sm:$0xff]
        %v283 = vld [vmem:[%s1 + $0x220] sm:$0xff]
        %v284 = vld [vmem:[%s1 + $0x228] sm:$0xff]
        %v285 = vld [vmem:[%s1 + $0x230] sm:$0xff]
        %v286 = vld [vmem:[%s1 + $0x238] sm:$0xff]
        %v287 = vld [vmem:[%s2] sm:$0x1]
        %v289 = vlaneseq
        %v290 = vshrl.u32 %v289, 7
        %v291 = vsub.s32 0, %v290
        %v292 = vrot.slane %v287, %v291
        %vm294 = vcmask 523264
        %v296 = vsel %vm294, %v179, 0
        %v299 = vsel %vm294, %v184, 0
        %v302 = vsel %vm294, %v189, 0
        %v305 = vsel %vm294, %v194, 0
        %v308 = vsel %vm294, %v199, 0
        %v311 = vsel %vm294, %v204, 0
        %v314 = vsel %vm294, %v209, 0
        %v317 = vsel %vm294, %v214, 0
        %319 = vmatprep.subr.mxu0 0.0
        %320 = vmatpush1.msra.mxu0 %v215
        %321 = vmatprep.subr.mxu0 0.0
        %322 = vmatpush1.msra.mxu0 %v216
        %323 = vmatprep.subr.mxu0 0.0
        %324 = vmatpush1.msra.mxu0 %v217
        %325 = vmatprep.subr.mxu0 0.0
        %326 = vmatpush1.msra.mxu0 %v218
        %327 = vmatprep.subr.mxu0 0.0
        %328 = vmatpush1.msra.mxu0 %v219
        %329 = vmatprep.subr.mxu0 0.0
        %330 = vmatpush1.msra.mxu0 %v220
        %331 = vmatprep.subr.mxu0 0.0
        %332 = vmatpush1.msra.mxu0 %v221
        %333 = vmatprep.subr.mxu0 0.0
        %334 = vmatpush1.msra.mxu0 %v222
        %335 = vmatprep.subr.mxu0 0.0
        %336 = vmatpush1.msra.mxu0 %v223
        %337 = vmatprep.subr.mxu0 0.0
        %338 = vmatpush1.msra.mxu0 %v224
        %339 = vmatprep.subr.mxu0 0.0
        %340 = vmatpush1.msra.mxu0 %v225
        %341 = vmatprep.subr.mxu0 0.0
        %342 = vmatpush1.msra.mxu0 %v226
        %343 = vmatprep.subr.mxu0 0.0
        %344 = vmatpush1.msra.mxu0 %v227
        %345 = vmatprep.subr.mxu0 0.0
        %346 = vmatpush1.msra.mxu0 %v228
        %347 = vmatprep.subr.mxu0 0.0
        %348 = vmatpush1.msra.mxu0 %v229
        %349 = vmatprep.subr.mxu0 0.0
        %350 = vmatpush1.msra.mxu0 %v230
        %351 = vmatprep.subr.mxu0 0.0
        %352 = vmatpush1.msra.mxu0 %v231
        %353 = vmatprep.subr.mxu0 0.0
        %354 = vmatpush1.msra.mxu0 %v232
        %355 = vmatprep.subr.mxu0 0.0
        %356 = vmatpush1.msra.mxu0 %v233
        %357 = vmatprep.subr.mxu0 0.0
        %358 = vmatpush1.msra.mxu0 %v234
        %359 = vmatprep.subr.mxu0 0.0
        %360 = vmatpush1.msra.mxu0 %v235
        %361 = vmatprep.subr.mxu0 0.0
        %362 = vmatpush1.msra.mxu0 %v236
        %363 = vmatprep.subr.mxu0 0.0
        %364 = vmatpush1.msra.mxu0 %v237
        %365 = vmatprep.subr.mxu0 0.0
        %366 = vmatpush1.msra.mxu0 %v238
        %367 = vmatprep.subr.mxu0 0.0
        %368 = vmatpush1.msra.mxu0 %v239
        %369 = vmatprep.subr.mxu0 0.0
        %370 = vmatpush1.msra.mxu0 %v240
        %371 = vmatprep.subr.mxu0 0.0
        %372 = vmatpush1.msra.mxu0 %v241
        %373 = vmatprep.subr.mxu0 0.0
        %374 = vmatpush1.msra.mxu0 %v242
        %375 = vmatprep.subr.mxu0 0.0
        %376 = vmatpush1.msra.mxu0 %v243
        %377 = vmatprep.subr.mxu0 0.0
        %378 = vmatpush1.msra.mxu0 %v244
        %379 = vmatprep.subr.mxu0 0.0
        %380 = vmatpush1.msra.mxu0 %v245
        %381 = vmatprep.subr.mxu0 0.0
        %382 = vmatpush1.msra.mxu0 %v246
        %383 = vmatprep.mubr.f32.mxu0 %v176
        %384 = vmatmul.mubr.f32.gmra.mrb[0].mxu0 %v175
        %v385 = vpop.f32.mrb[0].mxu0
        %v386 = vadd.f32 %v292, %v385
        %v387 = vpop.f32.mrb[0].mxu0
        %388 = vmatprep.mubr.f32.mxu0 %v181
        %389 = vmatmul.mubr.f32.gmra.mrb[0].mxu0 %v180
        %v390 = vpop.f32.mrb[0].mxu0
        %v391 = vadd.f32 %v292, %v390
        %v392 = vpop.f32.mrb[0].mxu0
        %393 = vmatprep.mubr.f32.mxu0 %v186
        %394 = vmatmul.mubr.f32.gmra.mrb[0].mxu0 %v185
        %v395 = vpop.f32.mrb[0].mxu0
        %v396 = vadd.f32 %v292, %v395
        %v397 = vpop.f32.mrb[0].mxu0
        %398 = vmatprep.mubr.f32.mxu0 %v191
        %399 = vmatmul.mubr.f32.gmra.mrb[0].mxu0 %v190
        %v400 = vpop.f32.mrb[0].mxu0
        %v401 = vadd.f32 %v292, %v400
        %v402 = vpop.f32.mrb[0].mxu0
        %403 = vmatprep.mubr.f32.mxu0 %v196
        %404 = vmatmul.mubr.f32.gmra.mrb[0].mxu0 %v195
        %v405 = vpop.f32.mrb[0].mxu0
        %v406 = vadd.f32 %v292, %v405
        %v407 = vpop.f32.mrb[0].mxu0
        %408 = vmatprep.mubr.f32.mxu0 %v201
        %409 = vmatmul.mubr.f32.gmra.mrb[0].mxu0 %v200
        %v410 = vpop.f32.mrb[0].mxu0
        %v411 = vadd.f32 %v292, %v410
        %v412 = vpop.f32.mrb[0].mxu0
        %413 = vmatprep.mubr.f32.mxu0 %v206
        %414 = vmatmul.mubr.f32.gmra.mrb[0].mxu0 %v205
        %v415 = vpop.f32.mrb[0].mxu0
        %v416 = vadd.f32 %v292, %v415
        %v417 = vpop.f32.mrb[0].mxu0
        %418 = vmatprep.mubr.f32.mxu0 %v211
        %419 = vmatmul.mubr.f32.gmra.mrb[0].mxu0 %v210
        %v420 = vpop.f32.mrb[0].mxu0
        %v421 = vadd.f32 %v292, %v420
        %v422 = vpop.f32.mrb[0].mxu0
        %423 = vdwg.mxu0
        %424 = vmatprep.subr.mxu0 0.0
        %425 = vmatpush1.msra.mxu0 %v247
        %426 = vmatprep.subr.mxu0 0.0
        %427 = vmatpush1.msra.mxu0 %v248
        %428 = vmatprep.subr.mxu0 0.0
        %429 = vmatpush1.msra.mxu0 %v249
        %430 = vmatprep.subr.mxu0 0.0
        %431 = vmatpush1.msra.mxu0 %v250
        %432 = vmatprep.subr.mxu0 0.0
        %433 = vmatpush1.msra.mxu0 %v251
        %434 = vmatprep.subr.mxu0 0.0
        %435 = vmatpush1.msra.mxu0 %v252
        %436 = vmatprep.subr.mxu0 0.0
        %437 = vmatpush1.msra.mxu0 %v253
        %438 = vmatprep.subr.mxu0 0.0
        %439 = vmatpush1.msra.mxu0 %v254
        %440 = vmatprep.subr.mxu0 0.0
        %441 = vmatpush1.msra.mxu0 %v255
        %442 = vmatprep.subr.mxu0 0.0
        %443 = vmatpush1.msra.mxu0 %v256
        %444 = vmatprep.subr.mxu0 0.0
        %445 = vmatpush1.msra.mxu0 %v257
        %446 = vmatprep.subr.mxu0 0.0
        %447 = vmatpush1.msra.mxu0 %v258
        %448 = vmatprep.subr.mxu0 0.0
        %449 = vmatpush1.msra.mxu0 %v259
        %450 = vmatprep.subr.mxu0 0.0
        %451 = vmatpush1.msra.mxu0 %v260
        %452 = vmatprep.subr.mxu0 0.0
        %453 = vmatpush1.msra.mxu0 %v261
        %454 = vmatprep.subr.mxu0 0.0
        %455 = vmatpush1.msra.mxu0 %v262
        %456 = vmatprep.subr.mxu0 0.0
        %457 = vmatpush1.msra.mxu0 %v263
        %458 = vmatprep.subr.mxu0 0.0
        %459 = vmatpush1.msra.mxu0 %v264
        %460 = vmatprep.subr.mxu0 0.0
        %461 = vmatpush1.msra.mxu0 %v265
        %462 = vmatprep.subr.mxu0 0.0
        %463 = vmatpush1.msra.mxu0 %v266
        %464 = vmatprep.subr.mxu0 0.0
        %465 = vmatpush1.msra.mxu0 %v267
        %466 = vmatprep.subr.mxu0 0.0
        %467 = vmatpush1.msra.mxu0 %v268
        %468 = vmatprep.subr.mxu0 0.0
        %469 = vmatpush1.msra.mxu0 %v269
        %470 = vmatprep.subr.mxu0 0.0
        %471 = vmatpush1.msra.mxu0 %v270
        %472 = vmatprep.subr.mxu0 0.0
        %473 = vmatpush1.msra.mxu0 %v271
        %474 = vmatprep.subr.mxu0 0.0
        %475 = vmatpush1.msra.mxu0 %v272
        %476 = vmatprep.subr.mxu0 0.0
        %477 = vmatpush1.msra.mxu0 %v273
        %478 = vmatprep.subr.mxu0 0.0
        %479 = vmatpush1.msra.mxu0 %v274
        %480 = vmatprep.subr.mxu0 0.0
        %481 = vmatpush1.msra.mxu0 %v275
        %482 = vmatprep.subr.mxu0 0.0
        %483 = vmatpush1.msra.mxu0 %v276
        %484 = vmatprep.subr.mxu0 0.0
        %485 = vmatpush1.msra.mxu0 %v277
        %486 = vmatprep.subr.mxu0 0.0
        %487 = vmatpush1.msra.mxu0 %v278
        %488 = vmatprep.mubr.f32.mxu0 %v178
        %489 = vmatmul.mubr.f32.gmra.mrb[0].mxu0 %v177
        %v490 = vpop.f32.mrb[0].mxu0
        %v491 = vadd.f32 %v386, %v490
        %v492 = vpop.f32.mrb[0].mxu0
        %493 = vmatprep.mubr.f32.mxu0 %v183
        %494 = vmatmul.mubr.f32.gmra.mrb[0].mxu0 %v182
        %v495 = vpop.f32.mrb[0].mxu0
        %v496 = vadd.f32 %v391, %v495
        %v497 = vpop.f32.mrb[0].mxu0
        %498 = vmatprep.mubr.f32.mxu0 %v188
        %499 = vmatmul.mubr.f32.gmra.mrb[0].mxu0 %v187
        %v500 = vpop.f32.mrb[0].mxu0
        %v501 = vadd.f32 %v396, %v500
        %v502 = vpop.f32.mrb[0].mxu0
        %503 = vmatprep.mubr.f32.mxu0 %v193
        %504 = vmatmul.mubr.f32.gmra.mrb[0].mxu0 %v192
        %v505 = vpop.f32.mrb[0].mxu0
        %v506 = vadd.f32 %v401, %v505
        %v507 = vpop.f32.mrb[0].mxu0
        %508 = vmatprep.mubr.f32.mxu0 %v198
        %509 = vmatmul.mubr.f32.gmra.mrb[0].mxu0 %v197
        %v510 = vpop.f32.mrb[0].mxu0
        %v511 = vadd.f32 %v406, %v510
        %v512 = vpop.f32.mrb[0].mxu0
        %513 = vmatprep.mubr.f32.mxu0 %v203
        %514 = vmatmul.mubr.f32.gmra.mrb[0].mxu0 %v202
        %v515 = vpop.f32.mrb[0].mxu0
        %v516 = vadd.f32 %v411, %v515
        %v517 = vpop.f32.mrb[0].mxu0
        %518 = vmatprep.mubr.f32.mxu0 %v208
        %519 = vmatmul.mubr.f32.gmra.mrb[0].mxu0 %v207
        %v520 = vpop.f32.mrb[0].mxu0
        %v521 = vadd.f32 %v416, %v520
        %v522 = vpop.f32.mrb[0].mxu0
        %523 = vmatprep.mubr.f32.mxu0 %v213
        %524 = vmatmul.mubr.f32.gmra.mrb[0].mxu0 %v212
        %v525 = vpop.f32.mrb[0].mxu0
        %v526 = vadd.f32 %v421, %v525
        %v527 = vpop.f32.mrb[0].mxu0
        %528 = vdwg.mxu0
        %529 = vmatprep.subr.mxu0 0.0
        %530 = vmatpush1.msra.mxu0 %v279
        %531 = vmatprep.subr.mxu0 0.0
        %532 = vmatpush1.msra.mxu0 %v280
        %533 = vmatprep.subr.mxu0 0.0
        %534 = vmatpush1.msra.mxu0 %v281
        %535 = vmatprep.subr.mxu0 0.0
        %536 = vmatpush1.msra.mxu0 %v282
        %537 = vmatprep.subr.mxu0 0.0
        %538 = vmatpush1.msra.mxu0 %v283
        %539 = vmatprep.subr.mxu0 0.0
        %540 = vmatpush1.msra.mxu0 %v284
        %541 = vmatprep.subr.mxu0 0.0
        %542 = vmatpush1.msra.mxu0 %v285
        %543 = vmatprep.subr.mxu0 0.0
        %544 = vmatpush1.msra.mxu0 %v286
        %545 = vmatprep.subr.mxu0 0.0
        %546 = vmatpush1.msra.mxu0 0.0
        %547 = vmatprep.subr.mxu0 0.0
        %548 = vmatpush1.msra.mxu0 0.0
        %549 = vmatprep.subr.mxu0 0.0
        %550 = vmatpush1.msra.mxu0 0.0
        %551 = vmatprep.subr.mxu0 0.0
        %552 = vmatpush1.msra.mxu0 0.0
        %553 = vmatprep.subr.mxu0 0.0
        %554 = vmatpush1.msra.mxu0 0.0
        %555 = vmatprep.subr.mxu0 0.0
        %556 = vmatpush1.msra.mxu0 0.0
        %557 = vmatprep.subr.mxu0 0.0
        %558 = vmatpush1.msra.mxu0 0.0
        %559 = vmatprep.subr.mxu0 0.0
        %560 = vmatpush1.msra.mxu0 0.0
        %561 = vmatprep.subr.mxu0 0.0
        %562 = vmatpush1.msra.mxu0 0.0
        %563 = vmatprep.subr.mxu0 0.0
        %564 = vmatpush1.msra.mxu0 0.0
        %565 = vmatprep.subr.mxu0 0.0
        %566 = vmatpush1.msra.mxu0 0.0
        %567 = vmatprep.subr.mxu0 0.0
        %568 = vmatpush1.msra.mxu0 0.0
        %569 = vmatprep.subr.mxu0 0.0
        %570 = vmatpush1.msra.mxu0 0.0
        %571 = vmatprep.subr.mxu0 0.0
        %572 = vmatpush1.msra.mxu0 0.0
        %573 = vmatprep.subr.mxu0 0.0
        %574 = vmatpush1.msra.mxu0 0.0
        %575 = vmatprep.subr.mxu0 0.0
        %576 = vmatpush1.msra.mxu0 0.0
        %577 = vmatprep.subr.mxu0 0.0
        %578 = vmatpush1.msra.mxu0 0.0
        %579 = vmatprep.subr.mxu0 0.0
        %580 = vmatpush1.msra.mxu0 0.0
        %581 = vmatprep.subr.mxu0 0.0
        %582 = vmatpush1.msra.mxu0 0.0
        %583 = vmatprep.subr.mxu0 0.0
        %584 = vmatpush1.msra.mxu0 0.0
        %585 = vmatprep.subr.mxu0 0.0
        %586 = vmatpush1.msra.mxu0 0.0
        %587 = vmatprep.subr.mxu0 0.0
        %588 = vmatpush1.msra.mxu0 0.0
        %589 = vmatprep.subr.mxu0 0.0
        %590 = vmatpush1.msra.mxu0 0.0
        %591 = vmatprep.subr.mxu0 0.0
        %592 = vmatpush1.msra.mxu0 0.0
        %593 = vmatprep.mubr.f32.mxu0 0.0
        %594 = vmatmul.mubr.f32.gmra.mrb[0].mxu0 %v296
        %v595 = vpop.f32.mrb[0].mxu0
        %v596 = vadd.f32 %v491, %v595
        %v597 = vpop.f32.mrb[0].mxu0
        %598 = vmatprep.mubr.f32.mxu0 0.0
        %599 = vmatmul.mubr.f32.gmra.mrb[0].mxu0 %v299
        %v600 = vpop.f32.mrb[0].mxu0
        %v601 = vadd.f32 %v496, %v600
        %v602 = vpop.f32.mrb[0].mxu0
        %603 = vmatprep.mubr.f32.mxu0 0.0
        %604 = vmatmul.mubr.f32.gmra.mrb[0].mxu0 %v302
        %v605 = vpop.f32.mrb[0].mxu0
        %v606 = vadd.f32 %v501, %v605
        %v607 = vpop.f32.mrb[0].mxu0
        %608 = vmatprep.mubr.f32.mxu0 0.0
        %609 = vmatmul.mubr.f32.gmra.mrb[0].mxu0 %v305
        %v610 = vpop.f32.mrb[0].mxu0
        %v611 = vadd.f32 %v506, %v610
        %v612 = vpop.f32.mrb[0].mxu0
        %613 = vmatprep.mubr.f32.mxu0 0.0
        %614 = vmatmul.mubr.f32.gmra.mrb[0].mxu0 %v308
        %v615 = vpop.f32.mrb[0].mxu0
        %v616 = vadd.f32 %v511, %v615
        %v617 = vpop.f32.mrb[0].mxu0
        %618 = vmatprep.mubr.f32.mxu0 0.0
        %619 = vmatmul.mubr.f32.gmra.mrb[0].mxu0 %v311
        %v620 = vpop.f32.mrb[0].mxu0
        %v621 = vadd.f32 %v516, %v620
        %v622 = vpop.f32.mrb[0].mxu0
        %623 = vmatprep.mubr.f32.mxu0 0.0
        %624 = vmatmul.mubr.f32.gmra.mrb[0].mxu0 %v314
        %v625 = vpop.f32.mrb[0].mxu0
        %v626 = vadd.f32 %v521, %v625
        %v627 = vpop.f32.mrb[0].mxu0
        %628 = vmatprep.mubr.f32.mxu0 0.0
        %629 = vmatmul.mubr.f32.gmra.mrb[0].mxu0 %v317
        %v630 = vpop.f32.mrb[0].mxu0
        %v631 = vadd.f32 %v526, %v630
        %v632 = vpop.f32.mrb[0].mxu0
        %633 = vdwg.mxu0
        %vm634 = vcmask 130048
        %635 = vst.msk [vmem:[%s166] sm:$0xff] %vm634, %v596
        %636 = vst.msk [vmem:[%s166 + $0x8] sm:$0xff] %vm634, %v601
        %637 = vst.msk [vmem:[%s166 + $0x10] sm:$0xff] %vm634, %v606
        %638 = vst.msk [vmem:[%s166 + $0x18] sm:$0xff] %vm634, %v611
        %639 = vst.msk [vmem:[%s166 + $0x20] sm:$0xff] %vm634, %v616
        %640 = vst.msk [vmem:[%s166 + $0x28] sm:$0xff] %vm634, %v621
        %641 = vst.msk [vmem:[%s166 + $0x30] sm:$0xff] %vm634, %v626
        %642 = vst.msk [vmem:[%s166 + $0x38] sm:$0xff] %vm634, %v631
        %s643 = sand.u32 %s93, 1
        %s644 = scalar_lea.sflag [#allocation3], %s643
        %s645 = sand.u32 %s93, 1
        %s646 = smul.addr %s645, 64
        %s647 = scalar_lea.vmem [#allocation2], %s646
        // Predicated region
        $region33: #{_lambda_.29} parent=31 // pred_check
          %p648 = pneg %p103
        $region34: #{_lambda_.29} parent=31 // pred_check_branch
          %650 = sbr.rel (%p648) target = $region36
        $region35: #{_lambda_.29} parent=31 // pred_region
          %s651 = smul.u32 8, %s17
          %s653 = ssub.s32 1024, 1024
          %654 = vsyncadd %s644, %s653
          %s655 = smul.addr %s651, 128
          %s656 = scalar_lea.hbm %s3, %s655
          %s657 = sshll.u32 %s647, 4
          %s658 = int_to_ptr.vmem [resolvable:$true] %s657
          %663 = dma.vmem_to_hbm [thread:$0]  %s658, 1024, %s656, %s644, 128, 128, 8
        $region36: #{_lambda_.29} parent=31 // pred_fallthru
          _
      $region32: #{_lambda_.29} parent=5 // pred_fallthru
        _
      %p664 = scmp.le.s32.totalorder 2, %s12
      // Predicated region
      $region37: #{_lambda_.29} parent=5 // pred_check
        %p665 = pneg %p664
      $region38: #{_lambda_.29} parent=5 // pred_check_branch
        %667 = sbr.rel (%p665) target = $region40
      $region39: #{_lambda_.29} parent=5 // pred_region
        %s668 = ssub.s32 %s12, 2
        // Predicated region
        $region41: #{_lambda_.29} parent=39 // pred_check
          %p669 = pneg %p109
        $region42: #{_lambda_.29} parent=39 // pred_check_branch
          %671 = sbr.rel (%p669) target = $region44
        $region43: #{_lambda_.29} parent=39 // pred_region
          %s672 = sand.u32 %s94, 1
          %s673 = scalar_lea.sflag [#allocation3], %s672
          %s674 = sand.u32 %s94, 1
          %s675 = smul.addr %s674, 64
          %s676 = scalar_lea.vmem [#allocation2], %s675
          %677 = dma.done %s673, 1024
        $region44: #{_lambda_.29} parent=39 // pred_fallthru
          _
      $region40: #{_lambda_.29} parent=5 // pred_fallthru
        _
    $region6: #{_lambda_.29} parent=1 // loop_footer
      %s16 = sadd.s32 1, %s12
    $region7: #{_lambda_.29} parent=1 // loop_footer_branch
      %11 = sbr.rel target = $region3
    $region8: #{_lambda_.29} parent=1 // loop_exit
      _
    %678 = vsyncpa [#allocation3], 1
    %s679 = scalar_lea.sflag [#allocation3], 1
    %680 = vsyncpa %s679, 1

// kernel: _lambda_.30
$region0: #{_lambda_.30}
  #allocation0 [shape = 'u32[]', space=smem, size = 0x4, offset = 0x4, fixed_abs, tag = 'smem constant byte address 0x4 - core index']
  #allocation1 [shape = 'u32[144,128]{1,0:T(1,128)}', space=vmem, size = 0x12000, scoped, tag = 'internal scratch']
  %s0 = inlined_call_operand.vmem [shape: f32[512,16], index: 0, kind: input, shape index: {}]
  %s1 = inlined_call_operand.vmem [shape: f32[16,64], index: 1, kind: input, shape index: {}]
  %s2 = inlined_call_operand.vmem [shape: f32[1,64], index: 2, kind: input, shape index: {}]
  %s3 = inlined_call_operand.vmem [shape: f32[512,64], index: 3, kind: output, shape index: {}]
  %s4 = sld [smem:[#allocation0]]
  $region45: #{_lambda_.30} parent=0
    _
  %s6 = ssub.s32 1, %s4
  %s7 = scalar_select 0, %s6, %s4
  loop: start=0, step=1, limit=4
  $region2: #{_lambda_.30} parent=0 // loop_pre_header
    _
  $region3: #{_lambda_.30} parent=0 // loop_header
    %s9 = sphi 0, %s13
    %p10 = scmp.ge.s32.totalorder %s9, 4
    %s19 = sphi 0, %s21
    %s22 = sphi 0, %s19
    %s23 = sphi 0, %s22
    %s39 = sphi 0, %s23
    %s43 = sphi 0, %s43
    %s45 = sphi 0, %s43
    %s46 = sphi 0, %s45
    %s60 = sphi 0, %s46
    %s64 = sphi 0, %s64
    %s66 = sphi 0, %s64
    %s67 = sphi 0, %s66
    %s81 = sphi 0, %s67
    %s87 = sphi 0, %s89
    %s90 = sphi 0, %s87
    %s91 = sphi 0, %s90
    %s107 = sphi 0, %s91
  $region4: #{_lambda_.30} parent=0 // loop_header_branch
    %12 = sbr.rel (%p10) target = $region8
  $region5: #{_lambda_.30} parent=0 // loop_body
    %s14 = ssub.s32 %s9, 1
    %s15 = ssub.s32 %s9, 2
    %s16 = sadd.s32 %s9, 1
    %s17 = ssub.s32 %s9, %s16
    %p18 = scmp.eq.s32.totalorder %s17, 0
    %s20 = sadd.s32 %s19, 1
    %s21 = scalar_select %p18, %s19, %s20
    %p24 = pneg %p18
    %p25 = scmp.eq.s32.totalorder %s9, 1
    %p26 = por %p24, %p25
    %p27 = scmp.ne.s32.totalorder %s19, %s22
    %p28 = scmp.eq.s32.totalorder %s9, 0
    %p29 = por %p27, %p28
    %p30 = scmp.ne.s32.totalorder %s19, %s22
    %p31 = scmp.eq.s32.totalorder %s14, 1
    %p32 = por %p30, %p31
    %p33 = scmp.ne.s32.totalorder %s22, %s23
    %p34 = scmp.eq.s32.totalorder %s14, 0
    %p35 = por %p33, %p34
    %p36 = scmp.ne.s32.totalorder %s22, %s23
    %p37 = scmp.eq.s32.totalorder %s15, 1
    %p38 = por %p36, %p37
    %p40 = scmp.ne.s32.totalorder %s23, %s39
    %p41 = scmp.eq.s32.totalorder %s15, 0
    %p42 = por %p40, %p41
    %s44 = sadd.s32 %s43, 1
    %p47 = scmp.eq.s32.totalorder %s9, 1
    %p48 = scmp.ne.s32.totalorder %s43, %s45
    %p49 = scmp.eq.s32.totalorder %s9, 0
    %p50 = por %p48, %p49
    %p51 = scmp.ne.s32.totalorder %s43, %s45
    %p52 = scmp.eq.s32.totalorder %s14, 1
    %p53 = por %p51, %p52
    %p54 = scmp.ne.s32.totalorder %s45, %s46
    %p55 = scmp.eq.s32.totalorder %s14, 0
    %p56 = por %p54, %p55
    %p57 = scmp.ne.s32.totalorder %s45, %s46
    %p58 = scmp.eq.s32.totalorder %s15, 1
    %p59 = por %p57, %p58
    %p61 = scmp.ne.s32.totalorder %s46, %s60
    %p62 = scmp.eq.s32.totalorder %s15, 0
    %p63 = por %p61, %p62
    %s65 = sadd.s32 %s64, 1
    %p68 = scmp.eq.s32.totalorder %s9, 1
    %p69 = scmp.ne.s32.totalorder %s64, %s66
    %p70 = scmp.eq.s32.totalorder %s9, 0
    %p71 = por %p69, %p70
    %p72 = scmp.ne.s32.totalorder %s64, %s66
    %p73 = scmp.eq.s32.totalorder %s14, 1
    %p74 = por %p72, %p73
    %p75 = scmp.ne.s32.totalorder %s66, %s67
    %p76 = scmp.eq.s32.totalorder %s14, 0
    %p77 = por %p75, %p76
    %p78 = scmp.ne.s32.totalorder %s66, %s67
    %p79 = scmp.eq.s32.totalorder %s15, 1
    %p80 = por %p78, %p79
    %p82 = scmp.ne.s32.totalorder %s67, %s81
    %p83 = scmp.eq.s32.totalorder %s15, 0
    %p84 = por %p82, %p83
    %s85 = ssub.s32 %s9, %s16
    %p86 = scmp.eq.s32.totalorder %s85, 0
    %s88 = sadd.s32 %s87, 1
    %s89 = scalar_select %p86, %s87, %s88
    %p92 = pneg %p86
    %p93 = scmp.eq.s32.totalorder %s9, 1
    %p94 = por %p92, %p93
    %p95 = scmp.ne.s32.totalorder %s87, %s90
    %p96 = scmp.eq.s32.totalorder %s9, 0
    %p97 = por %p95, %p96
    %p98 = scmp.ne.s32.totalorder %s87, %s90
    %p99 = scmp.eq.s32.totalorder %s14, 1
    %p100 = por %p98, %p99
    %p101 = scmp.ne.s32.totalorder %s90, %s91
    %p102 = scmp.eq.s32.totalorder %s14, 0
    %p103 = por %p101, %p102
    %p104 = scmp.ne.s32.totalorder %s90, %s91
    %p105 = scmp.eq.s32.totalorder %s15, 1
    %p106 = por %p104, %p105
    %p108 = scmp.ne.s32.totalorder %s91, %s107
    %p109 = scmp.eq.s32.totalorder %s15, 0
    %p110 = por %p108, %p109
    %p111 = scmp.le.s32.totalorder 1, %s9
    %p112 = scmp.lt.s32.totalorder %s9, 3
    %p113 = pnand %p111, %p112
    %p114 = pneg %p113
    // Predicated region
    $region9: #{_lambda_.30} parent=5 // pred_check
      _
    $region10: #{_lambda_.30} parent=5 // pred_check_branch
      %116 = sbr.rel (%p113) target = $region12
    $region11: #{_lambda_.30} parent=5 // pred_region
      %s117 = ssub.s32 %s9, 1
      // Predicated region
      $region13: #{_lambda_.30} parent=11 // pred_check
        %p118 = pneg %p56
      $region14: #{_lambda_.30} parent=11 // pred_check_branch
        %120 = sbr.rel (%p118) target = $region16
      $region15: #{_lambda_.30} parent=11 // pred_region
        _
      $region16: #{_lambda_.30} parent=11 // pred_fallthru
        _
      // Predicated region
      $region17: #{_lambda_.30} parent=11 // pred_check
        %p121 = pneg %p77
      $region18: #{_lambda_.30} parent=11 // pred_check_branch
        %123 = sbr.rel (%p121) target = $region20
      $region19: #{_lambda_.30} parent=11 // pred_region
        _
      $region20: #{_lambda_.30} parent=11 // pred_fallthru
        _
    $region12: #{_lambda_.30} parent=5 // pred_fallthru
      _
    %p124 = scmp.lt.s32.totalorder %s9, 2
    // Predicated region
    $region21: #{_lambda_.30} parent=5 // pred_check
      %p125 = pneg %p124
    $region22: #{_lambda_.30} parent=5 // pred_check_branch
      %127 = sbr.rel (%p125) target = $region24
    $region23: #{_lambda_.30} parent=5 // pred_region
      // Predicated region
      $region25: #{_lambda_.30} parent=23 // pred_check
        %p128 = pneg %p29
      $region26: #{_lambda_.30} parent=23 // pred_check_branch
        %130 = sbr.rel (%p128) target = $region28
      $region27: #{_lambda_.30} parent=23 // pred_region
        %s131 = smul.u32 32, %s9
        %p132 = scmp.lt.s32.totalorder %s131, 63
        %s133 = scalar_select %p132, %s131, 63
        %s134 = smul.addr %s133, 8
        %s135 = scalar_lea.vmem %s0, %s134
        %s136 = smul.u32 32, %s9
      $region28: #{_lambda_.30} parent=23 // pred_fallthru
        _
    $region24: #{_lambda_.30} parent=5 // pred_fallthru
      _
    %p137 = scmp.le.s32.totalorder 1, %s9
    %p138 = scmp.lt.s32.totalorder %s9, 3
    %p139 = pnand %p137, %p138
    %p140 = pneg %p139
    // Predicated region
    $region29: #{_lambda_.30} parent=5 // pred_check
      _
    $region30: #{_lambda_.30} parent=5 // pred_check_branch
      %142 = sbr.rel (%p139) target = $region32
    $region31: #{_lambda_.30} parent=5 // pred_region
      %s143 = ssub.s32 %s9, 1
      %s144 = smul.u32 32, %s14
      %p145 = scmp.lt.s32.totalorder %s144, 63
      %s146 = scalar_select %p145, %s144, 63
      %s147 = smul.addr %s146, 8
      %s148 = scalar_lea.vmem %s0, %s147
      %p149 = pneg %p35
      %p150 = pneg %p32
      %p151 = pneg %p56
      %p152 = pneg %p53
      %p153 = pneg %p77
      %p154 = pneg %p74
      %p155 = pneg %p103
      %p156 = pneg %p100
      %s157 = smul.u32 32, %s14
      %p158 = scmp.lt.s32.totalorder %s157, 63
      %s159 = scalar_select %p158, %s157, 63
      %s160 = smul.addr %s159, 8
      %s161 = scalar_lea.vmem %s3, %s160
      %s162 = smul.u32 32, %s14
      %p163 = scmp.lt.s32.totalorder %s162, 63
      %s164 = scalar_select %p163, %s162, 63
      %s165 = smul.addr %s164, 8
      %s166 = scalar_lea.vmem %s0, %s165
      %s167 = smul.u32 32, %s14
      %s168 = smul.u32 32, %s14
      %p169 = scmp.lt.s32.totalorder %s168, 63
      %s170 = scalar_select %p169, %s168, 63
      %s171 = smul.addr %s170, 8
      %s172 = scalar_lea.vmem %s3, %s171
      %s173 = smul.u32 32, %s14
      %v174 = vld [vmem:[%s166] sm:$0xff]
      %v175 = vld [vmem:[%s166 + $0x8] sm:$0xff]
      %v176 = vld [vmem:[%s166 + $0x10] sm:$0xff]
      %v177 = vld [vmem:[%s166 + $0x18] sm:$0xff]
      %v178 = vld [vmem:[%s166 + $0x20] sm:$0xff]
      %v179 = vld [vmem:[%s166 + $0x28] sm:$0xff]
      %v180 = vld [vmem:[%s166 + $0x30] sm:$0xff]
      %v181 = vld [vmem:[%s166 + $0x38] sm:$0xff]
      %v182 = vld [vmem:[%s166 + $0x40] sm:$0xff]
      %v183 = vld [vmem:[%s166 + $0x48] sm:$0xff]
      %v184 = vld [vmem:[%s166 + $0x50] sm:$0xff]
      %v185 = vld [vmem:[%s166 + $0x58] sm:$0xff]
      %v186 = vld [vmem:[%s166 + $0x60] sm:$0xff]
      %v187 = vld [vmem:[%s166 + $0x68] sm:$0xff]
      %v188 = vld [vmem:[%s166 + $0x70] sm:$0xff]
      %v189 = vld [vmem:[%s166 + $0x78] sm:$0xff]
      %v190 = vld [vmem:[%s166 + $0x80] sm:$0xff]
      %v191 = vld [vmem:[%s166 + $0x88] sm:$0xff]
      %v192 = vld [vmem:[%s166 + $0x90] sm:$0xff]
      %v193 = vld [vmem:[%s166 + $0x98] sm:$0xff]
      %v194 = vld [vmem:[%s166 + $0xa0] sm:$0xff]
      %v195 = vld [vmem:[%s166 + $0xa8] sm:$0xff]
      %v196 = vld [vmem:[%s166 + $0xb0] sm:$0xff]
      %v197 = vld [vmem:[%s166 + $0xb8] sm:$0xff]
      %v198 = vld [vmem:[%s166 + $0xc0] sm:$0xff]
      %v199 = vld [vmem:[%s166 + $0xc8] sm:$0xff]
      %v200 = vld [vmem:[%s166 + $0xd0] sm:$0xff]
      %v201 = vld [vmem:[%s166 + $0xd8] sm:$0xff]
      %v202 = vld [vmem:[%s166 + $0xe0] sm:$0xff]
      %v203 = vld [vmem:[%s166 + $0xe8] sm:$0xff]
      %v204 = vld [vmem:[%s166 + $0xf0] sm:$0xff]
      %v205 = vld [vmem:[%s166 + $0xf8] sm:$0xff]
      %v206 = vld [vmem:[%s1] sm:$0xff]
      %v207 = vld [vmem:[%s1 + $0x8] sm:$0xff]
      %v208 = vld [vmem:[%s2] sm:$0x1]
      %v210 = vlaneseq
      %v211 = vshrl.u32 %v210, 7
      %v212 = vsub.s32 0, %v211
      %v213 = vrot.slane %v208, %v212
      %vm215 = vcmask 130048
      %v217 = vsel %vm215, %v174, 0
      %v220 = vsel %vm215, %v175, 0
      %v223 = vsel %vm215, %v176, 0
      %v226 = vsel %vm215, %v177, 0
      %v229 = vsel %vm215, %v178, 0
      %v232 = vsel %vm215, %v179, 0
      %v235 = vsel %vm215, %v180, 0
      %v238 = vsel %vm215, %v181, 0
      %v241 = vsel %vm215, %v182, 0
      %v244 = vsel %vm215, %v183, 0
      %v247 = vsel %vm215, %v184, 0
      %v250 = vsel %vm215, %v185, 0
      %v253 = vsel %vm215, %v186, 0
      %v256 = vsel %vm215, %v187, 0
      %v259 = vsel %vm215, %v188, 0
      %v262 = vsel %vm215, %v189, 0
      %v265 = vsel %vm215, %v190, 0
      %v268 = vsel %vm215, %v191, 0
      %v271 = vsel %vm215, %v192, 0
      %v274 = vsel %vm215, %v193, 0
      %v277 = vsel %vm215, %v194, 0
      %v280 = vsel %vm215, %v195, 0
      %v283 = vsel %vm215, %v196, 0
      %v286 = vsel %vm215, %v197, 0
      %v289 = vsel %vm215, %v198, 0
      %v292 = vsel %vm215, %v199, 0
      %v295 = vsel %vm215, %v200, 0
      %v298 = vsel %vm215, %v201, 0
      %v301 = vsel %vm215, %v202, 0
      %v304 = vsel %vm215, %v203, 0
      %v307 = vsel %vm215, %v204, 0
      %v310 = vsel %vm215, %v205, 0
      %312 = vmatprep.subr.mxu0 0.0
      %313 = vmatpush1.msra.mxu0 %v206
      %314 = vmatprep.subr.mxu0 0.0
      %315 = vmatpush1.msra.mxu0 %v207
      %316 = vmatprep.subr.mxu0 0.0
      %317 = vmatpush1.msra.mxu0 0.0
      %318 = vmatprep.subr.mxu0 0.0
      %319 = vmatpush1.msra.mxu0 0.0
      %320 = vmatprep.subr.mxu0 0.0
      %321 = vmatpush1.msra.mxu0 0.0
      %322 = vmatprep.subr.mxu0 0.0
      %323 = vmatpush1.msra.mxu0 0.0
      %324 = vmatprep.subr.mxu0 0.0
      %325 = vmatpush1.msra.mxu0 0.0
      %326 = vmatprep.subr.mxu0 0.0
      %327 = vmatpush1.msra.mxu0 0.0
      %328 = vmatprep.subr.mxu0 0.0
      %329 = vmatpush1.msra.mxu0 0.0
      %330 = vmatprep.subr.mxu0 0.0
      %331 = vmatpush1.msra.mxu0 0.0
      %332 = vmatprep.subr.mxu0 0.0
      %333 = vmatpush1.msra.mxu0 0.0
      %334 = vmatprep.subr.mxu0 0.0
      %335 = vmatpush1.msra.mxu0 0.0
      %336 = vmatprep.subr.mxu0 0.0
      %337 = vmatpush1.msra.mxu0 0.0
      %338 = vmatprep.subr.mxu0 0.0
      %339 = vmatpush1.msra.mxu0 0.0
      %340 = vmatprep.subr.mxu0 0.0
      %341 = vmatpush1.msra.mxu0 0.0
      %342 = vmatprep.subr.mxu0 0.0
      %343 = vmatpush1.msra.mxu0 0.0
      %344 = vmatprep.subr.mxu0 0.0
      %345 = vmatpush1.msra.mxu0 0.0
      %346 = vmatprep.subr.mxu0 0.0
      %347 = vmatpush1.msra.mxu0 0.0
      %348 = vmatprep.subr.mxu0 0.0
      %349 = vmatpush1.msra.mxu0 0.0
      %350 = vmatprep.subr.mxu0 0.0
      %351 = vmatpush1.msra.mxu0 0.0
      %352 = vmatprep.subr.mxu0 0.0
      %353 = vmatpush1.msra.mxu0 0.0
      %354 = vmatprep.subr.mxu0 0.0
      %355 = vmatpush1.msra.mxu0 0.0
      %356 = vmatprep.subr.mxu0 0.0
      %357 = vmatpush1.msra.mxu0 0.0
      %358 = vmatprep.subr.mxu0 0.0
      %359 = vmatpush1.msra.mxu0 0.0
      %360 = vmatprep.subr.mxu0 0.0
      %361 = vmatpush1.msra.mxu0 0.0
      %362 = vmatprep.subr.mxu0 0.0
      %363 = vmatpush1.msra.mxu0 0.0
      %364 = vmatprep.subr.mxu0 0.0
      %365 = vmatpush1.msra.mxu0 0.0
      %366 = vmatprep.subr.mxu0 0.0
      %367 = vmatpush1.msra.mxu0 0.0
      %368 = vmatprep.subr.mxu0 0.0
      %369 = vmatpush1.msra.mxu0 0.0
      %370 = vmatprep.subr.mxu0 0.0
      %371 = vmatpush1.msra.mxu0 0.0
      %372 = vmatprep.subr.mxu0 0.0
      %373 = vmatpush1.msra.mxu0 0.0
      %374 = vmatprep.subr.mxu0 0.0
      %375 = vmatpush1.msra.mxu0 0.0
      %376 = vmatprep.mubr.f32.mxu0 0.0
      %377 = vmatmul.mubr.f32.gmra.mrb[0].mxu0 %v217
      %v378 = vpop.f32.mrb[0].mxu0
      %v379 = vadd.f32 %v213, %v378
      %v380 = vpop.f32.mrb[0].mxu0
      %381 = vmatprep.mubr.f32.mxu0 0.0
      %382 = vmatmul.mubr.f32.gmra.mrb[0].mxu0 %v220
      %v383 = vpop.f32.mrb[0].mxu0
      %v384 = vadd.f32 %v213, %v383
      %v385 = vpop.f32.mrb[0].mxu0
      %386 = vmatprep.mubr.f32.mxu0 0.0
      %387 = vmatmul.mubr.f32.gmra.mrb[0].mxu0 %v223
      %v388 = vpop.f32.mrb[0].mxu0
      %v389 = vadd.f32 %v213, %v388
      %v390 = vpop.f32.mrb[0].mxu0
      %391 = vmatprep.mubr.f32.mxu0 0.0
      %392 = vmatmul.mubr.f32.gmra.mrb[0].mxu0 %v226
      %v393 = vpop.f32.mrb[0].mxu0
      %v394 = vadd.f32 %v213, %v393
      %v395 = vpop.f32.mrb[0].mxu0
      %396 = vmatprep.mubr.f32.mxu0 0.0
      %397 = vmatmul.mubr.f32.gmra.mrb[0].mxu0 %v229
      %v398 = vpop.f32.mrb[0].mxu0
      %v399 = vadd.f32 %v213, %v398
      %v400 = vpop.f32.mrb[0].mxu0
      %401 = vmatprep.mubr.f32.mxu0 0.0
      %402 = vmatmul.mubr.f32.gmra.mrb[0].mxu0 %v232
      %v403 = vpop.f32.mrb[0].mxu0
      %v404 = vadd.f32 %v213, %v403
      %v405 = vpop.f32.mrb[0].mxu0
      %406 = vmatprep.mubr.f32.mxu0 0.0
      %407 = vmatmul.mubr.f32.gmra.mrb[0].mxu0 %v235
      %v408 = vpop.f32.mrb[0].mxu0
      %v409 = vadd.f32 %v213, %v408
      %v410 = vpop.f32.mrb[0].mxu0
      %411 = vmatprep.mubr.f32.mxu0 0.0
      %412 = vmatmul.mubr.f32.gmra.mrb[0].mxu0 %v238
      %v413 = vpop.f32.mrb[0].mxu0
      %v414 = vadd.f32 %v213, %v413
      %v415 = vpop.f32.mrb[0].mxu0
      %416 = vmatprep.mubr.f32.mxu0 0.0
      %417 = vmatmul.mubr.f32.gmra.mrb[0].mxu0 %v241
      %v418 = vpop.f32.mrb[0].mxu0
      %v419 = vadd.f32 %v213, %v418
      %v420 = vpop.f32.mrb[0].mxu0
      %421 = vmatprep.mubr.f32.mxu0 0.0
      %422 = vmatmul.mubr.f32.gmra.mrb[0].mxu0 %v244
      %v423 = vpop.f32.mrb[0].mxu0
      %v424 = vadd.f32 %v213, %v423
      %v425 = vpop.f32.mrb[0].mxu0
      %426 = vmatprep.mubr.f32.mxu0 0.0
      %427 = vmatmul.mubr.f32.gmra.mrb[0].mxu0 %v247
      %v428 = vpop.f32.mrb[0].mxu0
      %v429 = vadd.f32 %v213, %v428
      %v430 = vpop.f32.mrb[0].mxu0
      %431 = vmatprep.mubr.f32.mxu0 0.0
      %432 = vmatmul.mubr.f32.gmra.mrb[0].mxu0 %v250
      %v433 = vpop.f32.mrb[0].mxu0
      %v434 = vadd.f32 %v213, %v433
      %v435 = vpop.f32.mrb[0].mxu0
      %436 = vmatprep.mubr.f32.mxu0 0.0
      %437 = vmatmul.mubr.f32.gmra.mrb[0].mxu0 %v253
      %v438 = vpop.f32.mrb[0].mxu0
      %v439 = vadd.f32 %v213, %v438
      %v440 = vpop.f32.mrb[0].mxu0
      %441 = vmatprep.mubr.f32.mxu0 0.0
      %442 = vmatmul.mubr.f32.gmra.mrb[0].mxu0 %v256
      %v443 = vpop.f32.mrb[0].mxu0
      %v444 = vadd.f32 %v213, %v443
      %v445 = vpop.f32.mrb[0].mxu0
      %446 = vmatprep.mubr.f32.mxu0 0.0
      %447 = vmatmul.mubr.f32.gmra.mrb[0].mxu0 %v259
      %v448 = vpop.f32.mrb[0].mxu0
      %v449 = vadd.f32 %v213, %v448
      %v450 = vpop.f32.mrb[0].mxu0
      %451 = vmatprep.mubr.f32.mxu0 0.0
      %452 = vmatmul.mubr.f32.gmra.mrb[0].mxu0 %v262
      %v453 = vpop.f32.mrb[0].mxu0
      %v454 = vadd.f32 %v213, %v453
      %v455 = vpop.f32.mrb[0].mxu0
      %456 = vmatprep.mubr.f32.mxu0 0.0
      %457 = vmatmul.mubr.f32.gmra.mrb[0].mxu0 %v265
      %v458 = vpop.f32.mrb[0].mxu0
      %v459 = vadd.f32 %v213, %v458
      %v460 = vpop.f32.mrb[0].mxu0
      %461 = vmatprep.mubr.f32.mxu0 0.0
      %462 = vmatmul.mubr.f32.gmra.mrb[0].mxu0 %v268
      %v463 = vpop.f32.mrb[0].mxu0
      %v464 = vadd.f32 %v213, %v463
      %v465 = vpop.f32.mrb[0].mxu0
      %466 = vmatprep.mubr.f32.mxu0 0.0
      %467 = vmatmul.mubr.f32.gmra.mrb[0].mxu0 %v271
      %v468 = vpop.f32.mrb[0].mxu0
      %v469 = vadd.f32 %v213, %v468
      %v470 = vpop.f32.mrb[0].mxu0
      %471 = vmatprep.mubr.f32.mxu0 0.0
      %472 = vmatmul.mubr.f32.gmra.mrb[0].mxu0 %v274
      %v473 = vpop.f32.mrb[0].mxu0
      %v474 = vadd.f32 %v213, %v473
      %v475 = vpop.f32.mrb[0].mxu0
      %476 = vmatprep.mubr.f32.mxu0 0.0
      %477 = vmatmul.mubr.f32.gmra.mrb[0].mxu0 %v277
      %v478 = vpop.f32.mrb[0].mxu0
      %v479 = vadd.f32 %v213, %v478
      %v480 = vpop.f32.mrb[0].mxu0
      %481 = vmatprep.mubr.f32.mxu0 0.0
      %482 = vmatmul.mubr.f32.gmra.mrb[0].mxu0 %v280
      %v483 = vpop.f32.mrb[0].mxu0
      %v484 = vadd.f32 %v213, %v483
      %v485 = vpop.f32.mrb[0].mxu0
      %486 = vmatprep.mubr.f32.mxu0 0.0
      %487 = vmatmul.mubr.f32.gmra.mrb[0].mxu0 %v283
      %v488 = vpop.f32.mrb[0].mxu0
      %v489 = vadd.f32 %v213, %v488
      %v490 = vpop.f32.mrb[0].mxu0
      %491 = vmatprep.mubr.f32.mxu0 0.0
      %492 = vmatmul.mubr.f32.gmra.mrb[0].mxu0 %v286
      %v493 = vpop.f32.mrb[0].mxu0
      %v494 = vadd.f32 %v213, %v493
      %v495 = vpop.f32.mrb[0].mxu0
      %496 = vmatprep.mubr.f32.mxu0 0.0
      %497 = vmatmul.mubr.f32.gmra.mrb[0].mxu0 %v289
      %v498 = vpop.f32.mrb[0].mxu0
      %v499 = vadd.f32 %v213, %v498
      %v500 = vpop.f32.mrb[0].mxu0
      %501 = vmatprep.mubr.f32.mxu0 0.0
      %502 = vmatmul.mubr.f32.gmra.mrb[0].mxu0 %v292
      %v503 = vpop.f32.mrb[0].mxu0
      %v504 = vadd.f32 %v213, %v503
      %v505 = vpop.f32.mrb[0].mxu0
      %506 = vmatprep.mubr.f32.mxu0 0.0
      %507 = vmatmul.mubr.f32.gmra.mrb[0].mxu0 %v295
      %v508 = vpop.f32.mrb[0].mxu0
      %v509 = vadd.f32 %v213, %v508
      %v510 = vpop.f32.mrb[0].mxu0
      %511 = vmatprep.mubr.f32.mxu0 0.0
      %512 = vmatmul.mubr.f32.gmra.mrb[0].mxu0 %v298
      %v513 = vpop.f32.mrb[0].mxu0
      %v514 = vadd.f32 %v213, %v513
      %v515 = vpop.f32.mrb[0].mxu0
      %516 = vmatprep.mubr.f32.mxu0 0.0
      %517 = vmatmul.mubr.f32.gmra.mrb[0].mxu0 %v301
      %v518 = vpop.f32.mrb[0].mxu0
      %v519 = vadd.f32 %v213, %v518
      %v520 = vpop.f32.mrb[0].mxu0
      %521 = vmatprep.mubr.f32.mxu0 0.0
      %522 = vmatmul.mubr.f32.gmra.mrb[0].mxu0 %v304
      %v523 = vpop.f32.mrb[0].mxu0
      %v524 = vadd.f32 %v213, %v523
      %v525 = vpop.f32.mrb[0].mxu0
      %526 = vmatprep.mubr.f32.mxu0 0.0
      %527 = vmatmul.mubr.f32.gmra.mrb[0].mxu0 %v307
      %v528 = vpop.f32.mrb[0].mxu0
      %v529 = vadd.f32 %v213, %v528
      %v530 = vpop.f32.mrb[0].mxu0
      %531 = vmatprep.mubr.f32.mxu0 0.0
      %532 = vmatmul.mubr.f32.gmra.mrb[0].mxu0 %v310
      %v533 = vpop.f32.mrb[0].mxu0
      %v534 = vadd.f32 %v213, %v533
      %v535 = vpop.f32.mrb[0].mxu0
      %536 = vdwg.mxu0
      %vm537 = vcmask 523264
      %538 = vst.msk [vmem:[%s172] sm:$0xff] %vm537, %v379
      %539 = vst.msk [vmem:[%s172 + $0x8] sm:$0xff] %vm537, %v384
      %540 = vst.msk [vmem:[%s172 + $0x10] sm:$0xff] %vm537, %v389
      %541 = vst.msk [vmem:[%s172 + $0x18] sm:$0xff] %vm537, %v394
      %542 = vst.msk [vmem:[%s172 + $0x20] sm:$0xff] %vm537, %v399
      %543 = vst.msk [vmem:[%s172 + $0x28] sm:$0xff] %vm537, %v404
      %544 = vst.msk [vmem:[%s172 + $0x30] sm:$0xff] %vm537, %v409
      %545 = vst.msk [vmem:[%s172 + $0x38] sm:$0xff] %vm537, %v414
      %546 = vst.msk [vmem:[%s172 + $0x40] sm:$0xff] %vm537, %v419
      %547 = vst.msk [vmem:[%s172 + $0x48] sm:$0xff] %vm537, %v424
      %548 = vst.msk [vmem:[%s172 + $0x50] sm:$0xff] %vm537, %v429
      %549 = vst.msk [vmem:[%s172 + $0x58] sm:$0xff] %vm537, %v434
      %550 = vst.msk [vmem:[%s172 + $0x60] sm:$0xff] %vm537, %v439
      %551 = vst.msk [vmem:[%s172 + $0x68] sm:$0xff] %vm537, %v444
      %552 = vst.msk [vmem:[%s172 + $0x70] sm:$0xff] %vm537, %v449
      %553 = vst.msk [vmem:[%s172 + $0x78] sm:$0xff] %vm537, %v454
      %554 = vst.msk [vmem:[%s172 + $0x80] sm:$0xff] %vm537, %v459
      %555 = vst.msk [vmem:[%s172 + $0x88] sm:$0xff] %vm537, %v464
      %556 = vst.msk [vmem:[%s172 + $0x90] sm:$0xff] %vm537, %v469
      %557 = vst.msk [vmem:[%s172 + $0x98] sm:$0xff] %vm537, %v474
      %558 = vst.msk [vmem:[%s172 + $0xa0] sm:$0xff] %vm537, %v479
      %559 = vst.msk [vmem:[%s172 + $0xa8] sm:$0xff] %vm537, %v484
      %560 = vst.msk [vmem:[%s172 + $0xb0] sm:$0xff] %vm537, %v489
      %561 = vst.msk [vmem:[%s172 + $0xb8] sm:$0xff] %vm537, %v494
      %562 = vst.msk [vmem:[%s172 + $0xc0] sm:$0xff] %vm537, %v499
      %563 = vst.msk [vmem:[%s172 + $0xc8] sm:$0xff] %vm537, %v504
      %564 = vst.msk [vmem:[%s172 + $0xd0] sm:$0xff] %vm537, %v509
      %565 = vst.msk [vmem:[%s172 + $0xd8] sm:$0xff] %vm537, %v514
      %566 = vst.msk [vmem:[%s172 + $0xe0] sm:$0xff] %vm537, %v519
      %567 = vst.msk [vmem:[%s172 + $0xe8] sm:$0xff] %vm537, %v524
      %568 = vst.msk [vmem:[%s172 + $0xf0] sm:$0xff] %vm537, %v529
      %569 = vst.msk [vmem:[%s172 + $0xf8] sm:$0xff] %vm537, %v534
      %s570 = smul.u32 32, %s14
      %p571 = scmp.lt.s32.totalorder %s570, 63
      %s572 = scalar_select %p571, %s570, 63
      %s573 = smul.addr %s572, 8
      %s574 = scalar_lea.vmem %s3, %s573
      // Predicated region
      $region33: #{_lambda_.30} parent=31 // pred_check
        %p575 = pneg %p100
      $region34: #{_lambda_.30} parent=31 // pred_check_branch
        %577 = sbr.rel (%p575) target = $region36
      $region35: #{_lambda_.30} parent=31 // pred_region
        %s578 = smul.u32 32, %s14
      $region36: #{_lambda_.30} parent=31 // pred_fallthru
        _
    $region32: #{_lambda_.30} parent=5 // pred_fallthru
      _
    %p579 = scmp.le.s32.totalorder 2, %s9
    // Predicated region
    $region37: #{_lambda_.30} parent=5 // pred_check
      %p580 = pneg %p579
    $region38: #{_lambda_.30} parent=5 // pred_check_branch
      %582 = sbr.rel (%p580) target = $region40
    $region39: #{_lambda_.30} parent=5 // pred_region
      %s583 = ssub.s32 %s9, 2
      // Predicated region
      $region41: #{_lambda_.30} parent=39 // pred_check
        %p584 = pneg %p106
      $region42: #{_lambda_.30} parent=39 // pred_check_branch
        %586 = sbr.rel (%p584) target = $region44
      $region43: #{_lambda_.30} parent=39 // pred_region
        %s587 = smul.u32 32, %s15
        %p588 = scmp.lt.s32.totalorder %s587, 63
        %s589 = scalar_select %p588, %s587, 63
        %s590 = smul.addr %s589, 8
        %s591 = scalar_lea.vmem %s3, %s590
      $region44: #{_lambda_.30} parent=39 // pred_fallthru
        _
    $region40: #{_lambda_.30} parent=5 // pred_fallthru
      _
  $region6: #{_lambda_.30} parent=0 // loop_footer
    %s13 = sadd.s32 1, %s9
  $region7: #{_lambda_.30} parent=0 // loop_footer_branch
    %8 = sbr.rel target = $region3
  $region8: #{_lambda_.30} parent=0 // loop_exit
    _

// kernel: _lambda_.31
$region0: #{_lambda_.31}
  #allocation0 [shape = 'u32[]', space=smem, size = 0x4, offset = 0x4, fixed_abs, tag = 'smem constant byte address 0x4 - core index']
  #allocation1 [shape = 'u32[144,128]{1,0:T(1,128)}', space=vmem, size = 0x12000, scoped, tag = 'internal scratch']
  %s0 = inlined_call_operand.vmem [shape: f32[512,576], index: 0, kind: input, shape index: {}]
  %s1 = inlined_call_operand.vmem [shape: f32[576,8], index: 1, kind: input, shape index: {}]
  %s2 = inlined_call_operand.vmem [shape: f32[1,8], index: 2, kind: input, shape index: {}]
  %s3 = inlined_call_operand.vmem [shape: f32[512,8], index: 3, kind: output, shape index: {}]
  %s4 = sld [smem:[#allocation0]]
  $region45: #{_lambda_.31} parent=0
    _
  %s6 = ssub.s32 1, %s4
  %s7 = scalar_select 0, %s6, %s4
  loop: start=0, step=1, limit=4
  $region2: #{_lambda_.31} parent=0 // loop_pre_header
    _
  $region3: #{_lambda_.31} parent=0 // loop_header
    %s9 = sphi 0, %s13
    %p10 = scmp.ge.s32.totalorder %s9, 4
    %s19 = sphi 0, %s21
    %s22 = sphi 0, %s19
    %s23 = sphi 0, %s22
    %s39 = sphi 0, %s23
    %s43 = sphi 0, %s43
    %s45 = sphi 0, %s43
    %s46 = sphi 0, %s45
    %s60 = sphi 0, %s46
    %s64 = sphi 0, %s64
    %s66 = sphi 0, %s64
    %s67 = sphi 0, %s66
    %s81 = sphi 0, %s67
    %s87 = sphi 0, %s89
    %s90 = sphi 0, %s87
    %s91 = sphi 0, %s90
    %s107 = sphi 0, %s91
  $region4: #{_lambda_.31} parent=0 // loop_header_branch
    %12 = sbr.rel (%p10) target = $region8
  $region5: #{_lambda_.31} parent=0 // loop_body
    %s14 = ssub.s32 %s9, 1
    %s15 = ssub.s32 %s9, 2
    %s16 = sadd.s32 %s9, 1
    %s17 = ssub.s32 %s9, %s16
    %p18 = scmp.eq.s32.totalorder %s17, 0
    %s20 = sadd.s32 %s19, 1
    %s21 = scalar_select %p18, %s19, %s20
    %p24 = pneg %p18
    %p25 = scmp.eq.s32.totalorder %s9, 1
    %p26 = por %p24, %p25
    %p27 = scmp.ne.s32.totalorder %s19, %s22
    %p28 = scmp.eq.s32.totalorder %s9, 0
    %p29 = por %p27, %p28
    %p30 = scmp.ne.s32.totalorder %s19, %s22
    %p31 = scmp.eq.s32.totalorder %s14, 1
    %p32 = por %p30, %p31
    %p33 = scmp.ne.s32.totalorder %s22, %s23
    %p34 = scmp.eq.s32.totalorder %s14, 0
    %p35 = por %p33, %p34
    %p36 = scmp.ne.s32.totalorder %s22, %s23
    %p37 = scmp.eq.s32.totalorder %s15, 1
    %p38 = por %p36, %p37
    %p40 = scmp.ne.s32.totalorder %s23, %s39
    %p41 = scmp.eq.s32.totalorder %s15, 0
    %p42 = por %p40, %p41
    %s44 = sadd.s32 %s43, 1
    %p47 = scmp.eq.s32.totalorder %s9, 1
    %p48 = scmp.ne.s32.totalorder %s43, %s45
    %p49 = scmp.eq.s32.totalorder %s9, 0
    %p50 = por %p48, %p49
    %p51 = scmp.ne.s32.totalorder %s43, %s45
    %p52 = scmp.eq.s32.totalorder %s14, 1
    %p53 = por %p51, %p52
    %p54 = scmp.ne.s32.totalorder %s45, %s46
    %p55 = scmp.eq.s32.totalorder %s14, 0
    %p56 = por %p54, %p55
    %p57 = scmp.ne.s32.totalorder %s45, %s46
    %p58 = scmp.eq.s32.totalorder %s15, 1
    %p59 = por %p57, %p58
    %p61 = scmp.ne.s32.totalorder %s46, %s60
    %p62 = scmp.eq.s32.totalorder %s15, 0
    %p63 = por %p61, %p62
    %s65 = sadd.s32 %s64, 1
    %p68 = scmp.eq.s32.totalorder %s9, 1
    %p69 = scmp.ne.s32.totalorder %s64, %s66
    %p70 = scmp.eq.s32.totalorder %s9, 0
    %p71 = por %p69, %p70
    %p72 = scmp.ne.s32.totalorder %s64, %s66
    %p73 = scmp.eq.s32.totalorder %s14, 1
    %p74 = por %p72, %p73
    %p75 = scmp.ne.s32.totalorder %s66, %s67
    %p76 = scmp.eq.s32.totalorder %s14, 0
    %p77 = por %p75, %p76
    %p78 = scmp.ne.s32.totalorder %s66, %s67
    %p79 = scmp.eq.s32.totalorder %s15, 1
    %p80 = por %p78, %p79
    %p82 = scmp.ne.s32.totalorder %s67, %s81
    %p83 = scmp.eq.s32.totalorder %s15, 0
    %p84 = por %p82, %p83
    %s85 = ssub.s32 %s9, %s16
    %p86 = scmp.eq.s32.totalorder %s85, 0
    %s88 = sadd.s32 %s87, 1
    %s89 = scalar_select %p86, %s87, %s88
    %p92 = pneg %p86
    %p93 = scmp.eq.s32.totalorder %s9, 1
    %p94 = por %p92, %p93
    %p95 = scmp.ne.s32.totalorder %s87, %s90
    %p96 = scmp.eq.s32.totalorder %s9, 0
    %p97 = por %p95, %p96
    %p98 = scmp.ne.s32.totalorder %s87, %s90
    %p99 = scmp.eq.s32.totalorder %s14, 1
    %p100 = por %p98, %p99
    %p101 = scmp.ne.s32.totalorder %s90, %s91
    %p102 = scmp.eq.s32.totalorder %s14, 0
    %p103 = por %p101, %p102
    %p104 = scmp.ne.s32.totalorder %s90, %s91
    %p105 = scmp.eq.s32.totalorder %s15, 1
    %p106 = por %p104, %p105
    %p108 = scmp.ne.s32.totalorder %s91, %s107
    %p109 = scmp.eq.s32.totalorder %s15, 0
    %p110 = por %p108, %p109
    %p111 = scmp.le.s32.totalorder 1, %s9
    %p112 = scmp.lt.s32.totalorder %s9, 3
    %p113 = pnand %p111, %p112
    %p114 = pneg %p113
    // Predicated region
    $region9: #{_lambda_.31} parent=5 // pred_check
      _
    $region10: #{_lambda_.31} parent=5 // pred_check_branch
      %116 = sbr.rel (%p113) target = $region12
    $region11: #{_lambda_.31} parent=5 // pred_region
      %s117 = ssub.s32 %s9, 1
      // Predicated region
      $region13: #{_lambda_.31} parent=11 // pred_check
        %p118 = pneg %p56
      $region14: #{_lambda_.31} parent=11 // pred_check_branch
        %120 = sbr.rel (%p118) target = $region16
      $region15: #{_lambda_.31} parent=11 // pred_region
        _
      $region16: #{_lambda_.31} parent=11 // pred_fallthru
        _
      // Predicated region
      $region17: #{_lambda_.31} parent=11 // pred_check
        %p121 = pneg %p77
      $region18: #{_lambda_.31} parent=11 // pred_check_branch
        %123 = sbr.rel (%p121) target = $region20
      $region19: #{_lambda_.31} parent=11 // pred_region
        _
      $region20: #{_lambda_.31} parent=11 // pred_fallthru
        _
    $region12: #{_lambda_.31} parent=5 // pred_fallthru
      _
    %p124 = scmp.lt.s32.totalorder %s9, 2
    // Predicated region
    $region21: #{_lambda_.31} parent=5 // pred_check
      %p125 = pneg %p124
    $region22: #{_lambda_.31} parent=5 // pred_check_branch
      %127 = sbr.rel (%p125) target = $region24
    $region23: #{_lambda_.31} parent=5 // pred_region
      // Predicated region
      $region25: #{_lambda_.31} parent=23 // pred_check
        %p128 = pneg %p29
      $region26: #{_lambda_.31} parent=23 // pred_check_branch
        %130 = sbr.rel (%p128) target = $region28
      $region27: #{_lambda_.31} parent=23 // pred_region
        %s131 = smul.u32 32, %s9
        %p132 = scmp.lt.s32.totalorder %s131, 63
        %s133 = scalar_select %p132, %s131, 63
        %s134 = smul.addr %s133, 5
        %s135 = smul.addr %s134, 8
        %s136 = scalar_lea.vmem %s0, %s135
        %s137 = smul.u32 32, %s9
      $region28: #{_lambda_.31} parent=23 // pred_fallthru
        _
    $region24: #{_lambda_.31} parent=5 // pred_fallthru
      _
    %p138 = scmp.le.s32.totalorder 1, %s9
    %p139 = scmp.lt.s32.totalorder %s9, 3
    %p140 = pnand %p138, %p139
    %p141 = pneg %p140
    // Predicated region
    $region29: #{_lambda_.31} parent=5 // pred_check
      _
    $region30: #{_lambda_.31} parent=5 // pred_check_branch
      %143 = sbr.rel (%p140) target = $region32
    $region31: #{_lambda_.31} parent=5 // pred_region
      %s144 = ssub.s32 %s9, 1
      %s145 = smul.u32 32, %s14
      %p146 = scmp.lt.s32.totalorder %s145, 63
      %s147 = scalar_select %p146, %s145, 63
      %s148 = smul.addr %s147, 5
      %s149 = smul.addr %s148, 8
      %s150 = scalar_lea.vmem %s0, %s149
      %p151 = pneg %p35
      %p152 = pneg %p32
      %p153 = pneg %p56
      %p154 = pneg %p53
      %p155 = pneg %p77
      %p156 = pneg %p74
      %p157 = pneg %p103
      %p158 = pneg %p100
      %s159 = smul.u32 32, %s14
      %p160 = scmp.lt.s32.totalorder %s159, 63
      %s161 = scalar_select %p160, %s159, 63
      %s162 = smul.addr %s161, 8
      %s163 = scalar_lea.vmem %s3, %s162
      %s164 = smul.u32 32, %s14
      %p165 = scmp.lt.s32.totalorder %s164, 63
      %s166 = scalar_select %p165, %s164, 63
      %s167 = smul.addr %s166, 5
      %s168 = smul.addr %s167, 8
      %s169 = scalar_lea.vmem %s0, %s168
      %s170 = smul.u32 32, %s14
      %s171 = smul.u32 32, %s14
      %p172 = scmp.lt.s32.totalorder %s171, 63
      %s173 = scalar_select %p172, %s171, 63
      %s174 = smul.addr %s173, 8
      %s175 = scalar_lea.vmem %s3, %s174
      %s176 = smul.u32 32, %s14
      %v177 = vld [vmem:[%s169] sm:$0xff]
      %v178 = vld [vmem:[%s169 + $0x8] sm:$0xff]
      %v179 = vld [vmem:[%s169 + $0x10] sm:$0xff]
      %v180 = vld [vmem:[%s169 + $0x18] sm:$0xff]
      %v181 = vld [vmem:[%s169 + $0x20] sm:$0xff]
      %v182 = vld [vmem:[%s169 + $0x28] sm:$0xff]
      %v183 = vld [vmem:[%s169 + $0x30] sm:$0xff]
      %v184 = vld [vmem:[%s169 + $0x38] sm:$0xff]
      %v185 = vld [vmem:[%s169 + $0x40] sm:$0xff]
      %v186 = vld [vmem:[%s169 + $0x48] sm:$0xff]
      %v187 = vld [vmem:[%s169 + $0x50] sm:$0xff]
      %v188 = vld [vmem:[%s169 + $0x58] sm:$0xff]
      %v189 = vld [vmem:[%s169 + $0x60] sm:$0xff]
      %v190 = vld [vmem:[%s169 + $0x68] sm:$0xff]
      %v191 = vld [vmem:[%s169 + $0x70] sm:$0xff]
      %v192 = vld [vmem:[%s169 + $0x78] sm:$0xff]
      %v193 = vld [vmem:[%s169 + $0x80] sm:$0xff]
      %v194 = vld [vmem:[%s169 + $0x88] sm:$0xff]
      %v195 = vld [vmem:[%s169 + $0x90] sm:$0xff]
      %v196 = vld [vmem:[%s169 + $0x98] sm:$0xff]
      %v197 = vld [vmem:[%s169 + $0xa0] sm:$0xff]
      %v198 = vld [vmem:[%s169 + $0xa8] sm:$0xff]
      %v199 = vld [vmem:[%s169 + $0xb0] sm:$0xff]
      %v200 = vld [vmem:[%s169 + $0xb8] sm:$0xff]
      %v201 = vld [vmem:[%s169 + $0xc0] sm:$0xff]
      %v202 = vld [vmem:[%s169 + $0xc8] sm:$0xff]
      %v203 = vld [vmem:[%s169 + $0xd0] sm:$0xff]
      %v204 = vld [vmem:[%s169 + $0xd8] sm:$0xff]
      %v205 = vld [vmem:[%s169 + $0xe0] sm:$0xff]
      %v206 = vld [vmem:[%s169 + $0xe8] sm:$0xff]
      %v207 = vld [vmem:[%s169 + $0xf0] sm:$0xff]
      %v208 = vld [vmem:[%s169 + $0xf8] sm:$0xff]
      %v209 = vld [vmem:[%s169 + $0x100] sm:$0xff]
      %v210 = vld [vmem:[%s169 + $0x108] sm:$0xff]
      %v211 = vld [vmem:[%s169 + $0x110] sm:$0xff]
      %v212 = vld [vmem:[%s169 + $0x118] sm:$0xff]
      %v213 = vld [vmem:[%s169 + $0x120] sm:$0xff]
      %v214 = vld [vmem:[%s169 + $0x128] sm:$0xff]
      %v215 = vld [vmem:[%s169 + $0x130] sm:$0xff]
      %v216 = vld [vmem:[%s169 + $0x138] sm:$0xff]
      %v217 = vld [vmem:[%s169 + $0x140] sm:$0xff]
      %v218 = vld [vmem:[%s169 + $0x148] sm:$0xff]
      %v219 = vld [vmem:[%s169 + $0x150] sm:$0xff]
      %v220 = vld [vmem:[%s169 + $0x158] sm:$0xff]
      %v221 = vld [vmem:[%s169 + $0x160] sm:$0xff]
      %v222 = vld [vmem:[%s169 + $0x168] sm:$0xff]
      %v223 = vld [vmem:[%s169 + $0x170] sm:$0xff]
      %v224 = vld [vmem:[%s169 + $0x178] sm:$0xff]
      %v225 = vld [vmem:[%s169 + $0x180] sm:$0xff]
      %v226 = vld [vmem:[%s169 + $0x188] sm:$0xff]
      %v227 = vld [vmem:[%s169 + $0x190] sm:$0xff]
      %v228 = vld [vmem:[%s169 + $0x198] sm:$0xff]
      %v229 = vld [vmem:[%s169 + $0x1a0] sm:$0xff]
      %v230 = vld [vmem:[%s169 + $0x1a8] sm:$0xff]
      %v231 = vld [vmem:[%s169 + $0x1b0] sm:$0xff]
      %v232 = vld [vmem:[%s169 + $0x1b8] sm:$0xff]
      %v233 = vld [vmem:[%s169 + $0x1c0] sm:$0xff]
      %v234 = vld [vmem:[%s169 + $0x1c8] sm:$0xff]
      %v235 = vld [vmem:[%s169 + $0x1d0] sm:$0xff]
      %v236 = vld [vmem:[%s169 + $0x1d8] sm:$0xff]
      %v237 = vld [vmem:[%s169 + $0x1e0] sm:$0xff]
      %v238 = vld [vmem:[%s169 + $0x1e8] sm:$0xff]
      %v239 = vld [vmem:[%s169 + $0x1f0] sm:$0xff]
      %v240 = vld [vmem:[%s169 + $0x1f8] sm:$0xff]
      %v241 = vld [vmem:[%s169 + $0x200] sm:$0xff]
      %v242 = vld [vmem:[%s169 + $0x208] sm:$0xff]
      %v243 = vld [vmem:[%s169 + $0x210] sm:$0xff]
      %v244 = vld [vmem:[%s169 + $0x218] sm:$0xff]
      %v245 = vld [vmem:[%s169 + $0x220] sm:$0xff]
      %v246 = vld [vmem:[%s169 + $0x228] sm:$0xff]
      %v247 = vld [vmem:[%s169 + $0x230] sm:$0xff]
      %v248 = vld [vmem:[%s169 + $0x238] sm:$0xff]
      %v249 = vld [vmem:[%s169 + $0x240] sm:$0xff]
      %v250 = vld [vmem:[%s169 + $0x248] sm:$0xff]
      %v251 = vld [vmem:[%s169 + $0x250] sm:$0xff]
      %v252 = vld [vmem:[%s169 + $0x258] sm:$0xff]
      %v253 = vld [vmem:[%s169 + $0x260] sm:$0xff]
      %v254 = vld [vmem:[%s169 + $0x268] sm:$0xff]
      %v255 = vld [vmem:[%s169 + $0x270] sm:$0xff]
      %v256 = vld [vmem:[%s169 + $0x278] sm:$0xff]
      %v257 = vld [vmem:[%s169 + $0x280] sm:$0xff]
      %v258 = vld [vmem:[%s169 + $0x288] sm:$0xff]
      %v259 = vld [vmem:[%s169 + $0x290] sm:$0xff]
      %v260 = vld [vmem:[%s169 + $0x298] sm:$0xff]
      %v261 = vld [vmem:[%s169 + $0x2a0] sm:$0xff]
      %v262 = vld [vmem:[%s169 + $0x2a8] sm:$0xff]
      %v263 = vld [vmem:[%s169 + $0x2b0] sm:$0xff]
      %v264 = vld [vmem:[%s169 + $0x2b8] sm:$0xff]
      %v265 = vld [vmem:[%s169 + $0x2c0] sm:$0xff]
      %v266 = vld [vmem:[%s169 + $0x2c8] sm:$0xff]
      %v267 = vld [vmem:[%s169 + $0x2d0] sm:$0xff]
      %v268 = vld [vmem:[%s169 + $0x2d8] sm:$0xff]
      %v269 = vld [vmem:[%s169 + $0x2e0] sm:$0xff]
      %v270 = vld [vmem:[%s169 + $0x2e8] sm:$0xff]
      %v271 = vld [vmem:[%s169 + $0x2f0] sm:$0xff]
      %v272 = vld [vmem:[%s169 + $0x2f8] sm:$0xff]
      %v273 = vld [vmem:[%s169 + $0x300] sm:$0xff]
      %v274 = vld [vmem:[%s169 + $0x308] sm:$0xff]
      %v275 = vld [vmem:[%s169 + $0x310] sm:$0xff]
      %v276 = vld [vmem:[%s169 + $0x318] sm:$0xff]
      %v277 = vld [vmem:[%s169 + $0x320] sm:$0xff]
      %v278 = vld [vmem:[%s169 + $0x328] sm:$0xff]
      %v279 = vld [vmem:[%s169 + $0x330] sm:$0xff]
      %v280 = vld [vmem:[%s169 + $0x338] sm:$0xff]
      %v281 = vld [vmem:[%s169 + $0x340] sm:$0xff]
      %v282 = vld [vmem:[%s169 + $0x348] sm:$0xff]
      %v283 = vld [vmem:[%s169 + $0x350] sm:$0xff]
      %v284 = vld [vmem:[%s169 + $0x358] sm:$0xff]
      %v285 = vld [vmem:[%s169 + $0x360] sm:$0xff]
      %v286 = vld [vmem:[%s169 + $0x368] sm:$0xff]
      %v287 = vld [vmem:[%s169 + $0x370] sm:$0xff]
      %v288 = vld [vmem:[%s169 + $0x378] sm:$0xff]
      %v289 = vld [vmem:[%s169 + $0x380] sm:$0xff]
      %v290 = vld [vmem:[%s169 + $0x388] sm:$0xff]
      %v291 = vld [vmem:[%s169 + $0x390] sm:$0xff]
      %v292 = vld [vmem:[%s169 + $0x398] sm:$0xff]
      %v293 = vld [vmem:[%s169 + $0x3a0] sm:$0xff]
      %v294 = vld [vmem:[%s169 + $0x3a8] sm:$0xff]
      %v295 = vld [vmem:[%s169 + $0x3b0] sm:$0xff]
      %v296 = vld [vmem:[%s169 + $0x3b8] sm:$0xff]
      %v297 = vld [vmem:[%s169 + $0x3c0] sm:$0xff]
      %v298 = vld [vmem:[%s169 + $0x3c8] sm:$0xff]
      %v299 = vld [vmem:[%s169 + $0x3d0] sm:$0xff]
      %v300 = vld [vmem:[%s169 + $0x3d8] sm:$0xff]
      %v301 = vld [vmem:[%s169 + $0x3e0] sm:$0xff]
      %v302 = vld [vmem:[%s169 + $0x3e8] sm:$0xff]
      %v303 = vld [vmem:[%s169 + $0x3f0] sm:$0xff]
      %v304 = vld [vmem:[%s169 + $0x3f8] sm:$0xff]
      %v305 = vld [vmem:[%s169 + $0x400] sm:$0xff]
      %v306 = vld [vmem:[%s169 + $0x408] sm:$0xff]
      %v307 = vld [vmem:[%s169 + $0x410] sm:$0xff]
      %v308 = vld [vmem:[%s169 + $0x418] sm:$0xff]
      %v309 = vld [vmem:[%s169 + $0x420] sm:$0xff]
      %v310 = vld [vmem:[%s169 + $0x428] sm:$0xff]
      %v311 = vld [vmem:[%s169 + $0x430] sm:$0xff]
      %v312 = vld [vmem:[%s169 + $0x438] sm:$0xff]
      %v313 = vld [vmem:[%s169 + $0x440] sm:$0xff]
      %v314 = vld [vmem:[%s169 + $0x448] sm:$0xff]
      %v315 = vld [vmem:[%s169 + $0x450] sm:$0xff]
      %v316 = vld [vmem:[%s169 + $0x458] sm:$0xff]
      %v317 = vld [vmem:[%s169 + $0x460] sm:$0xff]
      %v318 = vld [vmem:[%s169 + $0x468] sm:$0xff]
      %v319 = vld [vmem:[%s169 + $0x470] sm:$0xff]
      %v320 = vld [vmem:[%s169 + $0x478] sm:$0xff]
      %v321 = vld [vmem:[%s169 + $0x480] sm:$0xff]
      %v322 = vld [vmem:[%s169 + $0x488] sm:$0xff]
      %v323 = vld [vmem:[%s169 + $0x490] sm:$0xff]
      %v324 = vld [vmem:[%s169 + $0x498] sm:$0xff]
      %v325 = vld [vmem:[%s169 + $0x4a0] sm:$0xff]
      %v326 = vld [vmem:[%s169 + $0x4a8] sm:$0xff]
      %v327 = vld [vmem:[%s169 + $0x4b0] sm:$0xff]
      %v328 = vld [vmem:[%s169 + $0x4b8] sm:$0xff]
      %v329 = vld [vmem:[%s169 + $0x4c0] sm:$0xff]
      %v330 = vld [vmem:[%s169 + $0x4c8] sm:$0xff]
      %v331 = vld [vmem:[%s169 + $0x4d0] sm:$0xff]
      %v332 = vld [vmem:[%s169 + $0x4d8] sm:$0xff]
      %v333 = vld [vmem:[%s169 + $0x4e0] sm:$0xff]
      %v334 = vld [vmem:[%s169 + $0x4e8] sm:$0xff]
      %v335 = vld [vmem:[%s169 + $0x4f0] sm:$0xff]
      %v336 = vld [vmem:[%s169 + $0x4f8] sm:$0xff]
      %v337 = vld [vmem:[%s1] sm:$0xff]
      %v338 = vld [vmem:[%s1 + $0x8] sm:$0xff]
      %v339 = vld [vmem:[%s1 + $0x10] sm:$0xff]
      %v340 = vld [vmem:[%s1 + $0x18] sm:$0xff]
      %v341 = vld [vmem:[%s1 + $0x20] sm:$0xff]
      %v342 = vld [vmem:[%s1 + $0x28] sm:$0xff]
      %v343 = vld [vmem:[%s1 + $0x30] sm:$0xff]
      %v344 = vld [vmem:[%s1 + $0x38] sm:$0xff]
      %v345 = vld [vmem:[%s1 + $0x40] sm:$0xff]
      %v346 = vld [vmem:[%s1 + $0x48] sm:$0xff]
      %v347 = vld [vmem:[%s1 + $0x50] sm:$0xff]
      %v348 = vld [vmem:[%s1 + $0x58] sm:$0xff]
      %v349 = vld [vmem:[%s1 + $0x60] sm:$0xff]
      %v350 = vld [vmem:[%s1 + $0x68] sm:$0xff]
      %v351 = vld [vmem:[%s1 + $0x70] sm:$0xff]
      %v352 = vld [vmem:[%s1 + $0x78] sm:$0xff]
      %v353 = vld [vmem:[%s1 + $0x80] sm:$0xff]
      %v354 = vld [vmem:[%s1 + $0x88] sm:$0xff]
      %v355 = vld [vmem:[%s1 + $0x90] sm:$0xff]
      %v356 = vld [vmem:[%s1 + $0x98] sm:$0xff]
      %v357 = vld [vmem:[%s1 + $0xa0] sm:$0xff]
      %v358 = vld [vmem:[%s1 + $0xa8] sm:$0xff]
      %v359 = vld [vmem:[%s1 + $0xb0] sm:$0xff]
      %v360 = vld [vmem:[%s1 + $0xb8] sm:$0xff]
      %v361 = vld [vmem:[%s1 + $0xc0] sm:$0xff]
      %v362 = vld [vmem:[%s1 + $0xc8] sm:$0xff]
      %v363 = vld [vmem:[%s1 + $0xd0] sm:$0xff]
      %v364 = vld [vmem:[%s1 + $0xd8] sm:$0xff]
      %v365 = vld [vmem:[%s1 + $0xe0] sm:$0xff]
      %v366 = vld [vmem:[%s1 + $0xe8] sm:$0xff]
      %v367 = vld [vmem:[%s1 + $0xf0] sm:$0xff]
      %v368 = vld [vmem:[%s1 + $0xf8] sm:$0xff]
      %v369 = vld [vmem:[%s1 + $0x100] sm:$0xff]
      %v370 = vld [vmem:[%s1 + $0x108] sm:$0xff]
      %v371 = vld [vmem:[%s1 + $0x110] sm:$0xff]
      %v372 = vld [vmem:[%s1 + $0x118] sm:$0xff]
      %v373 = vld [vmem:[%s1 + $0x120] sm:$0xff]
      %v374 = vld [vmem:[%s1 + $0x128] sm:$0xff]
      %v375 = vld [vmem:[%s1 + $0x130] sm:$0xff]
      %v376 = vld [vmem:[%s1 + $0x138] sm:$0xff]
      %v377 = vld [vmem:[%s1 + $0x140] sm:$0xff]
      %v378 = vld [vmem:[%s1 + $0x148] sm:$0xff]
      %v379 = vld [vmem:[%s1 + $0x150] sm:$0xff]
      %v380 = vld [vmem:[%s1 + $0x158] sm:$0xff]
      %v381 = vld [vmem:[%s1 + $0x160] sm:$0xff]
      %v382 = vld [vmem:[%s1 + $0x168] sm:$0xff]
      %v383 = vld [vmem:[%s1 + $0x170] sm:$0xff]
      %v384 = vld [vmem:[%s1 + $0x178] sm:$0xff]
      %v385 = vld [vmem:[%s1 + $0x180] sm:$0xff]
      %v386 = vld [vmem:[%s1 + $0x188] sm:$0xff]
      %v387 = vld [vmem:[%s1 + $0x190] sm:$0xff]
      %v388 = vld [vmem:[%s1 + $0x198] sm:$0xff]
      %v389 = vld [vmem:[%s1 + $0x1a0] sm:$0xff]
      %v390 = vld [vmem:[%s1 + $0x1a8] sm:$0xff]
      %v391 = vld [vmem:[%s1 + $0x1b0] sm:$0xff]
      %v392 = vld [vmem:[%s1 + $0x1b8] sm:$0xff]
      %v393 = vld [vmem:[%s1 + $0x1c0] sm:$0xff]
      %v394 = vld [vmem:[%s1 + $0x1c8] sm:$0xff]
      %v395 = vld [vmem:[%s1 + $0x1d0] sm:$0xff]
      %v396 = vld [vmem:[%s1 + $0x1d8] sm:$0xff]
      %v397 = vld [vmem:[%s1 + $0x1e0] sm:$0xff]
      %v398 = vld [vmem:[%s1 + $0x1e8] sm:$0xff]
      %v399 = vld [vmem:[%s1 + $0x1f0] sm:$0xff]
      %v400 = vld [vmem:[%s1 + $0x1f8] sm:$0xff]
      %v401 = vld [vmem:[%s1 + $0x200] sm:$0xff]
      %v402 = vld [vmem:[%s1 + $0x208] sm:$0xff]
      %v403 = vld [vmem:[%s1 + $0x210] sm:$0xff]
      %v404 = vld [vmem:[%s1 + $0x218] sm:$0xff]
      %v405 = vld [vmem:[%s1 + $0x220] sm:$0xff]
      %v406 = vld [vmem:[%s1 + $0x228] sm:$0xff]
      %v407 = vld [vmem:[%s1 + $0x230] sm:$0xff]
      %v408 = vld [vmem:[%s1 + $0x238] sm:$0xff]
      %v409 = vld [vmem:[%s2] sm:$0x1]
      %v411 = vlaneseq
      %v412 = vshrl.u32 %v411, 7
      %v413 = vsub.s32 0, %v412
      %v414 = vrot.slane %v409, %v413
      %vm416 = vcmask 523264
      %v418 = vsel %vm416, %v181, 0
      %v421 = vsel %vm416, %v186, 0
      %v424 = vsel %vm416, %v191, 0
      %v427 = vsel %vm416, %v196, 0
      %v430 = vsel %vm416, %v201, 0
      %v433 = vsel %vm416, %v206, 0
      %v436 = vsel %vm416, %v211, 0
      %v439 = vsel %vm416, %v216, 0
      %v442 = vsel %vm416, %v221, 0
      %v445 = vsel %vm416, %v226, 0
      %v448 = vsel %vm416, %v231, 0
      %v451 = vsel %vm416, %v236, 0
      %v454 = vsel %vm416, %v241, 0
      %v457 = vsel %vm416, %v246, 0
      %v460 = vsel %vm416, %v251, 0
      %v463 = vsel %vm416, %v256, 0
      %v466 = vsel %vm416, %v261, 0
      %v469 = vsel %vm416, %v266, 0
      %v472 = vsel %vm416, %v271, 0
      %v475 = vsel %vm416, %v276, 0
      %v478 = vsel %vm416, %v281, 0
      %v481 = vsel %vm416, %v286, 0
      %v484 = vsel %vm416, %v291, 0
      %v487 = vsel %vm416, %v296, 0
      %v490 = vsel %vm416, %v301, 0
      %v493 = vsel %vm416, %v306, 0
      %v496 = vsel %vm416, %v311, 0
      %v499 = vsel %vm416, %v316, 0
      %v502 = vsel %vm416, %v321, 0
      %v505 = vsel %vm416, %v326, 0
      %v508 = vsel %vm416, %v331, 0
      %v511 = vsel %vm416, %v336, 0
      %513 = vmatprep.subr.mxu0 0.0
      %514 = vmatpush1.msra.mxu0 %v337
      %515 = vmatprep.subr.mxu0 0.0
      %516 = vmatpush1.msra.mxu0 %v338
      %517 = vmatprep.subr.mxu0 0.0
      %518 = vmatpush1.msra.mxu0 %v339
      %519 = vmatprep.subr.mxu0 0.0
      %520 = vmatpush1.msra.mxu0 %v340
      %521 = vmatprep.subr.mxu0 0.0
      %522 = vmatpush1.msra.mxu0 %v341
      %523 = vmatprep.subr.mxu0 0.0
      %524 = vmatpush1.msra.mxu0 %v342
      %525 = vmatprep.subr.mxu0 0.0
      %526 = vmatpush1.msra.mxu0 %v343
      %527 = vmatprep.subr.mxu0 0.0
      %528 = vmatpush1.msra.mxu0 %v344
      %529 = vmatprep.subr.mxu0 0.0
      %530 = vmatpush1.msra.mxu0 %v345
      %531 = vmatprep.subr.mxu0 0.0
      %532 = vmatpush1.msra.mxu0 %v346
      %533 = vmatprep.subr.mxu0 0.0
      %534 = vmatpush1.msra.mxu0 %v347
      %535 = vmatprep.subr.mxu0 0.0
      %536 = vmatpush1.msra.mxu0 %v348
      %537 = vmatprep.subr.mxu0 0.0
      %538 = vmatpush1.msra.mxu0 %v349
      %539 = vmatprep.subr.mxu0 0.0
      %540 = vmatpush1.msra.mxu0 %v350
      %541 = vmatprep.subr.mxu0 0.0
      %542 = vmatpush1.msra.mxu0 %v351
      %543 = vmatprep.subr.mxu0 0.0
      %544 = vmatpush1.msra.mxu0 %v352
      %545 = vmatprep.subr.mxu0 0.0
      %546 = vmatpush1.msra.mxu0 %v353
      %547 = vmatprep.subr.mxu0 0.0
      %548 = vmatpush1.msra.mxu0 %v354
      %549 = vmatprep.subr.mxu0 0.0
      %550 = vmatpush1.msra.mxu0 %v355
      %551 = vmatprep.subr.mxu0 0.0
      %552 = vmatpush1.msra.mxu0 %v356
      %553 = vmatprep.subr.mxu0 0.0
      %554 = vmatpush1.msra.mxu0 %v357
      %555 = vmatprep.subr.mxu0 0.0
      %556 = vmatpush1.msra.mxu0 %v358
      %557 = vmatprep.subr.mxu0 0.0
      %558 = vmatpush1.msra.mxu0 %v359
      %559 = vmatprep.subr.mxu0 0.0
      %560 = vmatpush1.msra.mxu0 %v360
      %561 = vmatprep.subr.mxu0 0.0
      %562 = vmatpush1.msra.mxu0 %v361
      %563 = vmatprep.subr.mxu0 0.0
      %564 = vmatpush1.msra.mxu0 %v362
      %565 = vmatprep.subr.mxu0 0.0
      %566 = vmatpush1.msra.mxu0 %v363
      %567 = vmatprep.subr.mxu0 0.0
      %568 = vmatpush1.msra.mxu0 %v364
      %569 = vmatprep.subr.mxu0 0.0
      %570 = vmatpush1.msra.mxu0 %v365
      %571 = vmatprep.subr.mxu0 0.0
      %572 = vmatpush1.msra.mxu0 %v366
      %573 = vmatprep.subr.mxu0 0.0
      %574 = vmatpush1.msra.mxu0 %v367
      %575 = vmatprep.subr.mxu0 0.0
      %576 = vmatpush1.msra.mxu0 %v368
      %577 = vmatprep.mubr.f32.mxu0 %v178
      %578 = vmatmul.mubr.f32.gmra.mrb[0].mxu0 %v177
      %v579 = vpop.f32.mrb[0].mxu0
      %v580 = vadd.f32 %v414, %v579
      %v581 = vpop.f32.mrb[0].mxu0
      %582 = vmatprep.mubr.f32.mxu0 %v183
      %583 = vmatmul.mubr.f32.gmra.mrb[0].mxu0 %v182
      %v584 = vpop.f32.mrb[0].mxu0
      %v585 = vadd.f32 %v414, %v584
      %v586 = vpop.f32.mrb[0].mxu0
      %587 = vmatprep.mubr.f32.mxu0 %v188
      %588 = vmatmul.mubr.f32.gmra.mrb[0].mxu0 %v187
      %v589 = vpop.f32.mrb[0].mxu0
      %v590 = vadd.f32 %v414, %v589
      %v591 = vpop.f32.mrb[0].mxu0
      %592 = vmatprep.mubr.f32.mxu0 %v193
      %593 = vmatmul.mubr.f32.gmra.mrb[0].mxu0 %v192
      %v594 = vpop.f32.mrb[0].mxu0
      %v595 = vadd.f32 %v414, %v594
      %v596 = vpop.f32.mrb[0].mxu0
      %597 = vmatprep.mubr.f32.mxu0 %v198
      %598 = vmatmul.mubr.f32.gmra.mrb[0].mxu0 %v197
      %v599 = vpop.f32.mrb[0].mxu0
      %v600 = vadd.f32 %v414, %v599
      %v601 = vpop.f32.mrb[0].mxu0
      %602 = vmatprep.mubr.f32.mxu0 %v203
      %603 = vmatmul.mubr.f32.gmra.mrb[0].mxu0 %v202
      %v604 = vpop.f32.mrb[0].mxu0
      %v605 = vadd.f32 %v414, %v604
      %v606 = vpop.f32.mrb[0].mxu0
      %607 = vmatprep.mubr.f32.mxu0 %v208
      %608 = vmatmul.mubr.f32.gmra.mrb[0].mxu0 %v207
      %v609 = vpop.f32.mrb[0].mxu0
      %v610 = vadd.f32 %v414, %v609
      %v611 = vpop.f32.mrb[0].mxu0
      %612 = vmatprep.mubr.f32.mxu0 %v213
      %613 = vmatmul.mubr.f32.gmra.mrb[0].mxu0 %v212
      %v614 = vpop.f32.mrb[0].mxu0
      %v615 = vadd.f32 %v414, %v614
      %v616 = vpop.f32.mrb[0].mxu0
      %617 = vmatprep.mubr.f32.mxu0 %v218
      %618 = vmatmul.mubr.f32.gmra.mrb[0].mxu0 %v217
      %v619 = vpop.f32.mrb[0].mxu0
      %v620 = vadd.f32 %v414, %v619
      %v621 = vpop.f32.mrb[0].mxu0
      %622 = vmatprep.mubr.f32.mxu0 %v223
      %623 = vmatmul.mubr.f32.gmra.mrb[0].mxu0 %v222
      %v624 = vpop.f32.mrb[0].mxu0
      %v625 = vadd.f32 %v414, %v624
      %v626 = vpop.f32.mrb[0].mxu0
      %627 = vmatprep.mubr.f32.mxu0 %v228
      %628 = vmatmul.mubr.f32.gmra.mrb[0].mxu0 %v227
      %v629 = vpop.f32.mrb[0].mxu0
      %v630 = vadd.f32 %v414, %v629
      %v631 = vpop.f32.mrb[0].mxu0
      %632 = vmatprep.mubr.f32.mxu0 %v233
      %633 = vmatmul.mubr.f32.gmra.mrb[0].mxu0 %v232
      %v634 = vpop.f32.mrb[0].mxu0
      %v635 = vadd.f32 %v414, %v634
      %v636 = vpop.f32.mrb[0].mxu0
      %637 = vmatprep.mubr.f32.mxu0 %v238
      %638 = vmatmul.mubr.f32.gmra.mrb[0].mxu0 %v237
      %v639 = vpop.f32.mrb[0].mxu0
      %v640 = vadd.f32 %v414, %v639
      %v641 = vpop.f32.mrb[0].mxu0
      %642 = vmatprep.mubr.f32.mxu0 %v243
      %643 = vmatmul.mubr.f32.gmra.mrb[0].mxu0 %v242
      %v644 = vpop.f32.mrb[0].mxu0
      %v645 = vadd.f32 %v414, %v644
      %v646 = vpop.f32.mrb[0].mxu0
      %647 = vmatprep.mubr.f32.mxu0 %v248
      %648 = vmatmul.mubr.f32.gmra.mrb[0].mxu0 %v247
      %v649 = vpop.f32.mrb[0].mxu0
      %v650 = vadd.f32 %v414, %v649
      %v651 = vpop.f32.mrb[0].mxu0
      %652 = vmatprep.mubr.f32.mxu0 %v253
      %653 = vmatmul.mubr.f32.gmra.mrb[0].mxu0 %v252
      %v654 = vpop.f32.mrb[0].mxu0
      %v655 = vadd.f32 %v414, %v654
      %v656 = vpop.f32.mrb[0].mxu0
      %657 = vmatprep.mubr.f32.mxu0 %v258
      %658 = vmatmul.mubr.f32.gmra.mrb[0].mxu0 %v257
      %v659 = vpop.f32.mrb[0].mxu0
      %v660 = vadd.f32 %v414, %v659
      %v661 = vpop.f32.mrb[0].mxu0
      %662 = vmatprep.mubr.f32.mxu0 %v263
      %663 = vmatmul.mubr.f32.gmra.mrb[0].mxu0 %v262
      %v664 = vpop.f32.mrb[0].mxu0
      %v665 = vadd.f32 %v414, %v664
      %v666 = vpop.f32.mrb[0].mxu0
      %667 = vmatprep.mubr.f32.mxu0 %v268
      %668 = vmatmul.mubr.f32.gmra.mrb[0].mxu0 %v267
      %v669 = vpop.f32.mrb[0].mxu0
      %v670 = vadd.f32 %v414, %v669
      %v671 = vpop.f32.mrb[0].mxu0
      %672 = vmatprep.mubr.f32.mxu0 %v273
      %673 = vmatmul.mubr.f32.gmra.mrb[0].mxu0 %v272
      %v674 = vpop.f32.mrb[0].mxu0
      %v675 = vadd.f32 %v414, %v674
      %v676 = vpop.f32.mrb[0].mxu0
      %677 = vmatprep.mubr.f32.mxu0 %v278
      %678 = vmatmul.mubr.f32.gmra.mrb[0].mxu0 %v277
      %v679 = vpop.f32.mrb[0].mxu0
      %v680 = vadd.f32 %v414, %v679
      %v681 = vpop.f32.mrb[0].mxu0
      %682 = vmatprep.mubr.f32.mxu0 %v283
      %683 = vmatmul.mubr.f32.gmra.mrb[0].mxu0 %v282
      %v684 = vpop.f32.mrb[0].mxu0
      %v685 = vadd.f32 %v414, %v684
      %v686 = vpop.f32.mrb[0].mxu0
      %687 = vmatprep.mubr.f32.mxu0 %v288
      %688 = vmatmul.mubr.f32.gmra.mrb[0].mxu0 %v287
      %v689 = vpop.f32.mrb[0].mxu0
      %v690 = vadd.f32 %v414, %v689
      %v691 = vpop.f32.mrb[0].mxu0
      %692 = vmatprep.mubr.f32.mxu0 %v293
      %693 = vmatmul.mubr.f32.gmra.mrb[0].mxu0 %v292
      %v694 = vpop.f32.mrb[0].mxu0
      %v695 = vadd.f32 %v414, %v694
      %v696 = vpop.f32.mrb[0].mxu0
      %697 = vmatprep.mubr.f32.mxu0 %v298
      %698 = vmatmul.mubr.f32.gmra.mrb[0].mxu0 %v297
      %v699 = vpop.f32.mrb[0].mxu0
      %v700 = vadd.f32 %v414, %v699
      %v701 = vpop.f32.mrb[0].mxu0
      %702 = vmatprep.mubr.f32.mxu0 %v303
      %703 = vmatmul.mubr.f32.gmra.mrb[0].mxu0 %v302
      %v704 = vpop.f32.mrb[0].mxu0
      %v705 = vadd.f32 %v414, %v704
      %v706 = vpop.f32.mrb[0].mxu0
      %707 = vmatprep.mubr.f32.mxu0 %v308
      %708 = vmatmul.mubr.f32.gmra.mrb[0].mxu0 %v307
      %v709 = vpop.f32.mrb[0].mxu0
      %v710 = vadd.f32 %v414, %v709
      %v711 = vpop.f32.mrb[0].mxu0
      %712 = vmatprep.mubr.f32.mxu0 %v313
      %713 = vmatmul.mubr.f32.gmra.mrb[0].mxu0 %v312
      %v714 = vpop.f32.mrb[0].mxu0
      %v715 = vadd.f32 %v414, %v714
      %v716 = vpop.f32.mrb[0].mxu0
      %717 = vmatprep.mubr.f32.mxu0 %v318
      %718 = vmatmul.mubr.f32.gmra.mrb[0].mxu0 %v317
      %v719 = vpop.f32.mrb[0].mxu0
      %v720 = vadd.f32 %v414, %v719
      %v721 = vpop.f32.mrb[0].mxu0
      %722 = vmatprep.mubr.f32.mxu0 %v323
      %723 = vmatmul.mubr.f32.gmra.mrb[0].mxu0 %v322
      %v724 = vpop.f32.mrb[0].mxu0
      %v725 = vadd.f32 %v414, %v724
      %v726 = vpop.f32.mrb[0].mxu0
      %727 = vmatprep.mubr.f32.mxu0 %v328
      %728 = vmatmul.mubr.f32.gmra.mrb[0].mxu0 %v327
      %v729 = vpop.f32.mrb[0].mxu0
      %v730 = vadd.f32 %v414, %v729
      %v731 = vpop.f32.mrb[0].mxu0
      %732 = vmatprep.mubr.f32.mxu0 %v333
      %733 = vmatmul.mubr.f32.gmra.mrb[0].mxu0 %v332
      %v734 = vpop.f32.mrb[0].mxu0
      %v735 = vadd.f32 %v414, %v734
      %v736 = vpop.f32.mrb[0].mxu0
      %737 = vdwg.mxu0
      %738 = vmatprep.subr.mxu0 0.0
      %739 = vmatpush1.msra.mxu0 %v369
      %740 = vmatprep.subr.mxu0 0.0
      %741 = vmatpush1.msra.mxu0 %v370
      %742 = vmatprep.subr.mxu0 0.0
      %743 = vmatpush1.msra.mxu0 %v371
      %744 = vmatprep.subr.mxu0 0.0
      %745 = vmatpush1.msra.mxu0 %v372
      %746 = vmatprep.subr.mxu0 0.0
      %747 = vmatpush1.msra.mxu0 %v373
      %748 = vmatprep.subr.mxu0 0.0
      %749 = vmatpush1.msra.mxu0 %v374
      %750 = vmatprep.subr.mxu0 0.0
      %751 = vmatpush1.msra.mxu0 %v375
      %752 = vmatprep.subr.mxu0 0.0
      %753 = vmatpush1.msra.mxu0 %v376
      %754 = vmatprep.subr.mxu0 0.0
      %755 = vmatpush1.msra.mxu0 %v377
      %756 = vmatprep.subr.mxu0 0.0
      %757 = vmatpush1.msra.mxu0 %v378
      %758 = vmatprep.subr.mxu0 0.0
      %759 = vmatpush1.msra.mxu0 %v379
      %760 = vmatprep.subr.mxu0 0.0
      %761 = vmatpush1.msra.mxu0 %v380
      %762 = vmatprep.subr.mxu0 0.0
      %763 = vmatpush1.msra.mxu0 %v381
      %764 = vmatprep.subr.mxu0 0.0
      %765 = vmatpush1.msra.mxu0 %v382
      %766 = vmatprep.subr.mxu0 0.0
      %767 = vmatpush1.msra.mxu0 %v383
      %768 = vmatprep.subr.mxu0 0.0
      %769 = vmatpush1.msra.mxu0 %v384
      %770 = vmatprep.subr.mxu0 0.0
      %771 = vmatpush1.msra.mxu0 %v385
      %772 = vmatprep.subr.mxu0 0.0
      %773 = vmatpush1.msra.mxu0 %v386
      %774 = vmatprep.subr.mxu0 0.0
      %775 = vmatpush1.msra.mxu0 %v387
      %776 = vmatprep.subr.mxu0 0.0
      %777 = vmatpush1.msra.mxu0 %v388
      %778 = vmatprep.subr.mxu0 0.0
      %779 = vmatpush1.msra.mxu0 %v389
      %780 = vmatprep.subr.mxu0 0.0
      %781 = vmatpush1.msra.mxu0 %v390
      %782 = vmatprep.subr.mxu0 0.0
      %783 = vmatpush1.msra.mxu0 %v391
      %784 = vmatprep.subr.mxu0 0.0
      %785 = vmatpush1.msra.mxu0 %v392
      %786 = vmatprep.subr.mxu0 0.0
      %787 = vmatpush1.msra.mxu0 %v393
      %788 = vmatprep.subr.mxu0 0.0
      %789 = vmatpush1.msra.mxu0 %v394
      %790 = vmatprep.subr.mxu0 0.0
      %791 = vmatpush1.msra.mxu0 %v395
      %792 = vmatprep.subr.mxu0 0.0
      %793 = vmatpush1.msra.mxu0 %v396
      %794 = vmatprep.subr.mxu0 0.0
      %795 = vmatpush1.msra.mxu0 %v397
      %796 = vmatprep.subr.mxu0 0.0
      %797 = vmatpush1.msra.mxu0 %v398
      %798 = vmatprep.subr.mxu0 0.0
      %799 = vmatpush1.msra.mxu0 %v399
      %800 = vmatprep.subr.mxu0 0.0
      %801 = vmatpush1.msra.mxu0 %v400
      %802 = vmatprep.mubr.f32.mxu0 %v180
      %803 = vmatmul.mubr.f32.gmra.mrb[0].mxu0 %v179
      %v804 = vpop.f32.mrb[0].mxu0
      %v805 = vadd.f32 %v580, %v804
      %v806 = vpop.f32.mrb[0].mxu0
      %807 = vmatprep.mubr.f32.mxu0 %v185
      %808 = vmatmul.mubr.f32.gmra.mrb[0].mxu0 %v184
      %v809 = vpop.f32.mrb[0].mxu0
      %v810 = vadd.f32 %v585, %v809
      %v811 = vpop.f32.mrb[0].mxu0
      %812 = vmatprep.mubr.f32.mxu0 %v190
      %813 = vmatmul.mubr.f32.gmra.mrb[0].mxu0 %v189
      %v814 = vpop.f32.mrb[0].mxu0
      %v815 = vadd.f32 %v590, %v814
      %v816 = vpop.f32.mrb[0].mxu0
      %817 = vmatprep.mubr.f32.mxu0 %v195
      %818 = vmatmul.mubr.f32.gmra.mrb[0].mxu0 %v194
      %v819 = vpop.f32.mrb[0].mxu0
      %v820 = vadd.f32 %v595, %v819
      %v821 = vpop.f32.mrb[0].mxu0
      %822 = vmatprep.mubr.f32.mxu0 %v200
      %823 = vmatmul.mubr.f32.gmra.mrb[0].mxu0 %v199
      %v824 = vpop.f32.mrb[0].mxu0
      %v825 = vadd.f32 %v600, %v824
      %v826 = vpop.f32.mrb[0].mxu0
      %827 = vmatprep.mubr.f32.mxu0 %v205
      %828 = vmatmul.mubr.f32.gmra.mrb[0].mxu0 %v204
      %v829 = vpop.f32.mrb[0].mxu0
      %v830 = vadd.f32 %v605, %v829
      %v831 = vpop.f32.mrb[0].mxu0
      %832 = vmatprep.mubr.f32.mxu0 %v210
      %833 = vmatmul.mubr.f32.gmra.mrb[0].mxu0 %v209
      %v834 = vpop.f32.mrb[0].mxu0
      %v835 = vadd.f32 %v610, %v834
      %v836 = vpop.f32.mrb[0].mxu0
      %837 = vmatprep.mubr.f32.mxu0 %v215
      %838 = vmatmul.mubr.f32.gmra.mrb[0].mxu0 %v214
      %v839 = vpop.f32.mrb[0].mxu0
      %v840 = vadd.f32 %v615, %v839
      %v841 = vpop.f32.mrb[0].mxu0
      %842 = vmatprep.mubr.f32.mxu0 %v220
      %843 = vmatmul.mubr.f32.gmra.mrb[0].mxu0 %v219
      %v844 = vpop.f32.mrb[0].mxu0
      %v845 = vadd.f32 %v620, %v844
      %v846 = vpop.f32.mrb[0].mxu0
      %847 = vmatprep.mubr.f32.mxu0 %v225
      %848 = vmatmul.mubr.f32.gmra.mrb[0].mxu0 %v224
      %v849 = vpop.f32.mrb[0].mxu0
      %v850 = vadd.f32 %v625, %v849
      %v851 = vpop.f32.mrb[0].mxu0
      %852 = vmatprep.mubr.f32.mxu0 %v230
      %853 = vmatmul.mubr.f32.gmra.mrb[0].mxu0 %v229
      %v854 = vpop.f32.mrb[0].mxu0
      %v855 = vadd.f32 %v630, %v854
      %v856 = vpop.f32.mrb[0].mxu0
      %857 = vmatprep.mubr.f32.mxu0 %v235
      %858 = vmatmul.mubr.f32.gmra.mrb[0].mxu0 %v234
      %v859 = vpop.f32.mrb[0].mxu0
      %v860 = vadd.f32 %v635, %v859
      %v861 = vpop.f32.mrb[0].mxu0
      %862 = vmatprep.mubr.f32.mxu0 %v240
      %863 = vmatmul.mubr.f32.gmra.mrb[0].mxu0 %v239
      %v864 = vpop.f32.mrb[0].mxu0
      %v865 = vadd.f32 %v640, %v864
      %v866 = vpop.f32.mrb[0].mxu0
      %867 = vmatprep.mubr.f32.mxu0 %v245
      %868 = vmatmul.mubr.f32.gmra.mrb[0].mxu0 %v244
      %v869 = vpop.f32.mrb[0].mxu0
      %v870 = vadd.f32 %v645, %v869
      %v871 = vpop.f32.mrb[0].mxu0
      %872 = vmatprep.mubr.f32.mxu0 %v250
      %873 = vmatmul.mubr.f32.gmra.mrb[0].mxu0 %v249
      %v874 = vpop.f32.mrb[0].mxu0
      %v875 = vadd.f32 %v650, %v874
      %v876 = vpop.f32.mrb[0].mxu0
      %877 = vmatprep.mubr.f32.mxu0 %v255
      %878 = vmatmul.mubr.f32.gmra.mrb[0].mxu0 %v254
      %v879 = vpop.f32.mrb[0].mxu0
      %v880 = vadd.f32 %v655, %v879
      %v881 = vpop.f32.mrb[0].mxu0
      %882 = vmatprep.mubr.f32.mxu0 %v260
      %883 = vmatmul.mubr.f32.gmra.mrb[0].mxu0 %v259
      %v884 = vpop.f32.mrb[0].mxu0
      %v885 = vadd.f32 %v660, %v884
      %v886 = vpop.f32.mrb[0].mxu0
      %887 = vmatprep.mubr.f32.mxu0 %v265
      %888 = vmatmul.mubr.f32.gmra.mrb[0].mxu0 %v264
      %v889 = vpop.f32.mrb[0].mxu0
      %v890 = vadd.f32 %v665, %v889
      %v891 = vpop.f32.mrb[0].mxu0
      %892 = vmatprep.mubr.f32.mxu0 %v270
      %893 = vmatmul.mubr.f32.gmra.mrb[0].mxu0 %v269
      %v894 = vpop.f32.mrb[0].mxu0
      %v895 = vadd.f32 %v670, %v894
      %v896 = vpop.f32.mrb[0].mxu0
      %897 = vmatprep.mubr.f32.mxu0 %v275
      %898 = vmatmul.mubr.f32.gmra.mrb[0].mxu0 %v274
      %v899 = vpop.f32.mrb[0].mxu0
      %v900 = vadd.f32 %v675, %v899
      %v901 = vpop.f32.mrb[0].mxu0
      %902 = vmatprep.mubr.f32.mxu0 %v280
      %903 = vmatmul.mubr.f32.gmra.mrb[0].mxu0 %v279
      %v904 = vpop.f32.mrb[0].mxu0
      %v905 = vadd.f32 %v680, %v904
      %v906 = vpop.f32.mrb[0].mxu0
      %907 = vmatprep.mubr.f32.mxu0 %v285
      %908 = vmatmul.mubr.f32.gmra.mrb[0].mxu0 %v284
      %v909 = vpop.f32.mrb[0].mxu0
      %v910 = vadd.f32 %v685, %v909
      %v911 = vpop.f32.mrb[0].mxu0
      %912 = vmatprep.mubr.f32.mxu0 %v290
      %913 = vmatmul.mubr.f32.gmra.mrb[0].mxu0 %v289
      %v914 = vpop.f32.mrb[0].mxu0
      %v915 = vadd.f32 %v690, %v914
      %v916 = vpop.f32.mrb[0].mxu0
      %917 = vmatprep.mubr.f32.mxu0 %v295
      %918 = vmatmul.mubr.f32.gmra.mrb[0].mxu0 %v294
      %v919 = vpop.f32.mrb[0].mxu0
      %v920 = vadd.f32 %v695, %v919
      %v921 = vpop.f32.mrb[0].mxu0
      %922 = vmatprep.mubr.f32.mxu0 %v300
      %923 = vmatmul.mubr.f32.gmra.mrb[0].mxu0 %v299
      %v924 = vpop.f32.mrb[0].mxu0
      %v925 = vadd.f32 %v700, %v924
      %v926 = vpop.f32.mrb[0].mxu0
      %927 = vmatprep.mubr.f32.mxu0 %v305
      %928 = vmatmul.mubr.f32.gmra.mrb[0].mxu0 %v304
      %v929 = vpop.f32.mrb[0].mxu0
      %v930 = vadd.f32 %v705, %v929
      %v931 = vpop.f32.mrb[0].mxu0
      %932 = vmatprep.mubr.f32.mxu0 %v310
      %933 = vmatmul.mubr.f32.gmra.mrb[0].mxu0 %v309
      %v934 = vpop.f32.mrb[0].mxu0
      %v935 = vadd.f32 %v710, %v934
      %v936 = vpop.f32.mrb[0].mxu0
      %937 = vmatprep.mubr.f32.mxu0 %v315
      %938 = vmatmul.mubr.f32.gmra.mrb[0].mxu0 %v314
      %v939 = vpop.f32.mrb[0].mxu0
      %v940 = vadd.f32 %v715, %v939
      %v941 = vpop.f32.mrb[0].mxu0
      %942 = vmatprep.mubr.f32.mxu0 %v320
      %943 = vmatmul.mubr.f32.gmra.mrb[0].mxu0 %v319
      %v944 = vpop.f32.mrb[0].mxu0
      %v945 = vadd.f32 %v720, %v944
      %v946 = vpop.f32.mrb[0].mxu0
      %947 = vmatprep.mubr.f32.mxu0 %v325
      %948 = vmatmul.mubr.f32.gmra.mrb[0].mxu0 %v324
      %v949 = vpop.f32.mrb[0].mxu0
      %v950 = vadd.f32 %v725, %v949
      %v951 = vpop.f32.mrb[0].mxu0
      %952 = vmatprep.mubr.f32.mxu0 %v330
      %953 = vmatmul.mubr.f32.gmra.mrb[0].mxu0 %v329
      %v954 = vpop.f32.mrb[0].mxu0
      %v955 = vadd.f32 %v730, %v954
      %v956 = vpop.f32.mrb[0].mxu0
      %957 = vmatprep.mubr.f32.mxu0 %v335
      %958 = vmatmul.mubr.f32.gmra.mrb[0].mxu0 %v334
      %v959 = vpop.f32.mrb[0].mxu0
      %v960 = vadd.f32 %v735, %v959
      %v961 = vpop.f32.mrb[0].mxu0
      %962 = vdwg.mxu0
      %963 = vmatprep.subr.mxu0 0.0
      %964 = vmatpush1.msra.mxu0 %v401
      %965 = vmatprep.subr.mxu0 0.0
      %966 = vmatpush1.msra.mxu0 %v402
      %967 = vmatprep.subr.mxu0 0.0
      %968 = vmatpush1.msra.mxu0 %v403
      %969 = vmatprep.subr.mxu0 0.0
      %970 = vmatpush1.msra.mxu0 %v404
      %971 = vmatprep.subr.mxu0 0.0
      %972 = vmatpush1.msra.mxu0 %v405
      %973 = vmatprep.subr.mxu0 0.0
      %974 = vmatpush1.msra.mxu0 %v406
      %975 = vmatprep.subr.mxu0 0.0
      %976 = vmatpush1.msra.mxu0 %v407
      %977 = vmatprep.subr.mxu0 0.0
      %978 = vmatpush1.msra.mxu0 %v408
      %979 = vmatprep.subr.mxu0 0.0
      %980 = vmatpush1.msra.mxu0 0.0
      %981 = vmatprep.subr.mxu0 0.0
      %982 = vmatpush1.msra.mxu0 0.0
      %983 = vmatprep.subr.mxu0 0.0
      %984 = vmatpush1.msra.mxu0 0.0
      %985 = vmatprep.subr.mxu0 0.0
      %986 = vmatpush1.msra.mxu0 0.0
      %987 = vmatprep.subr.mxu0 0.0
      %988 = vmatpush1.msra.mxu0 0.0
      %989 = vmatprep.subr.mxu0 0.0
      %990 = vmatpush1.msra.mxu0 0.0
      %991 = vmatprep.subr.mxu0 0.0
      %992 = vmatpush1.msra.mxu0 0.0
      %993 = vmatprep.subr.mxu0 0.0
      %994 = vmatpush1.msra.mxu0 0.0
      %995 = vmatprep.subr.mxu0 0.0
      %996 = vmatpush1.msra.mxu0 0.0
      %997 = vmatprep.subr.mxu0 0.0
      %998 = vmatpush1.msra.mxu0 0.0
      %999 = vmatprep.subr.mxu0 0.0
      %1000 = vmatpush1.msra.mxu0 0.0
      %1001 = vmatprep.subr.mxu0 0.0
      %1002 = vmatpush1.msra.mxu0 0.0
      %1003 = vmatprep.subr.mxu0 0.0
      %1004 = vmatpush1.msra.mxu0 0.0
      %1005 = vmatprep.subr.mxu0 0.0
      %1006 = vmatpush1.msra.mxu0 0.0
      %1007 = vmatprep.subr.mxu0 0.0
      %1008 = vmatpush1.msra.mxu0 0.0
      %1009 = vmatprep.subr.mxu0 0.0
      %1010 = vmatpush1.msra.mxu0 0.0
      %1011 = vmatprep.subr.mxu0 0.0
      %1012 = vmatpush1.msra.mxu0 0.0
      %1013 = vmatprep.subr.mxu0 0.0
      %1014 = vmatpush1.msra.mxu0 0.0
      %1015 = vmatprep.subr.mxu0 0.0
      %1016 = vmatpush1.msra.mxu0 0.0
      %1017 = vmatprep.subr.mxu0 0.0
      %1018 = vmatpush1.msra.mxu0 0.0
      %1019 = vmatprep.subr.mxu0 0.0
      %1020 = vmatpush1.msra.mxu0 0.0
      %1021 = vmatprep.subr.mxu0 0.0
      %1022 = vmatpush1.msra.mxu0 0.0
      %1023 = vmatprep.subr.mxu0 0.0
      %1024 = vmatpush1.msra.mxu0 0.0
      %1025 = vmatprep.subr.mxu0 0.0
      %1026 = vmatpush1.msra.mxu0 0.0
      %1027 = vmatprep.mubr.f32.mxu0 0.0
      %1028 = vmatmul.mubr.f32.gmra.mrb[0].mxu0 %v418
      %v1029 = vpop.f32.mrb[0].mxu0
      %v1030 = vadd.f32 %v805, %v1029
      %v1031 = vpop.f32.mrb[0].mxu0
      %1032 = vmatprep.mubr.f32.mxu0 0.0
      %1033 = vmatmul.mubr.f32.gmra.mrb[0].mxu0 %v421
      %v1034 = vpop.f32.mrb[0].mxu0
      %v1035 = vadd.f32 %v810, %v1034
      %v1036 = vpop.f32.mrb[0].mxu0
      %1037 = vmatprep.mubr.f32.mxu0 0.0
      %1038 = vmatmul.mubr.f32.gmra.mrb[0].mxu0 %v424
      %v1039 = vpop.f32.mrb[0].mxu0
      %v1040 = vadd.f32 %v815, %v1039
      %v1041 = vpop.f32.mrb[0].mxu0
      %1042 = vmatprep.mubr.f32.mxu0 0.0
      %1043 = vmatmul.mubr.f32.gmra.mrb[0].mxu0 %v427
      %v1044 = vpop.f32.mrb[0].mxu0
      %v1045 = vadd.f32 %v820, %v1044
      %v1046 = vpop.f32.mrb[0].mxu0
      %1047 = vmatprep.mubr.f32.mxu0 0.0
      %1048 = vmatmul.mubr.f32.gmra.mrb[0].mxu0 %v430
      %v1049 = vpop.f32.mrb[0].mxu0
      %v1050 = vadd.f32 %v825, %v1049
      %v1051 = vpop.f32.mrb[0].mxu0
      %1052 = vmatprep.mubr.f32.mxu0 0.0
      %1053 = vmatmul.mubr.f32.gmra.mrb[0].mxu0 %v433
      %v1054 = vpop.f32.mrb[0].mxu0
      %v1055 = vadd.f32 %v830, %v1054
      %v1056 = vpop.f32.mrb[0].mxu0
      %1057 = vmatprep.mubr.f32.mxu0 0.0
      %1058 = vmatmul.mubr.f32.gmra.mrb[0].mxu0 %v436
      %v1059 = vpop.f32.mrb[0].mxu0
      %v1060 = vadd.f32 %v835, %v1059
      %v1061 = vpop.f32.mrb[0].mxu0
      %1062 = vmatprep.mubr.f32.mxu0 0.0
      %1063 = vmatmul.mubr.f32.gmra.mrb[0].mxu0 %v439
      %v1064 = vpop.f32.mrb[0].mxu0
      %v1065 = vadd.f32 %v840, %v1064
      %v1066 = vpop.f32.mrb[0].mxu0
      %1067 = vmatprep.mubr.f32.mxu0 0.0
      %1068 = vmatmul.mubr.f32.gmra.mrb[0].mxu0 %v442
      %v1069 = vpop.f32.mrb[0].mxu0
      %v1070 = vadd.f32 %v845, %v1069
      %v1071 = vpop.f32.mrb[0].mxu0
      %1072 = vmatprep.mubr.f32.mxu0 0.0
      %1073 = vmatmul.mubr.f32.gmra.mrb[0].mxu0 %v445
      %v1074 = vpop.f32.mrb[0].mxu0
      %v1075 = vadd.f32 %v850, %v1074
      %v1076 = vpop.f32.mrb[0].mxu0
      %1077 = vmatprep.mubr.f32.mxu0 0.0
      %1078 = vmatmul.mubr.f32.gmra.mrb[0].mxu0 %v448
      %v1079 = vpop.f32.mrb[0].mxu0
      %v1080 = vadd.f32 %v855, %v1079
      %v1081 = vpop.f32.mrb[0].mxu0
      %1082 = vmatprep.mubr.f32.mxu0 0.0
      %1083 = vmatmul.mubr.f32.gmra.mrb[0].mxu0 %v451
      %v1084 = vpop.f32.mrb[0].mxu0
      %v1085 = vadd.f32 %v860, %v1084
      %v1086 = vpop.f32.mrb[0].mxu0
      %1087 = vmatprep.mubr.f32.mxu0 0.0
      %1088 = vmatmul.mubr.f32.gmra.mrb[0].mxu0 %v454
      %v1089 = vpop.f32.mrb[0].mxu0
      %v1090 = vadd.f32 %v865, %v1089
      %v1091 = vpop.f32.mrb[0].mxu0
      %1092 = vmatprep.mubr.f32.mxu0 0.0
      %1093 = vmatmul.mubr.f32.gmra.mrb[0].mxu0 %v457
      %v1094 = vpop.f32.mrb[0].mxu0
      %v1095 = vadd.f32 %v870, %v1094
      %v1096 = vpop.f32.mrb[0].mxu0
      %1097 = vmatprep.mubr.f32.mxu0 0.0
      %1098 = vmatmul.mubr.f32.gmra.mrb[0].mxu0 %v460
      %v1099 = vpop.f32.mrb[0].mxu0
      %v1100 = vadd.f32 %v875, %v1099
      %v1101 = vpop.f32.mrb[0].mxu0
      %1102 = vmatprep.mubr.f32.mxu0 0.0
      %1103 = vmatmul.mubr.f32.gmra.mrb[0].mxu0 %v463
      %v1104 = vpop.f32.mrb[0].mxu0
      %v1105 = vadd.f32 %v880, %v1104
      %v1106 = vpop.f32.mrb[0].mxu0
      %1107 = vmatprep.mubr.f32.mxu0 0.0
      %1108 = vmatmul.mubr.f32.gmra.mrb[0].mxu0 %v466
      %v1109 = vpop.f32.mrb[0].mxu0
      %v1110 = vadd.f32 %v885, %v1109
      %v1111 = vpop.f32.mrb[0].mxu0
      %1112 = vmatprep.mubr.f32.mxu0 0.0
      %1113 = vmatmul.mubr.f32.gmra.mrb[0].mxu0 %v469
      %v1114 = vpop.f32.mrb[0].mxu0
      %v1115 = vadd.f32 %v890, %v1114
      %v1116 = vpop.f32.mrb[0].mxu0
      %1117 = vmatprep.mubr.f32.mxu0 0.0
      %1118 = vmatmul.mubr.f32.gmra.mrb[0].mxu0 %v472
      %v1119 = vpop.f32.mrb[0].mxu0
      %v1120 = vadd.f32 %v895, %v1119
      %v1121 = vpop.f32.mrb[0].mxu0
      %1122 = vmatprep.mubr.f32.mxu0 0.0
      %1123 = vmatmul.mubr.f32.gmra.mrb[0].mxu0 %v475
      %v1124 = vpop.f32.mrb[0].mxu0
      %v1125 = vadd.f32 %v900, %v1124
      %v1126 = vpop.f32.mrb[0].mxu0
      %1127 = vmatprep.mubr.f32.mxu0 0.0
      %1128 = vmatmul.mubr.f32.gmra.mrb[0].mxu0 %v478
      %v1129 = vpop.f32.mrb[0].mxu0
      %v1130 = vadd.f32 %v905, %v1129
      %v1131 = vpop.f32.mrb[0].mxu0
      %1132 = vmatprep.mubr.f32.mxu0 0.0
      %1133 = vmatmul.mubr.f32.gmra.mrb[0].mxu0 %v481
      %v1134 = vpop.f32.mrb[0].mxu0
      %v1135 = vadd.f32 %v910, %v1134
      %v1136 = vpop.f32.mrb[0].mxu0
      %1137 = vmatprep.mubr.f32.mxu0 0.0
      %1138 = vmatmul.mubr.f32.gmra.mrb[0].mxu0 %v484
      %v1139 = vpop.f32.mrb[0].mxu0
      %v1140 = vadd.f32 %v915, %v1139
      %v1141 = vpop.f32.mrb[0].mxu0
      %1142 = vmatprep.mubr.f32.mxu0 0.0
      %1143 = vmatmul.mubr.f32.gmra.mrb[0].mxu0 %v487
      %v1144 = vpop.f32.mrb[0].mxu0
      %v1145 = vadd.f32 %v920, %v1144
      %v1146 = vpop.f32.mrb[0].mxu0
      %1147 = vmatprep.mubr.f32.mxu0 0.0
      %1148 = vmatmul.mubr.f32.gmra.mrb[0].mxu0 %v490
      %v1149 = vpop.f32.mrb[0].mxu0
      %v1150 = vadd.f32 %v925, %v1149
      %v1151 = vpop.f32.mrb[0].mxu0
      %1152 = vmatprep.mubr.f32.mxu0 0.0
      %1153 = vmatmul.mubr.f32.gmra.mrb[0].mxu0 %v493
      %v1154 = vpop.f32.mrb[0].mxu0
      %v1155 = vadd.f32 %v930, %v1154
      %v1156 = vpop.f32.mrb[0].mxu0
      %1157 = vmatprep.mubr.f32.mxu0 0.0
      %1158 = vmatmul.mubr.f32.gmra.mrb[0].mxu0 %v496
      %v1159 = vpop.f32.mrb[0].mxu0
      %v1160 = vadd.f32 %v935, %v1159
      %v1161 = vpop.f32.mrb[0].mxu0
      %1162 = vmatprep.mubr.f32.mxu0 0.0
      %1163 = vmatmul.mubr.f32.gmra.mrb[0].mxu0 %v499
      %v1164 = vpop.f32.mrb[0].mxu0
      %v1165 = vadd.f32 %v940, %v1164
      %v1166 = vpop.f32.mrb[0].mxu0
      %1167 = vmatprep.mubr.f32.mxu0 0.0
      %1168 = vmatmul.mubr.f32.gmra.mrb[0].mxu0 %v502
      %v1169 = vpop.f32.mrb[0].mxu0
      %v1170 = vadd.f32 %v945, %v1169
      %v1171 = vpop.f32.mrb[0].mxu0
      %1172 = vmatprep.mubr.f32.mxu0 0.0
      %1173 = vmatmul.mubr.f32.gmra.mrb[0].mxu0 %v505
      %v1174 = vpop.f32.mrb[0].mxu0
      %v1175 = vadd.f32 %v950, %v1174
      %v1176 = vpop.f32.mrb[0].mxu0
      %1177 = vmatprep.mubr.f32.mxu0 0.0
      %1178 = vmatmul.mubr.f32.gmra.mrb[0].mxu0 %v508
      %v1179 = vpop.f32.mrb[0].mxu0
      %v1180 = vadd.f32 %v955, %v1179
      %v1181 = vpop.f32.mrb[0].mxu0
      %1182 = vmatprep.mubr.f32.mxu0 0.0
      %1183 = vmatmul.mubr.f32.gmra.mrb[0].mxu0 %v511
      %v1184 = vpop.f32.mrb[0].mxu0
      %v1185 = vadd.f32 %v960, %v1184
      %v1186 = vpop.f32.mrb[0].mxu0
      %1187 = vdwg.mxu0
      %vm1188 = vcmask 64512
      %1189 = vst.msk [vmem:[%s175] sm:$0xff] %vm1188, %v1030
      %1190 = vst.msk [vmem:[%s175 + $0x8] sm:$0xff] %vm1188, %v1035
      %1191 = vst.msk [vmem:[%s175 + $0x10] sm:$0xff] %vm1188, %v1040
      %1192 = vst.msk [vmem:[%s175 + $0x18] sm:$0xff] %vm1188, %v1045
      %1193 = vst.msk [vmem:[%s175 + $0x20] sm:$0xff] %vm1188, %v1050
      %1194 = vst.msk [vmem:[%s175 + $0x28] sm:$0xff] %vm1188, %v1055
      %1195 = vst.msk [vmem:[%s175 + $0x30] sm:$0xff] %vm1188, %v1060
      %1196 = vst.msk [vmem:[%s175 + $0x38] sm:$0xff] %vm1188, %v1065
      %1197 = vst.msk [vmem:[%s175 + $0x40] sm:$0xff] %vm1188, %v1070
      %1198 = vst.msk [vmem:[%s175 + $0x48] sm:$0xff] %vm1188, %v1075
      %1199 = vst.msk [vmem:[%s175 + $0x50] sm:$0xff] %vm1188, %v1080
      %1200 = vst.msk [vmem:[%s175 + $0x58] sm:$0xff] %vm1188, %v1085
      %1201 = vst.msk [vmem:[%s175 + $0x60] sm:$0xff] %vm1188, %v1090
      %1202 = vst.msk [vmem:[%s175 + $0x68] sm:$0xff] %vm1188, %v1095
      %1203 = vst.msk [vmem:[%s175 + $0x70] sm:$0xff] %vm1188, %v1100
      %1204 = vst.msk [vmem:[%s175 + $0x78] sm:$0xff] %vm1188, %v1105
      %1205 = vst.msk [vmem:[%s175 + $0x80] sm:$0xff] %vm1188, %v1110
      %1206 = vst.msk [vmem:[%s175 + $0x88] sm:$0xff] %vm1188, %v1115
      %1207 = vst.msk [vmem:[%s175 + $0x90] sm:$0xff] %vm1188, %v1120
      %1208 = vst.msk [vmem:[%s175 + $0x98] sm:$0xff] %vm1188, %v1125
      %1209 = vst.msk [vmem:[%s175 + $0xa0] sm:$0xff] %vm1188, %v1130
      %1210 = vst.msk [vmem:[%s175 + $0xa8] sm:$0xff] %vm1188, %v1135
      %1211 = vst.msk [vmem:[%s175 + $0xb0] sm:$0xff] %vm1188, %v1140
      %1212 = vst.msk [vmem:[%s175 + $0xb8] sm:$0xff] %vm1188, %v1145
      %1213 = vst.msk [vmem:[%s175 + $0xc0] sm:$0xff] %vm1188, %v1150
      %1214 = vst.msk [vmem:[%s175 + $0xc8] sm:$0xff] %vm1188, %v1155
      %1215 = vst.msk [vmem:[%s175 + $0xd0] sm:$0xff] %vm1188, %v1160
      %1216 = vst.msk [vmem:[%s175 + $0xd8] sm:$0xff] %vm1188, %v1165
      %1217 = vst.msk [vmem:[%s175 + $0xe0] sm:$0xff] %vm1188, %v1170
      %1218 = vst.msk [vmem:[%s175 + $0xe8] sm:$0xff] %vm1188, %v1175
      %1219 = vst.msk [vmem:[%s175 + $0xf0] sm:$0xff] %vm1188, %v1180
      %1220 = vst.msk [vmem:[%s175 + $0xf8] sm:$0xff] %vm1188, %v1185
      %s1221 = smul.u32 32, %s14
      %p1222 = scmp.lt.s32.totalorder %s1221, 63
      %s1223 = scalar_select %p1222, %s1221, 63
      %s1224 = smul.addr %s1223, 8
      %s1225 = scalar_lea.vmem %s3, %s1224
      // Predicated region
      $region33: #{_lambda_.31} parent=31 // pred_check
        %p1226 = pneg %p100
      $region34: #{_lambda_.31} parent=31 // pred_check_branch
        %1228 = sbr.rel (%p1226) target = $region36
      $region35: #{_lambda_.31} parent=31 // pred_region
        %s1229 = smul.u32 32, %s14
      $region36: #{_lambda_.31} parent=31 // pred_fallthru
        _
    $region32: #{_lambda_.31} parent=5 // pred_fallthru
      _
    %p1230 = scmp.le.s32.totalorder 2, %s9
    // Predicated region
    $region37: #{_lambda_.31} parent=5 // pred_check
      %p1231 = pneg %p1230
    $region38: #{_lambda_.31} parent=5 // pred_check_branch
      %1233 = sbr.rel (%p1231) target = $region40
    $region39: #{_lambda_.31} parent=5 // pred_region
      %s1234 = ssub.s32 %s9, 2
      // Predicated region
      $region41: #{_lambda_.31} parent=39 // pred_check
        %p1235 = pneg %p106
      $region42: #{_lambda_.31} parent=39 // pred_check_branch
        %1237 = sbr.rel (%p1235) target = $region44
      $region43: #{_lambda_.31} parent=39 // pred_region
        %s1238 = smul.u32 32, %s15
        %p1239 = scmp.lt.s32.totalorder %s1238, 63
        %s1240 = scalar_select %p1239, %s1238, 63
        %s1241 = smul.addr %s1240, 8
        %s1242 = scalar_lea.vmem %s3, %s1241
      $region44: #{_lambda_.31} parent=39 // pred_fallthru
        _
    $region40: #{_lambda_.31} parent=5 // pred_fallthru
      _
  $region6: #{_lambda_.31} parent=0 // loop_footer
    %s13 = sadd.s32 1, %s9
  $region7: #{_lambda_.31} parent=0 // loop_footer_branch
    %8 = sbr.rel target = $region3
  $region8: #{_lambda_.31} parent=0 // loop_exit
    _

</llo_original>
